<compile_context>
chip_gen: v7x
topology: tpu7x:2x2x1
jax: 0.10.0
libtpu: 0.0.40
codegen_flags: <defaults>
</compile_context>

<pallas_src>
import functools

import jax
import jax.numpy as jnp
import numpy as np
from jax import lax
from jax.experimental import pallas as pl
from jax.experimental.pallas import tpu as pltpu

EPS = 1e-5
LANES = 128
VMEM_LIMIT_BYTES = 32 * 1024 * 1024


def _round_up(x, m):
    return (x + m - 1) // m * m


def _choose_block_h(H, W, ci, co, itemsize, budget=12 * 1024 * 1024):
    """Largest row-tile height dividing H whose working set fits the budget."""
    for th in range(H, 0, -1):
        if H % th:
            continue
        need = (2 * (th + 2) * (W + 2) * ci * itemsize   # input halo double buffer
                + 2 * th * W * co * itemsize             # pipelined output blocks
                + 9 * ci * co * itemsize                 # weights
                + th * W * co * 4)                       # f32 accumulator
        if need <= budget:
            return th
    return 1


# ----------------------------------------------------------------------------
# Fused kernel: [optional folded BN+ReLU of previous stage on the input tile]
#               -> 3x3 "same" conv -> per-channel batch-stat partial sums.
# Grid = (N, H // TH).  Input stays in HBM (pl.ANY); halo row-tiles are fetched
# with a manual double-buffered DMA chain that is local to each image.
# ----------------------------------------------------------------------------
def _conv3x3_stats_kernel(x_hbm, w_ref, scale_ref, shift_ref,
                          o_ref, sum_ref, sq_ref,
                          xbuf, sem,
                          *, H, W, TH, apply_input_act):
    n = pl.program_id(0)
    t = pl.program_id(1)
    n_t = pl.num_programs(1)
    slot = lax.rem(t, 2)

    def start_fetch(row_tile, dst_slot):
        pltpu.make_async_copy(
            x_hbm.at[n, pl.ds(row_tile * TH, TH + 2), :, :],
            xbuf.at[dst_slot],
            sem.at[dst_slot],
        ).start()

    # Prime this image's first halo tile.  Keeping the DMA chain local to one
    # image keeps the batch axis safe to run as "parallel" (v7x megacore).
    @pl.when(t == 0)
    def _():
        start_fetch(0, 0)

    # Wait for the current tile.
    pltpu.make_async_copy(
        x_hbm.at[0, pl.ds(0, TH + 2), :, :], xbuf.at[slot], sem.at[slot]
    ).wait()

    # Prefetch the next row tile of the same image into the other slot.
    @pl.when(t + 1 < n_t)
    def _():
        start_fetch(t + 1, 1 - slot)

    ci = w_ref.shape[2]
    co = w_ref.shape[3]

    x_raw = xbuf[slot]                                   # (TH+2, W+2, ci)
    if apply_input_act:
        # Previous stage's BatchNorm + ReLU folded into this conv's input path.
        # The spatial halo must be zero *after* the affine+ReLU, so mask it.
        xa = x_raw.astype(jnp.float32) * scale_ref[0] + shift_ref[0]
        row = lax.broadcasted_iota(jnp.int32, (TH + 2, W + 2, 1), 0) + t * TH
        col = lax.broadcasted_iota(jnp.int32, (TH + 2, W + 2, 1), 1)
        valid = (row >= 1) & (row <= H) & (col >= 1) & (col <= W)
        x_in = jnp.where(valid, jnp.maximum(xa, 0.0), 0.0).astype(x_raw.dtype)
    else:
        x_in = x_raw

    # TODO(synk): replace the per-tap sublane slice with pltpu.roll-based
    # shifts once channels are realistic (micro-opt; correctness unaffected).
    w = w_ref[...]                                       # hoisted single load
    acc = jnp.zeros((TH * W, co), jnp.float32)
    for kh in range(3):
        for kw in range(3):
            patch = x_in[kh:kh + TH, kw:kw + W, :].reshape(TH * W, ci)
            acc = acc + jnp.dot(patch, w[kh, kw],
                                preferred_element_type=jnp.float32)

    # Fused batch-statistics epilogue: per-image partial sums accumulated in
    # the resident stats output blocks while the conv tile is still on-chip.
    @pl.when(t == 0)
    def _():
        sum_ref[...] = jnp.zeros_like(sum_ref)
        sq_ref[...] = jnp.zeros_like(sq_ref)

    sum_ref[...] += jnp.sum(acc, axis=0).reshape(1, 1, co)
    sq_ref[...] += jnp.sum(acc * acc, axis=0).reshape(1, 1, co)

    o_ref[...] = acc.reshape(1, TH, W, co).astype(o_ref.dtype)


def conv3x3_with_stats(x_pad, w, in_scale, in_shift, *, apply_input_act,
                       H, W, block_h, out_dtype):
    """x_pad: (N, H+2, W+2, ci) spatially pre-padded, channel-padded input."""
    N = x_pad.shape[0]
    ci = x_pad.shape[-1]
    co = w.shape[-1]
    n_t = H // block_h
    kernel = functools.partial(_conv3x3_stats_kernel, H=H, W=W, TH=block_h,
                               apply_input_act=apply_input_act)
    return pl.pallas_call(
        kernel,
        out_shape=(
            jax.ShapeDtypeStruct((N, H, W, co), out_dtype),
            jax.ShapeDtypeStruct((N, 1, co), jnp.float32),   # per-image sum
            jax.ShapeDtypeStruct((N, 1, co), jnp.float32),   # per-image sum sq
        ),
        grid=(N, n_t),
        in_specs=[
            pl.BlockSpec(memory_space=pl.ANY),               # manual halo DMA
            pl.BlockSpec((3, 3, ci, co), lambda n, t: (0, 0, 0, 0)),
            pl.BlockSpec((1, ci), lambda n, t: (0, 0)),
            pl.BlockSpec((1, ci), lambda n, t: (0, 0)),
        ],
        out_specs=(
            pl.BlockSpec((1, block_h, W, co), lambda n, t: (n, t, 0, 0)),
            pl.BlockSpec((1, 1, co), lambda n, t: (n, 0, 0)),
            pl.BlockSpec((1, 1, co), lambda n, t: (n, 0, 0)),
        ),
        scratch_shapes=[
            pltpu.VMEM((2, block_h + 2, W + 2, ci), x_pad.dtype),
            pltpu.SemaphoreType.DMA((2,)),
        ],
        compiler_params=pltpu.CompilerParams(
            dimension_semantics=("parallel", "arbitrary"),
            vmem_limit_bytes=VMEM_LIMIT_BYTES),
    )(x_pad, w, in_scale, in_shift)


# ----------------------------------------------------------------------------
# Final fused per-channel affine (folded BatchNorm) + ReLU, row-tiled.
# ----------------------------------------------------------------------------
def _bn_relu_kernel(x_ref, scale_ref, shift_ref, o_ref):
    y = x_ref[...].astype(jnp.float32) * scale_ref[0] + shift_ref[0]
    o_ref[...] = jnp.maximum(y, 0.0).astype(o_ref.dtype)


def bn_relu(x, scale, shift, *, block_h, out_dtype):
    N, H, W, C = x.shape
    n_t = H // block_h
    return pl.pallas_call(
        _bn_relu_kernel,
        out_shape=jax.ShapeDtypeStruct((N, H, W, C), out_dtype),
        grid=(N, n_t),
        in_specs=[
            pl.BlockSpec((1, block_h, W, C), lambda n, t: (n, t, 0, 0)),
            pl.BlockSpec((1, C), lambda n, t: (0, 0)),
            pl.BlockSpec((1, C), lambda n, t: (0, 0)),
        ],
        out_specs=pl.BlockSpec((1, block_h, W, C), lambda n, t: (n, t, 0, 0)),
        compiler_params=pltpu.CompilerParams(
            dimension_semantics=("parallel", "parallel"),
            vmem_limit_bytes=VMEM_LIMIT_BYTES),
    )(x, scale, shift)


def _bn_scale_shift(part_sum, part_sq, gamma, beta, count):
    """Fold train-mode BatchNorm (biased variance) into a per-channel affine."""
    s = jnp.sum(part_sum, axis=0)[0]                     # (C,)
    q = jnp.sum(part_sq, axis=0)[0]
    mean = s / count
    var = jnp.maximum(q / count - mean * mean, 0.0)
    scale = gamma / jnp.sqrt(var + EPS)
    shift = beta - mean * scale
    c = s.shape[0]
    return (scale.reshape(1, c).astype(jnp.float32),
            shift.reshape(1, c).astype(jnp.float32))


# ----------------------------------------------------------------------------
# double_conv forward: (conv => BN => ReLU) * 2, training-mode batch stats.
# ----------------------------------------------------------------------------
def double_conv_forward(x_nchw, params, *, block_h=None,
                        compute_dtype=jnp.float32):
    x = jnp.transpose(x_nchw, (0, 2, 3, 1))              # NCHW -> NHWC
    N, H, W, cin = x.shape
    cout = params["w1"].shape[-1]
    cin_p = _round_up(cin, LANES)
    cout_p = _round_up(cout, LANES)
    itemsize = jnp.dtype(compute_dtype).itemsize

    if block_h is None:
        block_h = _choose_block_h(H, W, max(cin_p, cout_p), cout_p, itemsize)
    assert H % block_h == 0, "block_h must divide H"

    # Channel-pad weights/BN params to a multiple of 128 lanes.  Conv biases
    # are dropped: training-mode BatchNorm's mean subtraction cancels them.
    w1 = jnp.pad(params["w1"], ((0, 0), (0, 0), (0, cin_p - cin),
                                (0, cout_p - cout))).astype(compute_dtype)
    w2 = jnp.pad(params["w2"], ((0, 0), (0, 0), (0, cout_p - cout),
                                (0, cout_p - cout))).astype(compute_dtype)
    g1 = jnp.pad(params["gamma1"], (0, cout_p - cout)).astype(jnp.float32)
    b1 = jnp.pad(params["beta1"], (0, cout_p - cout)).astype(jnp.float32)
    g2 = jnp.pad(params["gamma2"], (0, cout_p - cout)).astype(jnp.float32)
    b2 = jnp.pad(params["beta2"], (0, cout_p - cout)).astype(jnp.float32)

    count = float(N * H * W)
    unit_scale = jnp.ones((1, cin_p), jnp.float32)
    zero_shift = jnp.zeros((1, cin_p), jnp.float32)

    # Stage 1: conv1 (+ fused batch stats) on the raw input.
    # TODO(synk): generate the 1-pixel spatial halo in-kernel instead of this
    # host-side pad (costs one extra pass over the activation per stage).
    x1 = jnp.pad(x.astype(compute_dtype),
                 ((0, 0), (1, 1), (1, 1), (0, cin_p - cin)))
    y1, s1, q1 = conv3x3_with_stats(
        x1, w1, unit_scale, zero_shift, apply_input_act=False,
        H=H, W=W, block_h=block_h, out_dtype=compute_dtype)
    scale1, shift1 = _bn_scale_shift(s1, q1, g1, b1, count)

    # Stage 2: conv2 with stage-1 BN+ReLU folded into its input path.
    y1p = jnp.pad(y1, ((0, 0), (1, 1), (1, 1), (0, 0)))
    y2, s2, q2 = conv3x3_with_stats(
        y1p, w2, scale1, shift1, apply_input_act=True,
        H=H, W=W, block_h=block_h, out_dtype=compute_dtype)
    scale2, shift2 = _bn_scale_shift(s2, q2, g2, b2, count)

    # Final BN + ReLU (stats need the whole conv2 output, so not fusable).
    out = bn_relu(y2, scale2, shift2, block_h=block_h, out_dtype=x_nchw.dtype)
    out = out[..., :cout]
    return jnp.transpose(out, (0, 3, 1, 2))              # NHWC -> NCHW


# ----------------------------------------------------------------------------
# Pure-JAX reference (faithful to the PyTorch module, bias included).
# ----------------------------------------------------------------------------
def _ref_conv_bn_relu(x, w, b, gamma, beta):
    y = lax.conv_general_dilated(
        x, w, window_strides=(1, 1), padding="SAME",
        dimension_numbers=("NHWC", "HWIO", "NHWC")) + b
    mean = jnp.mean(y, axis=(0, 1, 2))
    var = jnp.mean((y - mean) ** 2, axis=(0, 1, 2))
    y = (y - mean) / jnp.sqrt(var + EPS) * gamma + beta
    return jnp.maximum(y, 0.0)


def double_conv_reference(x_nchw, params):
    x = jnp.transpose(x_nchw, (0, 2, 3, 1))
    x = _ref_conv_bn_relu(x, params["w1"], params["b1"],
                          params["gamma1"], params["beta1"])
    x = _ref_conv_bn_relu(x, params["w2"], params["b2"],
                          params["gamma2"], params["beta2"])
    return jnp.transpose(x, (0, 3, 1, 2))


def init_params(key, in_ch, out_ch):
    ks = jax.random.split(key, 8)
    # PyTorch Conv2d weights are OIHW; convert to HWIO for the NHWC kernels.
    w1_oihw = jax.random.normal(ks[0], (out_ch, in_ch, 3, 3), jnp.float32) * 0.1
    w2_oihw = jax.random.normal(ks[1], (out_ch, out_ch, 3, 3), jnp.float32) * 0.1
    return {
        "w1": jnp.transpose(w1_oihw, (2, 3, 1, 0)),
        "b1": jax.random.normal(ks[2], (out_ch,), jnp.float32) * 0.1,
        "gamma1": 1.0 + 0.1 * jax.random.normal(ks[3], (out_ch,), jnp.float32),
        "beta1": 0.1 * jax.random.normal(ks[4], (out_ch,), jnp.float32),
        "w2": jnp.transpose(w2_oihw, (2, 3, 1, 0)),
        "b2": jax.random.normal(ks[5], (out_ch,), jnp.float32) * 0.1,
        "gamma2": 1.0 + 0.1 * jax.random.normal(ks[6], (out_ch,), jnp.float32),
        "beta2": 0.1 * jax.random.normal(ks[7], (out_ch,), jnp.float32),
    }


if __name__ == "__main__":
    N, in_ch, out_ch, H, W = 2, 4, 8, 16, 16
    key = jax.random.PRNGKey(0)
    kx, kp = jax.random.split(key)
    x = jax.random.normal(kx, (N, in_ch, H, W), jnp.float32)
    params = init_params(kp, in_ch, out_ch)

    ref = double_conv_reference(x, params)

    # f32 path (tight check); block_h=8 exercises the multi-tile halo path.
    fwd_f32 = jax.jit(functools.partial(double_conv_forward,
                                        block_h=8, compute_dtype=jnp.float32))
    out_f32 = jax.block_until_ready(fwd_f32(x, params))
    np.testing.assert_allclose(np.asarray(out_f32), np.asarray(ref),
                               rtol=2e-3, atol=2e-3)

    # bf16 activations/weights, f32 accumulation (performance configuration).
    fwd_bf16 = jax.jit(functools.partial(double_conv_forward,
                                         block_h=8, compute_dtype=jnp.bfloat16))
    out_bf16 = jax.block_until_ready(fwd_bf16(x, params))
    np.testing.assert_allclose(np.asarray(out_bf16), np.asarray(ref),
                               rtol=5e-2, atol=5e-2)

    assert out_f32.shape == (N, out_ch, H, W)
    print("KERNEL_OK")
</pallas_src>

<mosaic_0001>
module attributes {stable_mosaic.version = 11 : i64} {
  func.func @_conv3x3_stats_kernel(%arg0: i32, %arg1: i32, %arg2: memref<2x18x18x128xf32, #tpu.memory_space<any>>, %arg3: memref<3x3x128x128xf32, #tpu.memory_space<vmem>>, %arg4: memref<1x128xf32, #tpu.memory_space<vmem>>, %arg5: memref<1x128xf32, #tpu.memory_space<vmem>>, %arg6: memref<1x8x16x128xf32, #tpu.memory_space<vmem>>, %arg7: memref<1x1x128xf32, #tpu.memory_space<vmem>>, %arg8: memref<1x1x128xf32, #tpu.memory_space<vmem>>, %arg9: memref<2x10x18x128xf32, #tpu.memory_space<vmem>>, %arg10: memref<2x!tpu.dma_semaphore, #tpu.memory_space<semaphore_mem>>) attributes {dimension_semantics = [#tpu.dimension_semantics<parallel>, #tpu.dimension_semantics<arbitrary>], iteration_bounds = array<i64: 2, 2>, scalar_prefetch = 0 : i64, scratch_operands = 2 : i64, tpu.core_type = #tpu.core_type<tc>, window_params = [{}, {pipeline_mode = #tpu.pipeline_mode<synchronous>, transform_indices = @transform_1, window_bounds = array<i64: 3, 3, 128, 128>}, {pipeline_mode = #tpu.pipeline_mode<synchronous>, transform_indices = @transform_2, window_bounds = array<i64: 1, 128>}, {pipeline_mode = #tpu.pipeline_mode<synchronous>, transform_indices = @transform_3, window_bounds = array<i64: 1, 128>}, {transform_indices = @transform_4, window_bounds = array<i64: 1, 8, 16, 128>}, {transform_indices = @transform_5, window_bounds = array<i64: 1, 1, 128>}, {transform_indices = @transform_6, window_bounds = array<i64: 1, 1, 128>}]} {
    %c2_i32 = arith.constant 2 : i32
    %0 = arith.remsi %arg1, %c2_i32 : i32
    %c0_i32 = arith.constant 0 : i32
    %1 = arith.cmpi eq, %arg1, %c0_i32 : i32
    %2 = arith.extui %1 : i1 to i32
    %c0_i32_0 = arith.constant 0 : i32
    %3 = arith.cmpi ne, %2, %c0_i32_0 : i32
    scf.if %3 {
      %c0_i32_45 = arith.constant 0 : i32
      %c0_i32_46 = arith.constant 0 : i32
      %c0_i32_47 = arith.constant 0 : i32
      %c0_i32_48 = arith.constant 0 : i32
      %c0_i32_49 = arith.constant 0 : i32
      %89 = tpu.memref_slice %arg2[%arg0, %c0_i32_47, %c0_i32_48, %c0_i32_49] : memref<2x18x18x128xf32, #tpu.memory_space<any>> -> memref<1x10x18x128xf32, #tpu.memory_space<any>>
      %90 = tpu.memref_squeeze %89 : memref<1x10x18x128xf32, #tpu.memory_space<any>> -> memref<10x18x128xf32, #tpu.memory_space<any>>
      %c0_i32_50 = arith.constant 0 : i32
      %c0_i32_51 = arith.constant 0 : i32
      %c0_i32_52 = arith.constant 0 : i32
      %91 = tpu.memref_slice %arg9[%c0_i32_45, %c0_i32_50, %c0_i32_51, %c0_i32_52] : memref<2x10x18x128xf32, #tpu.memory_space<vmem>> -> memref<1x10x18x128xf32, #tpu.memory_space<vmem>>
      %92 = tpu.memref_squeeze %91 : memref<1x10x18x128xf32, #tpu.memory_space<vmem>> -> memref<10x18x128xf32, #tpu.memory_space<vmem>>
      %93 = tpu.memref_slice %arg10[%c0_i32_46] : memref<2x!tpu.dma_semaphore, #tpu.memory_space<semaphore_mem>> -> memref<1x!tpu.dma_semaphore, #tpu.memory_space<semaphore_mem>>
      %94 = tpu.memref_squeeze %93 : memref<1x!tpu.dma_semaphore, #tpu.memory_space<semaphore_mem>> -> memref<!tpu.dma_semaphore, #tpu.memory_space<semaphore_mem>>
      tpu.enqueue_dma source(%90 : memref<10x18x128xf32, #tpu.memory_space<any>>) target(%92 : memref<10x18x128xf32, #tpu.memory_space<vmem>>) target_semaphore(%94 : memref<!tpu.dma_semaphore, #tpu.memory_space<semaphore_mem>>)
    } else {
    }
    %c0_i32_1 = arith.constant 0 : i32
    %c0_i32_2 = arith.constant 0 : i32
    %c0_i32_3 = arith.constant 0 : i32
    %c0_i32_4 = arith.constant 0 : i32
    %4 = tpu.memref_slice %arg2[%c0_i32_1, %c0_i32_2, %c0_i32_3, %c0_i32_4] : memref<2x18x18x128xf32, #tpu.memory_space<any>> -> memref<1x10x18x128xf32, #tpu.memory_space<any>>
    %5 = tpu.memref_squeeze %4 : memref<1x10x18x128xf32, #tpu.memory_space<any>> -> memref<10x18x128xf32, #tpu.memory_space<any>>
    %c0_i32_5 = arith.constant 0 : i32
    %c0_i32_6 = arith.constant 0 : i32
    %c0_i32_7 = arith.constant 0 : i32
    %6 = tpu.memref_slice %arg9[%0, %c0_i32_5, %c0_i32_6, %c0_i32_7] : memref<2x10x18x128xf32, #tpu.memory_space<vmem>> -> memref<1x10x18x128xf32, #tpu.memory_space<vmem>>
    %7 = tpu.memref_squeeze %6 : memref<1x10x18x128xf32, #tpu.memory_space<vmem>> -> memref<10x18x128xf32, #tpu.memory_space<vmem>>
    %8 = tpu.memref_slice %arg10[%0] : memref<2x!tpu.dma_semaphore, #tpu.memory_space<semaphore_mem>> -> memref<1x!tpu.dma_semaphore, #tpu.memory_space<semaphore_mem>>
    %9 = tpu.memref_squeeze %8 : memref<1x!tpu.dma_semaphore, #tpu.memory_space<semaphore_mem>> -> memref<!tpu.dma_semaphore, #tpu.memory_space<semaphore_mem>>
    tpu.wait_dma2 semaphore(%9 : memref<!tpu.dma_semaphore, #tpu.memory_space<semaphore_mem>>) src(%5 : memref<10x18x128xf32, #tpu.memory_space<any>>) dst(%7 : memref<10x18x128xf32, #tpu.memory_space<vmem>>)
    %c1_i32 = arith.constant 1 : i32
    %10 = arith.addi %arg1, %c1_i32 : i32
    %c2_i32_8 = arith.constant 2 : i32
    %11 = arith.cmpi slt, %10, %c2_i32_8 : i32
    %12 = arith.extui %11 : i1 to i32
    %c0_i32_9 = arith.constant 0 : i32
    %13 = arith.cmpi ne, %12, %c0_i32_9 : i32
    scf.if %13 {
      %c1_i32_45 = arith.constant 1 : i32
      %89 = arith.addi %arg1, %c1_i32_45 : i32
      %c1_i32_46 = arith.constant 1 : i32
      %90 = arith.subi %c1_i32_46, %0 : i32
      %c8_i32 = arith.constant 8 : i32
      %91 = arith.muli %89, %c8_i32 : i32
      %c0_i32_47 = arith.constant 0 : i32
      %c0_i32_48 = arith.constant 0 : i32
      %92 = tpu.memref_slice %arg2[%arg0, %91, %c0_i32_47, %c0_i32_48] : memref<2x18x18x128xf32, #tpu.memory_space<any>> -> memref<1x10x18x128xf32, #tpu.memory_space<any>>
      %93 = tpu.memref_squeeze %92 : memref<1x10x18x128xf32, #tpu.memory_space<any>> -> memref<10x18x128xf32, #tpu.memory_space<any>>
      %c0_i32_49 = arith.constant 0 : i32
      %c0_i32_50 = arith.constant 0 : i32
      %c0_i32_51 = arith.constant 0 : i32
      %94 = tpu.memref_slice %arg9[%90, %c0_i32_49, %c0_i32_50, %c0_i32_51] : memref<2x10x18x128xf32, #tpu.memory_space<vmem>> -> memref<1x10x18x128xf32, #tpu.memory_space<vmem>>
      %95 = tpu.memref_squeeze %94 : memref<1x10x18x128xf32, #tpu.memory_space<vmem>> -> memref<10x18x128xf32, #tpu.memory_space<vmem>>
      %96 = tpu.memref_slice %arg10[%90] : memref<2x!tpu.dma_semaphore, #tpu.memory_space<semaphore_mem>> -> memref<1x!tpu.dma_semaphore, #tpu.memory_space<semaphore_mem>>
      %97 = tpu.memref_squeeze %96 : memref<1x!tpu.dma_semaphore, #tpu.memory_space<semaphore_mem>> -> memref<!tpu.dma_semaphore, #tpu.memory_space<semaphore_mem>>
      tpu.enqueue_dma source(%93 : memref<10x18x128xf32, #tpu.memory_space<any>>) target(%95 : memref<10x18x128xf32, #tpu.memory_space<vmem>>) target_semaphore(%97 : memref<!tpu.dma_semaphore, #tpu.memory_space<semaphore_mem>>)
    } else {
    }
    %14 = arith.index_cast %0 : i32 to index
    %c0 = arith.constant 0 : index
    %c0_10 = arith.constant 0 : index
    %c0_11 = arith.constant 0 : index
    %15 = vector.load %arg9[%14, %c0, %c0_10, %c0_11] : memref<2x10x18x128xf32, #tpu.memory_space<vmem>>, vector<1x10x18x128xf32>
    %16 = vector.shape_cast %15 : vector<1x10x18x128xf32> to vector<10x18x128xf32>
    %c0_12 = arith.constant 0 : index
    %c0_13 = arith.constant 0 : index
    %c0_14 = arith.constant 0 : index
    %c0_15 = arith.constant 0 : index
    %17 = vector.load %arg3[%c0_12, %c0_13, %c0_14, %c0_15] : memref<3x3x128x128xf32, #tpu.memory_space<vmem>>, vector<3x3x128x128xf32>
    %cst = arith.constant 0.000000e+00 : f32
    %18 = vector.broadcast %cst : f32 to vector<128x128xf32>
    %19 = vector.extract_strided_slice %16 {offsets = [0, 0, 0], sizes = [8, 16, 128], strides = [1, 1, 1]} : vector<10x18x128xf32> to vector<8x16x128xf32>
    %20 = vector.shape_cast %19 : vector<8x16x128xf32> to vector<128x128xf32>
    %21 = vector.extract_strided_slice %17 {offsets = [0, 0, 0, 0], sizes = [1, 1, 128, 128], strides = [1, 1, 1, 1]} : vector<3x3x128x128xf32> to vector<1x1x128x128xf32>
    %22 = vector.shape_cast %21 : vector<1x1x128x128xf32> to vector<128x128xf32>
    %cst_16 = arith.constant dense<0.000000e+00> : vector<128x128xf32>
    %23 = tpu.matmul %20, %22, %cst_16 {dimension_numbers = #tpu.dot_dimension_numbers<[1], [0], [0], [1], [0, 0, 1, 1], [], []>} : vector<128x128xf32>, vector<128x128xf32>, vector<128x128xf32> -> vector<128x128xf32>
    %24 = arith.addf %18, %23 : vector<128x128xf32>
    %25 = vector.extract_strided_slice %16 {offsets = [0, 1, 0], sizes = [8, 16, 128], strides = [1, 1, 1]} : vector<10x18x128xf32> to vector<8x16x128xf32>
    %26 = vector.shape_cast %25 : vector<8x16x128xf32> to vector<128x128xf32>
    %27 = vector.extract_strided_slice %17 {offsets = [0, 1, 0, 0], sizes = [1, 1, 128, 128], strides = [1, 1, 1, 1]} : vector<3x3x128x128xf32> to vector<1x1x128x128xf32>
    %28 = vector.shape_cast %27 : vector<1x1x128x128xf32> to vector<128x128xf32>
    %cst_17 = arith.constant dense<0.000000e+00> : vector<128x128xf32>
    %29 = tpu.matmul %26, %28, %cst_17 {dimension_numbers = #tpu.dot_dimension_numbers<[1], [0], [0], [1], [0, 0, 1, 1], [], []>} : vector<128x128xf32>, vector<128x128xf32>, vector<128x128xf32> -> vector<128x128xf32>
    %30 = arith.addf %24, %29 : vector<128x128xf32>
    %31 = vector.extract_strided_slice %16 {offsets = [0, 2, 0], sizes = [8, 16, 128], strides = [1, 1, 1]} : vector<10x18x128xf32> to vector<8x16x128xf32>
    %32 = vector.shape_cast %31 : vector<8x16x128xf32> to vector<128x128xf32>
    %33 = vector.extract_strided_slice %17 {offsets = [0, 2, 0, 0], sizes = [1, 1, 128, 128], strides = [1, 1, 1, 1]} : vector<3x3x128x128xf32> to vector<1x1x128x128xf32>
    %34 = vector.shape_cast %33 : vector<1x1x128x128xf32> to vector<128x128xf32>
    %cst_18 = arith.constant dense<0.000000e+00> : vector<128x128xf32>
    %35 = tpu.matmul %32, %34, %cst_18 {dimension_numbers = #tpu.dot_dimension_numbers<[1], [0], [0], [1], [0, 0, 1, 1], [], []>} : vector<128x128xf32>, vector<128x128xf32>, vector<128x128xf32> -> vector<128x128xf32>
    %36 = arith.addf %30, %35 : vector<128x128xf32>
    %37 = vector.extract_strided_slice %16 {offsets = [1, 0, 0], sizes = [8, 16, 128], strides = [1, 1, 1]} : vector<10x18x128xf32> to vector<8x16x128xf32>
    %38 = vector.shape_cast %37 : vector<8x16x128xf32> to vector<128x128xf32>
    %39 = vector.extract_strided_slice %17 {offsets = [1, 0, 0, 0], sizes = [1, 1, 128, 128], strides = [1, 1, 1, 1]} : vector<3x3x128x128xf32> to vector<1x1x128x128xf32>
    %40 = vector.shape_cast %39 : vector<1x1x128x128xf32> to vector<128x128xf32>
    %cst_19 = arith.constant dense<0.000000e+00> : vector<128x128xf32>
    %41 = tpu.matmul %38, %40, %cst_19 {dimension_numbers = #tpu.dot_dimension_numbers<[1], [0], [0], [1], [0, 0, 1, 1], [], []>} : vector<128x128xf32>, vector<128x128xf32>, vector<128x128xf32> -> vector<128x128xf32>
    %42 = arith.addf %36, %41 : vector<128x128xf32>
    %43 = vector.extract_strided_slice %16 {offsets = [1, 1, 0], sizes = [8, 16, 128], strides = [1, 1, 1]} : vector<10x18x128xf32> to vector<8x16x128xf32>
    %44 = vector.shape_cast %43 : vector<8x16x128xf32> to vector<128x128xf32>
    %45 = vector.extract_strided_slice %17 {offsets = [1, 1, 0, 0], sizes = [1, 1, 128, 128], strides = [1, 1, 1, 1]} : vector<3x3x128x128xf32> to vector<1x1x128x128xf32>
    %46 = vector.shape_cast %45 : vector<1x1x128x128xf32> to vector<128x128xf32>
    %cst_20 = arith.constant dense<0.000000e+00> : vector<128x128xf32>
    %47 = tpu.matmul %44, %46, %cst_20 {dimension_numbers = #tpu.dot_dimension_numbers<[1], [0], [0], [1], [0, 0, 1, 1], [], []>} : vector<128x128xf32>, vector<128x128xf32>, vector<128x128xf32> -> vector<128x128xf32>
    %48 = arith.addf %42, %47 : vector<128x128xf32>
    %49 = vector.extract_strided_slice %16 {offsets = [1, 2, 0], sizes = [8, 16, 128], strides = [1, 1, 1]} : vector<10x18x128xf32> to vector<8x16x128xf32>
    %50 = vector.shape_cast %49 : vector<8x16x128xf32> to vector<128x128xf32>
    %51 = vector.extract_strided_slice %17 {offsets = [1, 2, 0, 0], sizes = [1, 1, 128, 128], strides = [1, 1, 1, 1]} : vector<3x3x128x128xf32> to vector<1x1x128x128xf32>
    %52 = vector.shape_cast %51 : vector<1x1x128x128xf32> to vector<128x128xf32>
    %cst_21 = arith.constant dense<0.000000e+00> : vector<128x128xf32>
    %53 = tpu.matmul %50, %52, %cst_21 {dimension_numbers = #tpu.dot_dimension_numbers<[1], [0], [0], [1], [0, 0, 1, 1], [], []>} : vector<128x128xf32>, vector<128x128xf32>, vector<128x128xf32> -> vector<128x128xf32>
    %54 = arith.addf %48, %53 : vector<128x128xf32>
    %55 = vector.extract_strided_slice %16 {offsets = [2, 0, 0], sizes = [8, 16, 128], strides = [1, 1, 1]} : vector<10x18x128xf32> to vector<8x16x128xf32>
    %56 = vector.shape_cast %55 : vector<8x16x128xf32> to vector<128x128xf32>
    %57 = vector.extract_strided_slice %17 {offsets = [2, 0, 0, 0], sizes = [1, 1, 128, 128], strides = [1, 1, 1, 1]} : vector<3x3x128x128xf32> to vector<1x1x128x128xf32>
    %58 = vector.shape_cast %57 : vector<1x1x128x128xf32> to vector<128x128xf32>
    %cst_22 = arith.constant dense<0.000000e+00> : vector<128x128xf32>
    %59 = tpu.matmul %56, %58, %cst_22 {dimension_numbers = #tpu.dot_dimension_numbers<[1], [0], [0], [1], [0, 0, 1, 1], [], []>} : vector<128x128xf32>, vector<128x128xf32>, vector<128x128xf32> -> vector<128x128xf32>
    %60 = arith.addf %54, %59 : vector<128x128xf32>
    %61 = vector.extract_strided_slice %16 {offsets = [2, 1, 0], sizes = [8, 16, 128], strides = [1, 1, 1]} : vector<10x18x128xf32> to vector<8x16x128xf32>
    %62 = vector.shape_cast %61 : vector<8x16x128xf32> to vector<128x128xf32>
    %63 = vector.extract_strided_slice %17 {offsets = [2, 1, 0, 0], sizes = [1, 1, 128, 128], strides = [1, 1, 1, 1]} : vector<3x3x128x128xf32> to vector<1x1x128x128xf32>
    %64 = vector.shape_cast %63 : vector<1x1x128x128xf32> to vector<128x128xf32>
    %cst_23 = arith.constant dense<0.000000e+00> : vector<128x128xf32>
    %65 = tpu.matmul %62, %64, %cst_23 {dimension_numbers = #tpu.dot_dimension_numbers<[1], [0], [0], [1], [0, 0, 1, 1], [], []>} : vector<128x128xf32>, vector<128x128xf32>, vector<128x128xf32> -> vector<128x128xf32>
    %66 = arith.addf %60, %65 : vector<128x128xf32>
    %67 = vector.extract_strided_slice %16 {offsets = [2, 2, 0], sizes = [8, 16, 128], strides = [1, 1, 1]} : vector<10x18x128xf32> to vector<8x16x128xf32>
    %68 = vector.shape_cast %67 : vector<8x16x128xf32> to vector<128x128xf32>
    %69 = vector.extract_strided_slice %17 {offsets = [2, 2, 0, 0], sizes = [1, 1, 128, 128], strides = [1, 1, 1, 1]} : vector<3x3x128x128xf32> to vector<1x1x128x128xf32>
    %70 = vector.shape_cast %69 : vector<1x1x128x128xf32> to vector<128x128xf32>
    %cst_24 = arith.constant dense<0.000000e+00> : vector<128x128xf32>
    %71 = tpu.matmul %68, %70, %cst_24 {dimension_numbers = #tpu.dot_dimension_numbers<[1], [0], [0], [1], [0, 0, 1, 1], [], []>} : vector<128x128xf32>, vector<128x128xf32>, vector<128x128xf32> -> vector<128x128xf32>
    %72 = arith.addf %66, %71 : vector<128x128xf32>
    %c0_i32_25 = arith.constant 0 : i32
    %73 = arith.cmpi eq, %arg1, %c0_i32_25 : i32
    %74 = arith.extui %73 : i1 to i32
    %c0_i32_26 = arith.constant 0 : i32
    %75 = arith.cmpi ne, %74, %c0_i32_26 : i32
    scf.if %75 {
      %cst_45 = arith.constant 0.000000e+00 : f32
      %89 = vector.broadcast %cst_45 : f32 to vector<1x1x128xf32>
      %c0_46 = arith.constant 0 : index
      %c0_47 = arith.constant 0 : index
      %c0_48 = arith.constant 0 : index
      %90 = vector.load %arg7[%c0_46, %c0_47, %c0_48] : memref<1x1x128xf32, #tpu.memory_space<vmem>>, vector<1x1x128xf32>
      tpu.vector_store %arg7[%c0_46, %c0_47, %c0_48], %89 {strides = array<i32>} : memref<1x1x128xf32, #tpu.memory_space<vmem>>, vector<1x1x128xf32>,
      %cst_49 = arith.constant 0.000000e+00 : f32
      %91 = vector.broadcast %cst_49 : f32 to vector<1x1x128xf32>
      %c0_50 = arith.constant 0 : index
      %c0_51 = arith.constant 0 : index
      %c0_52 = arith.constant 0 : index
      %92 = vector.load %arg8[%c0_50, %c0_51, %c0_52] : memref<1x1x128xf32, #tpu.memory_space<vmem>>, vector<1x1x128xf32>
      tpu.vector_store %arg8[%c0_50, %c0_51, %c0_52], %91 {strides = array<i32>} : memref<1x1x128xf32, #tpu.memory_space<vmem>>, vector<1x1x128xf32>,
    } else {
    }
    %c0_27 = arith.constant 0 : index
    %c0_28 = arith.constant 0 : index
    %c0_29 = arith.constant 0 : index
    %76 = vector.load %arg7[%c0_27, %c0_28, %c0_29] : memref<1x1x128xf32, #tpu.memory_space<vmem>>, vector<1x1x128xf32>
    %cst_30 = arith.constant dense<0.000000e+00> : vector<128xf32>
    %77 = vector.multi_reduction <add>, %72, %cst_30 [0] : vector<128x128xf32> to vector<128xf32>
    %78 = vector.shape_cast %77 : vector<128xf32> to vector<1x1x128xf32>
    %79 = arith.addf %76, %78 : vector<1x1x128xf32>
    %c0_31 = arith.constant 0 : index
    %c0_32 = arith.constant 0 : index
    %c0_33 = arith.constant 0 : index
    %80 = vector.load %arg7[%c0_31, %c0_32, %c0_33] : memref<1x1x128xf32, #tpu.memory_space<vmem>>, vector<1x1x128xf32>
    tpu.vector_store %arg7[%c0_31, %c0_32, %c0_33], %79 {strides = array<i32>} : memref<1x1x128xf32, #tpu.memory_space<vmem>>, vector<1x1x128xf32>,
    %c0_34 = arith.constant 0 : index
    %c0_35 = arith.constant 0 : index
    %c0_36 = arith.constant 0 : index
    %81 = vector.load %arg8[%c0_34, %c0_35, %c0_36] : memref<1x1x128xf32, #tpu.memory_space<vmem>>, vector<1x1x128xf32>
    %82 = arith.mulf %72, %72 : vector<128x128xf32>
    %cst_37 = arith.constant dense<0.000000e+00> : vector<128xf32>
    %83 = vector.multi_reduction <add>, %82, %cst_37 [0] : vector<128x128xf32> to vector<128xf32>
    %84 = vector.shape_cast %83 : vector<128xf32> to vector<1x1x128xf32>
    %85 = arith.addf %81, %84 : vector<1x1x128xf32>
    %c0_38 = arith.constant 0 : index
    %c0_39 = arith.constant 0 : index
    %c0_40 = arith.constant 0 : index
    %86 = vector.load %arg8[%c0_38, %c0_39, %c0_40] : memref<1x1x128xf32, #tpu.memory_space<vmem>>, vector<1x1x128xf32>
    tpu.vector_store %arg8[%c0_38, %c0_39, %c0_40], %85 {strides = array<i32>} : memref<1x1x128xf32, #tpu.memory_space<vmem>>, vector<1x1x128xf32>,
    %87 = vector.shape_cast %72 : vector<128x128xf32> to vector<1x8x16x128xf32>
    %c0_41 = arith.constant 0 : index
    %c0_42 = arith.constant 0 : index
    %c0_43 = arith.constant 0 : index
    %c0_44 = arith.constant 0 : index
    %88 = vector.load %arg6[%c0_41, %c0_42, %c0_43, %c0_44] : memref<1x8x16x128xf32, #tpu.memory_space<vmem>>, vector<1x8x16x128xf32>
    tpu.vector_store %arg6[%c0_41, %c0_42, %c0_43, %c0_44], %87 {strides = array<i32>} : memref<1x8x16x128xf32, #tpu.memory_space<vmem>>, vector<1x8x16x128xf32>,
    return
  }
  func.func @transform_1(%arg0: i32, %arg1: i32) -> (i32, i32, i32, i32) {
    %c0_i32 = arith.constant 0 : i32
    %c0_i32_0 = arith.constant 0 : i32
    %c0_i32_1 = arith.constant 0 : i32
    %c0_i32_2 = arith.constant 0 : i32
    %c0_i32_3 = arith.constant 0 : i32
    return %c0_i32, %c0_i32_0, %c0_i32_1, %c0_i32_2 : i32, i32, i32, i32
  }
  func.func @transform_2(%arg0: i32, %arg1: i32) -> (i32, i32) {
    %c0_i32 = arith.constant 0 : i32
    %c0_i32_0 = arith.constant 0 : i32
    %c0_i32_1 = arith.constant 0 : i32
    return %c0_i32, %c0_i32_0 : i32, i32
  }
  func.func @transform_3(%arg0: i32, %arg1: i32) -> (i32, i32) {
    %c0_i32 = arith.constant 0 : i32
    %c0_i32_0 = arith.constant 0 : i32
    %c0_i32_1 = arith.constant 0 : i32
    return %c0_i32, %c0_i32_0 : i32, i32
  }
  func.func @transform_4(%arg0: i32, %arg1: i32) -> (i32, i32, i32, i32) {
    %c0_i32 = arith.constant 0 : i32
    %c0_i32_0 = arith.constant 0 : i32
    %c0_i32_1 = arith.constant 0 : i32
    return %arg0, %arg1, %c0_i32, %c0_i32_0 : i32, i32, i32, i32
  }
  func.func @transform_5(%arg0: i32, %arg1: i32) -> (i32, i32, i32) {
    %c0_i32 = arith.constant 0 : i32
    %c0_i32_0 = arith.constant 0 : i32
    %c0_i32_1 = arith.constant 0 : i32
    return %arg0, %c0_i32, %c0_i32_0 : i32, i32, i32
  }
  func.func @transform_6(%arg0: i32, %arg1: i32) -> (i32, i32, i32) {
    %c0_i32 = arith.constant 0 : i32
    %c0_i32_0 = arith.constant 0 : i32
    %c0_i32_1 = arith.constant 0 : i32
    return %arg0, %c0_i32, %c0_i32_0 : i32, i32, i32
  }
}

module attributes {stable_mosaic.version = 11 : i64} {
  func.func @_conv3x3_stats_kernel(%arg0: i32, %arg1: i32, %arg2: memref<2x18x18x128xf32, #tpu.memory_space<any>>, %arg3: memref<3x3x128x128xf32, #tpu.memory_space<vmem>>, %arg4: memref<1x128xf32, #tpu.memory_space<vmem>>, %arg5: memref<1x128xf32, #tpu.memory_space<vmem>>, %arg6: memref<1x8x16x128xf32, #tpu.memory_space<vmem>>, %arg7: memref<1x1x128xf32, #tpu.memory_space<vmem>>, %arg8: memref<1x1x128xf32, #tpu.memory_space<vmem>>, %arg9: memref<2x10x18x128xf32, #tpu.memory_space<vmem>>, %arg10: memref<2x!tpu.dma_semaphore, #tpu.memory_space<semaphore_mem>>) attributes {dimension_semantics = [#tpu.dimension_semantics<parallel>, #tpu.dimension_semantics<arbitrary>], iteration_bounds = array<i64: 2, 2>, scalar_prefetch = 0 : i64, scratch_operands = 2 : i64, tpu.core_type = #tpu.core_type<tc>, window_params = [{}, {pipeline_mode = #tpu.pipeline_mode<synchronous>, transform_indices = @transform_1, window_bounds = array<i64: 3, 3, 128, 128>}, {pipeline_mode = #tpu.pipeline_mode<synchronous>, transform_indices = @transform_2, window_bounds = array<i64: 1, 128>}, {pipeline_mode = #tpu.pipeline_mode<synchronous>, transform_indices = @transform_3, window_bounds = array<i64: 1, 128>}, {transform_indices = @transform_4, window_bounds = array<i64: 1, 8, 16, 128>}, {transform_indices = @transform_5, window_bounds = array<i64: 1, 1, 128>}, {transform_indices = @transform_6, window_bounds = array<i64: 1, 1, 128>}]} {
    %c2_i32 = arith.constant 2 : i32
    %0 = arith.remsi %arg1, %c2_i32 : i32
    %c0_i32 = arith.constant 0 : i32
    %1 = arith.cmpi eq, %arg1, %c0_i32 : i32
    %2 = arith.extui %1 : i1 to i32
    %c0_i32_0 = arith.constant 0 : i32
    %3 = arith.cmpi ne, %2, %c0_i32_0 : i32
    scf.if %3 {
      %c0_i32_54 = arith.constant 0 : i32
      %c0_i32_55 = arith.constant 0 : i32
      %c0_i32_56 = arith.constant 0 : i32
      %c0_i32_57 = arith.constant 0 : i32
      %c0_i32_58 = arith.constant 0 : i32
      %121 = tpu.memref_slice %arg2[%arg0, %c0_i32_56, %c0_i32_57, %c0_i32_58] : memref<2x18x18x128xf32, #tpu.memory_space<any>> -> memref<1x10x18x128xf32, #tpu.memory_space<any>>
      %122 = tpu.memref_squeeze %121 : memref<1x10x18x128xf32, #tpu.memory_space<any>> -> memref<10x18x128xf32, #tpu.memory_space<any>>
      %c0_i32_59 = arith.constant 0 : i32
      %c0_i32_60 = arith.constant 0 : i32
      %c0_i32_61 = arith.constant 0 : i32
      %123 = tpu.memref_slice %arg9[%c0_i32_54, %c0_i32_59, %c0_i32_60, %c0_i32_61] : memref<2x10x18x128xf32, #tpu.memory_space<vmem>> -> memref<1x10x18x128xf32, #tpu.memory_space<vmem>>
      %124 = tpu.memref_squeeze %123 : memref<1x10x18x128xf32, #tpu.memory_space<vmem>> -> memref<10x18x128xf32, #tpu.memory_space<vmem>>
      %125 = tpu.memref_slice %arg10[%c0_i32_55] : memref<2x!tpu.dma_semaphore, #tpu.memory_space<semaphore_mem>> -> memref<1x!tpu.dma_semaphore, #tpu.memory_space<semaphore_mem>>
      %126 = tpu.memref_squeeze %125 : memref<1x!tpu.dma_semaphore, #tpu.memory_space<semaphore_mem>> -> memref<!tpu.dma_semaphore, #tpu.memory_space<semaphore_mem>>
      tpu.enqueue_dma source(%122 : memref<10x18x128xf32, #tpu.memory_space<any>>) target(%124 : memref<10x18x128xf32, #tpu.memory_space<vmem>>) target_semaphore(%126 : memref<!tpu.dma_semaphore, #tpu.memory_space<semaphore_mem>>)
    } else {
    }
    %c0_i32_1 = arith.constant 0 : i32
    %c0_i32_2 = arith.constant 0 : i32
    %c0_i32_3 = arith.constant 0 : i32
    %c0_i32_4 = arith.constant 0 : i32
    %4 = tpu.memref_slice %arg2[%c0_i32_1, %c0_i32_2, %c0_i32_3, %c0_i32_4] : memref<2x18x18x128xf32, #tpu.memory_space<any>> -> memref<1x10x18x128xf32, #tpu.memory_space<any>>
    %5 = tpu.memref_squeeze %4 : memref<1x10x18x128xf32, #tpu.memory_space<any>> -> memref<10x18x128xf32, #tpu.memory_space<any>>
    %c0_i32_5 = arith.constant 0 : i32
    %c0_i32_6 = arith.constant 0 : i32
    %c0_i32_7 = arith.constant 0 : i32
    %6 = tpu.memref_slice %arg9[%0, %c0_i32_5, %c0_i32_6, %c0_i32_7] : memref<2x10x18x128xf32, #tpu.memory_space<vmem>> -> memref<1x10x18x128xf32, #tpu.memory_space<vmem>>
    %7 = tpu.memref_squeeze %6 : memref<1x10x18x128xf32, #tpu.memory_space<vmem>> -> memref<10x18x128xf32, #tpu.memory_space<vmem>>
    %8 = tpu.memref_slice %arg10[%0] : memref<2x!tpu.dma_semaphore, #tpu.memory_space<semaphore_mem>> -> memref<1x!tpu.dma_semaphore, #tpu.memory_space<semaphore_mem>>
    %9 = tpu.memref_squeeze %8 : memref<1x!tpu.dma_semaphore, #tpu.memory_space<semaphore_mem>> -> memref<!tpu.dma_semaphore, #tpu.memory_space<semaphore_mem>>
    tpu.wait_dma2 semaphore(%9 : memref<!tpu.dma_semaphore, #tpu.memory_space<semaphore_mem>>) src(%5 : memref<10x18x128xf32, #tpu.memory_space<any>>) dst(%7 : memref<10x18x128xf32, #tpu.memory_space<vmem>>)
    %c1_i32 = arith.constant 1 : i32
    %10 = arith.addi %arg1, %c1_i32 : i32
    %c2_i32_8 = arith.constant 2 : i32
    %11 = arith.cmpi slt, %10, %c2_i32_8 : i32
    %12 = arith.extui %11 : i1 to i32
    %c0_i32_9 = arith.constant 0 : i32
    %13 = arith.cmpi ne, %12, %c0_i32_9 : i32
    scf.if %13 {
      %c1_i32_54 = arith.constant 1 : i32
      %121 = arith.addi %arg1, %c1_i32_54 : i32
      %c1_i32_55 = arith.constant 1 : i32
      %122 = arith.subi %c1_i32_55, %0 : i32
      %c8_i32_56 = arith.constant 8 : i32
      %123 = arith.muli %121, %c8_i32_56 : i32
      %c0_i32_57 = arith.constant 0 : i32
      %c0_i32_58 = arith.constant 0 : i32
      %124 = tpu.memref_slice %arg2[%arg0, %123, %c0_i32_57, %c0_i32_58] : memref<2x18x18x128xf32, #tpu.memory_space<any>> -> memref<1x10x18x128xf32, #tpu.memory_space<any>>
      %125 = tpu.memref_squeeze %124 : memref<1x10x18x128xf32, #tpu.memory_space<any>> -> memref<10x18x128xf32, #tpu.memory_space<any>>
      %c0_i32_59 = arith.constant 0 : i32
      %c0_i32_60 = arith.constant 0 : i32
      %c0_i32_61 = arith.constant 0 : i32
      %126 = tpu.memref_slice %arg9[%122, %c0_i32_59, %c0_i32_60, %c0_i32_61] : memref<2x10x18x128xf32, #tpu.memory_space<vmem>> -> memref<1x10x18x128xf32, #tpu.memory_space<vmem>>
      %127 = tpu.memref_squeeze %126 : memref<1x10x18x128xf32, #tpu.memory_space<vmem>> -> memref<10x18x128xf32, #tpu.memory_space<vmem>>
      %128 = tpu.memref_slice %arg10[%122] : memref<2x!tpu.dma_semaphore, #tpu.memory_space<semaphore_mem>> -> memref<1x!tpu.dma_semaphore, #tpu.memory_space<semaphore_mem>>
      %129 = tpu.memref_squeeze %128 : memref<1x!tpu.dma_semaphore, #tpu.memory_space<semaphore_mem>> -> memref<!tpu.dma_semaphore, #tpu.memory_space<semaphore_mem>>
      tpu.enqueue_dma source(%125 : memref<10x18x128xf32, #tpu.memory_space<any>>) target(%127 : memref<10x18x128xf32, #tpu.memory_space<vmem>>) target_semaphore(%129 : memref<!tpu.dma_semaphore, #tpu.memory_space<semaphore_mem>>)
    } else {
    }
    %14 = arith.index_cast %0 : i32 to index
    %c0 = arith.constant 0 : index
    %c0_10 = arith.constant 0 : index
    %c0_11 = arith.constant 0 : index
    %15 = vector.load %arg9[%14, %c0, %c0_10, %c0_11] : memref<2x10x18x128xf32, #tpu.memory_space<vmem>>, vector<1x10x18x128xf32>
    %16 = vector.shape_cast %15 : vector<1x10x18x128xf32> to vector<10x18x128xf32>
    %c0_12 = arith.constant 0 : index
    %c0_13 = arith.constant 0 : index
    %17 = vector.load %arg4[%c0_12, %c0_13] : memref<1x128xf32, #tpu.memory_space<vmem>>, vector<1x128xf32>
    %18 = vector.shape_cast %17 : vector<1x128xf32> to vector<128xf32>
    %19 = vector.shape_cast %18 : vector<128xf32> to vector<1x1x128xf32>
    %20 = vector.broadcast %19 : vector<1x1x128xf32> to vector<10x18x128xf32>
    %21 = arith.mulf %16, %20 : vector<10x18x128xf32>
    %c0_14 = arith.constant 0 : index
    %c0_15 = arith.constant 0 : index
    %22 = vector.load %arg5[%c0_14, %c0_15] : memref<1x128xf32, #tpu.memory_space<vmem>>, vector<1x128xf32>
    %23 = vector.shape_cast %22 : vector<1x128xf32> to vector<128xf32>
    %24 = vector.shape_cast %23 : vector<128xf32> to vector<1x1x128xf32>
    %25 = vector.broadcast %24 : vector<1x1x128xf32> to vector<10x18x128xf32>
    %26 = arith.addf %21, %25 : vector<10x18x128xf32>
    %27 = tpu.iota {dimensions = array<i32: 0>} : vector<10x18x1xi32>
    %c8_i32 = arith.constant 8 : i32
    %28 = arith.muli %arg1, %c8_i32 : i32
    %29 = vector.broadcast %28 : i32 to vector<10x18x1xi32>
    %30 = arith.addi %27, %29 : vector<10x18x1xi32>
    %31 = tpu.iota {dimensions = array<i32: 1>} : vector<10x18x1xi32>
    %c1_i32_16 = arith.constant 1 : i32
    %32 = vector.broadcast %c1_i32_16 : i32 to vector<10x18x1xi32>
    %33 = arith.cmpi sge, %30, %32 : vector<10x18x1xi32>
    %c16_i32 = arith.constant 16 : i32
    %34 = vector.broadcast %c16_i32 : i32 to vector<10x18x1xi32>
    %35 = arith.cmpi sle, %30, %34 : vector<10x18x1xi32>
    %36 = arith.andi %33, %35 : vector<10x18x1xi1>
    %c1_i32_17 = arith.constant 1 : i32
    %37 = vector.broadcast %c1_i32_17 : i32 to vector<10x18x1xi32>
    %38 = arith.cmpi sge, %31, %37 : vector<10x18x1xi32>
    %39 = arith.andi %36, %38 : vector<10x18x1xi1>
    %c16_i32_18 = arith.constant 16 : i32
    %40 = vector.broadcast %c16_i32_18 : i32 to vector<10x18x1xi32>
    %41 = arith.cmpi sle, %31, %40 : vector<10x18x1xi32>
    %42 = arith.andi %39, %41 : vector<10x18x1xi1>
    %cst = arith.constant 0.000000e+00 : f32
    %43 = vector.broadcast %cst : f32 to vector<10x18x128xf32>
    %44 = arith.maximumf %26, %43 : vector<10x18x128xf32>
    %cst_19 = arith.constant 0.000000e+00 : f32
    %45 = vector.shape_cast %42 : vector<10x18x1xi1> to vector<10x18x1xi1>
    %46 = vector.broadcast %45 : vector<10x18x1xi1> to vector<10x18x128xi1>
    %47 = vector.broadcast %cst_19 : f32 to vector<10x18x128xf32>
    %48 = arith.select %46, %44, %47 : vector<10x18x128xi1>, vector<10x18x128xf32>
    %c0_20 = arith.constant 0 : index
    %c0_21 = arith.constant 0 : index
    %c0_22 = arith.constant 0 : index
    %c0_23 = arith.constant 0 : index
    %49 = vector.load %arg3[%c0_20, %c0_21, %c0_22, %c0_23] : memref<3x3x128x128xf32, #tpu.memory_space<vmem>>, vector<3x3x128x128xf32>
    %cst_24 = arith.constant 0.000000e+00 : f32
    %50 = vector.broadcast %cst_24 : f32 to vector<128x128xf32>
    %51 = vector.extract_strided_slice %48 {offsets = [0, 0, 0], sizes = [8, 16, 128], strides = [1, 1, 1]} : vector<10x18x128xf32> to vector<8x16x128xf32>
    %52 = vector.shape_cast %51 : vector<8x16x128xf32> to vector<128x128xf32>
    %53 = vector.extract_strided_slice %49 {offsets = [0, 0, 0, 0], sizes = [1, 1, 128, 128], strides = [1, 1, 1, 1]} : vector<3x3x128x128xf32> to vector<1x1x128x128xf32>
    %54 = vector.shape_cast %53 : vector<1x1x128x128xf32> to vector<128x128xf32>
    %cst_25 = arith.constant dense<0.000000e+00> : vector<128x128xf32>
    %55 = tpu.matmul %52, %54, %cst_25 {dimension_numbers = #tpu.dot_dimension_numbers<[1], [0], [0], [1], [0, 0, 1, 1], [], []>} : vector<128x128xf32>, vector<128x128xf32>, vector<128x128xf32> -> vector<128x128xf32>
    %56 = arith.addf %50, %55 : vector<128x128xf32>
    %57 = vector.extract_strided_slice %48 {offsets = [0, 1, 0], sizes = [8, 16, 128], strides = [1, 1, 1]} : vector<10x18x128xf32> to vector<8x16x128xf32>
    %58 = vector.shape_cast %57 : vector<8x16x128xf32> to vector<128x128xf32>
    %59 = vector.extract_strided_slice %49 {offsets = [0, 1, 0, 0], sizes = [1, 1, 128, 128], strides = [1, 1, 1, 1]} : vector<3x3x128x128xf32> to vector<1x1x128x128xf32>
    %60 = vector.shape_cast %59 : vector<1x1x128x128xf32> to vector<128x128xf32>
    %cst_26 = arith.constant dense<0.000000e+00> : vector<128x128xf32>
    %61 = tpu.matmul %58, %60, %cst_26 {dimension_numbers = #tpu.dot_dimension_numbers<[1], [0], [0], [1], [0, 0, 1, 1], [], []>} : vector<128x128xf32>, vector<128x128xf32>, vector<128x128xf32> -> vector<128x128xf32>
    %62 = arith.addf %56, %61 : vector<128x128xf32>
    %63 = vector.extract_strided_slice %48 {offsets = [0, 2, 0], sizes = [8, 16, 128], strides = [1, 1, 1]} : vector<10x18x128xf32> to vector<8x16x128xf32>
    %64 = vector.shape_cast %63 : vector<8x16x128xf32> to vector<128x128xf32>
    %65 = vector.extract_strided_slice %49 {offsets = [0, 2, 0, 0], sizes = [1, 1, 128, 128], strides = [1, 1, 1, 1]} : vector<3x3x128x128xf32> to vector<1x1x128x128xf32>
    %66 = vector.shape_cast %65 : vector<1x1x128x128xf32> to vector<128x128xf32>
    %cst_27 = arith.constant dense<0.000000e+00> : vector<128x128xf32>
    %67 = tpu.matmul %64, %66, %cst_27 {dimension_numbers = #tpu.dot_dimension_numbers<[1], [0], [0], [1], [0, 0, 1, 1], [], []>} : vector<128x128xf32>, vector<128x128xf32>, vector<128x128xf32> -> vector<128x128xf32>
    %68 = arith.addf %62, %67 : vector<128x128xf32>
    %69 = vector.extract_strided_slice %48 {offsets = [1, 0, 0], sizes = [8, 16, 128], strides = [1, 1, 1]} : vector<10x18x128xf32> to vector<8x16x128xf32>
    %70 = vector.shape_cast %69 : vector<8x16x128xf32> to vector<128x128xf32>
    %71 = vector.extract_strided_slice %49 {offsets = [1, 0, 0, 0], sizes = [1, 1, 128, 128], strides = [1, 1, 1, 1]} : vector<3x3x128x128xf32> to vector<1x1x128x128xf32>
    %72 = vector.shape_cast %71 : vector<1x1x128x128xf32> to vector<128x128xf32>
    %cst_28 = arith.constant dense<0.000000e+00> : vector<128x128xf32>
    %73 = tpu.matmul %70, %72, %cst_28 {dimension_numbers = #tpu.dot_dimension_numbers<[1], [0], [0], [1], [0, 0, 1, 1], [], []>} : vector<128x128xf32>, vector<128x128xf32>, vector<128x128xf32> -> vector<128x128xf32>
    %74 = arith.addf %68, %73 : vector<128x128xf32>
    %75 = vector.extract_strided_slice %48 {offsets = [1, 1, 0], sizes = [8, 16, 128], strides = [1, 1, 1]} : vector<10x18x128xf32> to vector<8x16x128xf32>
    %76 = vector.shape_cast %75 : vector<8x16x128xf32> to vector<128x128xf32>
    %77 = vector.extract_strided_slice %49 {offsets = [1, 1, 0, 0], sizes = [1, 1, 128, 128], strides = [1, 1, 1, 1]} : vector<3x3x128x128xf32> to vector<1x1x128x128xf32>
    %78 = vector.shape_cast %77 : vector<1x1x128x128xf32> to vector<128x128xf32>
    %cst_29 = arith.constant dense<0.000000e+00> : vector<128x128xf32>
    %79 = tpu.matmul %76, %78, %cst_29 {dimension_numbers = #tpu.dot_dimension_numbers<[1], [0], [0], [1], [0, 0, 1, 1], [], []>} : vector<128x128xf32>, vector<128x128xf32>, vector<128x128xf32> -> vector<128x128xf32>
    %80 = arith.addf %74, %79 : vector<128x128xf32>
    %81 = vector.extract_strided_slice %48 {offsets = [1, 2, 0], sizes = [8, 16, 128], strides = [1, 1, 1]} : vector<10x18x128xf32> to vector<8x16x128xf32>
    %82 = vector.shape_cast %81 : vector<8x16x128xf32> to vector<128x128xf32>
    %83 = vector.extract_strided_slice %49 {offsets = [1, 2, 0, 0], sizes = [1, 1, 128, 128], strides = [1, 1, 1, 1]} : vector<3x3x128x128xf32> to vector<1x1x128x128xf32>
    %84 = vector.shape_cast %83 : vector<1x1x128x128xf32> to vector<128x128xf32>
    %cst_30 = arith.constant dense<0.000000e+00> : vector<128x128xf32>
    %85 = tpu.matmul %82, %84, %cst_30 {dimension_numbers = #tpu.dot_dimension_numbers<[1], [0], [0], [1], [0, 0, 1, 1], [], []>} : vector<128x128xf32>, vector<128x128xf32>, vector<128x128xf32> -> vector<128x128xf32>
    %86 = arith.addf %80, %85 : vector<128x128xf32>
    %87 = vector.extract_strided_slice %48 {offsets = [2, 0, 0], sizes = [8, 16, 128], strides = [1, 1, 1]} : vector<10x18x128xf32> to vector<8x16x128xf32>
    %88 = vector.shape_cast %87 : vector<8x16x128xf32> to vector<128x128xf32>
    %89 = vector.extract_strided_slice %49 {offsets = [2, 0, 0, 0], sizes = [1, 1, 128, 128], strides = [1, 1, 1, 1]} : vector<3x3x128x128xf32> to vector<1x1x128x128xf32>
    %90 = vector.shape_cast %89 : vector<1x1x128x128xf32> to vector<128x128xf32>
    %cst_31 = arith.constant dense<0.000000e+00> : vector<128x128xf32>
    %91 = tpu.matmul %88, %90, %cst_31 {dimension_numbers = #tpu.dot_dimension_numbers<[1], [0], [0], [1], [0, 0, 1, 1], [], []>} : vector<128x128xf32>, vector<128x128xf32>, vector<128x128xf32> -> vector<128x128xf32>
    %92 = arith.addf %86, %91 : vector<128x128xf32>
    %93 = vector.extract_strided_slice %48 {offsets = [2, 1, 0], sizes = [8, 16, 128], strides = [1, 1, 1]} : vector<10x18x128xf32> to vector<8x16x128xf32>
    %94 = vector.shape_cast %93 : vector<8x16x128xf32> to vector<128x128xf32>
    %95 = vector.extract_strided_slice %49 {offsets = [2, 1, 0, 0], sizes = [1, 1, 128, 128], strides = [1, 1, 1, 1]} : vector<3x3x128x128xf32> to vector<1x1x128x128xf32>
    %96 = vector.shape_cast %95 : vector<1x1x128x128xf32> to vector<128x128xf32>
    %cst_32 = arith.constant dense<0.000000e+00> : vector<128x128xf32>
    %97 = tpu.matmul %94, %96, %cst_32 {dimension_numbers = #tpu.dot_dimension_numbers<[1], [0], [0], [1], [0, 0, 1, 1], [], []>} : vector<128x128xf32>, vector<128x128xf32>, vector<128x128xf32> -> vector<128x128xf32>
    %98 = arith.addf %92, %97 : vector<128x128xf32>
    %99 = vector.extract_strided_slice %48 {offsets = [2, 2, 0], sizes = [8, 16, 128], strides = [1, 1, 1]} : vector<10x18x128xf32> to vector<8x16x128xf32>
    %100 = vector.shape_cast %99 : vector<8x16x128xf32> to vector<128x128xf32>
    %101 = vector.extract_strided_slice %49 {offsets = [2, 2, 0, 0], sizes = [1, 1, 128, 128], strides = [1, 1, 1, 1]} : vector<3x3x128x128xf32> to vector<1x1x128x128xf32>
    %102 = vector.shape_cast %101 : vector<1x1x128x128xf32> to vector<128x128xf32>
    %cst_33 = arith.constant dense<0.000000e+00> : vector<128x128xf32>
    %103 = tpu.matmul %100, %102, %cst_33 {dimension_numbers = #tpu.dot_dimension_numbers<[1], [0], [0], [1], [0, 0, 1, 1], [], []>} : vector<128x128xf32>, vector<128x128xf32>, vector<128x128xf32> -> vector<128x128xf32>
    %104 = arith.addf %98, %103 : vector<128x128xf32>
    %c0_i32_34 = arith.constant 0 : i32
    %105 = arith.cmpi eq, %arg1, %c0_i32_34 : i32
    %106 = arith.extui %105 : i1 to i32
    %c0_i32_35 = arith.constant 0 : i32
    %107 = arith.cmpi ne, %106, %c0_i32_35 : i32
    scf.if %107 {
      %cst_54 = arith.constant 0.000000e+00 : f32
      %121 = vector.broadcast %cst_54 : f32 to vector<1x1x128xf32>
      %c0_55 = arith.constant 0 : index
      %c0_56 = arith.constant 0 : index
      %c0_57 = arith.constant 0 : index
      %122 = vector.load %arg7[%c0_55, %c0_56, %c0_57] : memref<1x1x128xf32, #tpu.memory_space<vmem>>, vector<1x1x128xf32>
      tpu.vector_store %arg7[%c0_55, %c0_56, %c0_57], %121 {strides = array<i32>} : memref<1x1x128xf32, #tpu.memory_space<vmem>>, vector<1x1x128xf32>,
      %cst_58 = arith.constant 0.000000e+00 : f32
      %123 = vector.broadcast %cst_58 : f32 to vector<1x1x128xf32>
      %c0_59 = arith.constant 0 : index
      %c0_60 = arith.constant 0 : index
      %c0_61 = arith.constant 0 : index
      %124 = vector.load %arg8[%c0_59, %c0_60, %c0_61] : memref<1x1x128xf32, #tpu.memory_space<vmem>>, vector<1x1x128xf32>
      tpu.vector_store %arg8[%c0_59, %c0_60, %c0_61], %123 {strides = array<i32>} : memref<1x1x128xf32, #tpu.memory_space<vmem>>, vector<1x1x128xf32>,
    } else {
    }
    %c0_36 = arith.constant 0 : index
    %c0_37 = arith.constant 0 : index
    %c0_38 = arith.constant 0 : index
    %108 = vector.load %arg7[%c0_36, %c0_37, %c0_38] : memref<1x1x128xf32, #tpu.memory_space<vmem>>, vector<1x1x128xf32>
    %cst_39 = arith.constant dense<0.000000e+00> : vector<128xf32>
    %109 = vector.multi_reduction <add>, %104, %cst_39 [0] : vector<128x128xf32> to vector<128xf32>
    %110 = vector.shape_cast %109 : vector<128xf32> to vector<1x1x128xf32>
    %111 = arith.addf %108, %110 : vector<1x1x128xf32>
    %c0_40 = arith.constant 0 : index
    %c0_41 = arith.constant 0 : index
    %c0_42 = arith.constant 0 : index
    %112 = vector.load %arg7[%c0_40, %c0_41, %c0_42] : memref<1x1x128xf32, #tpu.memory_space<vmem>>, vector<1x1x128xf32>
    tpu.vector_store %arg7[%c0_40, %c0_41, %c0_42], %111 {strides = array<i32>} : memref<1x1x128xf32, #tpu.memory_space<vmem>>, vector<1x1x128xf32>,
    %c0_43 = arith.constant 0 : index
    %c0_44 = arith.constant 0 : index
    %c0_45 = arith.constant 0 : index
    %113 = vector.load %arg8[%c0_43, %c0_44, %c0_45] : memref<1x1x128xf32, #tpu.memory_space<vmem>>, vector<1x1x128xf32>
    %114 = arith.mulf %104, %104 : vector<128x128xf32>
    %cst_46 = arith.constant dense<0.000000e+00> : vector<128xf32>
    %115 = vector.multi_reduction <add>, %114, %cst_46 [0] : vector<128x128xf32> to vector<128xf32>
    %116 = vector.shape_cast %115 : vector<128xf32> to vector<1x1x128xf32>
    %117 = arith.addf %113, %116 : vector<1x1x128xf32>
    %c0_47 = arith.constant 0 : index
    %c0_48 = arith.constant 0 : index
    %c0_49 = arith.constant 0 : index
    %118 = vector.load %arg8[%c0_47, %c0_48, %c0_49] : memref<1x1x128xf32, #tpu.memory_space<vmem>>, vector<1x1x128xf32>
    tpu.vector_store %arg8[%c0_47, %c0_48, %c0_49], %117 {strides = array<i32>} : memref<1x1x128xf32, #tpu.memory_space<vmem>>, vector<1x1x128xf32>,
    %119 = vector.shape_cast %104 : vector<128x128xf32> to vector<1x8x16x128xf32>
    %c0_50 = arith.constant 0 : index
    %c0_51 = arith.constant 0 : index
    %c0_52 = arith.constant 0 : index
    %c0_53 = arith.constant 0 : index
    %120 = vector.load %arg6[%c0_50, %c0_51, %c0_52, %c0_53] : memref<1x8x16x128xf32, #tpu.memory_space<vmem>>, vector<1x8x16x128xf32>
    tpu.vector_store %arg6[%c0_50, %c0_51, %c0_52, %c0_53], %119 {strides = array<i32>} : memref<1x8x16x128xf32, #tpu.memory_space<vmem>>, vector<1x8x16x128xf32>,
    return
  }
  func.func @transform_1(%arg0: i32, %arg1: i32) -> (i32, i32, i32, i32) {
    %c0_i32 = arith.constant 0 : i32
    %c0_i32_0 = arith.constant 0 : i32
    %c0_i32_1 = arith.constant 0 : i32
    %c0_i32_2 = arith.constant 0 : i32
    %c0_i32_3 = arith.constant 0 : i32
    return %c0_i32, %c0_i32_0, %c0_i32_1, %c0_i32_2 : i32, i32, i32, i32
  }
  func.func @transform_2(%arg0: i32, %arg1: i32) -> (i32, i32) {
    %c0_i32 = arith.constant 0 : i32
    %c0_i32_0 = arith.constant 0 : i32
    %c0_i32_1 = arith.constant 0 : i32
    return %c0_i32, %c0_i32_0 : i32, i32
  }
  func.func @transform_3(%arg0: i32, %arg1: i32) -> (i32, i32) {
    %c0_i32 = arith.constant 0 : i32
    %c0_i32_0 = arith.constant 0 : i32
    %c0_i32_1 = arith.constant 0 : i32
    return %c0_i32, %c0_i32_0 : i32, i32
  }
  func.func @transform_4(%arg0: i32, %arg1: i32) -> (i32, i32, i32, i32) {
    %c0_i32 = arith.constant 0 : i32
    %c0_i32_0 = arith.constant 0 : i32
    %c0_i32_1 = arith.constant 0 : i32
    return %arg0, %arg1, %c0_i32, %c0_i32_0 : i32, i32, i32, i32
  }
  func.func @transform_5(%arg0: i32, %arg1: i32) -> (i32, i32, i32) {
    %c0_i32 = arith.constant 0 : i32
    %c0_i32_0 = arith.constant 0 : i32
    %c0_i32_1 = arith.constant 0 : i32
    return %arg0, %c0_i32, %c0_i32_0 : i32, i32, i32
  }
  func.func @transform_6(%arg0: i32, %arg1: i32) -> (i32, i32, i32) {
    %c0_i32 = arith.constant 0 : i32
    %c0_i32_0 = arith.constant 0 : i32
    %c0_i32_1 = arith.constant 0 : i32
    return %arg0, %c0_i32, %c0_i32_0 : i32, i32, i32
  }
}

module attributes {stable_mosaic.version = 11 : i64} {
  func.func @_bn_relu_kernel(%arg0: i32, %arg1: i32, %arg2: memref<1x8x16x128xf32, #tpu.memory_space<vmem>>, %arg3: memref<1x128xf32, #tpu.memory_space<vmem>>, %arg4: memref<1x128xf32, #tpu.memory_space<vmem>>, %arg5: memref<1x8x16x128xf32, #tpu.memory_space<vmem>>) attributes {dimension_semantics = [#tpu.dimension_semantics<parallel>, #tpu.dimension_semantics<parallel>], iteration_bounds = array<i64: 2, 2>, scalar_prefetch = 0 : i64, scratch_operands = 0 : i64, tpu.core_type = #tpu.core_type<tc>, window_params = [{transform_indices = @transform_0, window_bounds = array<i64: 1, 8, 16, 128>}, {pipeline_mode = #tpu.pipeline_mode<synchronous>, transform_indices = @transform_1, window_bounds = array<i64: 1, 128>}, {pipeline_mode = #tpu.pipeline_mode<synchronous>, transform_indices = @transform_2, window_bounds = array<i64: 1, 128>}, {transform_indices = @transform_3, window_bounds = array<i64: 1, 8, 16, 128>}]} {
    %c0 = arith.constant 0 : index
    %c0_0 = arith.constant 0 : index
    %c0_1 = arith.constant 0 : index
    %c0_2 = arith.constant 0 : index
    %0 = vector.load %arg2[%c0, %c0_0, %c0_1, %c0_2] : memref<1x8x16x128xf32, #tpu.memory_space<vmem>>, vector<1x8x16x128xf32>
    %c0_3 = arith.constant 0 : index
    %c0_4 = arith.constant 0 : index
    %1 = vector.load %arg3[%c0_3, %c0_4] : memref<1x128xf32, #tpu.memory_space<vmem>>, vector<1x128xf32>
    %2 = vector.shape_cast %1 : vector<1x128xf32> to vector<128xf32>
    %3 = vector.shape_cast %2 : vector<128xf32> to vector<1x1x1x128xf32>
    %4 = vector.broadcast %3 : vector<1x1x1x128xf32> to vector<1x8x16x128xf32>
    %5 = arith.mulf %0, %4 : vector<1x8x16x128xf32>
    %c0_5 = arith.constant 0 : index
    %c0_6 = arith.constant 0 : index
    %6 = vector.load %arg4[%c0_5, %c0_6] : memref<1x128xf32, #tpu.memory_space<vmem>>, vector<1x128xf32>
    %7 = vector.shape_cast %6 : vector<1x128xf32> to vector<128xf32>
    %8 = vector.shape_cast %7 : vector<128xf32> to vector<1x1x1x128xf32>
    %9 = vector.broadcast %8 : vector<1x1x1x128xf32> to vector<1x8x16x128xf32>
    %10 = arith.addf %5, %9 : vector<1x8x16x128xf32>
    %cst = arith.constant 0.000000e+00 : f32
    %11 = vector.broadcast %cst : f32 to vector<1x8x16x128xf32>
    %12 = arith.maximumf %10, %11 : vector<1x8x16x128xf32>
    %c0_7 = arith.constant 0 : index
    %c0_8 = arith.constant 0 : index
    %c0_9 = arith.constant 0 : index
    %c0_10 = arith.constant 0 : index
    %13 = vector.load %arg5[%c0_7, %c0_8, %c0_9, %c0_10] : memref<1x8x16x128xf32, #tpu.memory_space<vmem>>, vector<1x8x16x128xf32>
    tpu.vector_store %arg5[%c0_7, %c0_8, %c0_9, %c0_10], %12 {strides = array<i32>} : memref<1x8x16x128xf32, #tpu.memory_space<vmem>>, vector<1x8x16x128xf32>,
    return
  }
  func.func @transform_0(%arg0: i32, %arg1: i32) -> (i32, i32, i32, i32) {
    %c0_i32 = arith.constant 0 : i32
    %c0_i32_0 = arith.constant 0 : i32
    %c0_i32_1 = arith.constant 0 : i32
    return %arg0, %arg1, %c0_i32, %c0_i32_0 : i32, i32, i32, i32
  }
  func.func @transform_1(%arg0: i32, %arg1: i32) -> (i32, i32) {
    %c0_i32 = arith.constant 0 : i32
    %c0_i32_0 = arith.constant 0 : i32
    %c0_i32_1 = arith.constant 0 : i32
    return %c0_i32, %c0_i32_0 : i32, i32
  }
  func.func @transform_2(%arg0: i32, %arg1: i32) -> (i32, i32) {
    %c0_i32 = arith.constant 0 : i32
    %c0_i32_0 = arith.constant 0 : i32
    %c0_i32_1 = arith.constant 0 : i32
    return %c0_i32, %c0_i32_0 : i32, i32
  }
  func.func @transform_3(%arg0: i32, %arg1: i32) -> (i32, i32, i32, i32) {
    %c0_i32 = arith.constant 0 : i32
    %c0_i32_0 = arith.constant 0 : i32
    %c0_i32_1 = arith.constant 0 : i32
    return %arg0, %arg1, %c0_i32, %c0_i32_0 : i32, i32, i32, i32
  }
}

</mosaic_0001>

<llo_original>
// kernel: double_conv_forward.5
$region0: #{double_conv_forward.5}
  #allocation0 [shape = 'u32[]', space=smem, size = 0x4, offset = 0x4, fixed_abs, tag = 'smem constant byte address 0x4 - core index']
  #allocation1 [shape = 'u32[144,128]{1,0:T(1,128)}', space=vmem, size = 0x12000, scoped, tag = 'internal scratch']
  %s0 = inlined_call_operand.vmem [shape: f32[2,16,16,128], index: 0, kind: input, shape index: {}]
  %s1 = inlined_call_operand.vmem [shape: f32[1,128], index: 1, kind: input, shape index: {}]
  %s2 = inlined_call_operand.vmem [shape: f32[1,128], index: 2, kind: input, shape index: {}]
  %s3 = inlined_call_operand.vmem [shape: f32[2,16,16,128], index: 3, kind: output, shape index: {}]
  %s4 = sld [smem:[#allocation0]]
  $region45: #{double_conv_forward.5} parent=0
    _
  %s6 = ssub.s32 1, %s4
  %s7 = scalar_select 0, %s6, %s4
  loop: start=0, step=1, limit=6
  $region2: #{double_conv_forward.5} parent=0 // loop_pre_header
    _
  $region3: #{double_conv_forward.5} parent=0 // loop_header
    %s9 = sphi 0, %s13
    %p10 = scmp.ge.s32.totalorder %s9, 6
    %s16 = sphi 0, %s28
    %s17 = sphi 0, %s24
    %s18 = sphi 0, %s16
    %s19 = sphi 0, %s17
    %s20 = sphi 0, %s18
    %s21 = sphi 0, %s19
    %s33 = sphi 0, %s35
    %s36 = sphi 0, %s33
    %s37 = sphi 0, %s36
    %s53 = sphi 0, %s37
    %s57 = sphi 0, %s57
    %s59 = sphi 0, %s57
    %s60 = sphi 0, %s59
    %s74 = sphi 0, %s60
    %s78 = sphi 0, %s78
    %s80 = sphi 0, %s78
    %s81 = sphi 0, %s80
    %s95 = sphi 0, %s81
    %s103 = sphi 0, %s105
    %s106 = sphi 0, %s103
    %s107 = sphi 0, %s106
    %s123 = sphi 0, %s107
  $region4: #{double_conv_forward.5} parent=0 // loop_header_branch
    %12 = sbr.rel (%p10) target = $region8
  $region5: #{double_conv_forward.5} parent=0 // loop_body
    %s14 = ssub.s32 %s9, 1
    %s15 = ssub.s32 %s9, 2
    %s22 = sadd.s32 1, %s17
    %p23 = scmp.ge.s32.totalorder %s22, 2
    %s24 = scalar_select %p23, 0, %s22
    %s25 = sadd.s32 1, %s16
    %s26 = scalar_select %p23, %s25, %s16
    %p27 = scmp.ge.s32.totalorder %s26, 2
    %s28 = scalar_select %p27, 0, %s26
    %s29 = ssub.s32 %s16, %s28
    %s30 = ssub.s32 %s17, %s24
    %s31 = sor.u32 %s29, %s30
    %p32 = scmp.eq.s32.totalorder %s31, 0
    %s34 = sadd.s32 %s33, 1
    %s35 = scalar_select %p32, %s33, %s34
    %p38 = pneg %p32
    %p39 = scmp.eq.s32.totalorder %s9, 3
    %p40 = por %p38, %p39
    %p41 = scmp.ne.s32.totalorder %s33, %s36
    %p42 = scmp.eq.s32.totalorder %s9, 0
    %p43 = por %p41, %p42
    %p44 = scmp.ne.s32.totalorder %s33, %s36
    %p45 = scmp.eq.s32.totalorder %s14, 3
    %p46 = por %p44, %p45
    %p47 = scmp.ne.s32.totalorder %s36, %s37
    %p48 = scmp.eq.s32.totalorder %s14, 0
    %p49 = por %p47, %p48
    %p50 = scmp.ne.s32.totalorder %s36, %s37
    %p51 = scmp.eq.s32.totalorder %s15, 3
    %p52 = por %p50, %p51
    %p54 = scmp.ne.s32.totalorder %s37, %s53
    %p55 = scmp.eq.s32.totalorder %s15, 0
    %p56 = por %p54, %p55
    %s58 = sadd.s32 %s57, 1
    %p61 = scmp.eq.s32.totalorder %s9, 3
    %p62 = scmp.ne.s32.totalorder %s57, %s59
    %p63 = scmp.eq.s32.totalorder %s9, 0
    %p64 = por %p62, %p63
    %p65 = scmp.ne.s32.totalorder %s57, %s59
    %p66 = scmp.eq.s32.totalorder %s14, 3
    %p67 = por %p65, %p66
    %p68 = scmp.ne.s32.totalorder %s59, %s60
    %p69 = scmp.eq.s32.totalorder %s14, 0
    %p70 = por %p68, %p69
    %p71 = scmp.ne.s32.totalorder %s59, %s60
    %p72 = scmp.eq.s32.totalorder %s15, 3
    %p73 = por %p71, %p72
    %p75 = scmp.ne.s32.totalorder %s60, %s74
    %p76 = scmp.eq.s32.totalorder %s15, 0
    %p77 = por %p75, %p76
    %s79 = sadd.s32 %s78, 1
    %p82 = scmp.eq.s32.totalorder %s9, 3
    %p83 = scmp.ne.s32.totalorder %s78, %s80
    %p84 = scmp.eq.s32.totalorder %s9, 0
    %p85 = por %p83, %p84
    %p86 = scmp.ne.s32.totalorder %s78, %s80
    %p87 = scmp.eq.s32.totalorder %s14, 3
    %p88 = por %p86, %p87
    %p89 = scmp.ne.s32.totalorder %s80, %s81
    %p90 = scmp.eq.s32.totalorder %s14, 0
    %p91 = por %p89, %p90
    %p92 = scmp.ne.s32.totalorder %s80, %s81
    %p93 = scmp.eq.s32.totalorder %s15, 3
    %p94 = por %p92, %p93
    %p96 = scmp.ne.s32.totalorder %s81, %s95
    %p97 = scmp.eq.s32.totalorder %s15, 0
    %p98 = por %p96, %p97
    %s99 = ssub.s32 %s16, %s28
    %s100 = ssub.s32 %s17, %s24
    %s101 = sor.u32 %s99, %s100
    %p102 = scmp.eq.s32.totalorder %s101, 0
    %s104 = sadd.s32 %s103, 1
    %s105 = scalar_select %p102, %s103, %s104
    %p108 = pneg %p102
    %p109 = scmp.eq.s32.totalorder %s9, 3
    %p110 = por %p108, %p109
    %p111 = scmp.ne.s32.totalorder %s103, %s106
    %p112 = scmp.eq.s32.totalorder %s9, 0
    %p113 = por %p111, %p112
    %p114 = scmp.ne.s32.totalorder %s103, %s106
    %p115 = scmp.eq.s32.totalorder %s14, 3
    %p116 = por %p114, %p115
    %p117 = scmp.ne.s32.totalorder %s106, %s107
    %p118 = scmp.eq.s32.totalorder %s14, 0
    %p119 = por %p117, %p118
    %p120 = scmp.ne.s32.totalorder %s106, %s107
    %p121 = scmp.eq.s32.totalorder %s15, 3
    %p122 = por %p120, %p121
    %p124 = scmp.ne.s32.totalorder %s107, %s123
    %p125 = scmp.eq.s32.totalorder %s15, 0
    %p126 = por %p124, %p125
    %p127 = scmp.le.s32.totalorder 1, %s9
    %p128 = scmp.lt.s32.totalorder %s9, 5
    %p129 = pnand %p127, %p128
    %p130 = pneg %p129
    // Predicated region
    $region9: #{double_conv_forward.5} parent=5 // pred_check
      _
    $region10: #{double_conv_forward.5} parent=5 // pred_check_branch
      %132 = sbr.rel (%p129) target = $region12
    $region11: #{double_conv_forward.5} parent=5 // pred_region
      %s133 = ssub.s32 %s9, 1
      // Predicated region
      $region13: #{double_conv_forward.5} parent=11 // pred_check
        %p134 = pneg %p70
      $region14: #{double_conv_forward.5} parent=11 // pred_check_branch
        %136 = sbr.rel (%p134) target = $region16
      $region15: #{double_conv_forward.5} parent=11 // pred_region
        _
      $region16: #{double_conv_forward.5} parent=11 // pred_fallthru
        _
      // Predicated region
      $region17: #{double_conv_forward.5} parent=11 // pred_check
        %p137 = pneg %p91
      $region18: #{double_conv_forward.5} parent=11 // pred_check_branch
        %139 = sbr.rel (%p137) target = $region20
      $region19: #{double_conv_forward.5} parent=11 // pred_region
        _
      $region20: #{double_conv_forward.5} parent=11 // pred_fallthru
        _
    $region12: #{double_conv_forward.5} parent=5 // pred_fallthru
      _
    %p140 = scmp.lt.s32.totalorder %s9, 4
    // Predicated region
    $region21: #{double_conv_forward.5} parent=5 // pred_check
      %p141 = pneg %p140
    $region22: #{double_conv_forward.5} parent=5 // pred_check_branch
      %143 = sbr.rel (%p141) target = $region24
    $region23: #{double_conv_forward.5} parent=5 // pred_region
      // Predicated region
      $region25: #{double_conv_forward.5} parent=23 // pred_check
        %p144 = pneg %p43
      $region26: #{double_conv_forward.5} parent=23 // pred_check_branch
        %146 = sbr.rel (%p144) target = $region28
      $region27: #{double_conv_forward.5} parent=23 // pred_region
        %s147 = smul.u32 8, %s17
        %p148 = scmp.lt.s32.totalorder %s16, 1
        %s149 = scalar_select %p148, %s16, 1
        %p150 = scmp.lt.s32.totalorder %s147, 15
        %s151 = scalar_select %p150, %s147, 15
        %s152 = smul.addr %s151, 2
        %s153 = smul.addr %s149, 32
        %s154 = sadd.s32 %s152, %s153
        %s155 = smul.addr %s154, 8
        %s156 = scalar_lea.vmem %s0, %s155
        %s157 = smul.u32 8, %s17
      $region28: #{double_conv_forward.5} parent=23 // pred_fallthru
        _
    $region24: #{double_conv_forward.5} parent=5 // pred_fallthru
      _
    %p158 = scmp.le.s32.totalorder 1, %s9
    %p159 = scmp.lt.s32.totalorder %s9, 5
    %p160 = pnand %p158, %p159
    %p161 = pneg %p160
    // Predicated region
    $region29: #{double_conv_forward.5} parent=5 // pred_check
      _
    $region30: #{double_conv_forward.5} parent=5 // pred_check_branch
      %163 = sbr.rel (%p160) target = $region32
    $region31: #{double_conv_forward.5} parent=5 // pred_region
      %s164 = ssub.s32 %s9, 1
      %s165 = smul.u32 8, %s19
      %p166 = scmp.lt.s32.totalorder %s18, 1
      %s167 = scalar_select %p166, %s18, 1
      %p168 = scmp.lt.s32.totalorder %s165, 15
      %s169 = scalar_select %p168, %s165, 15
      %s170 = smul.addr %s169, 2
      %s171 = smul.addr %s167, 32
      %s172 = sadd.s32 %s170, %s171
      %s173 = smul.addr %s172, 8
      %s174 = scalar_lea.vmem %s0, %s173
      %p175 = pneg %p49
      %p176 = pneg %p46
      %p177 = pneg %p70
      %p178 = pneg %p67
      %p179 = pneg %p91
      %p180 = pneg %p88
      %p181 = pneg %p119
      %p182 = pneg %p116
      %s183 = smul.u32 8, %s19
      %p184 = scmp.lt.s32.totalorder %s18, 1
      %s185 = scalar_select %p184, %s18, 1
      %p186 = scmp.lt.s32.totalorder %s183, 15
      %s187 = scalar_select %p186, %s183, 15
      %s188 = smul.addr %s187, 2
      %s189 = smul.addr %s185, 32
      %s190 = sadd.s32 %s188, %s189
      %s191 = smul.addr %s190, 8
      %s192 = scalar_lea.vmem %s3, %s191
      %s193 = smul.u32 8, %s19
      %p194 = scmp.lt.s32.totalorder %s18, 1
      %s195 = scalar_select %p194, %s18, 1
      %p196 = scmp.lt.s32.totalorder %s193, 15
      %s197 = scalar_select %p196, %s193, 15
      %s198 = smul.addr %s197, 2
      %s199 = smul.addr %s195, 32
      %s200 = sadd.s32 %s198, %s199
      %s201 = smul.addr %s200, 8
      %s202 = scalar_lea.vmem %s0, %s201
      %s203 = smul.u32 8, %s19
      %s204 = smul.u32 8, %s19
      %p205 = scmp.lt.s32.totalorder %s18, 1
      %s206 = scalar_select %p205, %s18, 1
      %p207 = scmp.lt.s32.totalorder %s204, 15
      %s208 = scalar_select %p207, %s204, 15
      %s209 = smul.addr %s208, 2
      %s210 = smul.addr %s206, 32
      %s211 = sadd.s32 %s209, %s210
      %s212 = smul.addr %s211, 8
      %s213 = scalar_lea.vmem %s3, %s212
      %s214 = smul.u32 8, %s19
      %v215 = vld [vmem:[%s202] sm:$0xff]
      %v216 = vld [vmem:[%s202 + $0x8] sm:$0xff]
      %v217 = vld [vmem:[%s202 + $0x10] sm:$0xff]
      %v218 = vld [vmem:[%s202 + $0x18] sm:$0xff]
      %v219 = vld [vmem:[%s202 + $0x20] sm:$0xff]
      %v220 = vld [vmem:[%s202 + $0x28] sm:$0xff]
      %v221 = vld [vmem:[%s202 + $0x30] sm:$0xff]
      %v222 = vld [vmem:[%s202 + $0x38] sm:$0xff]
      %v223 = vld [vmem:[%s202 + $0x40] sm:$0xff]
      %v224 = vld [vmem:[%s202 + $0x48] sm:$0xff]
      %v225 = vld [vmem:[%s202 + $0x50] sm:$0xff]
      %v226 = vld [vmem:[%s202 + $0x58] sm:$0xff]
      %v227 = vld [vmem:[%s202 + $0x60] sm:$0xff]
      %v228 = vld [vmem:[%s202 + $0x68] sm:$0xff]
      %v229 = vld [vmem:[%s202 + $0x70] sm:$0xff]
      %v230 = vld [vmem:[%s202 + $0x78] sm:$0xff]
      %v231 = vld [vmem:[%s1] sm:$0x1]
      %v233 = vlaneseq
      %v234 = vshrl.u32 %v233, 7
      %v235 = vsub.s32 0, %v234
      %v236 = vrot.slane %v231, %v235
      %v238 = vmul.f32 %v215, %v236
      %v239 = vmul.f32 %v216, %v236
      %v240 = vmul.f32 %v217, %v236
      %v241 = vmul.f32 %v218, %v236
      %v242 = vmul.f32 %v219, %v236
      %v243 = vmul.f32 %v220, %v236
      %v244 = vmul.f32 %v221, %v236
      %v245 = vmul.f32 %v222, %v236
      %v246 = vmul.f32 %v223, %v236
      %v247 = vmul.f32 %v224, %v236
      %v248 = vmul.f32 %v225, %v236
      %v249 = vmul.f32 %v226, %v236
      %v250 = vmul.f32 %v227, %v236
      %v251 = vmul.f32 %v228, %v236
      %v252 = vmul.f32 %v229, %v236
      %v253 = vmul.f32 %v230, %v236
      %v254 = vld [vmem:[%s2] sm:$0x1]
      %v256 = vlaneseq
      %v257 = vshrl.u32 %v256, 7
      %v258 = vsub.s32 0, %v257
      %v259 = vrot.slane %v254, %v258
      %v261 = vadd.f32 %v238, %v259
      %v262 = vadd.f32 %v239, %v259
      %v263 = vadd.f32 %v240, %v259
      %v264 = vadd.f32 %v241, %v259
      %v265 = vadd.f32 %v242, %v259
      %v266 = vadd.f32 %v243, %v259
      %v267 = vadd.f32 %v244, %v259
      %v268 = vadd.f32 %v245, %v259
      %v269 = vadd.f32 %v246, %v259
      %v270 = vadd.f32 %v247, %v259
      %v271 = vadd.f32 %v248, %v259
      %v272 = vadd.f32 %v249, %v259
      %v273 = vadd.f32 %v250, %v259
      %v274 = vadd.f32 %v251, %v259
      %v275 = vadd.f32 %v252, %v259
      %v276 = vadd.f32 %v253, %v259
      %v277 = vmax.f32 %v261, 0.0
      %v278 = vmax.f32 %v262, 0.0
      %v279 = vmax.f32 %v263, 0.0
      %v280 = vmax.f32 %v264, 0.0
      %v281 = vmax.f32 %v265, 0.0
      %v282 = vmax.f32 %v266, 0.0
      %v283 = vmax.f32 %v267, 0.0
      %v284 = vmax.f32 %v268, 0.0
      %v285 = vmax.f32 %v269, 0.0
      %v286 = vmax.f32 %v270, 0.0
      %v287 = vmax.f32 %v271, 0.0
      %v288 = vmax.f32 %v272, 0.0
      %v289 = vmax.f32 %v273, 0.0
      %v290 = vmax.f32 %v274, 0.0
      %v291 = vmax.f32 %v275, 0.0
      %v292 = vmax.f32 %v276, 0.0
      %293 = vst [vmem:[%s213] sm:$0xff] %v277
      %294 = vst [vmem:[%s213 + $0x8] sm:$0xff] %v278
      %295 = vst [vmem:[%s213 + $0x10] sm:$0xff] %v279
      %296 = vst [vmem:[%s213 + $0x18] sm:$0xff] %v280
      %297 = vst [vmem:[%s213 + $0x20] sm:$0xff] %v281
      %298 = vst [vmem:[%s213 + $0x28] sm:$0xff] %v282
      %299 = vst [vmem:[%s213 + $0x30] sm:$0xff] %v283
      %300 = vst [vmem:[%s213 + $0x38] sm:$0xff] %v284
      %301 = vst [vmem:[%s213 + $0x40] sm:$0xff] %v285
      %302 = vst [vmem:[%s213 + $0x48] sm:$0xff] %v286
      %303 = vst [vmem:[%s213 + $0x50] sm:$0xff] %v287
      %304 = vst [vmem:[%s213 + $0x58] sm:$0xff] %v288
      %305 = vst [vmem:[%s213 + $0x60] sm:$0xff] %v289
      %306 = vst [vmem:[%s213 + $0x68] sm:$0xff] %v290
      %307 = vst [vmem:[%s213 + $0x70] sm:$0xff] %v291
      %308 = vst [vmem:[%s213 + $0x78] sm:$0xff] %v292
      %s309 = smul.u32 8, %s19
      %p310 = scmp.lt.s32.totalorder %s18, 1
      %s311 = scalar_select %p310, %s18, 1
      %p312 = scmp.lt.s32.totalorder %s309, 15
      %s313 = scalar_select %p312, %s309, 15
      %s314 = smul.addr %s313, 2
      %s315 = smul.addr %s311, 32
      %s316 = sadd.s32 %s314, %s315
      %s317 = smul.addr %s316, 8
      %s318 = scalar_lea.vmem %s3, %s317
      // Predicated region
      $region33: #{double_conv_forward.5} parent=31 // pred_check
        %p319 = pneg %p116
      $region34: #{double_conv_forward.5} parent=31 // pred_check_branch
        %321 = sbr.rel (%p319) target = $region36
      $region35: #{double_conv_forward.5} parent=31 // pred_region
        %s322 = smul.u32 8, %s19
      $region36: #{double_conv_forward.5} parent=31 // pred_fallthru
        _
    $region32: #{double_conv_forward.5} parent=5 // pred_fallthru
      _
    %p323 = scmp.le.s32.totalorder 2, %s9
    // Predicated region
    $region37: #{double_conv_forward.5} parent=5 // pred_check
      %p324 = pneg %p323
    $region38: #{double_conv_forward.5} parent=5 // pred_check_branch
      %326 = sbr.rel (%p324) target = $region40
    $region39: #{double_conv_forward.5} parent=5 // pred_region
      %s327 = ssub.s32 %s9, 2
      // Predicated region
      $region41: #{double_conv_forward.5} parent=39 // pred_check
        %p328 = pneg %p122
      $region42: #{double_conv_forward.5} parent=39 // pred_check_branch
        %330 = sbr.rel (%p328) target = $region44
      $region43: #{double_conv_forward.5} parent=39 // pred_region
        %s331 = smul.u32 8, %s21
        %p332 = scmp.lt.s32.totalorder %s20, 1
        %s333 = scalar_select %p332, %s20, 1
        %p334 = scmp.lt.s32.totalorder %s331, 15
        %s335 = scalar_select %p334, %s331, 15
        %s336 = smul.addr %s335, 2
        %s337 = smul.addr %s333, 32
        %s338 = sadd.s32 %s336, %s337
        %s339 = smul.addr %s338, 8
        %s340 = scalar_lea.vmem %s3, %s339
      $region44: #{double_conv_forward.5} parent=39 // pred_fallthru
        _
    $region40: #{double_conv_forward.5} parent=5 // pred_fallthru
      _
  $region6: #{double_conv_forward.5} parent=0 // loop_footer
    %s13 = sadd.s32 1, %s9
  $region7: #{double_conv_forward.5} parent=0 // loop_footer_branch
    %8 = sbr.rel target = $region3
  $region8: #{double_conv_forward.5} parent=0 // loop_exit
    _

// kernel: double_conv_forward.3
$region0: #{double_conv_forward.3}
  #allocation0 [shape = 'u32[]', space=smem, size = 0x4, offset = 0x4, fixed_abs, tag = 'smem constant byte address 0x4 - core index']
  #allocation1 [shape = 'u32[144,128]{1,0:T(1,128)}', space=vmem, size = 0x12000, scoped, tag = 'internal scratch']
  #allocation2 [shape = 'f32[2,10,18,128]{3,2,1,0:T(8,128)}', space=vmem, size = 0x3c000, scoped, tag = 'scratch operand']
  #allocation3 [shape = 's32[2]{0}', space=sflag, size = 0x8, scoped, tag = 'scratch operand']
  #allocation4 [shape = 's32[]', space=sflag, size = 0x4, offset = 0, fixed_abs, tag = 'sflag constant byte address 0x0 - dummy sync flag']
  #allocation5 [shape = 's32[]', space=sflag, size = 0x4, offset = 0, fixed_abs, tag = 'sflag constant byte address 0x0 - dummy sync flag']
  %s0 = inlined_call_operand.vmem [shape: f32[2,18,18,128], index: 0, kind: input, shape index: {}]
  %s1 = inlined_call_operand.vmem [shape: f32[3,3,128,128], index: 1, kind: input, shape index: {}]
  %s2 = inlined_call_operand.vmem [shape: f32[1,128], index: 2, kind: input, shape index: {}]
  %s3 = inlined_call_operand.vmem [shape: f32[1,128], index: 3, kind: input, shape index: {}]
  %s4 = inlined_call_operand.vmem [shape: f32[2,16,16,128], index: 4, kind: output, shape index: {0}]
  %s5 = inlined_call_operand.vmem [shape: f32[2,1,128], index: 5, kind: output, shape index: {1}]
  %s6 = inlined_call_operand.vmem [shape: f32[2,1,128], index: 6, kind: output, shape index: {2}]
  %7 = xla_tuple %s4, %s5, %s6
  %s8 = sld [smem:[#allocation0]]
  $region147: #{double_conv_forward.3} parent=0
    _
  %s10 = ssub.s32 1, %s8
  %s11 = scalar_select 0, %s10, %s8
  loop: start=0, step=1, limit=6
  $region2: #{double_conv_forward.3} parent=0 // loop_pre_header
    _
  $region3: #{double_conv_forward.3} parent=0 // loop_header
    %s13 = sphi 0, %s17
    %p14 = scmp.ge.s32.totalorder %s13, 6
    %s20 = sphi 0, %s32
    %s21 = sphi 0, %s28
    %s22 = sphi 0, %s20
    %s23 = sphi 0, %s21
    %s24 = sphi 0, %s22
    %s25 = sphi 0, %s23
    %s33 = sphi 0, %s33
    %s35 = sphi 0, %s33
    %s36 = sphi 0, %s35
    %s50 = sphi 0, %s36
    %s54 = sphi 0, %s54
    %s56 = sphi 0, %s54
    %s57 = sphi 0, %s56
    %s71 = sphi 0, %s57
    %s75 = sphi 0, %s75
    %s77 = sphi 0, %s75
    %s78 = sphi 0, %s77
    %s92 = sphi 0, %s78
    %s100 = sphi 0, %s102
    %s103 = sphi 0, %s100
    %s104 = sphi 0, %s103
    %s120 = sphi 0, %s104
    %s126 = sphi 0, %s128
    %s129 = sphi 0, %s126
    %s130 = sphi 0, %s129
    %s146 = sphi 0, %s130
    %s152 = sphi 0, %s154
    %s155 = sphi 0, %s152
    %s156 = sphi 0, %s155
    %s172 = sphi 0, %s156
  $region4: #{double_conv_forward.3} parent=0 // loop_header_branch
    %16 = sbr.rel (%p14) target = $region8
  $region5: #{double_conv_forward.3} parent=0 // loop_body
    %s18 = ssub.s32 %s13, 1
    %s19 = ssub.s32 %s13, 2
    %s26 = sadd.s32 1, %s21
    %p27 = scmp.ge.s32.totalorder %s26, 2
    %s28 = scalar_select %p27, 0, %s26
    %s29 = sadd.s32 1, %s20
    %s30 = scalar_select %p27, %s29, %s20
    %p31 = scmp.ge.s32.totalorder %s30, 2
    %s32 = scalar_select %p31, 0, %s30
    %s34 = sadd.s32 %s33, 1
    %p37 = scmp.eq.s32.totalorder %s13, 3
    %p38 = scmp.ne.s32.totalorder %s33, %s35
    %p39 = scmp.eq.s32.totalorder %s13, 0
    %p40 = por %p38, %p39
    %p41 = scmp.ne.s32.totalorder %s33, %s35
    %p42 = scmp.eq.s32.totalorder %s18, 3
    %p43 = por %p41, %p42
    %p44 = scmp.ne.s32.totalorder %s35, %s36
    %p45 = scmp.eq.s32.totalorder %s18, 0
    %p46 = por %p44, %p45
    %p47 = scmp.ne.s32.totalorder %s35, %s36
    %p48 = scmp.eq.s32.totalorder %s19, 3
    %p49 = por %p47, %p48
    %p51 = scmp.ne.s32.totalorder %s36, %s50
    %p52 = scmp.eq.s32.totalorder %s19, 0
    %p53 = por %p51, %p52
    %s55 = sadd.s32 %s54, 1
    %p58 = scmp.eq.s32.totalorder %s13, 3
    %p59 = scmp.ne.s32.totalorder %s54, %s56
    %p60 = scmp.eq.s32.totalorder %s13, 0
    %p61 = por %p59, %p60
    %p62 = scmp.ne.s32.totalorder %s54, %s56
    %p63 = scmp.eq.s32.totalorder %s18, 3
    %p64 = por %p62, %p63
    %p65 = scmp.ne.s32.totalorder %s56, %s57
    %p66 = scmp.eq.s32.totalorder %s18, 0
    %p67 = por %p65, %p66
    %p68 = scmp.ne.s32.totalorder %s56, %s57
    %p69 = scmp.eq.s32.totalorder %s19, 3
    %p70 = por %p68, %p69
    %p72 = scmp.ne.s32.totalorder %s57, %s71
    %p73 = scmp.eq.s32.totalorder %s19, 0
    %p74 = por %p72, %p73
    %s76 = sadd.s32 %s75, 1
    %p79 = scmp.eq.s32.totalorder %s13, 3
    %p80 = scmp.ne.s32.totalorder %s75, %s77
    %p81 = scmp.eq.s32.totalorder %s13, 0
    %p82 = por %p80, %p81
    %p83 = scmp.ne.s32.totalorder %s75, %s77
    %p84 = scmp.eq.s32.totalorder %s18, 3
    %p85 = por %p83, %p84
    %p86 = scmp.ne.s32.totalorder %s77, %s78
    %p87 = scmp.eq.s32.totalorder %s18, 0
    %p88 = por %p86, %p87
    %p89 = scmp.ne.s32.totalorder %s77, %s78
    %p90 = scmp.eq.s32.totalorder %s19, 3
    %p91 = por %p89, %p90
    %p93 = scmp.ne.s32.totalorder %s78, %s92
    %p94 = scmp.eq.s32.totalorder %s19, 0
    %p95 = por %p93, %p94
    %s96 = ssub.s32 %s20, %s32
    %s97 = ssub.s32 %s21, %s28
    %s98 = sor.u32 %s96, %s97
    %p99 = scmp.eq.s32.totalorder %s98, 0
    %s101 = sadd.s32 %s100, 1
    %s102 = scalar_select %p99, %s100, %s101
    %p105 = pneg %p99
    %p106 = scmp.eq.s32.totalorder %s13, 3
    %p107 = por %p105, %p106
    %p108 = scmp.ne.s32.totalorder %s100, %s103
    %p109 = scmp.eq.s32.totalorder %s13, 0
    %p110 = por %p108, %p109
    %p111 = scmp.ne.s32.totalorder %s100, %s103
    %p112 = scmp.eq.s32.totalorder %s18, 3
    %p113 = por %p111, %p112
    %p114 = scmp.ne.s32.totalorder %s103, %s104
    %p115 = scmp.eq.s32.totalorder %s18, 0
    %p116 = por %p114, %p115
    %p117 = scmp.ne.s32.totalorder %s103, %s104
    %p118 = scmp.eq.s32.totalorder %s19, 3
    %p119 = por %p117, %p118
    %p121 = scmp.ne.s32.totalorder %s104, %s120
    %p122 = scmp.eq.s32.totalorder %s19, 0
    %p123 = por %p121, %p122
    %s124 = ssub.s32 %s20, %s32
    %p125 = scmp.eq.s32.totalorder %s124, 0
    %s127 = sadd.s32 %s126, 1
    %s128 = scalar_select %p125, %s126, %s127
    %p131 = pneg %p125
    %p132 = scmp.eq.s32.totalorder %s13, 3
    %p133 = por %p131, %p132
    %p134 = scmp.ne.s32.totalorder %s126, %s129
    %p135 = scmp.eq.s32.totalorder %s13, 0
    %p136 = por %p134, %p135
    %p137 = scmp.ne.s32.totalorder %s126, %s129
    %p138 = scmp.eq.s32.totalorder %s18, 3
    %p139 = por %p137, %p138
    %p140 = scmp.ne.s32.totalorder %s129, %s130
    %p141 = scmp.eq.s32.totalorder %s18, 0
    %p142 = por %p140, %p141
    %p143 = scmp.ne.s32.totalorder %s129, %s130
    %p144 = scmp.eq.s32.totalorder %s19, 3
    %p145 = por %p143, %p144
    %p147 = scmp.ne.s32.totalorder %s130, %s146
    %p148 = scmp.eq.s32.totalorder %s19, 0
    %p149 = por %p147, %p148
    %s150 = ssub.s32 %s20, %s32
    %p151 = scmp.eq.s32.totalorder %s150, 0
    %s153 = sadd.s32 %s152, 1
    %s154 = scalar_select %p151, %s152, %s153
    %p157 = pneg %p151
    %p158 = scmp.eq.s32.totalorder %s13, 3
    %p159 = por %p157, %p158
    %p160 = scmp.ne.s32.totalorder %s152, %s155
    %p161 = scmp.eq.s32.totalorder %s13, 0
    %p162 = por %p160, %p161
    %p163 = scmp.ne.s32.totalorder %s152, %s155
    %p164 = scmp.eq.s32.totalorder %s18, 3
    %p165 = por %p163, %p164
    %p166 = scmp.ne.s32.totalorder %s155, %s156
    %p167 = scmp.eq.s32.totalorder %s18, 0
    %p168 = por %p166, %p167
    %p169 = scmp.ne.s32.totalorder %s155, %s156
    %p170 = scmp.eq.s32.totalorder %s19, 3
    %p171 = por %p169, %p170
    %p173 = scmp.ne.s32.totalorder %s156, %s172
    %p174 = scmp.eq.s32.totalorder %s19, 0
    %p175 = por %p173, %p174
    %p176 = scmp.le.s32.totalorder 1, %s13
    %p177 = scmp.lt.s32.totalorder %s13, 5
    %p178 = pnand %p176, %p177
    %p179 = pneg %p178
    // Predicated region
    $region9: #{double_conv_forward.3} parent=5 // pred_check
      _
    $region10: #{double_conv_forward.3} parent=5 // pred_check_branch
      %181 = sbr.rel (%p178) target = $region12
    $region11: #{double_conv_forward.3} parent=5 // pred_region
      %s182 = ssub.s32 %s13, 1
      // Predicated region
      $region13: #{double_conv_forward.3} parent=11 // pred_check
        %p183 = pneg %p46
      $region14: #{double_conv_forward.3} parent=11 // pred_check_branch
        %185 = sbr.rel (%p183) target = $region16
      $region15: #{double_conv_forward.3} parent=11 // pred_region
        _
      $region16: #{double_conv_forward.3} parent=11 // pred_fallthru
        _
      // Predicated region
      $region17: #{double_conv_forward.3} parent=11 // pred_check
        %p186 = pneg %p67
      $region18: #{double_conv_forward.3} parent=11 // pred_check_branch
        %188 = sbr.rel (%p186) target = $region20
      $region19: #{double_conv_forward.3} parent=11 // pred_region
        _
      $region20: #{double_conv_forward.3} parent=11 // pred_fallthru
        _
      // Predicated region
      $region21: #{double_conv_forward.3} parent=11 // pred_check
        %p189 = pneg %p88
      $region22: #{double_conv_forward.3} parent=11 // pred_check_branch
        %191 = sbr.rel (%p189) target = $region24
      $region23: #{double_conv_forward.3} parent=11 // pred_region
        _
      $region24: #{double_conv_forward.3} parent=11 // pred_fallthru
        _
    $region12: #{double_conv_forward.3} parent=5 // pred_fallthru
      _
    %p192 = scmp.lt.s32.totalorder %s13, 4
    // Predicated region
    $region25: #{double_conv_forward.3} parent=5 // pred_check
      %p193 = pneg %p192
    $region26: #{double_conv_forward.3} parent=5 // pred_check_branch
      %195 = sbr.rel (%p193) target = $region28
    $region27: #{double_conv_forward.3} parent=5 // pred_region
      _
    $region28: #{double_conv_forward.3} parent=5 // pred_fallthru
      _
    %p196 = scmp.le.s32.totalorder 1, %s13
    %p197 = scmp.lt.s32.totalorder %s13, 5
    %p198 = pnand %p196, %p197
    %p199 = pneg %p198
    // Predicated region
    $region29: #{double_conv_forward.3} parent=5 // pred_check
      _
    $region30: #{double_conv_forward.3} parent=5 // pred_check_branch
      %201 = sbr.rel (%p198) target = $region32
    $region31: #{double_conv_forward.3} parent=5 // pred_region
      %s202 = ssub.s32 %s13, 1
      %p203 = pneg %p46
      %p204 = pneg %p43
      %p205 = pneg %p67
      %p206 = pneg %p64
      %p207 = pneg %p88
      %p208 = pneg %p85
      %p209 = pneg %p116
      %p210 = pneg %p113
      %s211 = smul.u32 8, %s23
      %p212 = scmp.lt.s32.totalorder %s22, 1
      %s213 = scalar_select %p212, %s22, 1
      %p214 = scmp.lt.s32.totalorder %s211, 15
      %s215 = scalar_select %p214, %s211, 15
      %s216 = smul.addr %s215, 2
      %s217 = smul.addr %s213, 32
      %s218 = sadd.s32 %s216, %s217
      %s219 = smul.addr %s218, 8
      %s220 = scalar_lea.vmem %s4, %s219
      %p221 = pneg %p142
      %p222 = pneg %p139
      %p223 = scmp.lt.s32.totalorder %s22, 1
      %s224 = scalar_select %p223, %s22, 1
      %s225 = scalar_lea.vmem %s5, %s224
      %p226 = pneg %p168
      %p227 = pneg %p165
      %p228 = scmp.lt.s32.totalorder %s22, 1
      %s229 = scalar_select %p228, %s22, 1
      %s230 = scalar_lea.vmem %s6, %s229
      %s231 = smul.u32 8, %s23
      %p232 = scmp.lt.s32.totalorder %s22, 1
      %s233 = scalar_select %p232, %s22, 1
      %p234 = scmp.lt.s32.totalorder %s231, 15
      %s235 = scalar_select %p234, %s231, 15
      %s236 = smul.addr %s235, 2
      %s237 = smul.addr %s233, 32
      %s238 = sadd.s32 %s236, %s237
      %s239 = smul.addr %s238, 8
      %s240 = scalar_lea.vmem %s4, %s239
      %s241 = smul.u32 8, %s23
      %p242 = scmp.lt.s32.totalorder %s22, 1
      %s243 = scalar_select %p242, %s22, 1
      %s244 = scalar_lea.vmem %s5, %s243
      %p245 = scmp.lt.s32.totalorder %s22, 1
      %s246 = scalar_select %p245, %s22, 1
      %s247 = scalar_lea.vmem %s6, %s246
      %p248 = scmp.lt.s32.totalorder %s23, 0
      %s249 = ssub.s32 0, %s23
      %s250 = scalar_select %p248, %s249, %s23
      %s251 = sand.u32 %s250, 1
      %s252 = ssub.s32 0, %s251
      %s253 = scalar_select %p248, %s252, %s251
      %p254 = scmp.eq.s32.totalorder %s23, 0
      // Predicated region
      $region33: #{double_conv_forward.3} parent=31 // pred_check
        %p255 = pneg %p254
      $region34: #{double_conv_forward.3} parent=31 // pred_check_branch
        %257 = sbr.rel (%p255) target = $region36
      $region35: #{double_conv_forward.3} parent=31 // pred_region
        %s258 = smul.u32 %s22, 432
        %s259 = scalar_lea.vmem %s0, %s258
        %p261 = scmp.lt.u32.totalorder 18, 8
        %p262 = pneg %p261
        // Predicated region
        $region37: #{double_conv_forward.3} parent=35 // pred_check
          _
        $region38: #{double_conv_forward.3} parent=35 // pred_check_branch
          %264 = sbr.rel (%p261) target = $region40
        $region39: #{double_conv_forward.3} parent=35 // pred_region
          %s297 = sand.u32 18, 7
          %p298 = scmp.eq.s32.totalorder %s297, 0
          %p299 = pneg %p298
          // Predicated region
          $region52: #{double_conv_forward.3} parent=39 // pred_check
            _
          $region53: #{double_conv_forward.3} parent=39 // pred_check_branch
            %301 = sbr.rel (%p298) target = $region55
          $region54: #{double_conv_forward.3} parent=39 // pred_region
            %s302 = sand.u32 18, 7
            %s303 = ssub.s32 18, %s302
            %s304 = scalar_lea.vmem %s259, %s303
            %s305 = ssub.s32 18, %s302
            %s306 = scalar_lea.vmem [#allocation2], %s305
            loop: start=0, step=1, limit=1
            $region56: #{double_conv_forward.3} parent=54 // loop_pre_header
              _
            $region57: #{double_conv_forward.3} parent=54 // loop_header
              %s308 = sphi 0, %s312
              %p309 = scmp.ge.s32.totalorder %s308, 1
              %s313 = sphi %s259, %s259
              %s314 = sphi [#allocation2], [#allocation2]
            $region58: #{double_conv_forward.3} parent=54 // loop_header_branch
              %311 = sbr.rel (%p309) target = $region62
            $region59: #{double_conv_forward.3} parent=54 // loop_body
              %v315 = vld [vmem:[%s313] sm:$0xff]
              %316 = vst [vmem:[%s314] sm:$0xff] %v315
              %v317 = vld [vmem:[%s313 + $0x8] sm:$0xff]
              %318 = vst [vmem:[%s314 + $0x8] sm:$0xff] %v317
              %v319 = vld [vmem:[%s313 + $0x18] sm:$0xff]
              %320 = vst [vmem:[%s314 + $0x18] sm:$0xff] %v319
              %v321 = vld [vmem:[%s313 + $0x20] sm:$0xff]
              %322 = vst [vmem:[%s314 + $0x20] sm:$0xff] %v321
              %v323 = vld [vmem:[%s313 + $0x30] sm:$0xff]
              %324 = vst [vmem:[%s314 + $0x30] sm:$0xff] %v323
              %v325 = vld [vmem:[%s313 + $0x38] sm:$0xff]
              %326 = vst [vmem:[%s314 + $0x38] sm:$0xff] %v325
              %v327 = vld [vmem:[%s313 + $0x48] sm:$0xff]
              %328 = vst [vmem:[%s314 + $0x48] sm:$0xff] %v327
              %v329 = vld [vmem:[%s313 + $0x50] sm:$0xff]
              %330 = vst [vmem:[%s314 + $0x50] sm:$0xff] %v329
              %v331 = vld [vmem:[%s313 + $0x60] sm:$0xff]
              %332 = vst [vmem:[%s314 + $0x60] sm:$0xff] %v331
              %v333 = vld [vmem:[%s313 + $0x68] sm:$0xff]
              %334 = vst [vmem:[%s314 + $0x68] sm:$0xff] %v333
              %v335 = vld [vmem:[%s313 + $0x78] sm:$0xff]
              %336 = vst [vmem:[%s314 + $0x78] sm:$0xff] %v335
              %v337 = vld [vmem:[%s313 + $0x80] sm:$0xff]
              %338 = vst [vmem:[%s314 + $0x80] sm:$0xff] %v337
              %v339 = vld [vmem:[%s313 + $0x90] sm:$0xff]
              %340 = vst [vmem:[%s314 + $0x90] sm:$0xff] %v339
              %v341 = vld [vmem:[%s313 + $0x98] sm:$0xff]
              %342 = vst [vmem:[%s314 + $0x98] sm:$0xff] %v341
              %v343 = vld [vmem:[%s313 + $0xa8] sm:$0xff]
              %344 = vst [vmem:[%s314 + $0xa8] sm:$0xff] %v343
              %v345 = vld [vmem:[%s313 + $0xb0] sm:$0xff]
              %346 = vst [vmem:[%s314 + $0xb0] sm:$0xff] %v345
              %v347 = vld [vmem:[%s313 + $0xc0] sm:$0xff]
              %348 = vst [vmem:[%s314 + $0xc0] sm:$0xff] %v347
              %v349 = vld [vmem:[%s313 + $0xc8] sm:$0xff]
              %350 = vst [vmem:[%s314 + $0xc8] sm:$0xff] %v349
              %v351 = vld [vmem:[%s313 + $0xd8] sm:$0xff]
              %352 = vst [vmem:[%s314 + $0xd8] sm:$0xff] %v351
              %v353 = vld [vmem:[%s313 + $0xe0] sm:$0xff]
              %354 = vst [vmem:[%s314 + $0xe0] sm:$0xff] %v353
            $region60: #{double_conv_forward.3} parent=54 // loop_footer
              %s312 = sadd.s32 1, %s308
            $region61: #{double_conv_forward.3} parent=54 // loop_footer_branch
              %307 = sbr.rel target = $region57
            $region62: #{double_conv_forward.3} parent=54 // loop_exit
              _
            %s355 = sshllo.u32 0, %s302
            loop: start=0, step=1, limit=1
            $region63: #{double_conv_forward.3} parent=54 // loop_pre_header
              _
            $region64: #{double_conv_forward.3} parent=54 // loop_header
              %s357 = sphi 0, %s361
              %p358 = scmp.ge.s32.totalorder %s357, 1
              %s362 = sphi %s304, %s304
              %s363 = sphi %s306, %s306
            $region65: #{double_conv_forward.3} parent=54 // loop_header_branch
              %360 = sbr.rel (%p358) target = $region69
            $region66: #{double_conv_forward.3} parent=54 // loop_body
              %v364 = vld [vmem:[%s362] sm:%s355]
              %365 = vst [vmem:[%s363] sm:%s355] %v364
              %v366 = vld [vmem:[%s362 + $0x18] sm:%s355]
              %367 = vst [vmem:[%s363 + $0x18] sm:%s355] %v366
              %v368 = vld [vmem:[%s362 + $0x30] sm:%s355]
              %369 = vst [vmem:[%s363 + $0x30] sm:%s355] %v368
              %v370 = vld [vmem:[%s362 + $0x48] sm:%s355]
              %371 = vst [vmem:[%s363 + $0x48] sm:%s355] %v370
              %v372 = vld [vmem:[%s362 + $0x60] sm:%s355]
              %373 = vst [vmem:[%s363 + $0x60] sm:%s355] %v372
              %v374 = vld [vmem:[%s362 + $0x78] sm:%s355]
              %375 = vst [vmem:[%s363 + $0x78] sm:%s355] %v374
              %v376 = vld [vmem:[%s362 + $0x90] sm:%s355]
              %377 = vst [vmem:[%s363 + $0x90] sm:%s355] %v376
              %v378 = vld [vmem:[%s362 + $0xa8] sm:%s355]
              %379 = vst [vmem:[%s363 + $0xa8] sm:%s355] %v378
              %v380 = vld [vmem:[%s362 + $0xc0] sm:%s355]
              %381 = vst [vmem:[%s363 + $0xc0] sm:%s355] %v380
              %v382 = vld [vmem:[%s362 + $0xd8] sm:%s355]
              %383 = vst [vmem:[%s363 + $0xd8] sm:%s355] %v382
            $region67: #{double_conv_forward.3} parent=54 // loop_footer
              %s361 = sadd.s32 1, %s357
            $region68: #{double_conv_forward.3} parent=54 // loop_footer_branch
              %356 = sbr.rel target = $region64
            $region69: #{double_conv_forward.3} parent=54 // loop_exit
              _
          $region55: #{double_conv_forward.3} parent=39 // pred_fallthru
            _
        $region40: #{double_conv_forward.3} parent=35 // pred_fallthru
          _
        // Predicated region
        $region41: #{double_conv_forward.3} parent=35 // pred_check
          %p265 = pneg %p261
        $region42: #{double_conv_forward.3} parent=35 // pred_check_branch
          %267 = sbr.rel (%p265) target = $region44
        $region43: #{double_conv_forward.3} parent=35 // pred_region
          %s268 = sshllo.u32 0, 18
          loop: start=0, step=1, limit=1
          $region45: #{double_conv_forward.3} parent=43 // loop_pre_header
            _
          $region46: #{double_conv_forward.3} parent=43 // loop_header
            %s270 = sphi 0, %s274
            %p271 = scmp.ge.s32.totalorder %s270, 1
            %s275 = sphi %s259, %s259
            %s276 = sphi [#allocation2], [#allocation2]
          $region47: #{double_conv_forward.3} parent=43 // loop_header_branch
            %273 = sbr.rel (%p271) target = $region51
          $region48: #{double_conv_forward.3} parent=43 // loop_body
            %v277 = vld [vmem:[%s275] sm:%s268]
            %278 = vst [vmem:[%s276] sm:%s268] %v277
            %v279 = vld [vmem:[%s275 + $0x18] sm:%s268]
            %280 = vst [vmem:[%s276 + $0x18] sm:%s268] %v279
            %v281 = vld [vmem:[%s275 + $0x30] sm:%s268]
            %282 = vst [vmem:[%s276 + $0x30] sm:%s268] %v281
            %v283 = vld [vmem:[%s275 + $0x48] sm:%s268]
            %284 = vst [vmem:[%s276 + $0x48] sm:%s268] %v283
            %v285 = vld [vmem:[%s275 + $0x60] sm:%s268]
            %286 = vst [vmem:[%s276 + $0x60] sm:%s268] %v285
            %v287 = vld [vmem:[%s275 + $0x78] sm:%s268]
            %288 = vst [vmem:[%s276 + $0x78] sm:%s268] %v287
            %v289 = vld [vmem:[%s275 + $0x90] sm:%s268]
            %290 = vst [vmem:[%s276 + $0x90] sm:%s268] %v289
            %v291 = vld [vmem:[%s275 + $0xa8] sm:%s268]
            %292 = vst [vmem:[%s276 + $0xa8] sm:%s268] %v291
            %v293 = vld [vmem:[%s275 + $0xc0] sm:%s268]
            %294 = vst [vmem:[%s276 + $0xc0] sm:%s268] %v293
            %v295 = vld [vmem:[%s275 + $0xd8] sm:%s268]
            %296 = vst [vmem:[%s276 + $0xd8] sm:%s268] %v295
          $region49: #{double_conv_forward.3} parent=43 // loop_footer
            %s274 = sadd.s32 1, %s270
          $region50: #{double_conv_forward.3} parent=43 // loop_footer_branch
            %269 = sbr.rel target = $region46
          $region51: #{double_conv_forward.3} parent=43 // loop_exit
            _
        $region44: #{double_conv_forward.3} parent=35 // pred_fallthru
          _
        // Predicated region
        $region70: #{double_conv_forward.3} parent=35 // pred_check
          _
        $region71: #{double_conv_forward.3} parent=35 // pred_check_branch
          %386 = sbr.rel (0) target = $region73
        $region72: #{double_conv_forward.3} parent=35 // pred_region
          %387 = vsyncadd [#allocation3], 2880
        $region73: #{double_conv_forward.3} parent=35 // pred_fallthru
          _
      $region36: #{double_conv_forward.3} parent=31 // pred_fallthru
        _
      %s388 = smul.u32 %s253, 240
      %s389 = scalar_lea.vmem [#allocation2], %s388
      %s390 = scalar_lea.sflag [#allocation3], %s253
      %s391 = smul.u32 10, 18
      %s392 = smul.u32 %s391, 1
      %s393 = sshll.u32 %s392, 4
      %394 = dma.done %s390, %s393
      %s395 = sadd.s32 %s23, 1
      %p396 = scmp.lt.s32.totalorder %s395, 2
      // Predicated region
      $region74: #{double_conv_forward.3} parent=31 // pred_check
        %p397 = pneg %p396
      $region75: #{double_conv_forward.3} parent=31 // pred_check_branch
        %399 = sbr.rel (%p397) target = $region77
      $region76: #{double_conv_forward.3} parent=31 // pred_region
        %s400 = ssub.s32 1, %s253
        %s401 = smul.u32 %s395, 8
        %s402 = smul.u32 %s401, 24
        %s403 = smul.u32 %s22, 432
        %s404 = sadd.s32 %s402, %s403
        %s405 = scalar_lea.vmem %s0, %s404
        %s406 = smul.u32 %s400, 240
        %s407 = scalar_lea.vmem [#allocation2], %s406
        %s408 = scalar_lea.sflag [#allocation3], %s400
        %p410 = scmp.lt.u32.totalorder 18, 8
        %p411 = pneg %p410
        // Predicated region
        $region78: #{double_conv_forward.3} parent=76 // pred_check
          _
        $region79: #{double_conv_forward.3} parent=76 // pred_check_branch
          %413 = sbr.rel (%p410) target = $region81
        $region80: #{double_conv_forward.3} parent=76 // pred_region
          %s446 = sand.u32 18, 7
          %p447 = scmp.eq.s32.totalorder %s446, 0
          %p448 = pneg %p447
          // Predicated region
          $region93: #{double_conv_forward.3} parent=80 // pred_check
            _
          $region94: #{double_conv_forward.3} parent=80 // pred_check_branch
            %450 = sbr.rel (%p447) target = $region96
          $region95: #{double_conv_forward.3} parent=80 // pred_region
            %s451 = sand.u32 18, 7
            %s452 = ssub.s32 18, %s451
            %s453 = scalar_lea.vmem %s405, %s452
            %s454 = ssub.s32 18, %s451
            %s455 = scalar_lea.vmem %s407, %s454 [#allocation2]
            loop: start=0, step=1, limit=1
            $region97: #{double_conv_forward.3} parent=95 // loop_pre_header
              _
            $region98: #{double_conv_forward.3} parent=95 // loop_header
              %s457 = sphi 0, %s461
              %p458 = scmp.ge.s32.totalorder %s457, 1
              %s462 = sphi %s405, %s405
              %s463 = sphi %s407, %s407
            $region99: #{double_conv_forward.3} parent=95 // loop_header_branch
              %460 = sbr.rel (%p458) target = $region103
            $region100: #{double_conv_forward.3} parent=95 // loop_body
              %v464 = vld [vmem:[%s462] sm:$0xff]
              %465 = vst [vmem:[%s463] sm:$0xff] %v464
              %v466 = vld [vmem:[%s462 + $0x8] sm:$0xff]
              %467 = vst [vmem:[%s463 + $0x8] sm:$0xff] %v466
              %v468 = vld [vmem:[%s462 + $0x18] sm:$0xff]
              %469 = vst [vmem:[%s463 + $0x18] sm:$0xff] %v468
              %v470 = vld [vmem:[%s462 + $0x20] sm:$0xff]
              %471 = vst [vmem:[%s463 + $0x20] sm:$0xff] %v470
              %v472 = vld [vmem:[%s462 + $0x30] sm:$0xff]
              %473 = vst [vmem:[%s463 + $0x30] sm:$0xff] %v472
              %v474 = vld [vmem:[%s462 + $0x38] sm:$0xff]
              %475 = vst [vmem:[%s463 + $0x38] sm:$0xff] %v474
              %v476 = vld [vmem:[%s462 + $0x48] sm:$0xff]
              %477 = vst [vmem:[%s463 + $0x48] sm:$0xff] %v476
              %v478 = vld [vmem:[%s462 + $0x50] sm:$0xff]
              %479 = vst [vmem:[%s463 + $0x50] sm:$0xff] %v478
              %v480 = vld [vmem:[%s462 + $0x60] sm:$0xff]
              %481 = vst [vmem:[%s463 + $0x60] sm:$0xff] %v480
              %v482 = vld [vmem:[%s462 + $0x68] sm:$0xff]
              %483 = vst [vmem:[%s463 + $0x68] sm:$0xff] %v482
              %v484 = vld [vmem:[%s462 + $0x78] sm:$0xff]
              %485 = vst [vmem:[%s463 + $0x78] sm:$0xff] %v484
              %v486 = vld [vmem:[%s462 + $0x80] sm:$0xff]
              %487 = vst [vmem:[%s463 + $0x80] sm:$0xff] %v486
              %v488 = vld [vmem:[%s462 + $0x90] sm:$0xff]
              %489 = vst [vmem:[%s463 + $0x90] sm:$0xff] %v488
              %v490 = vld [vmem:[%s462 + $0x98] sm:$0xff]
              %491 = vst [vmem:[%s463 + $0x98] sm:$0xff] %v490
              %v492 = vld [vmem:[%s462 + $0xa8] sm:$0xff]
              %493 = vst [vmem:[%s463 + $0xa8] sm:$0xff] %v492
              %v494 = vld [vmem:[%s462 + $0xb0] sm:$0xff]
              %495 = vst [vmem:[%s463 + $0xb0] sm:$0xff] %v494
              %v496 = vld [vmem:[%s462 + $0xc0] sm:$0xff]
              %497 = vst [vmem:[%s463 + $0xc0] sm:$0xff] %v496
              %v498 = vld [vmem:[%s462 + $0xc8] sm:$0xff]
              %499 = vst [vmem:[%s463 + $0xc8] sm:$0xff] %v498
              %v500 = vld [vmem:[%s462 + $0xd8] sm:$0xff]
              %501 = vst [vmem:[%s463 + $0xd8] sm:$0xff] %v500
              %v502 = vld [vmem:[%s462 + $0xe0] sm:$0xff]
              %503 = vst [vmem:[%s463 + $0xe0] sm:$0xff] %v502
            $region101: #{double_conv_forward.3} parent=95 // loop_footer
              %s461 = sadd.s32 1, %s457
            $region102: #{double_conv_forward.3} parent=95 // loop_footer_branch
              %456 = sbr.rel target = $region98
            $region103: #{double_conv_forward.3} parent=95 // loop_exit
              _
            %s504 = sshllo.u32 0, %s451
            loop: start=0, step=1, limit=1
            $region104: #{double_conv_forward.3} parent=95 // loop_pre_header
              _
            $region105: #{double_conv_forward.3} parent=95 // loop_header
              %s506 = sphi 0, %s510
              %p507 = scmp.ge.s32.totalorder %s506, 1
              %s511 = sphi %s453, %s453
              %s512 = sphi %s455, %s455
            $region106: #{double_conv_forward.3} parent=95 // loop_header_branch
              %509 = sbr.rel (%p507) target = $region110
            $region107: #{double_conv_forward.3} parent=95 // loop_body
              %v513 = vld [vmem:[%s511] sm:%s504]
              %514 = vst [vmem:[%s512] sm:%s504] %v513
              %v515 = vld [vmem:[%s511 + $0x18] sm:%s504]
              %516 = vst [vmem:[%s512 + $0x18] sm:%s504] %v515
              %v517 = vld [vmem:[%s511 + $0x30] sm:%s504]
              %518 = vst [vmem:[%s512 + $0x30] sm:%s504] %v517
              %v519 = vld [vmem:[%s511 + $0x48] sm:%s504]
              %520 = vst [vmem:[%s512 + $0x48] sm:%s504] %v519
              %v521 = vld [vmem:[%s511 + $0x60] sm:%s504]
              %522 = vst [vmem:[%s512 + $0x60] sm:%s504] %v521
              %v523 = vld [vmem:[%s511 + $0x78] sm:%s504]
              %524 = vst [vmem:[%s512 + $0x78] sm:%s504] %v523
              %v525 = vld [vmem:[%s511 + $0x90] sm:%s504]
              %526 = vst [vmem:[%s512 + $0x90] sm:%s504] %v525
              %v527 = vld [vmem:[%s511 + $0xa8] sm:%s504]
              %528 = vst [vmem:[%s512 + $0xa8] sm:%s504] %v527
              %v529 = vld [vmem:[%s511 + $0xc0] sm:%s504]
              %530 = vst [vmem:[%s512 + $0xc0] sm:%s504] %v529
              %v531 = vld [vmem:[%s511 + $0xd8] sm:%s504]
              %532 = vst [vmem:[%s512 + $0xd8] sm:%s504] %v531
            $region108: #{double_conv_forward.3} parent=95 // loop_footer
              %s510 = sadd.s32 1, %s506
            $region109: #{double_conv_forward.3} parent=95 // loop_footer_branch
              %505 = sbr.rel target = $region105
            $region110: #{double_conv_forward.3} parent=95 // loop_exit
              _
          $region96: #{double_conv_forward.3} parent=80 // pred_fallthru
            _
        $region81: #{double_conv_forward.3} parent=76 // pred_fallthru
          _
        // Predicated region
        $region82: #{double_conv_forward.3} parent=76 // pred_check
          %p414 = pneg %p410
        $region83: #{double_conv_forward.3} parent=76 // pred_check_branch
          %416 = sbr.rel (%p414) target = $region85
        $region84: #{double_conv_forward.3} parent=76 // pred_region
          %s417 = sshllo.u32 0, 18
          loop: start=0, step=1, limit=1
          $region86: #{double_conv_forward.3} parent=84 // loop_pre_header
            _
          $region87: #{double_conv_forward.3} parent=84 // loop_header
            %s419 = sphi 0, %s423
            %p420 = scmp.ge.s32.totalorder %s419, 1
            %s424 = sphi %s405, %s405
            %s425 = sphi %s407, %s407
          $region88: #{double_conv_forward.3} parent=84 // loop_header_branch
            %422 = sbr.rel (%p420) target = $region92
          $region89: #{double_conv_forward.3} parent=84 // loop_body
            %v426 = vld [vmem:[%s424] sm:%s417]
            %427 = vst [vmem:[%s425] sm:%s417] %v426
            %v428 = vld [vmem:[%s424 + $0x18] sm:%s417]
            %429 = vst [vmem:[%s425 + $0x18] sm:%s417] %v428
            %v430 = vld [vmem:[%s424 + $0x30] sm:%s417]
            %431 = vst [vmem:[%s425 + $0x30] sm:%s417] %v430
            %v432 = vld [vmem:[%s424 + $0x48] sm:%s417]
            %433 = vst [vmem:[%s425 + $0x48] sm:%s417] %v432
            %v434 = vld [vmem:[%s424 + $0x60] sm:%s417]
            %435 = vst [vmem:[%s425 + $0x60] sm:%s417] %v434
            %v436 = vld [vmem:[%s424 + $0x78] sm:%s417]
            %437 = vst [vmem:[%s425 + $0x78] sm:%s417] %v436
            %v438 = vld [vmem:[%s424 + $0x90] sm:%s417]
            %439 = vst [vmem:[%s425 + $0x90] sm:%s417] %v438
            %v440 = vld [vmem:[%s424 + $0xa8] sm:%s417]
            %441 = vst [vmem:[%s425 + $0xa8] sm:%s417] %v440
            %v442 = vld [vmem:[%s424 + $0xc0] sm:%s417]
            %443 = vst [vmem:[%s425 + $0xc0] sm:%s417] %v442
            %v444 = vld [vmem:[%s424 + $0xd8] sm:%s417]
            %445 = vst [vmem:[%s425 + $0xd8] sm:%s417] %v444
          $region90: #{double_conv_forward.3} parent=84 // loop_footer
            %s423 = sadd.s32 1, %s419
          $region91: #{double_conv_forward.3} parent=84 // loop_footer_branch
            %418 = sbr.rel target = $region87
          $region92: #{double_conv_forward.3} parent=84 // loop_exit
            _
        $region85: #{double_conv_forward.3} parent=76 // pred_fallthru
          _
        // Predicated region
        $region111: #{double_conv_forward.3} parent=76 // pred_check
          _
        $region112: #{double_conv_forward.3} parent=76 // pred_check_branch
          %535 = sbr.rel (0) target = $region114
        $region113: #{double_conv_forward.3} parent=76 // pred_region
          %536 = vsyncadd %s408, 2880
        $region114: #{double_conv_forward.3} parent=76 // pred_fallthru
          _
      $region77: #{double_conv_forward.3} parent=31 // pred_fallthru
        _
      %v537 = vld [vmem:[%s389] sm:$0xff]
      %v538 = vld [vmem:[%s389 + $0x8] sm:$0xff]
      %v539 = vld [vmem:[%s389 + $0x10] sm:$0x3]
      %v540 = vld [vmem:[%s389 + $0x18] sm:$0xff]
      %v541 = vld [vmem:[%s389 + $0x20] sm:$0xff]
      %v542 = vld [vmem:[%s389 + $0x28] sm:$0x3]
      %v543 = vld [vmem:[%s389 + $0x30] sm:$0xff]
      %v544 = vld [vmem:[%s389 + $0x38] sm:$0xff]
      %v545 = vld [vmem:[%s389 + $0x40] sm:$0x3]
      %v546 = vld [vmem:[%s389 + $0x48] sm:$0xff]
      %v547 = vld [vmem:[%s389 + $0x50] sm:$0xff]
      %v548 = vld [vmem:[%s389 + $0x58] sm:$0x3]
      %v549 = vld [vmem:[%s389 + $0x60] sm:$0xff]
      %v550 = vld [vmem:[%s389 + $0x68] sm:$0xff]
      %v551 = vld [vmem:[%s389 + $0x70] sm:$0x3]
      %v552 = vld [vmem:[%s389 + $0x78] sm:$0xff]
      %v553 = vld [vmem:[%s389 + $0x80] sm:$0xff]
      %v554 = vld [vmem:[%s389 + $0x88] sm:$0x3]
      %v555 = vld [vmem:[%s389 + $0x90] sm:$0xff]
      %v556 = vld [vmem:[%s389 + $0x98] sm:$0xff]
      %v557 = vld [vmem:[%s389 + $0xa0] sm:$0x3]
      %v558 = vld [vmem:[%s389 + $0xa8] sm:$0xff]
      %v559 = vld [vmem:[%s389 + $0xb0] sm:$0xff]
      %v560 = vld [vmem:[%s389 + $0xb8] sm:$0x3]
      %v561 = vld [vmem:[%s389 + $0xc0] sm:$0xff]
      %v562 = vld [vmem:[%s389 + $0xc8] sm:$0xff]
      %v563 = vld [vmem:[%s389 + $0xd0] sm:$0x3]
      %v564 = vld [vmem:[%s389 + $0xd8] sm:$0xff]
      %v565 = vld [vmem:[%s389 + $0xe0] sm:$0xff]
      %v566 = vld [vmem:[%s389 + $0xe8] sm:$0x3]
      %v567 = vld [vmem:[%s1] sm:$0xff]
      %v568 = vld [vmem:[%s1 + $0x8] sm:$0xff]
      %v569 = vld [vmem:[%s1 + $0x10] sm:$0xff]
      %v570 = vld [vmem:[%s1 + $0x18] sm:$0xff]
      %v571 = vld [vmem:[%s1 + $0x20] sm:$0xff]
      %v572 = vld [vmem:[%s1 + $0x28] sm:$0xff]
      %v573 = vld [vmem:[%s1 + $0x30] sm:$0xff]
      %v574 = vld [vmem:[%s1 + $0x38] sm:$0xff]
      %v575 = vld [vmem:[%s1 + $0x40] sm:$0xff]
      %v576 = vld [vmem:[%s1 + $0x48] sm:$0xff]
      %v577 = vld [vmem:[%s1 + $0x50] sm:$0xff]
      %v578 = vld [vmem:[%s1 + $0x58] sm:$0xff]
      %v579 = vld [vmem:[%s1 + $0x60] sm:$0xff]
      %v580 = vld [vmem:[%s1 + $0x68] sm:$0xff]
      %v581 = vld [vmem:[%s1 + $0x70] sm:$0xff]
      %v582 = vld [vmem:[%s1 + $0x78] sm:$0xff]
      %v583 = vld [vmem:[%s1 + $0x80] sm:$0xff]
      %v584 = vld [vmem:[%s1 + $0x88] sm:$0xff]
      %v585 = vld [vmem:[%s1 + $0x90] sm:$0xff]
      %v586 = vld [vmem:[%s1 + $0x98] sm:$0xff]
      %v587 = vld [vmem:[%s1 + $0xa0] sm:$0xff]
      %v588 = vld [vmem:[%s1 + $0xa8] sm:$0xff]
      %v589 = vld [vmem:[%s1 + $0xb0] sm:$0xff]
      %v590 = vld [vmem:[%s1 + $0xb8] sm:$0xff]
      %v591 = vld [vmem:[%s1 + $0xc0] sm:$0xff]
      %v592 = vld [vmem:[%s1 + $0xc8] sm:$0xff]
      %v593 = vld [vmem:[%s1 + $0xd0] sm:$0xff]
      %v594 = vld [vmem:[%s1 + $0xd8] sm:$0xff]
      %v595 = vld [vmem:[%s1 + $0xe0] sm:$0xff]
      %v596 = vld [vmem:[%s1 + $0xe8] sm:$0xff]
      %v597 = vld [vmem:[%s1 + $0xf0] sm:$0xff]
      %v598 = vld [vmem:[%s1 + $0xf8] sm:$0xff]
      %v599 = vld [vmem:[%s1 + $0x100] sm:$0xff]
      %v600 = vld [vmem:[%s1 + $0x108] sm:$0xff]
      %v601 = vld [vmem:[%s1 + $0x110] sm:$0xff]
      %v602 = vld [vmem:[%s1 + $0x118] sm:$0xff]
      %v603 = vld [vmem:[%s1 + $0x120] sm:$0xff]
      %v604 = vld [vmem:[%s1 + $0x128] sm:$0xff]
      %v605 = vld [vmem:[%s1 + $0x130] sm:$0xff]
      %v606 = vld [vmem:[%s1 + $0x138] sm:$0xff]
      %v607 = vld [vmem:[%s1 + $0x140] sm:$0xff]
      %v608 = vld [vmem:[%s1 + $0x148] sm:$0xff]
      %v609 = vld [vmem:[%s1 + $0x150] sm:$0xff]
      %v610 = vld [vmem:[%s1 + $0x158] sm:$0xff]
      %v611 = vld [vmem:[%s1 + $0x160] sm:$0xff]
      %v612 = vld [vmem:[%s1 + $0x168] sm:$0xff]
      %v613 = vld [vmem:[%s1 + $0x170] sm:$0xff]
      %v614 = vld [vmem:[%s1 + $0x178] sm:$0xff]
      %v615 = vld [vmem:[%s1 + $0x180] sm:$0xff]
      %v616 = vld [vmem:[%s1 + $0x188] sm:$0xff]
      %v617 = vld [vmem:[%s1 + $0x190] sm:$0xff]
      %v618 = vld [vmem:[%s1 + $0x198] sm:$0xff]
      %v619 = vld [vmem:[%s1 + $0x1a0] sm:$0xff]
      %v620 = vld [vmem:[%s1 + $0x1a8] sm:$0xff]
      %v621 = vld [vmem:[%s1 + $0x1b0] sm:$0xff]
      %v622 = vld [vmem:[%s1 + $0x1b8] sm:$0xff]
      %v623 = vld [vmem:[%s1 + $0x1c0] sm:$0xff]
      %v624 = vld [vmem:[%s1 + $0x1c8] sm:$0xff]
      %v625 = vld [vmem:[%s1 + $0x1d0] sm:$0xff]
      %v626 = vld [vmem:[%s1 + $0x1d8] sm:$0xff]
      %v627 = vld [vmem:[%s1 + $0x1e0] sm:$0xff]
      %v628 = vld [vmem:[%s1 + $0x1e8] sm:$0xff]
      %v629 = vld [vmem:[%s1 + $0x1f0] sm:$0xff]
      %v630 = vld [vmem:[%s1 + $0x1f8] sm:$0xff]
      %v631 = vld [vmem:[%s1 + $0x200] sm:$0xff]
      %v632 = vld [vmem:[%s1 + $0x208] sm:$0xff]
      %v633 = vld [vmem:[%s1 + $0x210] sm:$0xff]
      %v634 = vld [vmem:[%s1 + $0x218] sm:$0xff]
      %v635 = vld [vmem:[%s1 + $0x220] sm:$0xff]
      %v636 = vld [vmem:[%s1 + $0x228] sm:$0xff]
      %v637 = vld [vmem:[%s1 + $0x230] sm:$0xff]
      %v638 = vld [vmem:[%s1 + $0x238] sm:$0xff]
      %v639 = vld [vmem:[%s1 + $0x240] sm:$0xff]
      %v640 = vld [vmem:[%s1 + $0x248] sm:$0xff]
      %v641 = vld [vmem:[%s1 + $0x250] sm:$0xff]
      %v642 = vld [vmem:[%s1 + $0x258] sm:$0xff]
      %v643 = vld [vmem:[%s1 + $0x260] sm:$0xff]
      %v644 = vld [vmem:[%s1 + $0x268] sm:$0xff]
      %v645 = vld [vmem:[%s1 + $0x270] sm:$0xff]
      %v646 = vld [vmem:[%s1 + $0x278] sm:$0xff]
      %v647 = vld [vmem:[%s1 + $0x280] sm:$0xff]
      %v648 = vld [vmem:[%s1 + $0x288] sm:$0xff]
      %v649 = vld [vmem:[%s1 + $0x290] sm:$0xff]
      %v650 = vld [vmem:[%s1 + $0x298] sm:$0xff]
      %v651 = vld [vmem:[%s1 + $0x2a0] sm:$0xff]
      %v652 = vld [vmem:[%s1 + $0x2a8] sm:$0xff]
      %v653 = vld [vmem:[%s1 + $0x2b0] sm:$0xff]
      %v654 = vld [vmem:[%s1 + $0x2b8] sm:$0xff]
      %v655 = vld [vmem:[%s1 + $0x2c0] sm:$0xff]
      %v656 = vld [vmem:[%s1 + $0x2c8] sm:$0xff]
      %v657 = vld [vmem:[%s1 + $0x2d0] sm:$0xff]
      %v658 = vld [vmem:[%s1 + $0x2d8] sm:$0xff]
      %v659 = vld [vmem:[%s1 + $0x2e0] sm:$0xff]
      %v660 = vld [vmem:[%s1 + $0x2e8] sm:$0xff]
      %v661 = vld [vmem:[%s1 + $0x2f0] sm:$0xff]
      %v662 = vld [vmem:[%s1 + $0x2f8] sm:$0xff]
      %v663 = vld [vmem:[%s1 + $0x300] sm:$0xff]
      %v664 = vld [vmem:[%s1 + $0x308] sm:$0xff]
      %v665 = vld [vmem:[%s1 + $0x310] sm:$0xff]
      %v666 = vld [vmem:[%s1 + $0x318] sm:$0xff]
      %v667 = vld [vmem:[%s1 + $0x320] sm:$0xff]
      %v668 = vld [vmem:[%s1 + $0x328] sm:$0xff]
      %v669 = vld [vmem:[%s1 + $0x330] sm:$0xff]
      %v670 = vld [vmem:[%s1 + $0x338] sm:$0xff]
      %v671 = vld [vmem:[%s1 + $0x340] sm:$0xff]
      %v672 = vld [vmem:[%s1 + $0x348] sm:$0xff]
      %v673 = vld [vmem:[%s1 + $0x350] sm:$0xff]
      %v674 = vld [vmem:[%s1 + $0x358] sm:$0xff]
      %v675 = vld [vmem:[%s1 + $0x360] sm:$0xff]
      %v676 = vld [vmem:[%s1 + $0x368] sm:$0xff]
      %v677 = vld [vmem:[%s1 + $0x370] sm:$0xff]
      %v678 = vld [vmem:[%s1 + $0x378] sm:$0xff]
      %v679 = vld [vmem:[%s1 + $0x380] sm:$0xff]
      %v680 = vld [vmem:[%s1 + $0x388] sm:$0xff]
      %v681 = vld [vmem:[%s1 + $0x390] sm:$0xff]
      %v682 = vld [vmem:[%s1 + $0x398] sm:$0xff]
      %v683 = vld [vmem:[%s1 + $0x3a0] sm:$0xff]
      %v684 = vld [vmem:[%s1 + $0x3a8] sm:$0xff]
      %v685 = vld [vmem:[%s1 + $0x3b0] sm:$0xff]
      %v686 = vld [vmem:[%s1 + $0x3b8] sm:$0xff]
      %v687 = vld [vmem:[%s1 + $0x3c0] sm:$0xff]
      %v688 = vld [vmem:[%s1 + $0x3c8] sm:$0xff]
      %v689 = vld [vmem:[%s1 + $0x3d0] sm:$0xff]
      %v690 = vld [vmem:[%s1 + $0x3d8] sm:$0xff]
      %v691 = vld [vmem:[%s1 + $0x3e0] sm:$0xff]
      %v692 = vld [vmem:[%s1 + $0x3e8] sm:$0xff]
      %v693 = vld [vmem:[%s1 + $0x3f0] sm:$0xff]
      %v694 = vld [vmem:[%s1 + $0x3f8] sm:$0xff]
      %v695 = vld [vmem:[%s1 + $0x400] sm:$0xff]
      %v696 = vld [vmem:[%s1 + $0x408] sm:$0xff]
      %v697 = vld [vmem:[%s1 + $0x410] sm:$0xff]
      %v698 = vld [vmem:[%s1 + $0x418] sm:$0xff]
      %v699 = vld [vmem:[%s1 + $0x420] sm:$0xff]
      %v700 = vld [vmem:[%s1 + $0x428] sm:$0xff]
      %v701 = vld [vmem:[%s1 + $0x430] sm:$0xff]
      %v702 = vld [vmem:[%s1 + $0x438] sm:$0xff]
      %v703 = vld [vmem:[%s1 + $0x440] sm:$0xff]
      %v704 = vld [vmem:[%s1 + $0x448] sm:$0xff]
      %v705 = vld [vmem:[%s1 + $0x450] sm:$0xff]
      %v706 = vld [vmem:[%s1 + $0x458] sm:$0xff]
      %v707 = vld [vmem:[%s1 + $0x460] sm:$0xff]
      %v708 = vld [vmem:[%s1 + $0x468] sm:$0xff]
      %v709 = vld [vmem:[%s1 + $0x470] sm:$0xff]
      %v710 = vld [vmem:[%s1 + $0x478] sm:$0xff]
      %vm735 = vcmask 1046528
      %v736 = vrot.slane %v537, 1
      %v737 = vrot.slane %v538, 1
      %v738 = vsel %vm735, %v736, %v737
      %v739 = vrot.slane %v539, 1
      %v740 = vsel %vm735, %v737, %v739
      %v741 = vrot.slane %v540, 1
      %v742 = vrot.slane %v541, 1
      %v743 = vsel %vm735, %v741, %v742
      %v744 = vrot.slane %v542, 1
      %v745 = vsel %vm735, %v742, %v744
      %v746 = vrot.slane %v543, 1
      %v747 = vrot.slane %v544, 1
      %v748 = vsel %vm735, %v746, %v747
      %v749 = vrot.slane %v545, 1
      %v750 = vsel %vm735, %v747, %v749
      %v751 = vrot.slane %v546, 1
      %v752 = vrot.slane %v547, 1
      %v753 = vsel %vm735, %v751, %v752
      %v754 = vrot.slane %v548, 1
      %v755 = vsel %vm735, %v752, %v754
      %v756 = vrot.slane %v549, 1
      %v757 = vrot.slane %v550, 1
      %v758 = vsel %vm735, %v756, %v757
      %v759 = vrot.slane %v551, 1
      %v760 = vsel %vm735, %v757, %v759
      %v761 = vrot.slane %v552, 1
      %v762 = vrot.slane %v553, 1
      %v763 = vsel %vm735, %v761, %v762
      %v764 = vrot.slane %v554, 1
      %v765 = vsel %vm735, %v762, %v764
      %v766 = vrot.slane %v555, 1
      %v767 = vrot.slane %v556, 1
      %v768 = vsel %vm735, %v766, %v767
      %v769 = vrot.slane %v557, 1
      %v770 = vsel %vm735, %v767, %v769
      %v771 = vrot.slane %v558, 1
      %v772 = vrot.slane %v559, 1
      %v773 = vsel %vm735, %v771, %v772
      %v774 = vrot.slane %v560, 1
      %v775 = vsel %vm735, %v772, %v774
      %792 = vmatprep.subr.mxu0 0.0
      %793 = vmatpush1.msra.mxu0 %v583
      %794 = vmatprep.subr.mxu0 0.0
      %795 = vmatpush1.msra.mxu0 %v584
      %796 = vmatprep.subr.mxu0 0.0
      %797 = vmatpush1.msra.mxu0 %v585
      %798 = vmatprep.subr.mxu0 0.0
      %799 = vmatpush1.msra.mxu0 %v586
      %800 = vmatprep.subr.mxu0 0.0
      %801 = vmatpush1.msra.mxu0 %v587
      %802 = vmatprep.subr.mxu0 0.0
      %803 = vmatpush1.msra.mxu0 %v588
      %804 = vmatprep.subr.mxu0 0.0
      %805 = vmatpush1.msra.mxu0 %v589
      %806 = vmatprep.subr.mxu0 0.0
      %807 = vmatpush1.msra.mxu0 %v590
      %808 = vmatprep.subr.mxu0 0.0
      %809 = vmatpush1.msra.mxu0 %v591
      %810 = vmatprep.subr.mxu0 0.0
      %811 = vmatpush1.msra.mxu0 %v592
      %812 = vmatprep.subr.mxu0 0.0
      %813 = vmatpush1.msra.mxu0 %v593
      %814 = vmatprep.subr.mxu0 0.0
      %815 = vmatpush1.msra.mxu0 %v594
      %816 = vmatprep.subr.mxu0 0.0
      %817 = vmatpush1.msra.mxu0 %v595
      %818 = vmatprep.subr.mxu0 0.0
      %819 = vmatpush1.msra.mxu0 %v596
      %820 = vmatprep.subr.mxu0 0.0
      %821 = vmatpush1.msra.mxu0 %v597
      %822 = vmatprep.subr.mxu0 0.0
      %823 = vmatpush1.msra.mxu0 %v598
      %824 = vmatprep.subr.mxu0 0.0
      %825 = vmatpush1.msra.mxu0 0.0
      %826 = vmatprep.subr.mxu0 0.0
      %827 = vmatpush1.msra.mxu0 0.0
      %828 = vmatprep.subr.mxu0 0.0
      %829 = vmatpush1.msra.mxu0 0.0
      %830 = vmatprep.subr.mxu0 0.0
      %831 = vmatpush1.msra.mxu0 0.0
      %832 = vmatprep.subr.mxu0 0.0
      %833 = vmatpush1.msra.mxu0 0.0
      %834 = vmatprep.subr.mxu0 0.0
      %835 = vmatpush1.msra.mxu0 0.0
      %836 = vmatprep.subr.mxu0 0.0
      %837 = vmatpush1.msra.mxu0 0.0
      %838 = vmatprep.subr.mxu0 0.0
      %839 = vmatpush1.msra.mxu0 0.0
      %840 = vmatprep.subr.mxu0 0.0
      %841 = vmatpush1.msra.mxu0 0.0
      %842 = vmatprep.subr.mxu0 0.0
      %843 = vmatpush1.msra.mxu0 0.0
      %844 = vmatprep.subr.mxu0 0.0
      %845 = vmatpush1.msra.mxu0 0.0
      %846 = vmatprep.subr.mxu0 0.0
      %847 = vmatpush1.msra.mxu0 0.0
      %848 = vmatprep.subr.mxu0 0.0
      %849 = vmatpush1.msra.mxu0 0.0
      %850 = vmatprep.subr.mxu0 0.0
      %851 = vmatpush1.msra.mxu0 0.0
      %852 = vmatprep.subr.mxu0 0.0
      %853 = vmatpush1.msra.mxu0 0.0
      %854 = vmatprep.subr.mxu0 0.0
      %855 = vmatpush1.msra.mxu0 0.0
      %856 = vmatprep.mubr.f32.mxu0 0.0
      %857 = vmatmul.mubr.f32.gmra.mrb[0].mxu0 %v738
      %v858 = vpop.f32.mrb[0].mxu0
      %v859 = vadd.f32 0.0, %v858
      %v860 = vpop.f32.mrb[0].mxu0
      %861 = vmatprep.mubr.f32.mxu0 0.0
      %862 = vmatmul.mubr.f32.gmra.mrb[0].mxu0 %v740
      %v863 = vpop.f32.mrb[0].mxu0
      %v864 = vadd.f32 0.0, %v863
      %v865 = vpop.f32.mrb[0].mxu0
      %866 = vmatprep.mubr.f32.mxu0 0.0
      %867 = vmatmul.mubr.f32.gmra.mrb[0].mxu0 %v743
      %v868 = vpop.f32.mrb[0].mxu0
      %v869 = vadd.f32 0.0, %v868
      %v870 = vpop.f32.mrb[0].mxu0
      %871 = vmatprep.mubr.f32.mxu0 0.0
      %872 = vmatmul.mubr.f32.gmra.mrb[0].mxu0 %v745
      %v873 = vpop.f32.mrb[0].mxu0
      %v874 = vadd.f32 0.0, %v873
      %v875 = vpop.f32.mrb[0].mxu0
      %876 = vmatprep.mubr.f32.mxu0 0.0
      %877 = vmatmul.mubr.f32.gmra.mrb[0].mxu0 %v748
      %v878 = vpop.f32.mrb[0].mxu0
      %v879 = vadd.f32 0.0, %v878
      %v880 = vpop.f32.mrb[0].mxu0
      %881 = vmatprep.mubr.f32.mxu0 0.0
      %882 = vmatmul.mubr.f32.gmra.mrb[0].mxu0 %v750
      %v883 = vpop.f32.mrb[0].mxu0
      %v884 = vadd.f32 0.0, %v883
      %v885 = vpop.f32.mrb[0].mxu0
      %886 = vmatprep.mubr.f32.mxu0 0.0
      %887 = vmatmul.mubr.f32.gmra.mrb[0].mxu0 %v753
      %v888 = vpop.f32.mrb[0].mxu0
      %v889 = vadd.f32 0.0, %v888
      %v890 = vpop.f32.mrb[0].mxu0
      %891 = vmatprep.mubr.f32.mxu0 0.0
      %892 = vmatmul.mubr.f32.gmra.mrb[0].mxu0 %v755
      %v893 = vpop.f32.mrb[0].mxu0
      %v894 = vadd.f32 0.0, %v893
      %v895 = vpop.f32.mrb[0].mxu0
      %896 = vmatprep.mubr.f32.mxu0 0.0
      %897 = vmatmul.mubr.f32.gmra.mrb[0].mxu0 %v758
      %v898 = vpop.f32.mrb[0].mxu0
      %v899 = vadd.f32 0.0, %v898
      %v900 = vpop.f32.mrb[0].mxu0
      %901 = vmatprep.mubr.f32.mxu0 0.0
      %902 = vmatmul.mubr.f32.gmra.mrb[0].mxu0 %v760
      %v903 = vpop.f32.mrb[0].mxu0
      %v904 = vadd.f32 0.0, %v903
      %v905 = vpop.f32.mrb[0].mxu0
      %906 = vmatprep.mubr.f32.mxu0 0.0
      %907 = vmatmul.mubr.f32.gmra.mrb[0].mxu0 %v763
      %v908 = vpop.f32.mrb[0].mxu0
      %v909 = vadd.f32 0.0, %v908
      %v910 = vpop.f32.mrb[0].mxu0
      %911 = vmatprep.mubr.f32.mxu0 0.0
      %912 = vmatmul.mubr.f32.gmra.mrb[0].mxu0 %v765
      %v913 = vpop.f32.mrb[0].mxu0
      %v914 = vadd.f32 0.0, %v913
      %v915 = vpop.f32.mrb[0].mxu0
      %916 = vmatprep.mubr.f32.mxu0 0.0
      %917 = vmatmul.mubr.f32.gmra.mrb[0].mxu0 %v768
      %v918 = vpop.f32.mrb[0].mxu0
      %v919 = vadd.f32 0.0, %v918
      %v920 = vpop.f32.mrb[0].mxu0
      %921 = vmatprep.mubr.f32.mxu0 0.0
      %922 = vmatmul.mubr.f32.gmra.mrb[0].mxu0 %v770
      %v923 = vpop.f32.mrb[0].mxu0
      %v924 = vadd.f32 0.0, %v923
      %v925 = vpop.f32.mrb[0].mxu0
      %926 = vmatprep.mubr.f32.mxu0 0.0
      %927 = vmatmul.mubr.f32.gmra.mrb[0].mxu0 %v773
      %v928 = vpop.f32.mrb[0].mxu0
      %v929 = vadd.f32 0.0, %v928
      %v930 = vpop.f32.mrb[0].mxu0
      %931 = vmatprep.mubr.f32.mxu0 0.0
      %932 = vmatmul.mubr.f32.gmra.mrb[0].mxu0 %v775
      %v933 = vpop.f32.mrb[0].mxu0
      %v934 = vadd.f32 0.0, %v933
      %v935 = vpop.f32.mrb[0].mxu0
      %936 = vdwg.mxu0
      %937 = vmatprep.subr.mxu0 0.0
      %938 = vmatpush1.msra.mxu0 %v567
      %939 = vmatprep.subr.mxu0 0.0
      %940 = vmatpush1.msra.mxu0 %v568
      %941 = vmatprep.subr.mxu0 0.0
      %942 = vmatpush1.msra.mxu0 %v569
      %943 = vmatprep.subr.mxu0 0.0
      %944 = vmatpush1.msra.mxu0 %v570
      %945 = vmatprep.subr.mxu0 0.0
      %946 = vmatpush1.msra.mxu0 %v571
      %947 = vmatprep.subr.mxu0 0.0
      %948 = vmatpush1.msra.mxu0 %v572
      %949 = vmatprep.subr.mxu0 0.0
      %950 = vmatpush1.msra.mxu0 %v573
      %951 = vmatprep.subr.mxu0 0.0
      %952 = vmatpush1.msra.mxu0 %v574
      %953 = vmatprep.subr.mxu0 0.0
      %954 = vmatpush1.msra.mxu0 %v575
      %955 = vmatprep.subr.mxu0 0.0
      %956 = vmatpush1.msra.mxu0 %v576
      %957 = vmatprep.subr.mxu0 0.0
      %958 = vmatpush1.msra.mxu0 %v577
      %959 = vmatprep.subr.mxu0 0.0
      %960 = vmatpush1.msra.mxu0 %v578
      %961 = vmatprep.subr.mxu0 0.0
      %962 = vmatpush1.msra.mxu0 %v579
      %963 = vmatprep.subr.mxu0 0.0
      %964 = vmatpush1.msra.mxu0 %v580
      %965 = vmatprep.subr.mxu0 0.0
      %966 = vmatpush1.msra.mxu0 %v581
      %967 = vmatprep.subr.mxu0 0.0
      %968 = vmatpush1.msra.mxu0 %v582
      %969 = vmatprep.subr.mxu0 0.0
      %970 = vmatpush1.msra.mxu0 0.0
      %971 = vmatprep.subr.mxu0 0.0
      %972 = vmatpush1.msra.mxu0 0.0
      %973 = vmatprep.subr.mxu0 0.0
      %974 = vmatpush1.msra.mxu0 0.0
      %975 = vmatprep.subr.mxu0 0.0
      %976 = vmatpush1.msra.mxu0 0.0
      %977 = vmatprep.subr.mxu0 0.0
      %978 = vmatpush1.msra.mxu0 0.0
      %979 = vmatprep.subr.mxu0 0.0
      %980 = vmatpush1.msra.mxu0 0.0
      %981 = vmatprep.subr.mxu0 0.0
      %982 = vmatpush1.msra.mxu0 0.0
      %983 = vmatprep.subr.mxu0 0.0
      %984 = vmatpush1.msra.mxu0 0.0
      %985 = vmatprep.subr.mxu0 0.0
      %986 = vmatpush1.msra.mxu0 0.0
      %987 = vmatprep.subr.mxu0 0.0
      %988 = vmatpush1.msra.mxu0 0.0
      %989 = vmatprep.subr.mxu0 0.0
      %990 = vmatpush1.msra.mxu0 0.0
      %991 = vmatprep.subr.mxu0 0.0
      %992 = vmatpush1.msra.mxu0 0.0
      %993 = vmatprep.subr.mxu0 0.0
      %994 = vmatpush1.msra.mxu0 0.0
      %995 = vmatprep.subr.mxu0 0.0
      %996 = vmatpush1.msra.mxu0 0.0
      %997 = vmatprep.subr.mxu0 0.0
      %998 = vmatpush1.msra.mxu0 0.0
      %999 = vmatprep.subr.mxu0 0.0
      %1000 = vmatpush1.msra.mxu0 0.0
      %1001 = vmatprep.mubr.f32.mxu0 0.0
      %1002 = vmatmul.mubr.f32.gmra.mrb[0].mxu0 %v537
      %v1003 = vpop.f32.mrb[0].mxu0
      %v1004 = vadd.f32 %v859, %v1003
      %v1005 = vpop.f32.mrb[0].mxu0
      %1006 = vmatprep.mubr.f32.mxu0 0.0
      %1007 = vmatmul.mubr.f32.gmra.mrb[0].mxu0 %v538
      %v1008 = vpop.f32.mrb[0].mxu0
      %v1009 = vadd.f32 %v864, %v1008
      %v1010 = vpop.f32.mrb[0].mxu0
      %1011 = vmatprep.mubr.f32.mxu0 0.0
      %1012 = vmatmul.mubr.f32.gmra.mrb[0].mxu0 %v540
      %v1013 = vpop.f32.mrb[0].mxu0
      %v1014 = vadd.f32 %v869, %v1013
      %v1015 = vpop.f32.mrb[0].mxu0
      %1016 = vmatprep.mubr.f32.mxu0 0.0
      %1017 = vmatmul.mubr.f32.gmra.mrb[0].mxu0 %v541
      %v1018 = vpop.f32.mrb[0].mxu0
      %v1019 = vadd.f32 %v874, %v1018
      %v1020 = vpop.f32.mrb[0].mxu0
      %1021 = vmatprep.mubr.f32.mxu0 0.0
      %1022 = vmatmul.mubr.f32.gmra.mrb[0].mxu0 %v543
      %v1023 = vpop.f32.mrb[0].mxu0
      %v1024 = vadd.f32 %v879, %v1023
      %v1025 = vpop.f32.mrb[0].mxu0
      %1026 = vmatprep.mubr.f32.mxu0 0.0
      %1027 = vmatmul.mubr.f32.gmra.mrb[0].mxu0 %v544
      %v1028 = vpop.f32.mrb[0].mxu0
      %v1029 = vadd.f32 %v884, %v1028
      %v1030 = vpop.f32.mrb[0].mxu0
      %1031 = vmatprep.mubr.f32.mxu0 0.0
      %1032 = vmatmul.mubr.f32.gmra.mrb[0].mxu0 %v546
      %v1033 = vpop.f32.mrb[0].mxu0
      %v1034 = vadd.f32 %v889, %v1033
      %v1035 = vpop.f32.mrb[0].mxu0
      %1036 = vmatprep.mubr.f32.mxu0 0.0
      %1037 = vmatmul.mubr.f32.gmra.mrb[0].mxu0 %v547
      %v1038 = vpop.f32.mrb[0].mxu0
      %v1039 = vadd.f32 %v894, %v1038
      %v1040 = vpop.f32.mrb[0].mxu0
      %1041 = vmatprep.mubr.f32.mxu0 0.0
      %1042 = vmatmul.mubr.f32.gmra.mrb[0].mxu0 %v549
      %v1043 = vpop.f32.mrb[0].mxu0
      %v1044 = vadd.f32 %v899, %v1043
      %v1045 = vpop.f32.mrb[0].mxu0
      %1046 = vmatprep.mubr.f32.mxu0 0.0
      %1047 = vmatmul.mubr.f32.gmra.mrb[0].mxu0 %v550
      %v1048 = vpop.f32.mrb[0].mxu0
      %v1049 = vadd.f32 %v904, %v1048
      %v1050 = vpop.f32.mrb[0].mxu0
      %1051 = vmatprep.mubr.f32.mxu0 0.0
      %1052 = vmatmul.mubr.f32.gmra.mrb[0].mxu0 %v552
      %v1053 = vpop.f32.mrb[0].mxu0
      %v1054 = vadd.f32 %v909, %v1053
      %v1055 = vpop.f32.mrb[0].mxu0
      %1056 = vmatprep.mubr.f32.mxu0 0.0
      %1057 = vmatmul.mubr.f32.gmra.mrb[0].mxu0 %v553
      %v1058 = vpop.f32.mrb[0].mxu0
      %v1059 = vadd.f32 %v914, %v1058
      %v1060 = vpop.f32.mrb[0].mxu0
      %1061 = vmatprep.mubr.f32.mxu0 0.0
      %1062 = vmatmul.mubr.f32.gmra.mrb[0].mxu0 %v555
      %v1063 = vpop.f32.mrb[0].mxu0
      %v1064 = vadd.f32 %v919, %v1063
      %v1065 = vpop.f32.mrb[0].mxu0
      %1066 = vmatprep.mubr.f32.mxu0 0.0
      %1067 = vmatmul.mubr.f32.gmra.mrb[0].mxu0 %v556
      %v1068 = vpop.f32.mrb[0].mxu0
      %v1069 = vadd.f32 %v924, %v1068
      %v1070 = vpop.f32.mrb[0].mxu0
      %1071 = vmatprep.mubr.f32.mxu0 0.0
      %1072 = vmatmul.mubr.f32.gmra.mrb[0].mxu0 %v558
      %v1073 = vpop.f32.mrb[0].mxu0
      %v1074 = vadd.f32 %v929, %v1073
      %v1075 = vpop.f32.mrb[0].mxu0
      %1076 = vmatprep.mubr.f32.mxu0 0.0
      %1077 = vmatmul.mubr.f32.gmra.mrb[0].mxu0 %v559
      %v1078 = vpop.f32.mrb[0].mxu0
      %v1079 = vadd.f32 %v934, %v1078
      %v1080 = vpop.f32.mrb[0].mxu0
      %1081 = vdwg.mxu0
      %vm1082 = vcmask 1045504
      %v1083 = vrot.slane %v537, 2
      %v1084 = vrot.slane %v538, 2
      %v1085 = vsel %vm1082, %v1083, %v1084
      %v1086 = vrot.slane %v539, 2
      %v1087 = vsel %vm1082, %v1084, %v1086
      %v1088 = vrot.slane %v540, 2
      %v1089 = vrot.slane %v541, 2
      %v1090 = vsel %vm1082, %v1088, %v1089
      %v1091 = vrot.slane %v542, 2
      %v1092 = vsel %vm1082, %v1089, %v1091
      %v1093 = vrot.slane %v543, 2
      %v1094 = vrot.slane %v544, 2
      %v1095 = vsel %vm1082, %v1093, %v1094
      %v1096 = vrot.slane %v545, 2
      %v1097 = vsel %vm1082, %v1094, %v1096
      %v1098 = vrot.slane %v546, 2
      %v1099 = vrot.slane %v547, 2
      %v1100 = vsel %vm1082, %v1098, %v1099
      %v1101 = vrot.slane %v548, 2
      %v1102 = vsel %vm1082, %v1099, %v1101
      %v1103 = vrot.slane %v549, 2
      %v1104 = vrot.slane %v550, 2
      %v1105 = vsel %vm1082, %v1103, %v1104
      %v1106 = vrot.slane %v551, 2
      %v1107 = vsel %vm1082, %v1104, %v1106
      %v1108 = vrot.slane %v552, 2
      %v1109 = vrot.slane %v553, 2
      %v1110 = vsel %vm1082, %v1108, %v1109
      %v1111 = vrot.slane %v554, 2
      %v1112 = vsel %vm1082, %v1109, %v1111
      %v1113 = vrot.slane %v555, 2
      %v1114 = vrot.slane %v556, 2
      %v1115 = vsel %vm1082, %v1113, %v1114
      %v1116 = vrot.slane %v557, 2
      %v1117 = vsel %vm1082, %v1114, %v1116
      %v1118 = vrot.slane %v558, 2
      %v1119 = vrot.slane %v559, 2
      %v1120 = vsel %vm1082, %v1118, %v1119
      %v1121 = vrot.slane %v560, 2
      %v1122 = vsel %vm1082, %v1119, %v1121
      %1139 = vmatprep.subr.mxu0 0.0
      %1140 = vmatpush1.msra.mxu0 %v599
      %1141 = vmatprep.subr.mxu0 0.0
      %1142 = vmatpush1.msra.mxu0 %v600
      %1143 = vmatprep.subr.mxu0 0.0
      %1144 = vmatpush1.msra.mxu0 %v601
      %1145 = vmatprep.subr.mxu0 0.0
      %1146 = vmatpush1.msra.mxu0 %v602
      %1147 = vmatprep.subr.mxu0 0.0
      %1148 = vmatpush1.msra.mxu0 %v603
      %1149 = vmatprep.subr.mxu0 0.0
      %1150 = vmatpush1.msra.mxu0 %v604
      %1151 = vmatprep.subr.mxu0 0.0
      %1152 = vmatpush1.msra.mxu0 %v605
      %1153 = vmatprep.subr.mxu0 0.0
      %1154 = vmatpush1.msra.mxu0 %v606
      %1155 = vmatprep.subr.mxu0 0.0
      %1156 = vmatpush1.msra.mxu0 %v607
      %1157 = vmatprep.subr.mxu0 0.0
      %1158 = vmatpush1.msra.mxu0 %v608
      %1159 = vmatprep.subr.mxu0 0.0
      %1160 = vmatpush1.msra.mxu0 %v609
      %1161 = vmatprep.subr.mxu0 0.0
      %1162 = vmatpush1.msra.mxu0 %v610
      %1163 = vmatprep.subr.mxu0 0.0
      %1164 = vmatpush1.msra.mxu0 %v611
      %1165 = vmatprep.subr.mxu0 0.0
      %1166 = vmatpush1.msra.mxu0 %v612
      %1167 = vmatprep.subr.mxu0 0.0
      %1168 = vmatpush1.msra.mxu0 %v613
      %1169 = vmatprep.subr.mxu0 0.0
      %1170 = vmatpush1.msra.mxu0 %v614
      %1171 = vmatprep.subr.mxu0 0.0
      %1172 = vmatpush1.msra.mxu0 0.0
      %1173 = vmatprep.subr.mxu0 0.0
      %1174 = vmatpush1.msra.mxu0 0.0
      %1175 = vmatprep.subr.mxu0 0.0
      %1176 = vmatpush1.msra.mxu0 0.0
      %1177 = vmatprep.subr.mxu0 0.0
      %1178 = vmatpush1.msra.mxu0 0.0
      %1179 = vmatprep.subr.mxu0 0.0
      %1180 = vmatpush1.msra.mxu0 0.0
      %1181 = vmatprep.subr.mxu0 0.0
      %1182 = vmatpush1.msra.mxu0 0.0
      %1183 = vmatprep.subr.mxu0 0.0
      %1184 = vmatpush1.msra.mxu0 0.0
      %1185 = vmatprep.subr.mxu0 0.0
      %1186 = vmatpush1.msra.mxu0 0.0
      %1187 = vmatprep.subr.mxu0 0.0
      %1188 = vmatpush1.msra.mxu0 0.0
      %1189 = vmatprep.subr.mxu0 0.0
      %1190 = vmatpush1.msra.mxu0 0.0
      %1191 = vmatprep.subr.mxu0 0.0
      %1192 = vmatpush1.msra.mxu0 0.0
      %1193 = vmatprep.subr.mxu0 0.0
      %1194 = vmatpush1.msra.mxu0 0.0
      %1195 = vmatprep.subr.mxu0 0.0
      %1196 = vmatpush1.msra.mxu0 0.0
      %1197 = vmatprep.subr.mxu0 0.0
      %1198 = vmatpush1.msra.mxu0 0.0
      %1199 = vmatprep.subr.mxu0 0.0
      %1200 = vmatpush1.msra.mxu0 0.0
      %1201 = vmatprep.subr.mxu0 0.0
      %1202 = vmatpush1.msra.mxu0 0.0
      %1203 = vmatprep.mubr.f32.mxu0 0.0
      %1204 = vmatmul.mubr.f32.gmra.mrb[0].mxu0 %v1085
      %v1205 = vpop.f32.mrb[0].mxu0
      %v1206 = vadd.f32 0.0, %v1205
      %v1207 = vpop.f32.mrb[0].mxu0
      %1208 = vmatprep.mubr.f32.mxu0 0.0
      %1209 = vmatmul.mubr.f32.gmra.mrb[0].mxu0 %v1087
      %v1210 = vpop.f32.mrb[0].mxu0
      %v1211 = vadd.f32 0.0, %v1210
      %v1212 = vpop.f32.mrb[0].mxu0
      %1213 = vmatprep.mubr.f32.mxu0 0.0
      %1214 = vmatmul.mubr.f32.gmra.mrb[0].mxu0 %v1090
      %v1215 = vpop.f32.mrb[0].mxu0
      %v1216 = vadd.f32 0.0, %v1215
      %v1217 = vpop.f32.mrb[0].mxu0
      %1218 = vmatprep.mubr.f32.mxu0 0.0
      %1219 = vmatmul.mubr.f32.gmra.mrb[0].mxu0 %v1092
      %v1220 = vpop.f32.mrb[0].mxu0
      %v1221 = vadd.f32 0.0, %v1220
      %v1222 = vpop.f32.mrb[0].mxu0
      %1223 = vmatprep.mubr.f32.mxu0 0.0
      %1224 = vmatmul.mubr.f32.gmra.mrb[0].mxu0 %v1095
      %v1225 = vpop.f32.mrb[0].mxu0
      %v1226 = vadd.f32 0.0, %v1225
      %v1227 = vpop.f32.mrb[0].mxu0
      %1228 = vmatprep.mubr.f32.mxu0 0.0
      %1229 = vmatmul.mubr.f32.gmra.mrb[0].mxu0 %v1097
      %v1230 = vpop.f32.mrb[0].mxu0
      %v1231 = vadd.f32 0.0, %v1230
      %v1232 = vpop.f32.mrb[0].mxu0
      %1233 = vmatprep.mubr.f32.mxu0 0.0
      %1234 = vmatmul.mubr.f32.gmra.mrb[0].mxu0 %v1100
      %v1235 = vpop.f32.mrb[0].mxu0
      %v1236 = vadd.f32 0.0, %v1235
      %v1237 = vpop.f32.mrb[0].mxu0
      %1238 = vmatprep.mubr.f32.mxu0 0.0
      %1239 = vmatmul.mubr.f32.gmra.mrb[0].mxu0 %v1102
      %v1240 = vpop.f32.mrb[0].mxu0
      %v1241 = vadd.f32 0.0, %v1240
      %v1242 = vpop.f32.mrb[0].mxu0
      %1243 = vmatprep.mubr.f32.mxu0 0.0
      %1244 = vmatmul.mubr.f32.gmra.mrb[0].mxu0 %v1105
      %v1245 = vpop.f32.mrb[0].mxu0
      %v1246 = vadd.f32 0.0, %v1245
      %v1247 = vpop.f32.mrb[0].mxu0
      %1248 = vmatprep.mubr.f32.mxu0 0.0
      %1249 = vmatmul.mubr.f32.gmra.mrb[0].mxu0 %v1107
      %v1250 = vpop.f32.mrb[0].mxu0
      %v1251 = vadd.f32 0.0, %v1250
      %v1252 = vpop.f32.mrb[0].mxu0
      %1253 = vmatprep.mubr.f32.mxu0 0.0
      %1254 = vmatmul.mubr.f32.gmra.mrb[0].mxu0 %v1110
      %v1255 = vpop.f32.mrb[0].mxu0
      %v1256 = vadd.f32 0.0, %v1255
      %v1257 = vpop.f32.mrb[0].mxu0
      %1258 = vmatprep.mubr.f32.mxu0 0.0
      %1259 = vmatmul.mubr.f32.gmra.mrb[0].mxu0 %v1112
      %v1260 = vpop.f32.mrb[0].mxu0
      %v1261 = vadd.f32 0.0, %v1260
      %v1262 = vpop.f32.mrb[0].mxu0
      %1263 = vmatprep.mubr.f32.mxu0 0.0
      %1264 = vmatmul.mubr.f32.gmra.mrb[0].mxu0 %v1115
      %v1265 = vpop.f32.mrb[0].mxu0
      %v1266 = vadd.f32 0.0, %v1265
      %v1267 = vpop.f32.mrb[0].mxu0
      %1268 = vmatprep.mubr.f32.mxu0 0.0
      %1269 = vmatmul.mubr.f32.gmra.mrb[0].mxu0 %v1117
      %v1270 = vpop.f32.mrb[0].mxu0
      %v1271 = vadd.f32 0.0, %v1270
      %v1272 = vpop.f32.mrb[0].mxu0
      %1273 = vmatprep.mubr.f32.mxu0 0.0
      %1274 = vmatmul.mubr.f32.gmra.mrb[0].mxu0 %v1120
      %v1275 = vpop.f32.mrb[0].mxu0
      %v1276 = vadd.f32 0.0, %v1275
      %v1277 = vpop.f32.mrb[0].mxu0
      %1278 = vmatprep.mubr.f32.mxu0 0.0
      %1279 = vmatmul.mubr.f32.gmra.mrb[0].mxu0 %v1122
      %v1280 = vpop.f32.mrb[0].mxu0
      %v1281 = vadd.f32 0.0, %v1280
      %v1282 = vpop.f32.mrb[0].mxu0
      %1283 = vdwg.mxu0
      %v1284 = vadd.f32 %v1004, %v1206
      %v1285 = vadd.f32 %v1009, %v1211
      %v1286 = vadd.f32 %v1014, %v1216
      %v1287 = vadd.f32 %v1019, %v1221
      %v1288 = vadd.f32 %v1024, %v1226
      %v1289 = vadd.f32 %v1029, %v1231
      %v1290 = vadd.f32 %v1034, %v1236
      %v1291 = vadd.f32 %v1039, %v1241
      %v1292 = vadd.f32 %v1044, %v1246
      %v1293 = vadd.f32 %v1049, %v1251
      %v1294 = vadd.f32 %v1054, %v1256
      %v1295 = vadd.f32 %v1059, %v1261
      %v1296 = vadd.f32 %v1064, %v1266
      %v1297 = vadd.f32 %v1069, %v1271
      %v1298 = vadd.f32 %v1074, %v1276
      %v1299 = vadd.f32 %v1079, %v1281
      %1300 = vmatprep.subr.mxu0 0.0
      %1301 = vmatpush1.msra.mxu0 %v615
      %1302 = vmatprep.subr.mxu0 0.0
      %1303 = vmatpush1.msra.mxu0 %v616
      %1304 = vmatprep.subr.mxu0 0.0
      %1305 = vmatpush1.msra.mxu0 %v617
      %1306 = vmatprep.subr.mxu0 0.0
      %1307 = vmatpush1.msra.mxu0 %v618
      %1308 = vmatprep.subr.mxu0 0.0
      %1309 = vmatpush1.msra.mxu0 %v619
      %1310 = vmatprep.subr.mxu0 0.0
      %1311 = vmatpush1.msra.mxu0 %v620
      %1312 = vmatprep.subr.mxu0 0.0
      %1313 = vmatpush1.msra.mxu0 %v621
      %1314 = vmatprep.subr.mxu0 0.0
      %1315 = vmatpush1.msra.mxu0 %v622
      %1316 = vmatprep.subr.mxu0 0.0
      %1317 = vmatpush1.msra.mxu0 %v623
      %1318 = vmatprep.subr.mxu0 0.0
      %1319 = vmatpush1.msra.mxu0 %v624
      %1320 = vmatprep.subr.mxu0 0.0
      %1321 = vmatpush1.msra.mxu0 %v625
      %1322 = vmatprep.subr.mxu0 0.0
      %1323 = vmatpush1.msra.mxu0 %v626
      %1324 = vmatprep.subr.mxu0 0.0
      %1325 = vmatpush1.msra.mxu0 %v627
      %1326 = vmatprep.subr.mxu0 0.0
      %1327 = vmatpush1.msra.mxu0 %v628
      %1328 = vmatprep.subr.mxu0 0.0
      %1329 = vmatpush1.msra.mxu0 %v629
      %1330 = vmatprep.subr.mxu0 0.0
      %1331 = vmatpush1.msra.mxu0 %v630
      %1332 = vmatprep.subr.mxu0 0.0
      %1333 = vmatpush1.msra.mxu0 0.0
      %1334 = vmatprep.subr.mxu0 0.0
      %1335 = vmatpush1.msra.mxu0 0.0
      %1336 = vmatprep.subr.mxu0 0.0
      %1337 = vmatpush1.msra.mxu0 0.0
      %1338 = vmatprep.subr.mxu0 0.0
      %1339 = vmatpush1.msra.mxu0 0.0
      %1340 = vmatprep.subr.mxu0 0.0
      %1341 = vmatpush1.msra.mxu0 0.0
      %1342 = vmatprep.subr.mxu0 0.0
      %1343 = vmatpush1.msra.mxu0 0.0
      %1344 = vmatprep.subr.mxu0 0.0
      %1345 = vmatpush1.msra.mxu0 0.0
      %1346 = vmatprep.subr.mxu0 0.0
      %1347 = vmatpush1.msra.mxu0 0.0
      %1348 = vmatprep.subr.mxu0 0.0
      %1349 = vmatpush1.msra.mxu0 0.0
      %1350 = vmatprep.subr.mxu0 0.0
      %1351 = vmatpush1.msra.mxu0 0.0
      %1352 = vmatprep.subr.mxu0 0.0
      %1353 = vmatpush1.msra.mxu0 0.0
      %1354 = vmatprep.subr.mxu0 0.0
      %1355 = vmatpush1.msra.mxu0 0.0
      %1356 = vmatprep.subr.mxu0 0.0
      %1357 = vmatpush1.msra.mxu0 0.0
      %1358 = vmatprep.subr.mxu0 0.0
      %1359 = vmatpush1.msra.mxu0 0.0
      %1360 = vmatprep.subr.mxu0 0.0
      %1361 = vmatpush1.msra.mxu0 0.0
      %1362 = vmatprep.subr.mxu0 0.0
      %1363 = vmatpush1.msra.mxu0 0.0
      %1364 = vmatprep.mubr.f32.mxu0 0.0
      %1365 = vmatmul.mubr.f32.gmra.mrb[0].mxu0 %v540
      %v1366 = vpop.f32.mrb[0].mxu0
      %v1367 = vadd.f32 0.0, %v1366
      %v1368 = vpop.f32.mrb[0].mxu0
      %1369 = vmatprep.mubr.f32.mxu0 0.0
      %1370 = vmatmul.mubr.f32.gmra.mrb[0].mxu0 %v541
      %v1371 = vpop.f32.mrb[0].mxu0
      %v1372 = vadd.f32 0.0, %v1371
      %v1373 = vpop.f32.mrb[0].mxu0
      %1374 = vmatprep.mubr.f32.mxu0 0.0
      %1375 = vmatmul.mubr.f32.gmra.mrb[0].mxu0 %v543
      %v1376 = vpop.f32.mrb[0].mxu0
      %v1377 = vadd.f32 0.0, %v1376
      %v1378 = vpop.f32.mrb[0].mxu0
      %1379 = vmatprep.mubr.f32.mxu0 0.0
      %1380 = vmatmul.mubr.f32.gmra.mrb[0].mxu0 %v544
      %v1381 = vpop.f32.mrb[0].mxu0
      %v1382 = vadd.f32 0.0, %v1381
      %v1383 = vpop.f32.mrb[0].mxu0
      %1384 = vmatprep.mubr.f32.mxu0 0.0
      %1385 = vmatmul.mubr.f32.gmra.mrb[0].mxu0 %v546
      %v1386 = vpop.f32.mrb[0].mxu0
      %v1387 = vadd.f32 0.0, %v1386
      %v1388 = vpop.f32.mrb[0].mxu0
      %1389 = vmatprep.mubr.f32.mxu0 0.0
      %1390 = vmatmul.mubr.f32.gmra.mrb[0].mxu0 %v547
      %v1391 = vpop.f32.mrb[0].mxu0
      %v1392 = vadd.f32 0.0, %v1391
      %v1393 = vpop.f32.mrb[0].mxu0
      %1394 = vmatprep.mubr.f32.mxu0 0.0
      %1395 = vmatmul.mubr.f32.gmra.mrb[0].mxu0 %v549
      %v1396 = vpop.f32.mrb[0].mxu0
      %v1397 = vadd.f32 0.0, %v1396
      %v1398 = vpop.f32.mrb[0].mxu0
      %1399 = vmatprep.mubr.f32.mxu0 0.0
      %1400 = vmatmul.mubr.f32.gmra.mrb[0].mxu0 %v550
      %v1401 = vpop.f32.mrb[0].mxu0
      %v1402 = vadd.f32 0.0, %v1401
      %v1403 = vpop.f32.mrb[0].mxu0
      %1404 = vmatprep.mubr.f32.mxu0 0.0
      %1405 = vmatmul.mubr.f32.gmra.mrb[0].mxu0 %v552
      %v1406 = vpop.f32.mrb[0].mxu0
      %v1407 = vadd.f32 0.0, %v1406
      %v1408 = vpop.f32.mrb[0].mxu0
      %1409 = vmatprep.mubr.f32.mxu0 0.0
      %1410 = vmatmul.mubr.f32.gmra.mrb[0].mxu0 %v553
      %v1411 = vpop.f32.mrb[0].mxu0
      %v1412 = vadd.f32 0.0, %v1411
      %v1413 = vpop.f32.mrb[0].mxu0
      %1414 = vmatprep.mubr.f32.mxu0 0.0
      %1415 = vmatmul.mubr.f32.gmra.mrb[0].mxu0 %v555
      %v1416 = vpop.f32.mrb[0].mxu0
      %v1417 = vadd.f32 0.0, %v1416
      %v1418 = vpop.f32.mrb[0].mxu0
      %1419 = vmatprep.mubr.f32.mxu0 0.0
      %1420 = vmatmul.mubr.f32.gmra.mrb[0].mxu0 %v556
      %v1421 = vpop.f32.mrb[0].mxu0
      %v1422 = vadd.f32 0.0, %v1421
      %v1423 = vpop.f32.mrb[0].mxu0
      %1424 = vmatprep.mubr.f32.mxu0 0.0
      %1425 = vmatmul.mubr.f32.gmra.mrb[0].mxu0 %v558
      %v1426 = vpop.f32.mrb[0].mxu0
      %v1427 = vadd.f32 0.0, %v1426
      %v1428 = vpop.f32.mrb[0].mxu0
      %1429 = vmatprep.mubr.f32.mxu0 0.0
      %1430 = vmatmul.mubr.f32.gmra.mrb[0].mxu0 %v559
      %v1431 = vpop.f32.mrb[0].mxu0
      %v1432 = vadd.f32 0.0, %v1431
      %v1433 = vpop.f32.mrb[0].mxu0
      %1434 = vmatprep.mubr.f32.mxu0 0.0
      %1435 = vmatmul.mubr.f32.gmra.mrb[0].mxu0 %v561
      %v1436 = vpop.f32.mrb[0].mxu0
      %v1437 = vadd.f32 0.0, %v1436
      %v1438 = vpop.f32.mrb[0].mxu0
      %1439 = vmatprep.mubr.f32.mxu0 0.0
      %1440 = vmatmul.mubr.f32.gmra.mrb[0].mxu0 %v562
      %v1441 = vpop.f32.mrb[0].mxu0
      %v1442 = vadd.f32 0.0, %v1441
      %v1443 = vpop.f32.mrb[0].mxu0
      %1444 = vdwg.mxu0
      %v1445 = vadd.f32 %v1284, %v1367
      %v1446 = vadd.f32 %v1285, %v1372
      %v1447 = vadd.f32 %v1286, %v1377
      %v1448 = vadd.f32 %v1287, %v1382
      %v1449 = vadd.f32 %v1288, %v1387
      %v1450 = vadd.f32 %v1289, %v1392
      %v1451 = vadd.f32 %v1290, %v1397
      %v1452 = vadd.f32 %v1291, %v1402
      %v1453 = vadd.f32 %v1292, %v1407
      %v1454 = vadd.f32 %v1293, %v1412
      %v1455 = vadd.f32 %v1294, %v1417
      %v1456 = vadd.f32 %v1295, %v1422
      %v1457 = vadd.f32 %v1296, %v1427
      %v1458 = vadd.f32 %v1297, %v1432
      %v1459 = vadd.f32 %v1298, %v1437
      %v1460 = vadd.f32 %v1299, %v1442
      %v1464 = vrot.slane %v561, 1
      %v1465 = vrot.slane %v562, 1
      %v1466 = vsel %vm735, %v1464, %v1465
      %v1467 = vrot.slane %v563, 1
      %v1468 = vsel %vm735, %v1465, %v1467
      %1471 = vmatprep.subr.mxu0 0.0
      %1472 = vmatpush1.msra.mxu0 %v631
      %1473 = vmatprep.subr.mxu0 0.0
      %1474 = vmatpush1.msra.mxu0 %v632
      %1475 = vmatprep.subr.mxu0 0.0
      %1476 = vmatpush1.msra.mxu0 %v633
      %1477 = vmatprep.subr.mxu0 0.0
      %1478 = vmatpush1.msra.mxu0 %v634
      %1479 = vmatprep.subr.mxu0 0.0
      %1480 = vmatpush1.msra.mxu0 %v635
      %1481 = vmatprep.subr.mxu0 0.0
      %1482 = vmatpush1.msra.mxu0 %v636
      %1483 = vmatprep.subr.mxu0 0.0
      %1484 = vmatpush1.msra.mxu0 %v637
      %1485 = vmatprep.subr.mxu0 0.0
      %1486 = vmatpush1.msra.mxu0 %v638
      %1487 = vmatprep.subr.mxu0 0.0
      %1488 = vmatpush1.msra.mxu0 %v639
      %1489 = vmatprep.subr.mxu0 0.0
      %1490 = vmatpush1.msra.mxu0 %v640
      %1491 = vmatprep.subr.mxu0 0.0
      %1492 = vmatpush1.msra.mxu0 %v641
      %1493 = vmatprep.subr.mxu0 0.0
      %1494 = vmatpush1.msra.mxu0 %v642
      %1495 = vmatprep.subr.mxu0 0.0
      %1496 = vmatpush1.msra.mxu0 %v643
      %1497 = vmatprep.subr.mxu0 0.0
      %1498 = vmatpush1.msra.mxu0 %v644
      %1499 = vmatprep.subr.mxu0 0.0
      %1500 = vmatpush1.msra.mxu0 %v645
      %1501 = vmatprep.subr.mxu0 0.0
      %1502 = vmatpush1.msra.mxu0 %v646
      %1503 = vmatprep.subr.mxu0 0.0
      %1504 = vmatpush1.msra.mxu0 0.0
      %1505 = vmatprep.subr.mxu0 0.0
      %1506 = vmatpush1.msra.mxu0 0.0
      %1507 = vmatprep.subr.mxu0 0.0
      %1508 = vmatpush1.msra.mxu0 0.0
      %1509 = vmatprep.subr.mxu0 0.0
      %1510 = vmatpush1.msra.mxu0 0.0
      %1511 = vmatprep.subr.mxu0 0.0
      %1512 = vmatpush1.msra.mxu0 0.0
      %1513 = vmatprep.subr.mxu0 0.0
      %1514 = vmatpush1.msra.mxu0 0.0
      %1515 = vmatprep.subr.mxu0 0.0
      %1516 = vmatpush1.msra.mxu0 0.0
      %1517 = vmatprep.subr.mxu0 0.0
      %1518 = vmatpush1.msra.mxu0 0.0
      %1519 = vmatprep.subr.mxu0 0.0
      %1520 = vmatpush1.msra.mxu0 0.0
      %1521 = vmatprep.subr.mxu0 0.0
      %1522 = vmatpush1.msra.mxu0 0.0
      %1523 = vmatprep.subr.mxu0 0.0
      %1524 = vmatpush1.msra.mxu0 0.0
      %1525 = vmatprep.subr.mxu0 0.0
      %1526 = vmatpush1.msra.mxu0 0.0
      %1527 = vmatprep.subr.mxu0 0.0
      %1528 = vmatpush1.msra.mxu0 0.0
      %1529 = vmatprep.subr.mxu0 0.0
      %1530 = vmatpush1.msra.mxu0 0.0
      %1531 = vmatprep.subr.mxu0 0.0
      %1532 = vmatpush1.msra.mxu0 0.0
      %1533 = vmatprep.subr.mxu0 0.0
      %1534 = vmatpush1.msra.mxu0 0.0
      %1535 = vmatprep.mubr.f32.mxu0 0.0
      %1536 = vmatmul.mubr.f32.gmra.mrb[0].mxu0 %v743
      %v1537 = vpop.f32.mrb[0].mxu0
      %v1538 = vadd.f32 0.0, %v1537
      %v1539 = vpop.f32.mrb[0].mxu0
      %1540 = vmatprep.mubr.f32.mxu0 0.0
      %1541 = vmatmul.mubr.f32.gmra.mrb[0].mxu0 %v745
      %v1542 = vpop.f32.mrb[0].mxu0
      %v1543 = vadd.f32 0.0, %v1542
      %v1544 = vpop.f32.mrb[0].mxu0
      %1545 = vmatprep.mubr.f32.mxu0 0.0
      %1546 = vmatmul.mubr.f32.gmra.mrb[0].mxu0 %v748
      %v1547 = vpop.f32.mrb[0].mxu0
      %v1548 = vadd.f32 0.0, %v1547
      %v1549 = vpop.f32.mrb[0].mxu0
      %1550 = vmatprep.mubr.f32.mxu0 0.0
      %1551 = vmatmul.mubr.f32.gmra.mrb[0].mxu0 %v750
      %v1552 = vpop.f32.mrb[0].mxu0
      %v1553 = vadd.f32 0.0, %v1552
      %v1554 = vpop.f32.mrb[0].mxu0
      %1555 = vmatprep.mubr.f32.mxu0 0.0
      %1556 = vmatmul.mubr.f32.gmra.mrb[0].mxu0 %v753
      %v1557 = vpop.f32.mrb[0].mxu0
      %v1558 = vadd.f32 0.0, %v1557
      %v1559 = vpop.f32.mrb[0].mxu0
      %1560 = vmatprep.mubr.f32.mxu0 0.0
      %1561 = vmatmul.mubr.f32.gmra.mrb[0].mxu0 %v755
      %v1562 = vpop.f32.mrb[0].mxu0
      %v1563 = vadd.f32 0.0, %v1562
      %v1564 = vpop.f32.mrb[0].mxu0
      %1565 = vmatprep.mubr.f32.mxu0 0.0
      %1566 = vmatmul.mubr.f32.gmra.mrb[0].mxu0 %v758
      %v1567 = vpop.f32.mrb[0].mxu0
      %v1568 = vadd.f32 0.0, %v1567
      %v1569 = vpop.f32.mrb[0].mxu0
      %1570 = vmatprep.mubr.f32.mxu0 0.0
      %1571 = vmatmul.mubr.f32.gmra.mrb[0].mxu0 %v760
      %v1572 = vpop.f32.mrb[0].mxu0
      %v1573 = vadd.f32 0.0, %v1572
      %v1574 = vpop.f32.mrb[0].mxu0
      %1575 = vmatprep.mubr.f32.mxu0 0.0
      %1576 = vmatmul.mubr.f32.gmra.mrb[0].mxu0 %v763
      %v1577 = vpop.f32.mrb[0].mxu0
      %v1578 = vadd.f32 0.0, %v1577
      %v1579 = vpop.f32.mrb[0].mxu0
      %1580 = vmatprep.mubr.f32.mxu0 0.0
      %1581 = vmatmul.mubr.f32.gmra.mrb[0].mxu0 %v765
      %v1582 = vpop.f32.mrb[0].mxu0
      %v1583 = vadd.f32 0.0, %v1582
      %v1584 = vpop.f32.mrb[0].mxu0
      %1585 = vmatprep.mubr.f32.mxu0 0.0
      %1586 = vmatmul.mubr.f32.gmra.mrb[0].mxu0 %v768
      %v1587 = vpop.f32.mrb[0].mxu0
      %v1588 = vadd.f32 0.0, %v1587
      %v1589 = vpop.f32.mrb[0].mxu0
      %1590 = vmatprep.mubr.f32.mxu0 0.0
      %1591 = vmatmul.mubr.f32.gmra.mrb[0].mxu0 %v770
      %v1592 = vpop.f32.mrb[0].mxu0
      %v1593 = vadd.f32 0.0, %v1592
      %v1594 = vpop.f32.mrb[0].mxu0
      %1595 = vmatprep.mubr.f32.mxu0 0.0
      %1596 = vmatmul.mubr.f32.gmra.mrb[0].mxu0 %v773
      %v1597 = vpop.f32.mrb[0].mxu0
      %v1598 = vadd.f32 0.0, %v1597
      %v1599 = vpop.f32.mrb[0].mxu0
      %1600 = vmatprep.mubr.f32.mxu0 0.0
      %1601 = vmatmul.mubr.f32.gmra.mrb[0].mxu0 %v775
      %v1602 = vpop.f32.mrb[0].mxu0
      %v1603 = vadd.f32 0.0, %v1602
      %v1604 = vpop.f32.mrb[0].mxu0
      %1605 = vmatprep.mubr.f32.mxu0 0.0
      %1606 = vmatmul.mubr.f32.gmra.mrb[0].mxu0 %v1466
      %v1607 = vpop.f32.mrb[0].mxu0
      %v1608 = vadd.f32 0.0, %v1607
      %v1609 = vpop.f32.mrb[0].mxu0
      %1610 = vmatprep.mubr.f32.mxu0 0.0
      %1611 = vmatmul.mubr.f32.gmra.mrb[0].mxu0 %v1468
      %v1612 = vpop.f32.mrb[0].mxu0
      %v1613 = vadd.f32 0.0, %v1612
      %v1614 = vpop.f32.mrb[0].mxu0
      %1615 = vdwg.mxu0
      %v1616 = vadd.f32 %v1445, %v1538
      %v1617 = vadd.f32 %v1446, %v1543
      %v1618 = vadd.f32 %v1447, %v1548
      %v1619 = vadd.f32 %v1448, %v1553
      %v1620 = vadd.f32 %v1449, %v1558
      %v1621 = vadd.f32 %v1450, %v1563
      %v1622 = vadd.f32 %v1451, %v1568
      %v1623 = vadd.f32 %v1452, %v1573
      %v1624 = vadd.f32 %v1453, %v1578
      %v1625 = vadd.f32 %v1454, %v1583
      %v1626 = vadd.f32 %v1455, %v1588
      %v1627 = vadd.f32 %v1456, %v1593
      %v1628 = vadd.f32 %v1457, %v1598
      %v1629 = vadd.f32 %v1458, %v1603
      %v1630 = vadd.f32 %v1459, %v1608
      %v1631 = vadd.f32 %v1460, %v1613
      %v1632 = vrot.slane %v561, 2
      %v1633 = vrot.slane %v562, 2
      %v1634 = vsel %vm1082, %v1632, %v1633
      %v1635 = vrot.slane %v563, 2
      %v1636 = vsel %vm1082, %v1633, %v1635
      %1639 = vmatprep.subr.mxu0 0.0
      %1640 = vmatpush1.msra.mxu0 %v647
      %1641 = vmatprep.subr.mxu0 0.0
      %1642 = vmatpush1.msra.mxu0 %v648
      %1643 = vmatprep.subr.mxu0 0.0
      %1644 = vmatpush1.msra.mxu0 %v649
      %1645 = vmatprep.subr.mxu0 0.0
      %1646 = vmatpush1.msra.mxu0 %v650
      %1647 = vmatprep.subr.mxu0 0.0
      %1648 = vmatpush1.msra.mxu0 %v651
      %1649 = vmatprep.subr.mxu0 0.0
      %1650 = vmatpush1.msra.mxu0 %v652
      %1651 = vmatprep.subr.mxu0 0.0
      %1652 = vmatpush1.msra.mxu0 %v653
      %1653 = vmatprep.subr.mxu0 0.0
      %1654 = vmatpush1.msra.mxu0 %v654
      %1655 = vmatprep.subr.mxu0 0.0
      %1656 = vmatpush1.msra.mxu0 %v655
      %1657 = vmatprep.subr.mxu0 0.0
      %1658 = vmatpush1.msra.mxu0 %v656
      %1659 = vmatprep.subr.mxu0 0.0
      %1660 = vmatpush1.msra.mxu0 %v657
      %1661 = vmatprep.subr.mxu0 0.0
      %1662 = vmatpush1.msra.mxu0 %v658
      %1663 = vmatprep.subr.mxu0 0.0
      %1664 = vmatpush1.msra.mxu0 %v659
      %1665 = vmatprep.subr.mxu0 0.0
      %1666 = vmatpush1.msra.mxu0 %v660
      %1667 = vmatprep.subr.mxu0 0.0
      %1668 = vmatpush1.msra.mxu0 %v661
      %1669 = vmatprep.subr.mxu0 0.0
      %1670 = vmatpush1.msra.mxu0 %v662
      %1671 = vmatprep.subr.mxu0 0.0
      %1672 = vmatpush1.msra.mxu0 0.0
      %1673 = vmatprep.subr.mxu0 0.0
      %1674 = vmatpush1.msra.mxu0 0.0
      %1675 = vmatprep.subr.mxu0 0.0
      %1676 = vmatpush1.msra.mxu0 0.0
      %1677 = vmatprep.subr.mxu0 0.0
      %1678 = vmatpush1.msra.mxu0 0.0
      %1679 = vmatprep.subr.mxu0 0.0
      %1680 = vmatpush1.msra.mxu0 0.0
      %1681 = vmatprep.subr.mxu0 0.0
      %1682 = vmatpush1.msra.mxu0 0.0
      %1683 = vmatprep.subr.mxu0 0.0
      %1684 = vmatpush1.msra.mxu0 0.0
      %1685 = vmatprep.subr.mxu0 0.0
      %1686 = vmatpush1.msra.mxu0 0.0
      %1687 = vmatprep.subr.mxu0 0.0
      %1688 = vmatpush1.msra.mxu0 0.0
      %1689 = vmatprep.subr.mxu0 0.0
      %1690 = vmatpush1.msra.mxu0 0.0
      %1691 = vmatprep.subr.mxu0 0.0
      %1692 = vmatpush1.msra.mxu0 0.0
      %1693 = vmatprep.subr.mxu0 0.0
      %1694 = vmatpush1.msra.mxu0 0.0
      %1695 = vmatprep.subr.mxu0 0.0
      %1696 = vmatpush1.msra.mxu0 0.0
      %1697 = vmatprep.subr.mxu0 0.0
      %1698 = vmatpush1.msra.mxu0 0.0
      %1699 = vmatprep.subr.mxu0 0.0
      %1700 = vmatpush1.msra.mxu0 0.0
      %1701 = vmatprep.subr.mxu0 0.0
      %1702 = vmatpush1.msra.mxu0 0.0
      %1703 = vmatprep.mubr.f32.mxu0 0.0
      %1704 = vmatmul.mubr.f32.gmra.mrb[0].mxu0 %v1090
      %v1705 = vpop.f32.mrb[0].mxu0
      %v1706 = vadd.f32 0.0, %v1705
      %v1707 = vpop.f32.mrb[0].mxu0
      %1708 = vmatprep.mubr.f32.mxu0 0.0
      %1709 = vmatmul.mubr.f32.gmra.mrb[0].mxu0 %v1092
      %v1710 = vpop.f32.mrb[0].mxu0
      %v1711 = vadd.f32 0.0, %v1710
      %v1712 = vpop.f32.mrb[0].mxu0
      %1713 = vmatprep.mubr.f32.mxu0 0.0
      %1714 = vmatmul.mubr.f32.gmra.mrb[0].mxu0 %v1095
      %v1715 = vpop.f32.mrb[0].mxu0
      %v1716 = vadd.f32 0.0, %v1715
      %v1717 = vpop.f32.mrb[0].mxu0
      %1718 = vmatprep.mubr.f32.mxu0 0.0
      %1719 = vmatmul.mubr.f32.gmra.mrb[0].mxu0 %v1097
      %v1720 = vpop.f32.mrb[0].mxu0
      %v1721 = vadd.f32 0.0, %v1720
      %v1722 = vpop.f32.mrb[0].mxu0
      %1723 = vmatprep.mubr.f32.mxu0 0.0
      %1724 = vmatmul.mubr.f32.gmra.mrb[0].mxu0 %v1100
      %v1725 = vpop.f32.mrb[0].mxu0
      %v1726 = vadd.f32 0.0, %v1725
      %v1727 = vpop.f32.mrb[0].mxu0
      %1728 = vmatprep.mubr.f32.mxu0 0.0
      %1729 = vmatmul.mubr.f32.gmra.mrb[0].mxu0 %v1102
      %v1730 = vpop.f32.mrb[0].mxu0
      %v1731 = vadd.f32 0.0, %v1730
      %v1732 = vpop.f32.mrb[0].mxu0
      %1733 = vmatprep.mubr.f32.mxu0 0.0
      %1734 = vmatmul.mubr.f32.gmra.mrb[0].mxu0 %v1105
      %v1735 = vpop.f32.mrb[0].mxu0
      %v1736 = vadd.f32 0.0, %v1735
      %v1737 = vpop.f32.mrb[0].mxu0
      %1738 = vmatprep.mubr.f32.mxu0 0.0
      %1739 = vmatmul.mubr.f32.gmra.mrb[0].mxu0 %v1107
      %v1740 = vpop.f32.mrb[0].mxu0
      %v1741 = vadd.f32 0.0, %v1740
      %v1742 = vpop.f32.mrb[0].mxu0
      %1743 = vmatprep.mubr.f32.mxu0 0.0
      %1744 = vmatmul.mubr.f32.gmra.mrb[0].mxu0 %v1110
      %v1745 = vpop.f32.mrb[0].mxu0
      %v1746 = vadd.f32 0.0, %v1745
      %v1747 = vpop.f32.mrb[0].mxu0
      %1748 = vmatprep.mubr.f32.mxu0 0.0
      %1749 = vmatmul.mubr.f32.gmra.mrb[0].mxu0 %v1112
      %v1750 = vpop.f32.mrb[0].mxu0
      %v1751 = vadd.f32 0.0, %v1750
      %v1752 = vpop.f32.mrb[0].mxu0
      %1753 = vmatprep.mubr.f32.mxu0 0.0
      %1754 = vmatmul.mubr.f32.gmra.mrb[0].mxu0 %v1115
      %v1755 = vpop.f32.mrb[0].mxu0
      %v1756 = vadd.f32 0.0, %v1755
      %v1757 = vpop.f32.mrb[0].mxu0
      %1758 = vmatprep.mubr.f32.mxu0 0.0
      %1759 = vmatmul.mubr.f32.gmra.mrb[0].mxu0 %v1117
      %v1760 = vpop.f32.mrb[0].mxu0
      %v1761 = vadd.f32 0.0, %v1760
      %v1762 = vpop.f32.mrb[0].mxu0
      %1763 = vmatprep.mubr.f32.mxu0 0.0
      %1764 = vmatmul.mubr.f32.gmra.mrb[0].mxu0 %v1120
      %v1765 = vpop.f32.mrb[0].mxu0
      %v1766 = vadd.f32 0.0, %v1765
      %v1767 = vpop.f32.mrb[0].mxu0
      %1768 = vmatprep.mubr.f32.mxu0 0.0
      %1769 = vmatmul.mubr.f32.gmra.mrb[0].mxu0 %v1122
      %v1770 = vpop.f32.mrb[0].mxu0
      %v1771 = vadd.f32 0.0, %v1770
      %v1772 = vpop.f32.mrb[0].mxu0
      %1773 = vmatprep.mubr.f32.mxu0 0.0
      %1774 = vmatmul.mubr.f32.gmra.mrb[0].mxu0 %v1634
      %v1775 = vpop.f32.mrb[0].mxu0
      %v1776 = vadd.f32 0.0, %v1775
      %v1777 = vpop.f32.mrb[0].mxu0
      %1778 = vmatprep.mubr.f32.mxu0 0.0
      %1779 = vmatmul.mubr.f32.gmra.mrb[0].mxu0 %v1636
      %v1780 = vpop.f32.mrb[0].mxu0
      %v1781 = vadd.f32 0.0, %v1780
      %v1782 = vpop.f32.mrb[0].mxu0
      %1783 = vdwg.mxu0
      %v1784 = vadd.f32 %v1616, %v1706
      %v1785 = vadd.f32 %v1617, %v1711
      %v1786 = vadd.f32 %v1618, %v1716
      %v1787 = vadd.f32 %v1619, %v1721
      %v1788 = vadd.f32 %v1620, %v1726
      %v1789 = vadd.f32 %v1621, %v1731
      %v1790 = vadd.f32 %v1622, %v1736
      %v1791 = vadd.f32 %v1623, %v1741
      %v1792 = vadd.f32 %v1624, %v1746
      %v1793 = vadd.f32 %v1625, %v1751
      %v1794 = vadd.f32 %v1626, %v1756
      %v1795 = vadd.f32 %v1627, %v1761
      %v1796 = vadd.f32 %v1628, %v1766
      %v1797 = vadd.f32 %v1629, %v1771
      %v1798 = vadd.f32 %v1630, %v1776
      %v1799 = vadd.f32 %v1631, %v1781
      %1800 = vmatprep.subr.mxu0 0.0
      %1801 = vmatpush1.msra.mxu0 %v663
      %1802 = vmatprep.subr.mxu0 0.0
      %1803 = vmatpush1.msra.mxu0 %v664
      %1804 = vmatprep.subr.mxu0 0.0
      %1805 = vmatpush1.msra.mxu0 %v665
      %1806 = vmatprep.subr.mxu0 0.0
      %1807 = vmatpush1.msra.mxu0 %v666
      %1808 = vmatprep.subr.mxu0 0.0
      %1809 = vmatpush1.msra.mxu0 %v667
      %1810 = vmatprep.subr.mxu0 0.0
      %1811 = vmatpush1.msra.mxu0 %v668
      %1812 = vmatprep.subr.mxu0 0.0
      %1813 = vmatpush1.msra.mxu0 %v669
      %1814 = vmatprep.subr.mxu0 0.0
      %1815 = vmatpush1.msra.mxu0 %v670
      %1816 = vmatprep.subr.mxu0 0.0
      %1817 = vmatpush1.msra.mxu0 %v671
      %1818 = vmatprep.subr.mxu0 0.0
      %1819 = vmatpush1.msra.mxu0 %v672
      %1820 = vmatprep.subr.mxu0 0.0
      %1821 = vmatpush1.msra.mxu0 %v673
      %1822 = vmatprep.subr.mxu0 0.0
      %1823 = vmatpush1.msra.mxu0 %v674
      %1824 = vmatprep.subr.mxu0 0.0
      %1825 = vmatpush1.msra.mxu0 %v675
      %1826 = vmatprep.subr.mxu0 0.0
      %1827 = vmatpush1.msra.mxu0 %v676
      %1828 = vmatprep.subr.mxu0 0.0
      %1829 = vmatpush1.msra.mxu0 %v677
      %1830 = vmatprep.subr.mxu0 0.0
      %1831 = vmatpush1.msra.mxu0 %v678
      %1832 = vmatprep.subr.mxu0 0.0
      %1833 = vmatpush1.msra.mxu0 0.0
      %1834 = vmatprep.subr.mxu0 0.0
      %1835 = vmatpush1.msra.mxu0 0.0
      %1836 = vmatprep.subr.mxu0 0.0
      %1837 = vmatpush1.msra.mxu0 0.0
      %1838 = vmatprep.subr.mxu0 0.0
      %1839 = vmatpush1.msra.mxu0 0.0
      %1840 = vmatprep.subr.mxu0 0.0
      %1841 = vmatpush1.msra.mxu0 0.0
      %1842 = vmatprep.subr.mxu0 0.0
      %1843 = vmatpush1.msra.mxu0 0.0
      %1844 = vmatprep.subr.mxu0 0.0
      %1845 = vmatpush1.msra.mxu0 0.0
      %1846 = vmatprep.subr.mxu0 0.0
      %1847 = vmatpush1.msra.mxu0 0.0
      %1848 = vmatprep.subr.mxu0 0.0
      %1849 = vmatpush1.msra.mxu0 0.0
      %1850 = vmatprep.subr.mxu0 0.0
      %1851 = vmatpush1.msra.mxu0 0.0
      %1852 = vmatprep.subr.mxu0 0.0
      %1853 = vmatpush1.msra.mxu0 0.0
      %1854 = vmatprep.subr.mxu0 0.0
      %1855 = vmatpush1.msra.mxu0 0.0
      %1856 = vmatprep.subr.mxu0 0.0
      %1857 = vmatpush1.msra.mxu0 0.0
      %1858 = vmatprep.subr.mxu0 0.0
      %1859 = vmatpush1.msra.mxu0 0.0
      %1860 = vmatprep.subr.mxu0 0.0
      %1861 = vmatpush1.msra.mxu0 0.0
      %1862 = vmatprep.subr.mxu0 0.0
      %1863 = vmatpush1.msra.mxu0 0.0
      %1864 = vmatprep.mubr.f32.mxu0 0.0
      %1865 = vmatmul.mubr.f32.gmra.mrb[0].mxu0 %v543
      %v1866 = vpop.f32.mrb[0].mxu0
      %v1867 = vadd.f32 0.0, %v1866
      %v1868 = vpop.f32.mrb[0].mxu0
      %1869 = vmatprep.mubr.f32.mxu0 0.0
      %1870 = vmatmul.mubr.f32.gmra.mrb[0].mxu0 %v544
      %v1871 = vpop.f32.mrb[0].mxu0
      %v1872 = vadd.f32 0.0, %v1871
      %v1873 = vpop.f32.mrb[0].mxu0
      %1874 = vmatprep.mubr.f32.mxu0 0.0
      %1875 = vmatmul.mubr.f32.gmra.mrb[0].mxu0 %v546
      %v1876 = vpop.f32.mrb[0].mxu0
      %v1877 = vadd.f32 0.0, %v1876
      %v1878 = vpop.f32.mrb[0].mxu0
      %1879 = vmatprep.mubr.f32.mxu0 0.0
      %1880 = vmatmul.mubr.f32.gmra.mrb[0].mxu0 %v547
      %v1881 = vpop.f32.mrb[0].mxu0
      %v1882 = vadd.f32 0.0, %v1881
      %v1883 = vpop.f32.mrb[0].mxu0
      %1884 = vmatprep.mubr.f32.mxu0 0.0
      %1885 = vmatmul.mubr.f32.gmra.mrb[0].mxu0 %v549
      %v1886 = vpop.f32.mrb[0].mxu0
      %v1887 = vadd.f32 0.0, %v1886
      %v1888 = vpop.f32.mrb[0].mxu0
      %1889 = vmatprep.mubr.f32.mxu0 0.0
      %1890 = vmatmul.mubr.f32.gmra.mrb[0].mxu0 %v550
      %v1891 = vpop.f32.mrb[0].mxu0
      %v1892 = vadd.f32 0.0, %v1891
      %v1893 = vpop.f32.mrb[0].mxu0
      %1894 = vmatprep.mubr.f32.mxu0 0.0
      %1895 = vmatmul.mubr.f32.gmra.mrb[0].mxu0 %v552
      %v1896 = vpop.f32.mrb[0].mxu0
      %v1897 = vadd.f32 0.0, %v1896
      %v1898 = vpop.f32.mrb[0].mxu0
      %1899 = vmatprep.mubr.f32.mxu0 0.0
      %1900 = vmatmul.mubr.f32.gmra.mrb[0].mxu0 %v553
      %v1901 = vpop.f32.mrb[0].mxu0
      %v1902 = vadd.f32 0.0, %v1901
      %v1903 = vpop.f32.mrb[0].mxu0
      %1904 = vmatprep.mubr.f32.mxu0 0.0
      %1905 = vmatmul.mubr.f32.gmra.mrb[0].mxu0 %v555
      %v1906 = vpop.f32.mrb[0].mxu0
      %v1907 = vadd.f32 0.0, %v1906
      %v1908 = vpop.f32.mrb[0].mxu0
      %1909 = vmatprep.mubr.f32.mxu0 0.0
      %1910 = vmatmul.mubr.f32.gmra.mrb[0].mxu0 %v556
      %v1911 = vpop.f32.mrb[0].mxu0
      %v1912 = vadd.f32 0.0, %v1911
      %v1913 = vpop.f32.mrb[0].mxu0
      %1914 = vmatprep.mubr.f32.mxu0 0.0
      %1915 = vmatmul.mubr.f32.gmra.mrb[0].mxu0 %v558
      %v1916 = vpop.f32.mrb[0].mxu0
      %v1917 = vadd.f32 0.0, %v1916
      %v1918 = vpop.f32.mrb[0].mxu0
      %1919 = vmatprep.mubr.f32.mxu0 0.0
      %1920 = vmatmul.mubr.f32.gmra.mrb[0].mxu0 %v559
      %v1921 = vpop.f32.mrb[0].mxu0
      %v1922 = vadd.f32 0.0, %v1921
      %v1923 = vpop.f32.mrb[0].mxu0
      %1924 = vmatprep.mubr.f32.mxu0 0.0
      %1925 = vmatmul.mubr.f32.gmra.mrb[0].mxu0 %v561
      %v1926 = vpop.f32.mrb[0].mxu0
      %v1927 = vadd.f32 0.0, %v1926
      %v1928 = vpop.f32.mrb[0].mxu0
      %1929 = vmatprep.mubr.f32.mxu0 0.0
      %1930 = vmatmul.mubr.f32.gmra.mrb[0].mxu0 %v562
      %v1931 = vpop.f32.mrb[0].mxu0
      %v1932 = vadd.f32 0.0, %v1931
      %v1933 = vpop.f32.mrb[0].mxu0
      %1934 = vmatprep.mubr.f32.mxu0 0.0
      %1935 = vmatmul.mubr.f32.gmra.mrb[0].mxu0 %v564
      %v1936 = vpop.f32.mrb[0].mxu0
      %v1937 = vadd.f32 0.0, %v1936
      %v1938 = vpop.f32.mrb[0].mxu0
      %1939 = vmatprep.mubr.f32.mxu0 0.0
      %1940 = vmatmul.mubr.f32.gmra.mrb[0].mxu0 %v565
      %v1941 = vpop.f32.mrb[0].mxu0
      %v1942 = vadd.f32 0.0, %v1941
      %v1943 = vpop.f32.mrb[0].mxu0
      %1944 = vdwg.mxu0
      %v1945 = vadd.f32 %v1784, %v1867
      %v1946 = vadd.f32 %v1785, %v1872
      %v1947 = vadd.f32 %v1786, %v1877
      %v1948 = vadd.f32 %v1787, %v1882
      %v1949 = vadd.f32 %v1788, %v1887
      %v1950 = vadd.f32 %v1789, %v1892
      %v1951 = vadd.f32 %v1790, %v1897
      %v1952 = vadd.f32 %v1791, %v1902
      %v1953 = vadd.f32 %v1792, %v1907
      %v1954 = vadd.f32 %v1793, %v1912
      %v1955 = vadd.f32 %v1794, %v1917
      %v1956 = vadd.f32 %v1795, %v1922
      %v1957 = vadd.f32 %v1796, %v1927
      %v1958 = vadd.f32 %v1797, %v1932
      %v1959 = vadd.f32 %v1798, %v1937
      %v1960 = vadd.f32 %v1799, %v1942
      %v1964 = vrot.slane %v564, 1
      %v1965 = vrot.slane %v565, 1
      %v1966 = vsel %vm735, %v1964, %v1965
      %v1967 = vrot.slane %v566, 1
      %v1968 = vsel %vm735, %v1965, %v1967
      %1971 = vmatprep.subr.mxu0 0.0
      %1972 = vmatpush1.msra.mxu0 %v679
      %1973 = vmatprep.subr.mxu0 0.0
      %1974 = vmatpush1.msra.mxu0 %v680
      %1975 = vmatprep.subr.mxu0 0.0
      %1976 = vmatpush1.msra.mxu0 %v681
      %1977 = vmatprep.subr.mxu0 0.0
      %1978 = vmatpush1.msra.mxu0 %v682
      %1979 = vmatprep.subr.mxu0 0.0
      %1980 = vmatpush1.msra.mxu0 %v683
      %1981 = vmatprep.subr.mxu0 0.0
      %1982 = vmatpush1.msra.mxu0 %v684
      %1983 = vmatprep.subr.mxu0 0.0
      %1984 = vmatpush1.msra.mxu0 %v685
      %1985 = vmatprep.subr.mxu0 0.0
      %1986 = vmatpush1.msra.mxu0 %v686
      %1987 = vmatprep.subr.mxu0 0.0
      %1988 = vmatpush1.msra.mxu0 %v687
      %1989 = vmatprep.subr.mxu0 0.0
      %1990 = vmatpush1.msra.mxu0 %v688
      %1991 = vmatprep.subr.mxu0 0.0
      %1992 = vmatpush1.msra.mxu0 %v689
      %1993 = vmatprep.subr.mxu0 0.0
      %1994 = vmatpush1.msra.mxu0 %v690
      %1995 = vmatprep.subr.mxu0 0.0
      %1996 = vmatpush1.msra.mxu0 %v691
      %1997 = vmatprep.subr.mxu0 0.0
      %1998 = vmatpush1.msra.mxu0 %v692
      %1999 = vmatprep.subr.mxu0 0.0
      %2000 = vmatpush1.msra.mxu0 %v693
      %2001 = vmatprep.subr.mxu0 0.0
      %2002 = vmatpush1.msra.mxu0 %v694
      %2003 = vmatprep.subr.mxu0 0.0
      %2004 = vmatpush1.msra.mxu0 0.0
      %2005 = vmatprep.subr.mxu0 0.0
      %2006 = vmatpush1.msra.mxu0 0.0
      %2007 = vmatprep.subr.mxu0 0.0
      %2008 = vmatpush1.msra.mxu0 0.0
      %2009 = vmatprep.subr.mxu0 0.0
      %2010 = vmatpush1.msra.mxu0 0.0
      %2011 = vmatprep.subr.mxu0 0.0
      %2012 = vmatpush1.msra.mxu0 0.0
      %2013 = vmatprep.subr.mxu0 0.0
      %2014 = vmatpush1.msra.mxu0 0.0
      %2015 = vmatprep.subr.mxu0 0.0
      %2016 = vmatpush1.msra.mxu0 0.0
      %2017 = vmatprep.subr.mxu0 0.0
      %2018 = vmatpush1.msra.mxu0 0.0
      %2019 = vmatprep.subr.mxu0 0.0
      %2020 = vmatpush1.msra.mxu0 0.0
      %2021 = vmatprep.subr.mxu0 0.0
      %2022 = vmatpush1.msra.mxu0 0.0
      %2023 = vmatprep.subr.mxu0 0.0
      %2024 = vmatpush1.msra.mxu0 0.0
      %2025 = vmatprep.subr.mxu0 0.0
      %2026 = vmatpush1.msra.mxu0 0.0
      %2027 = vmatprep.subr.mxu0 0.0
      %2028 = vmatpush1.msra.mxu0 0.0
      %2029 = vmatprep.subr.mxu0 0.0
      %2030 = vmatpush1.msra.mxu0 0.0
      %2031 = vmatprep.subr.mxu0 0.0
      %2032 = vmatpush1.msra.mxu0 0.0
      %2033 = vmatprep.subr.mxu0 0.0
      %2034 = vmatpush1.msra.mxu0 0.0
      %2035 = vmatprep.mubr.f32.mxu0 0.0
      %2036 = vmatmul.mubr.f32.gmra.mrb[0].mxu0 %v748
      %v2037 = vpop.f32.mrb[0].mxu0
      %v2038 = vadd.f32 0.0, %v2037
      %v2039 = vpop.f32.mrb[0].mxu0
      %2040 = vmatprep.mubr.f32.mxu0 0.0
      %2041 = vmatmul.mubr.f32.gmra.mrb[0].mxu0 %v750
      %v2042 = vpop.f32.mrb[0].mxu0
      %v2043 = vadd.f32 0.0, %v2042
      %v2044 = vpop.f32.mrb[0].mxu0
      %2045 = vmatprep.mubr.f32.mxu0 0.0
      %2046 = vmatmul.mubr.f32.gmra.mrb[0].mxu0 %v753
      %v2047 = vpop.f32.mrb[0].mxu0
      %v2048 = vadd.f32 0.0, %v2047
      %v2049 = vpop.f32.mrb[0].mxu0
      %2050 = vmatprep.mubr.f32.mxu0 0.0
      %2051 = vmatmul.mubr.f32.gmra.mrb[0].mxu0 %v755
      %v2052 = vpop.f32.mrb[0].mxu0
      %v2053 = vadd.f32 0.0, %v2052
      %v2054 = vpop.f32.mrb[0].mxu0
      %2055 = vmatprep.mubr.f32.mxu0 0.0
      %2056 = vmatmul.mubr.f32.gmra.mrb[0].mxu0 %v758
      %v2057 = vpop.f32.mrb[0].mxu0
      %v2058 = vadd.f32 0.0, %v2057
      %v2059 = vpop.f32.mrb[0].mxu0
      %2060 = vmatprep.mubr.f32.mxu0 0.0
      %2061 = vmatmul.mubr.f32.gmra.mrb[0].mxu0 %v760
      %v2062 = vpop.f32.mrb[0].mxu0
      %v2063 = vadd.f32 0.0, %v2062
      %v2064 = vpop.f32.mrb[0].mxu0
      %2065 = vmatprep.mubr.f32.mxu0 0.0
      %2066 = vmatmul.mubr.f32.gmra.mrb[0].mxu0 %v763
      %v2067 = vpop.f32.mrb[0].mxu0
      %v2068 = vadd.f32 0.0, %v2067
      %v2069 = vpop.f32.mrb[0].mxu0
      %2070 = vmatprep.mubr.f32.mxu0 0.0
      %2071 = vmatmul.mubr.f32.gmra.mrb[0].mxu0 %v765
      %v2072 = vpop.f32.mrb[0].mxu0
      %v2073 = vadd.f32 0.0, %v2072
      %v2074 = vpop.f32.mrb[0].mxu0
      %2075 = vmatprep.mubr.f32.mxu0 0.0
      %2076 = vmatmul.mubr.f32.gmra.mrb[0].mxu0 %v768
      %v2077 = vpop.f32.mrb[0].mxu0
      %v2078 = vadd.f32 0.0, %v2077
      %v2079 = vpop.f32.mrb[0].mxu0
      %2080 = vmatprep.mubr.f32.mxu0 0.0
      %2081 = vmatmul.mubr.f32.gmra.mrb[0].mxu0 %v770
      %v2082 = vpop.f32.mrb[0].mxu0
      %v2083 = vadd.f32 0.0, %v2082
      %v2084 = vpop.f32.mrb[0].mxu0
      %2085 = vmatprep.mubr.f32.mxu0 0.0
      %2086 = vmatmul.mubr.f32.gmra.mrb[0].mxu0 %v773
      %v2087 = vpop.f32.mrb[0].mxu0
      %v2088 = vadd.f32 0.0, %v2087
      %v2089 = vpop.f32.mrb[0].mxu0
      %2090 = vmatprep.mubr.f32.mxu0 0.0
      %2091 = vmatmul.mubr.f32.gmra.mrb[0].mxu0 %v775
      %v2092 = vpop.f32.mrb[0].mxu0
      %v2093 = vadd.f32 0.0, %v2092
      %v2094 = vpop.f32.mrb[0].mxu0
      %2095 = vmatprep.mubr.f32.mxu0 0.0
      %2096 = vmatmul.mubr.f32.gmra.mrb[0].mxu0 %v1466
      %v2097 = vpop.f32.mrb[0].mxu0
      %v2098 = vadd.f32 0.0, %v2097
      %v2099 = vpop.f32.mrb[0].mxu0
      %2100 = vmatprep.mubr.f32.mxu0 0.0
      %2101 = vmatmul.mubr.f32.gmra.mrb[0].mxu0 %v1468
      %v2102 = vpop.f32.mrb[0].mxu0
      %v2103 = vadd.f32 0.0, %v2102
      %v2104 = vpop.f32.mrb[0].mxu0
      %2105 = vmatprep.mubr.f32.mxu0 0.0
      %2106 = vmatmul.mubr.f32.gmra.mrb[0].mxu0 %v1966
      %v2107 = vpop.f32.mrb[0].mxu0
      %v2108 = vadd.f32 0.0, %v2107
      %v2109 = vpop.f32.mrb[0].mxu0
      %2110 = vmatprep.mubr.f32.mxu0 0.0
      %2111 = vmatmul.mubr.f32.gmra.mrb[0].mxu0 %v1968
      %v2112 = vpop.f32.mrb[0].mxu0
      %v2113 = vadd.f32 0.0, %v2112
      %v2114 = vpop.f32.mrb[0].mxu0
      %2115 = vdwg.mxu0
      %v2116 = vadd.f32 %v1945, %v2038
      %v2117 = vadd.f32 %v1946, %v2043
      %v2118 = vadd.f32 %v1947, %v2048
      %v2119 = vadd.f32 %v1948, %v2053
      %v2120 = vadd.f32 %v1949, %v2058
      %v2121 = vadd.f32 %v1950, %v2063
      %v2122 = vadd.f32 %v1951, %v2068
      %v2123 = vadd.f32 %v1952, %v2073
      %v2124 = vadd.f32 %v1953, %v2078
      %v2125 = vadd.f32 %v1954, %v2083
      %v2126 = vadd.f32 %v1955, %v2088
      %v2127 = vadd.f32 %v1956, %v2093
      %v2128 = vadd.f32 %v1957, %v2098
      %v2129 = vadd.f32 %v1958, %v2103
      %v2130 = vadd.f32 %v1959, %v2108
      %v2131 = vadd.f32 %v1960, %v2113
      %v2132 = vrot.slane %v564, 2
      %v2133 = vrot.slane %v565, 2
      %v2134 = vsel %vm1082, %v2132, %v2133
      %v2135 = vrot.slane %v566, 2
      %v2136 = vsel %vm1082, %v2133, %v2135
      %2139 = vmatprep.subr.mxu0 0.0
      %2140 = vmatpush1.msra.mxu0 %v695
      %2141 = vmatprep.subr.mxu0 0.0
      %2142 = vmatpush1.msra.mxu0 %v696
      %2143 = vmatprep.subr.mxu0 0.0
      %2144 = vmatpush1.msra.mxu0 %v697
      %2145 = vmatprep.subr.mxu0 0.0
      %2146 = vmatpush1.msra.mxu0 %v698
      %2147 = vmatprep.subr.mxu0 0.0
      %2148 = vmatpush1.msra.mxu0 %v699
      %2149 = vmatprep.subr.mxu0 0.0
      %2150 = vmatpush1.msra.mxu0 %v700
      %2151 = vmatprep.subr.mxu0 0.0
      %2152 = vmatpush1.msra.mxu0 %v701
      %2153 = vmatprep.subr.mxu0 0.0
      %2154 = vmatpush1.msra.mxu0 %v702
      %2155 = vmatprep.subr.mxu0 0.0
      %2156 = vmatpush1.msra.mxu0 %v703
      %2157 = vmatprep.subr.mxu0 0.0
      %2158 = vmatpush1.msra.mxu0 %v704
      %2159 = vmatprep.subr.mxu0 0.0
      %2160 = vmatpush1.msra.mxu0 %v705
      %2161 = vmatprep.subr.mxu0 0.0
      %2162 = vmatpush1.msra.mxu0 %v706
      %2163 = vmatprep.subr.mxu0 0.0
      %2164 = vmatpush1.msra.mxu0 %v707
      %2165 = vmatprep.subr.mxu0 0.0
      %2166 = vmatpush1.msra.mxu0 %v708
      %2167 = vmatprep.subr.mxu0 0.0
      %2168 = vmatpush1.msra.mxu0 %v709
      %2169 = vmatprep.subr.mxu0 0.0
      %2170 = vmatpush1.msra.mxu0 %v710
      %2171 = vmatprep.subr.mxu0 0.0
      %2172 = vmatpush1.msra.mxu0 0.0
      %2173 = vmatprep.subr.mxu0 0.0
      %2174 = vmatpush1.msra.mxu0 0.0
      %2175 = vmatprep.subr.mxu0 0.0
      %2176 = vmatpush1.msra.mxu0 0.0
      %2177 = vmatprep.subr.mxu0 0.0
      %2178 = vmatpush1.msra.mxu0 0.0
      %2179 = vmatprep.subr.mxu0 0.0
      %2180 = vmatpush1.msra.mxu0 0.0
      %2181 = vmatprep.subr.mxu0 0.0
      %2182 = vmatpush1.msra.mxu0 0.0
      %2183 = vmatprep.subr.mxu0 0.0
      %2184 = vmatpush1.msra.mxu0 0.0
      %2185 = vmatprep.subr.mxu0 0.0
      %2186 = vmatpush1.msra.mxu0 0.0
      %2187 = vmatprep.subr.mxu0 0.0
      %2188 = vmatpush1.msra.mxu0 0.0
      %2189 = vmatprep.subr.mxu0 0.0
      %2190 = vmatpush1.msra.mxu0 0.0
      %2191 = vmatprep.subr.mxu0 0.0
      %2192 = vmatpush1.msra.mxu0 0.0
      %2193 = vmatprep.subr.mxu0 0.0
      %2194 = vmatpush1.msra.mxu0 0.0
      %2195 = vmatprep.subr.mxu0 0.0
      %2196 = vmatpush1.msra.mxu0 0.0
      %2197 = vmatprep.subr.mxu0 0.0
      %2198 = vmatpush1.msra.mxu0 0.0
      %2199 = vmatprep.subr.mxu0 0.0
      %2200 = vmatpush1.msra.mxu0 0.0
      %2201 = vmatprep.subr.mxu0 0.0
      %2202 = vmatpush1.msra.mxu0 0.0
      %2203 = vmatprep.mubr.f32.mxu0 0.0
      %2204 = vmatmul.mubr.f32.gmra.mrb[0].mxu0 %v1095
      %v2205 = vpop.f32.mrb[0].mxu0
      %v2206 = vadd.f32 0.0, %v2205
      %v2207 = vpop.f32.mrb[0].mxu0
      %2208 = vmatprep.mubr.f32.mxu0 0.0
      %2209 = vmatmul.mubr.f32.gmra.mrb[0].mxu0 %v1097
      %v2210 = vpop.f32.mrb[0].mxu0
      %v2211 = vadd.f32 0.0, %v2210
      %v2212 = vpop.f32.mrb[0].mxu0
      %2213 = vmatprep.mubr.f32.mxu0 0.0
      %2214 = vmatmul.mubr.f32.gmra.mrb[0].mxu0 %v1100
      %v2215 = vpop.f32.mrb[0].mxu0
      %v2216 = vadd.f32 0.0, %v2215
      %v2217 = vpop.f32.mrb[0].mxu0
      %2218 = vmatprep.mubr.f32.mxu0 0.0
      %2219 = vmatmul.mubr.f32.gmra.mrb[0].mxu0 %v1102
      %v2220 = vpop.f32.mrb[0].mxu0
      %v2221 = vadd.f32 0.0, %v2220
      %v2222 = vpop.f32.mrb[0].mxu0
      %2223 = vmatprep.mubr.f32.mxu0 0.0
      %2224 = vmatmul.mubr.f32.gmra.mrb[0].mxu0 %v1105
      %v2225 = vpop.f32.mrb[0].mxu0
      %v2226 = vadd.f32 0.0, %v2225
      %v2227 = vpop.f32.mrb[0].mxu0
      %2228 = vmatprep.mubr.f32.mxu0 0.0
      %2229 = vmatmul.mubr.f32.gmra.mrb[0].mxu0 %v1107
      %v2230 = vpop.f32.mrb[0].mxu0
      %v2231 = vadd.f32 0.0, %v2230
      %v2232 = vpop.f32.mrb[0].mxu0
      %2233 = vmatprep.mubr.f32.mxu0 0.0
      %2234 = vmatmul.mubr.f32.gmra.mrb[0].mxu0 %v1110
      %v2235 = vpop.f32.mrb[0].mxu0
      %v2236 = vadd.f32 0.0, %v2235
      %v2237 = vpop.f32.mrb[0].mxu0
      %2238 = vmatprep.mubr.f32.mxu0 0.0
      %2239 = vmatmul.mubr.f32.gmra.mrb[0].mxu0 %v1112
      %v2240 = vpop.f32.mrb[0].mxu0
      %v2241 = vadd.f32 0.0, %v2240
      %v2242 = vpop.f32.mrb[0].mxu0
      %2243 = vmatprep.mubr.f32.mxu0 0.0
      %2244 = vmatmul.mubr.f32.gmra.mrb[0].mxu0 %v1115
      %v2245 = vpop.f32.mrb[0].mxu0
      %v2246 = vadd.f32 0.0, %v2245
      %v2247 = vpop.f32.mrb[0].mxu0
      %2248 = vmatprep.mubr.f32.mxu0 0.0
      %2249 = vmatmul.mubr.f32.gmra.mrb[0].mxu0 %v1117
      %v2250 = vpop.f32.mrb[0].mxu0
      %v2251 = vadd.f32 0.0, %v2250
      %v2252 = vpop.f32.mrb[0].mxu0
      %2253 = vmatprep.mubr.f32.mxu0 0.0
      %2254 = vmatmul.mubr.f32.gmra.mrb[0].mxu0 %v1120
      %v2255 = vpop.f32.mrb[0].mxu0
      %v2256 = vadd.f32 0.0, %v2255
      %v2257 = vpop.f32.mrb[0].mxu0
      %2258 = vmatprep.mubr.f32.mxu0 0.0
      %2259 = vmatmul.mubr.f32.gmra.mrb[0].mxu0 %v1122
      %v2260 = vpop.f32.mrb[0].mxu0
      %v2261 = vadd.f32 0.0, %v2260
      %v2262 = vpop.f32.mrb[0].mxu0
      %2263 = vmatprep.mubr.f32.mxu0 0.0
      %2264 = vmatmul.mubr.f32.gmra.mrb[0].mxu0 %v1634
      %v2265 = vpop.f32.mrb[0].mxu0
      %v2266 = vadd.f32 0.0, %v2265
      %v2267 = vpop.f32.mrb[0].mxu0
      %2268 = vmatprep.mubr.f32.mxu0 0.0
      %2269 = vmatmul.mubr.f32.gmra.mrb[0].mxu0 %v1636
      %v2270 = vpop.f32.mrb[0].mxu0
      %v2271 = vadd.f32 0.0, %v2270
      %v2272 = vpop.f32.mrb[0].mxu0
      %2273 = vmatprep.mubr.f32.mxu0 0.0
      %2274 = vmatmul.mubr.f32.gmra.mrb[0].mxu0 %v2134
      %v2275 = vpop.f32.mrb[0].mxu0
      %v2276 = vadd.f32 0.0, %v2275
      %v2277 = vpop.f32.mrb[0].mxu0
      %2278 = vmatprep.mubr.f32.mxu0 0.0
      %2279 = vmatmul.mubr.f32.gmra.mrb[0].mxu0 %v2136
      %v2280 = vpop.f32.mrb[0].mxu0
      %v2281 = vadd.f32 0.0, %v2280
      %v2282 = vpop.f32.mrb[0].mxu0
      %2283 = vdwg.mxu0
      %v2284 = vadd.f32 %v2116, %v2206
      %v2285 = vadd.f32 %v2117, %v2211
      %v2286 = vadd.f32 %v2118, %v2216
      %v2287 = vadd.f32 %v2119, %v2221
      %v2288 = vadd.f32 %v2120, %v2226
      %v2289 = vadd.f32 %v2121, %v2231
      %v2290 = vadd.f32 %v2122, %v2236
      %v2291 = vadd.f32 %v2123, %v2241
      %v2292 = vadd.f32 %v2124, %v2246
      %v2293 = vadd.f32 %v2125, %v2251
      %v2294 = vadd.f32 %v2126, %v2256
      %v2295 = vadd.f32 %v2127, %v2261
      %v2296 = vadd.f32 %v2128, %v2266
      %v2297 = vadd.f32 %v2129, %v2271
      %v2298 = vadd.f32 %v2130, %v2276
      %v2299 = vadd.f32 %v2131, %v2281
      // Predicated region
      $region115: #{double_conv_forward.3} parent=31 // pred_check
        %p2300 = pneg %p254
      $region116: #{double_conv_forward.3} parent=31 // pred_check_branch
        %2302 = sbr.rel (%p2300) target = $region118
      $region117: #{double_conv_forward.3} parent=31 // pred_region
        %2303 = vst [vmem:[%s244] sm:$0x1] 0.0
        %2304 = vst [vmem:[%s247] sm:$0x1] 0.0
      $region118: #{double_conv_forward.3} parent=31 // pred_fallthru
        _
      %v2305 = vld [vmem:[%s244] sm:$0x1]
      %v2306 = vadd.f32 %v2284, %v2285
      %v2307 = vadd.f32 %v2306, %v2286
      %v2308 = vadd.f32 %v2307, %v2287
      %v2309 = vadd.f32 %v2308, %v2288
      %v2310 = vadd.f32 %v2309, %v2289
      %v2311 = vadd.f32 %v2310, %v2290
      %v2312 = vadd.f32 %v2311, %v2291
      %v2313 = vadd.f32 %v2312, %v2292
      %v2314 = vadd.f32 %v2313, %v2293
      %v2315 = vadd.f32 %v2314, %v2294
      %v2316 = vadd.f32 %v2315, %v2295
      %v2317 = vadd.f32 %v2316, %v2296
      %v2318 = vadd.f32 %v2317, %v2297
      %v2319 = vadd.f32 %v2318, %v2298
      %v2320 = vadd.f32 %v2319, %v2299
      %v2321 = vrot.slane %v2320, 4
      %v2322 = vadd.f32 %v2320, %v2321
      %v2323 = vrot.slane %v2322, 2
      %v2324 = vadd.f32 %v2322, %v2323
      %v2325 = vrot.slane %v2324, 1
      %v2326 = vadd.f32 %v2324, %v2325
      %v2327 = vadd.f32 %v2305, %v2326
      %2328 = vst [vmem:[%s244] sm:$0x1] %v2327
      %v2329 = vld [vmem:[%s247] sm:$0x1]
      %v2330 = vmul.f32 %v2284, %v2284
      %v2331 = vmul.f32 %v2285, %v2285
      %v2332 = vmul.f32 %v2286, %v2286
      %v2333 = vmul.f32 %v2287, %v2287
      %v2334 = vmul.f32 %v2288, %v2288
      %v2335 = vmul.f32 %v2289, %v2289
      %v2336 = vmul.f32 %v2290, %v2290
      %v2337 = vmul.f32 %v2291, %v2291
      %v2338 = vmul.f32 %v2292, %v2292
      %v2339 = vmul.f32 %v2293, %v2293
      %v2340 = vmul.f32 %v2294, %v2294
      %v2341 = vmul.f32 %v2295, %v2295
      %v2342 = vmul.f32 %v2296, %v2296
      %v2343 = vmul.f32 %v2297, %v2297
      %v2344 = vmul.f32 %v2298, %v2298
      %v2345 = vmul.f32 %v2299, %v2299
      %v2346 = vadd.f32 %v2330, %v2331
      %v2347 = vadd.f32 %v2346, %v2332
      %v2348 = vadd.f32 %v2347, %v2333
      %v2349 = vadd.f32 %v2348, %v2334
      %v2350 = vadd.f32 %v2349, %v2335
      %v2351 = vadd.f32 %v2350, %v2336
      %v2352 = vadd.f32 %v2351, %v2337
      %v2353 = vadd.f32 %v2352, %v2338
      %v2354 = vadd.f32 %v2353, %v2339
      %v2355 = vadd.f32 %v2354, %v2340
      %v2356 = vadd.f32 %v2355, %v2341
      %v2357 = vadd.f32 %v2356, %v2342
      %v2358 = vadd.f32 %v2357, %v2343
      %v2359 = vadd.f32 %v2358, %v2344
      %v2360 = vadd.f32 %v2359, %v2345
      %v2361 = vrot.slane %v2360, 4
      %v2362 = vadd.f32 %v2360, %v2361
      %v2363 = vrot.slane %v2362, 2
      %v2364 = vadd.f32 %v2362, %v2363
      %v2365 = vrot.slane %v2364, 1
      %v2366 = vadd.f32 %v2364, %v2365
      %v2367 = vadd.f32 %v2329, %v2366
      %2368 = vst [vmem:[%s247] sm:$0x1] %v2367
      %2369 = vst [vmem:[%s240] sm:$0xff] %v2284
      %2370 = vst [vmem:[%s240 + $0x8] sm:$0xff] %v2285
      %2371 = vst [vmem:[%s240 + $0x10] sm:$0xff] %v2286
      %2372 = vst [vmem:[%s240 + $0x18] sm:$0xff] %v2287
      %2373 = vst [vmem:[%s240 + $0x20] sm:$0xff] %v2288
      %2374 = vst [vmem:[%s240 + $0x28] sm:$0xff] %v2289
      %2375 = vst [vmem:[%s240 + $0x30] sm:$0xff] %v2290
      %2376 = vst [vmem:[%s240 + $0x38] sm:$0xff] %v2291
      %2377 = vst [vmem:[%s240 + $0x40] sm:$0xff] %v2292
      %2378 = vst [vmem:[%s240 + $0x48] sm:$0xff] %v2293
      %2379 = vst [vmem:[%s240 + $0x50] sm:$0xff] %v2294
      %2380 = vst [vmem:[%s240 + $0x58] sm:$0xff] %v2295
      %2381 = vst [vmem:[%s240 + $0x60] sm:$0xff] %v2296
      %2382 = vst [vmem:[%s240 + $0x68] sm:$0xff] %v2297
      %2383 = vst [vmem:[%s240 + $0x70] sm:$0xff] %v2298
      %2384 = vst [vmem:[%s240 + $0x78] sm:$0xff] %v2299
      %s2385 = smul.u32 8, %s23
      %p2386 = scmp.lt.s32.totalorder %s22, 1
      %s2387 = scalar_select %p2386, %s22, 1
      %p2388 = scmp.lt.s32.totalorder %s2385, 15
      %s2389 = scalar_select %p2388, %s2385, 15
      %s2390 = smul.addr %s2389, 2
      %s2391 = smul.addr %s2387, 32
      %s2392 = sadd.s32 %s2390, %s2391
      %s2393 = smul.addr %s2392, 8
      %s2394 = scalar_lea.vmem %s4, %s2393
      %p2395 = scmp.lt.s32.totalorder %s22, 1
      %s2396 = scalar_select %p2395, %s22, 1
      %s2397 = scalar_lea.vmem %s5, %s2396
      %p2398 = scmp.lt.s32.totalorder %s22, 1
      %s2399 = scalar_select %p2398, %s22, 1
      %s2400 = scalar_lea.vmem %s6, %s2399
      // Predicated region
      $region119: #{double_conv_forward.3} parent=31 // pred_check
        %p2401 = pneg %p113
      $region120: #{double_conv_forward.3} parent=31 // pred_check_branch
        %2403 = sbr.rel (%p2401) target = $region122
      $region121: #{double_conv_forward.3} parent=31 // pred_region
        %s2404 = smul.u32 8, %s23
      $region122: #{double_conv_forward.3} parent=31 // pred_fallthru
        _
      // Predicated region
      $region123: #{double_conv_forward.3} parent=31 // pred_check
        %p2405 = pneg %p139
      $region124: #{double_conv_forward.3} parent=31 // pred_check_branch
        %2407 = sbr.rel (%p2405) target = $region126
      $region125: #{double_conv_forward.3} parent=31 // pred_region
        _
      $region126: #{double_conv_forward.3} parent=31 // pred_fallthru
        _
      // Predicated region
      $region127: #{double_conv_forward.3} parent=31 // pred_check
        %p2408 = pneg %p165
      $region128: #{double_conv_forward.3} parent=31 // pred_check_branch
        %2410 = sbr.rel (%p2408) target = $region130
      $region129: #{double_conv_forward.3} parent=31 // pred_region
        _
      $region130: #{double_conv_forward.3} parent=31 // pred_fallthru
        _
    $region32: #{double_conv_forward.3} parent=5 // pred_fallthru
      _
    %p2411 = scmp.le.s32.totalorder 2, %s13
    // Predicated region
    $region131: #{double_conv_forward.3} parent=5 // pred_check
      %p2412 = pneg %p2411
    $region132: #{double_conv_forward.3} parent=5 // pred_check_branch
      %2414 = sbr.rel (%p2412) target = $region134
    $region133: #{double_conv_forward.3} parent=5 // pred_region
      %s2415 = ssub.s32 %s13, 2
      // Predicated region
      $region135: #{double_conv_forward.3} parent=133 // pred_check
        %p2416 = pneg %p119
      $region136: #{double_conv_forward.3} parent=133 // pred_check_branch
        %2418 = sbr.rel (%p2416) target = $region138
      $region137: #{double_conv_forward.3} parent=133 // pred_region
        %s2419 = smul.u32 8, %s25
        %p2420 = scmp.lt.s32.totalorder %s24, 1
        %s2421 = scalar_select %p2420, %s24, 1
        %p2422 = scmp.lt.s32.totalorder %s2419, 15
        %s2423 = scalar_select %p2422, %s2419, 15
        %s2424 = smul.addr %s2423, 2
        %s2425 = smul.addr %s2421, 32
        %s2426 = sadd.s32 %s2424, %s2425
        %s2427 = smul.addr %s2426, 8
        %s2428 = scalar_lea.vmem %s4, %s2427
      $region138: #{double_conv_forward.3} parent=133 // pred_fallthru
        _
      // Predicated region
      $region139: #{double_conv_forward.3} parent=133 // pred_check
        %p2429 = pneg %p145
      $region140: #{double_conv_forward.3} parent=133 // pred_check_branch
        %2431 = sbr.rel (%p2429) target = $region142
      $region141: #{double_conv_forward.3} parent=133 // pred_region
        %p2432 = scmp.lt.s32.totalorder %s24, 1
        %s2433 = scalar_select %p2432, %s24, 1
        %s2434 = scalar_lea.vmem %s5, %s2433
      $region142: #{double_conv_forward.3} parent=133 // pred_fallthru
        _
      // Predicated region
      $region143: #{double_conv_forward.3} parent=133 // pred_check
        %p2435 = pneg %p171
      $region144: #{double_conv_forward.3} parent=133 // pred_check_branch
        %2437 = sbr.rel (%p2435) target = $region146
      $region145: #{double_conv_forward.3} parent=133 // pred_region
        %p2438 = scmp.lt.s32.totalorder %s24, 1
        %s2439 = scalar_select %p2438, %s24, 1
        %s2440 = scalar_lea.vmem %s6, %s2439
      $region146: #{double_conv_forward.3} parent=133 // pred_fallthru
        _
    $region134: #{double_conv_forward.3} parent=5 // pred_fallthru
      _
  $region6: #{double_conv_forward.3} parent=0 // loop_footer
    %s17 = sadd.s32 1, %s13
  $region7: #{double_conv_forward.3} parent=0 // loop_footer_branch
    %12 = sbr.rel target = $region3
  $region8: #{double_conv_forward.3} parent=0 // loop_exit
    _
  %2441 = vsyncmov [#allocation3]
  %s2442 = vpop.sfrf %2441
  %p2443 = scmp.eq.s32.totalorder %s2442, 0
  %p2444 = pneg %p2443
  %2446 = shalt.err (%p2444)
  %s2447 = scalar_lea.sflag [#allocation3], 1
  %2448 = vsyncmov %s2447
  %s2449 = vpop.sfrf %2448
  %p2450 = scmp.eq.s32.totalorder %s2449, 0
  %p2451 = pneg %p2450
  %2453 = shalt.err (%p2451)

// kernel: double_conv_forward.4
$region0: #{double_conv_forward.4}
  #allocation0 [shape = 'u32[]', space=smem, size = 0x4, offset = 0x4, fixed_abs, tag = 'smem constant byte address 0x4 - core index']
  #allocation1 [shape = 'u32[144,128]{1,0:T(1,128)}', space=vmem, size = 0x12000, scoped, tag = 'internal scratch']
  #allocation2 [shape = 'f32[2,10,18,128]{3,2,1,0:T(8,128)}', space=vmem, size = 0x3c000, scoped, tag = 'scratch operand']
  #allocation3 [shape = 's32[2]{0}', space=sflag, size = 0x8, scoped, tag = 'scratch operand']
  #allocation4 [shape = 's32[]', space=sflag, size = 0x4, offset = 0, fixed_abs, tag = 'sflag constant byte address 0x0 - dummy sync flag']
  #allocation5 [shape = 's32[]', space=sflag, size = 0x4, offset = 0, fixed_abs, tag = 'sflag constant byte address 0x0 - dummy sync flag']
  %s0 = inlined_call_operand.vmem [shape: f32[2,18,18,128], index: 0, kind: input, shape index: {}]
  %s1 = inlined_call_operand.vmem [shape: f32[3,3,128,128], index: 1, kind: input, shape index: {}]
  %s2 = inlined_call_operand.vmem [shape: f32[1,128], index: 2, kind: input, shape index: {}]
  %s3 = inlined_call_operand.vmem [shape: f32[1,128], index: 3, kind: input, shape index: {}]
  %s4 = inlined_call_operand.vmem [shape: f32[2,16,16,128], index: 4, kind: output, shape index: {0}]
  %s5 = inlined_call_operand.vmem [shape: f32[2,1,128], index: 5, kind: output, shape index: {1}]
  %s6 = inlined_call_operand.vmem [shape: f32[2,1,128], index: 6, kind: output, shape index: {2}]
  %7 = xla_tuple %s4, %s5, %s6
  %s8 = sld [smem:[#allocation0]]
  $region147: #{double_conv_forward.4} parent=0
    _
  %s10 = ssub.s32 1, %s8
  %s11 = scalar_select 0, %s10, %s8
  loop: start=0, step=1, limit=6
  $region2: #{double_conv_forward.4} parent=0 // loop_pre_header
    _
  $region3: #{double_conv_forward.4} parent=0 // loop_header
    %s13 = sphi 0, %s17
    %p14 = scmp.ge.s32.totalorder %s13, 6
    %s20 = sphi 0, %s32
    %s21 = sphi 0, %s28
    %s22 = sphi 0, %s20
    %s23 = sphi 0, %s21
    %s24 = sphi 0, %s22
    %s25 = sphi 0, %s23
    %s33 = sphi 0, %s33
    %s35 = sphi 0, %s33
    %s36 = sphi 0, %s35
    %s50 = sphi 0, %s36
    %s54 = sphi 0, %s54
    %s56 = sphi 0, %s54
    %s57 = sphi 0, %s56
    %s71 = sphi 0, %s57
    %s75 = sphi 0, %s75
    %s77 = sphi 0, %s75
    %s78 = sphi 0, %s77
    %s92 = sphi 0, %s78
    %s100 = sphi 0, %s102
    %s103 = sphi 0, %s100
    %s104 = sphi 0, %s103
    %s120 = sphi 0, %s104
    %s126 = sphi 0, %s128
    %s129 = sphi 0, %s126
    %s130 = sphi 0, %s129
    %s146 = sphi 0, %s130
    %s152 = sphi 0, %s154
    %s155 = sphi 0, %s152
    %s156 = sphi 0, %s155
    %s172 = sphi 0, %s156
  $region4: #{double_conv_forward.4} parent=0 // loop_header_branch
    %16 = sbr.rel (%p14) target = $region8
  $region5: #{double_conv_forward.4} parent=0 // loop_body
    %s18 = ssub.s32 %s13, 1
    %s19 = ssub.s32 %s13, 2
    %s26 = sadd.s32 1, %s21
    %p27 = scmp.ge.s32.totalorder %s26, 2
    %s28 = scalar_select %p27, 0, %s26
    %s29 = sadd.s32 1, %s20
    %s30 = scalar_select %p27, %s29, %s20
    %p31 = scmp.ge.s32.totalorder %s30, 2
    %s32 = scalar_select %p31, 0, %s30
    %s34 = sadd.s32 %s33, 1
    %p37 = scmp.eq.s32.totalorder %s13, 3
    %p38 = scmp.ne.s32.totalorder %s33, %s35
    %p39 = scmp.eq.s32.totalorder %s13, 0
    %p40 = por %p38, %p39
    %p41 = scmp.ne.s32.totalorder %s33, %s35
    %p42 = scmp.eq.s32.totalorder %s18, 3
    %p43 = por %p41, %p42
    %p44 = scmp.ne.s32.totalorder %s35, %s36
    %p45 = scmp.eq.s32.totalorder %s18, 0
    %p46 = por %p44, %p45
    %p47 = scmp.ne.s32.totalorder %s35, %s36
    %p48 = scmp.eq.s32.totalorder %s19, 3
    %p49 = por %p47, %p48
    %p51 = scmp.ne.s32.totalorder %s36, %s50
    %p52 = scmp.eq.s32.totalorder %s19, 0
    %p53 = por %p51, %p52
    %s55 = sadd.s32 %s54, 1
    %p58 = scmp.eq.s32.totalorder %s13, 3
    %p59 = scmp.ne.s32.totalorder %s54, %s56
    %p60 = scmp.eq.s32.totalorder %s13, 0
    %p61 = por %p59, %p60
    %p62 = scmp.ne.s32.totalorder %s54, %s56
    %p63 = scmp.eq.s32.totalorder %s18, 3
    %p64 = por %p62, %p63
    %p65 = scmp.ne.s32.totalorder %s56, %s57
    %p66 = scmp.eq.s32.totalorder %s18, 0
    %p67 = por %p65, %p66
    %p68 = scmp.ne.s32.totalorder %s56, %s57
    %p69 = scmp.eq.s32.totalorder %s19, 3
    %p70 = por %p68, %p69
    %p72 = scmp.ne.s32.totalorder %s57, %s71
    %p73 = scmp.eq.s32.totalorder %s19, 0
    %p74 = por %p72, %p73
    %s76 = sadd.s32 %s75, 1
    %p79 = scmp.eq.s32.totalorder %s13, 3
    %p80 = scmp.ne.s32.totalorder %s75, %s77
    %p81 = scmp.eq.s32.totalorder %s13, 0
    %p82 = por %p80, %p81
    %p83 = scmp.ne.s32.totalorder %s75, %s77
    %p84 = scmp.eq.s32.totalorder %s18, 3
    %p85 = por %p83, %p84
    %p86 = scmp.ne.s32.totalorder %s77, %s78
    %p87 = scmp.eq.s32.totalorder %s18, 0
    %p88 = por %p86, %p87
    %p89 = scmp.ne.s32.totalorder %s77, %s78
    %p90 = scmp.eq.s32.totalorder %s19, 3
    %p91 = por %p89, %p90
    %p93 = scmp.ne.s32.totalorder %s78, %s92
    %p94 = scmp.eq.s32.totalorder %s19, 0
    %p95 = por %p93, %p94
    %s96 = ssub.s32 %s20, %s32
    %s97 = ssub.s32 %s21, %s28
    %s98 = sor.u32 %s96, %s97
    %p99 = scmp.eq.s32.totalorder %s98, 0
    %s101 = sadd.s32 %s100, 1
    %s102 = scalar_select %p99, %s100, %s101
    %p105 = pneg %p99
    %p106 = scmp.eq.s32.totalorder %s13, 3
    %p107 = por %p105, %p106
    %p108 = scmp.ne.s32.totalorder %s100, %s103
    %p109 = scmp.eq.s32.totalorder %s13, 0
    %p110 = por %p108, %p109
    %p111 = scmp.ne.s32.totalorder %s100, %s103
    %p112 = scmp.eq.s32.totalorder %s18, 3
    %p113 = por %p111, %p112
    %p114 = scmp.ne.s32.totalorder %s103, %s104
    %p115 = scmp.eq.s32.totalorder %s18, 0
    %p116 = por %p114, %p115
    %p117 = scmp.ne.s32.totalorder %s103, %s104
    %p118 = scmp.eq.s32.totalorder %s19, 3
    %p119 = por %p117, %p118
    %p121 = scmp.ne.s32.totalorder %s104, %s120
    %p122 = scmp.eq.s32.totalorder %s19, 0
    %p123 = por %p121, %p122
    %s124 = ssub.s32 %s20, %s32
    %p125 = scmp.eq.s32.totalorder %s124, 0
    %s127 = sadd.s32 %s126, 1
    %s128 = scalar_select %p125, %s126, %s127
    %p131 = pneg %p125
    %p132 = scmp.eq.s32.totalorder %s13, 3
    %p133 = por %p131, %p132
    %p134 = scmp.ne.s32.totalorder %s126, %s129
    %p135 = scmp.eq.s32.totalorder %s13, 0
    %p136 = por %p134, %p135
    %p137 = scmp.ne.s32.totalorder %s126, %s129
    %p138 = scmp.eq.s32.totalorder %s18, 3
    %p139 = por %p137, %p138
    %p140 = scmp.ne.s32.totalorder %s129, %s130
    %p141 = scmp.eq.s32.totalorder %s18, 0
    %p142 = por %p140, %p141
    %p143 = scmp.ne.s32.totalorder %s129, %s130
    %p144 = scmp.eq.s32.totalorder %s19, 3
    %p145 = por %p143, %p144
    %p147 = scmp.ne.s32.totalorder %s130, %s146
    %p148 = scmp.eq.s32.totalorder %s19, 0
    %p149 = por %p147, %p148
    %s150 = ssub.s32 %s20, %s32
    %p151 = scmp.eq.s32.totalorder %s150, 0
    %s153 = sadd.s32 %s152, 1
    %s154 = scalar_select %p151, %s152, %s153
    %p157 = pneg %p151
    %p158 = scmp.eq.s32.totalorder %s13, 3
    %p159 = por %p157, %p158
    %p160 = scmp.ne.s32.totalorder %s152, %s155
    %p161 = scmp.eq.s32.totalorder %s13, 0
    %p162 = por %p160, %p161
    %p163 = scmp.ne.s32.totalorder %s152, %s155
    %p164 = scmp.eq.s32.totalorder %s18, 3
    %p165 = por %p163, %p164
    %p166 = scmp.ne.s32.totalorder %s155, %s156
    %p167 = scmp.eq.s32.totalorder %s18, 0
    %p168 = por %p166, %p167
    %p169 = scmp.ne.s32.totalorder %s155, %s156
    %p170 = scmp.eq.s32.totalorder %s19, 3
    %p171 = por %p169, %p170
    %p173 = scmp.ne.s32.totalorder %s156, %s172
    %p174 = scmp.eq.s32.totalorder %s19, 0
    %p175 = por %p173, %p174
    %p176 = scmp.le.s32.totalorder 1, %s13
    %p177 = scmp.lt.s32.totalorder %s13, 5
    %p178 = pnand %p176, %p177
    %p179 = pneg %p178
    // Predicated region
    $region9: #{double_conv_forward.4} parent=5 // pred_check
      _
    $region10: #{double_conv_forward.4} parent=5 // pred_check_branch
      %181 = sbr.rel (%p178) target = $region12
    $region11: #{double_conv_forward.4} parent=5 // pred_region
      %s182 = ssub.s32 %s13, 1
      // Predicated region
      $region13: #{double_conv_forward.4} parent=11 // pred_check
        %p183 = pneg %p46
      $region14: #{double_conv_forward.4} parent=11 // pred_check_branch
        %185 = sbr.rel (%p183) target = $region16
      $region15: #{double_conv_forward.4} parent=11 // pred_region
        _
      $region16: #{double_conv_forward.4} parent=11 // pred_fallthru
        _
      // Predicated region
      $region17: #{double_conv_forward.4} parent=11 // pred_check
        %p186 = pneg %p67
      $region18: #{double_conv_forward.4} parent=11 // pred_check_branch
        %188 = sbr.rel (%p186) target = $region20
      $region19: #{double_conv_forward.4} parent=11 // pred_region
        _
      $region20: #{double_conv_forward.4} parent=11 // pred_fallthru
        _
      // Predicated region
      $region21: #{double_conv_forward.4} parent=11 // pred_check
        %p189 = pneg %p88
      $region22: #{double_conv_forward.4} parent=11 // pred_check_branch
        %191 = sbr.rel (%p189) target = $region24
      $region23: #{double_conv_forward.4} parent=11 // pred_region
        _
      $region24: #{double_conv_forward.4} parent=11 // pred_fallthru
        _
    $region12: #{double_conv_forward.4} parent=5 // pred_fallthru
      _
    %p192 = scmp.lt.s32.totalorder %s13, 4
    // Predicated region
    $region25: #{double_conv_forward.4} parent=5 // pred_check
      %p193 = pneg %p192
    $region26: #{double_conv_forward.4} parent=5 // pred_check_branch
      %195 = sbr.rel (%p193) target = $region28
    $region27: #{double_conv_forward.4} parent=5 // pred_region
      _
    $region28: #{double_conv_forward.4} parent=5 // pred_fallthru
      _
    %p196 = scmp.le.s32.totalorder 1, %s13
    %p197 = scmp.lt.s32.totalorder %s13, 5
    %p198 = pnand %p196, %p197
    %p199 = pneg %p198
    // Predicated region
    $region29: #{double_conv_forward.4} parent=5 // pred_check
      _
    $region30: #{double_conv_forward.4} parent=5 // pred_check_branch
      %201 = sbr.rel (%p198) target = $region32
    $region31: #{double_conv_forward.4} parent=5 // pred_region
      %s202 = ssub.s32 %s13, 1
      %p203 = pneg %p46
      %p204 = pneg %p43
      %p205 = pneg %p67
      %p206 = pneg %p64
      %p207 = pneg %p88
      %p208 = pneg %p85
      %p209 = pneg %p116
      %p210 = pneg %p113
      %s211 = smul.u32 8, %s23
      %p212 = scmp.lt.s32.totalorder %s22, 1
      %s213 = scalar_select %p212, %s22, 1
      %p214 = scmp.lt.s32.totalorder %s211, 15
      %s215 = scalar_select %p214, %s211, 15
      %s216 = smul.addr %s215, 2
      %s217 = smul.addr %s213, 32
      %s218 = sadd.s32 %s216, %s217
      %s219 = smul.addr %s218, 8
      %s220 = scalar_lea.vmem %s4, %s219
      %p221 = pneg %p142
      %p222 = pneg %p139
      %p223 = scmp.lt.s32.totalorder %s22, 1
      %s224 = scalar_select %p223, %s22, 1
      %s225 = scalar_lea.vmem %s5, %s224
      %p226 = pneg %p168
      %p227 = pneg %p165
      %p228 = scmp.lt.s32.totalorder %s22, 1
      %s229 = scalar_select %p228, %s22, 1
      %s230 = scalar_lea.vmem %s6, %s229
      %s231 = smul.u32 8, %s23
      %p232 = scmp.lt.s32.totalorder %s22, 1
      %s233 = scalar_select %p232, %s22, 1
      %p234 = scmp.lt.s32.totalorder %s231, 15
      %s235 = scalar_select %p234, %s231, 15
      %s236 = smul.addr %s235, 2
      %s237 = smul.addr %s233, 32
      %s238 = sadd.s32 %s236, %s237
      %s239 = smul.addr %s238, 8
      %s240 = scalar_lea.vmem %s4, %s239
      %s241 = smul.u32 8, %s23
      %p242 = scmp.lt.s32.totalorder %s22, 1
      %s243 = scalar_select %p242, %s22, 1
      %s244 = scalar_lea.vmem %s5, %s243
      %p245 = scmp.lt.s32.totalorder %s22, 1
      %s246 = scalar_select %p245, %s22, 1
      %s247 = scalar_lea.vmem %s6, %s246
      %p248 = scmp.lt.s32.totalorder %s23, 0
      %s249 = ssub.s32 0, %s23
      %s250 = scalar_select %p248, %s249, %s23
      %s251 = sand.u32 %s250, 1
      %s252 = ssub.s32 0, %s251
      %s253 = scalar_select %p248, %s252, %s251
      %p254 = scmp.eq.s32.totalorder %s23, 0
      // Predicated region
      $region33: #{double_conv_forward.4} parent=31 // pred_check
        %p255 = pneg %p254
      $region34: #{double_conv_forward.4} parent=31 // pred_check_branch
        %257 = sbr.rel (%p255) target = $region36
      $region35: #{double_conv_forward.4} parent=31 // pred_region
        %s258 = smul.u32 %s22, 432
        %s259 = scalar_lea.vmem %s0, %s258
        %p261 = scmp.lt.u32.totalorder 18, 8
        %p262 = pneg %p261
        // Predicated region
        $region37: #{double_conv_forward.4} parent=35 // pred_check
          _
        $region38: #{double_conv_forward.4} parent=35 // pred_check_branch
          %264 = sbr.rel (%p261) target = $region40
        $region39: #{double_conv_forward.4} parent=35 // pred_region
          %s297 = sand.u32 18, 7
          %p298 = scmp.eq.s32.totalorder %s297, 0
          %p299 = pneg %p298
          // Predicated region
          $region52: #{double_conv_forward.4} parent=39 // pred_check
            _
          $region53: #{double_conv_forward.4} parent=39 // pred_check_branch
            %301 = sbr.rel (%p298) target = $region55
          $region54: #{double_conv_forward.4} parent=39 // pred_region
            %s302 = sand.u32 18, 7
            %s303 = ssub.s32 18, %s302
            %s304 = scalar_lea.vmem %s259, %s303
            %s305 = ssub.s32 18, %s302
            %s306 = scalar_lea.vmem [#allocation2], %s305
            loop: start=0, step=1, limit=1
            $region56: #{double_conv_forward.4} parent=54 // loop_pre_header
              _
            $region57: #{double_conv_forward.4} parent=54 // loop_header
              %s308 = sphi 0, %s312
              %p309 = scmp.ge.s32.totalorder %s308, 1
              %s313 = sphi %s259, %s259
              %s314 = sphi [#allocation2], [#allocation2]
            $region58: #{double_conv_forward.4} parent=54 // loop_header_branch
              %311 = sbr.rel (%p309) target = $region62
            $region59: #{double_conv_forward.4} parent=54 // loop_body
              %v315 = vld [vmem:[%s313] sm:$0xff]
              %316 = vst [vmem:[%s314] sm:$0xff] %v315
              %v317 = vld [vmem:[%s313 + $0x8] sm:$0xff]
              %318 = vst [vmem:[%s314 + $0x8] sm:$0xff] %v317
              %v319 = vld [vmem:[%s313 + $0x18] sm:$0xff]
              %320 = vst [vmem:[%s314 + $0x18] sm:$0xff] %v319
              %v321 = vld [vmem:[%s313 + $0x20] sm:$0xff]
              %322 = vst [vmem:[%s314 + $0x20] sm:$0xff] %v321
              %v323 = vld [vmem:[%s313 + $0x30] sm:$0xff]
              %324 = vst [vmem:[%s314 + $0x30] sm:$0xff] %v323
              %v325 = vld [vmem:[%s313 + $0x38] sm:$0xff]
              %326 = vst [vmem:[%s314 + $0x38] sm:$0xff] %v325
              %v327 = vld [vmem:[%s313 + $0x48] sm:$0xff]
              %328 = vst [vmem:[%s314 + $0x48] sm:$0xff] %v327
              %v329 = vld [vmem:[%s313 + $0x50] sm:$0xff]
              %330 = vst [vmem:[%s314 + $0x50] sm:$0xff] %v329
              %v331 = vld [vmem:[%s313 + $0x60] sm:$0xff]
              %332 = vst [vmem:[%s314 + $0x60] sm:$0xff] %v331
              %v333 = vld [vmem:[%s313 + $0x68] sm:$0xff]
              %334 = vst [vmem:[%s314 + $0x68] sm:$0xff] %v333
              %v335 = vld [vmem:[%s313 + $0x78] sm:$0xff]
              %336 = vst [vmem:[%s314 + $0x78] sm:$0xff] %v335
              %v337 = vld [vmem:[%s313 + $0x80] sm:$0xff]
              %338 = vst [vmem:[%s314 + $0x80] sm:$0xff] %v337
              %v339 = vld [vmem:[%s313 + $0x90] sm:$0xff]
              %340 = vst [vmem:[%s314 + $0x90] sm:$0xff] %v339
              %v341 = vld [vmem:[%s313 + $0x98] sm:$0xff]
              %342 = vst [vmem:[%s314 + $0x98] sm:$0xff] %v341
              %v343 = vld [vmem:[%s313 + $0xa8] sm:$0xff]
              %344 = vst [vmem:[%s314 + $0xa8] sm:$0xff] %v343
              %v345 = vld [vmem:[%s313 + $0xb0] sm:$0xff]
              %346 = vst [vmem:[%s314 + $0xb0] sm:$0xff] %v345
              %v347 = vld [vmem:[%s313 + $0xc0] sm:$0xff]
              %348 = vst [vmem:[%s314 + $0xc0] sm:$0xff] %v347
              %v349 = vld [vmem:[%s313 + $0xc8] sm:$0xff]
              %350 = vst [vmem:[%s314 + $0xc8] sm:$0xff] %v349
              %v351 = vld [vmem:[%s313 + $0xd8] sm:$0xff]
              %352 = vst [vmem:[%s314 + $0xd8] sm:$0xff] %v351
              %v353 = vld [vmem:[%s313 + $0xe0] sm:$0xff]
              %354 = vst [vmem:[%s314 + $0xe0] sm:$0xff] %v353
            $region60: #{double_conv_forward.4} parent=54 // loop_footer
              %s312 = sadd.s32 1, %s308
            $region61: #{double_conv_forward.4} parent=54 // loop_footer_branch
              %307 = sbr.rel target = $region57
            $region62: #{double_conv_forward.4} parent=54 // loop_exit
              _
            %s355 = sshllo.u32 0, %s302
            loop: start=0, step=1, limit=1
            $region63: #{double_conv_forward.4} parent=54 // loop_pre_header
              _
            $region64: #{double_conv_forward.4} parent=54 // loop_header
              %s357 = sphi 0, %s361
              %p358 = scmp.ge.s32.totalorder %s357, 1
              %s362 = sphi %s304, %s304
              %s363 = sphi %s306, %s306
            $region65: #{double_conv_forward.4} parent=54 // loop_header_branch
              %360 = sbr.rel (%p358) target = $region69
            $region66: #{double_conv_forward.4} parent=54 // loop_body
              %v364 = vld [vmem:[%s362] sm:%s355]
              %365 = vst [vmem:[%s363] sm:%s355] %v364
              %v366 = vld [vmem:[%s362 + $0x18] sm:%s355]
              %367 = vst [vmem:[%s363 + $0x18] sm:%s355] %v366
              %v368 = vld [vmem:[%s362 + $0x30] sm:%s355]
              %369 = vst [vmem:[%s363 + $0x30] sm:%s355] %v368
              %v370 = vld [vmem:[%s362 + $0x48] sm:%s355]
              %371 = vst [vmem:[%s363 + $0x48] sm:%s355] %v370
              %v372 = vld [vmem:[%s362 + $0x60] sm:%s355]
              %373 = vst [vmem:[%s363 + $0x60] sm:%s355] %v372
              %v374 = vld [vmem:[%s362 + $0x78] sm:%s355]
              %375 = vst [vmem:[%s363 + $0x78] sm:%s355] %v374
              %v376 = vld [vmem:[%s362 + $0x90] sm:%s355]
              %377 = vst [vmem:[%s363 + $0x90] sm:%s355] %v376
              %v378 = vld [vmem:[%s362 + $0xa8] sm:%s355]
              %379 = vst [vmem:[%s363 + $0xa8] sm:%s355] %v378
              %v380 = vld [vmem:[%s362 + $0xc0] sm:%s355]
              %381 = vst [vmem:[%s363 + $0xc0] sm:%s355] %v380
              %v382 = vld [vmem:[%s362 + $0xd8] sm:%s355]
              %383 = vst [vmem:[%s363 + $0xd8] sm:%s355] %v382
            $region67: #{double_conv_forward.4} parent=54 // loop_footer
              %s361 = sadd.s32 1, %s357
            $region68: #{double_conv_forward.4} parent=54 // loop_footer_branch
              %356 = sbr.rel target = $region64
            $region69: #{double_conv_forward.4} parent=54 // loop_exit
              _
          $region55: #{double_conv_forward.4} parent=39 // pred_fallthru
            _
        $region40: #{double_conv_forward.4} parent=35 // pred_fallthru
          _
        // Predicated region
        $region41: #{double_conv_forward.4} parent=35 // pred_check
          %p265 = pneg %p261
        $region42: #{double_conv_forward.4} parent=35 // pred_check_branch
          %267 = sbr.rel (%p265) target = $region44
        $region43: #{double_conv_forward.4} parent=35 // pred_region
          %s268 = sshllo.u32 0, 18
          loop: start=0, step=1, limit=1
          $region45: #{double_conv_forward.4} parent=43 // loop_pre_header
            _
          $region46: #{double_conv_forward.4} parent=43 // loop_header
            %s270 = sphi 0, %s274
            %p271 = scmp.ge.s32.totalorder %s270, 1
            %s275 = sphi %s259, %s259
            %s276 = sphi [#allocation2], [#allocation2]
          $region47: #{double_conv_forward.4} parent=43 // loop_header_branch
            %273 = sbr.rel (%p271) target = $region51
          $region48: #{double_conv_forward.4} parent=43 // loop_body
            %v277 = vld [vmem:[%s275] sm:%s268]
            %278 = vst [vmem:[%s276] sm:%s268] %v277
            %v279 = vld [vmem:[%s275 + $0x18] sm:%s268]
            %280 = vst [vmem:[%s276 + $0x18] sm:%s268] %v279
            %v281 = vld [vmem:[%s275 + $0x30] sm:%s268]
            %282 = vst [vmem:[%s276 + $0x30] sm:%s268] %v281
            %v283 = vld [vmem:[%s275 + $0x48] sm:%s268]
            %284 = vst [vmem:[%s276 + $0x48] sm:%s268] %v283
            %v285 = vld [vmem:[%s275 + $0x60] sm:%s268]
            %286 = vst [vmem:[%s276 + $0x60] sm:%s268] %v285
            %v287 = vld [vmem:[%s275 + $0x78] sm:%s268]
            %288 = vst [vmem:[%s276 + $0x78] sm:%s268] %v287
            %v289 = vld [vmem:[%s275 + $0x90] sm:%s268]
            %290 = vst [vmem:[%s276 + $0x90] sm:%s268] %v289
            %v291 = vld [vmem:[%s275 + $0xa8] sm:%s268]
            %292 = vst [vmem:[%s276 + $0xa8] sm:%s268] %v291
            %v293 = vld [vmem:[%s275 + $0xc0] sm:%s268]
            %294 = vst [vmem:[%s276 + $0xc0] sm:%s268] %v293
            %v295 = vld [vmem:[%s275 + $0xd8] sm:%s268]
            %296 = vst [vmem:[%s276 + $0xd8] sm:%s268] %v295
          $region49: #{double_conv_forward.4} parent=43 // loop_footer
            %s274 = sadd.s32 1, %s270
          $region50: #{double_conv_forward.4} parent=43 // loop_footer_branch
            %269 = sbr.rel target = $region46
          $region51: #{double_conv_forward.4} parent=43 // loop_exit
            _
        $region44: #{double_conv_forward.4} parent=35 // pred_fallthru
          _
        // Predicated region
        $region70: #{double_conv_forward.4} parent=35 // pred_check
          _
        $region71: #{double_conv_forward.4} parent=35 // pred_check_branch
          %386 = sbr.rel (0) target = $region73
        $region72: #{double_conv_forward.4} parent=35 // pred_region
          %387 = vsyncadd [#allocation3], 2880
        $region73: #{double_conv_forward.4} parent=35 // pred_fallthru
          _
      $region36: #{double_conv_forward.4} parent=31 // pred_fallthru
        _
      %s388 = smul.u32 %s253, 240
      %s389 = scalar_lea.vmem [#allocation2], %s388
      %s390 = scalar_lea.sflag [#allocation3], %s253
      %s391 = smul.u32 10, 18
      %s392 = smul.u32 %s391, 1
      %s393 = sshll.u32 %s392, 4
      %394 = dma.done %s390, %s393
      %s395 = sadd.s32 %s23, 1
      %p396 = scmp.lt.s32.totalorder %s395, 2
      // Predicated region
      $region74: #{double_conv_forward.4} parent=31 // pred_check
        %p397 = pneg %p396
      $region75: #{double_conv_forward.4} parent=31 // pred_check_branch
        %399 = sbr.rel (%p397) target = $region77
      $region76: #{double_conv_forward.4} parent=31 // pred_region
        %s400 = ssub.s32 1, %s253
        %s401 = smul.u32 %s395, 8
        %s402 = smul.u32 %s401, 24
        %s403 = smul.u32 %s22, 432
        %s404 = sadd.s32 %s402, %s403
        %s405 = scalar_lea.vmem %s0, %s404
        %s406 = smul.u32 %s400, 240
        %s407 = scalar_lea.vmem [#allocation2], %s406
        %s408 = scalar_lea.sflag [#allocation3], %s400
        %p410 = scmp.lt.u32.totalorder 18, 8
        %p411 = pneg %p410
        // Predicated region
        $region78: #{double_conv_forward.4} parent=76 // pred_check
          _
        $region79: #{double_conv_forward.4} parent=76 // pred_check_branch
          %413 = sbr.rel (%p410) target = $region81
        $region80: #{double_conv_forward.4} parent=76 // pred_region
          %s446 = sand.u32 18, 7
          %p447 = scmp.eq.s32.totalorder %s446, 0
          %p448 = pneg %p447
          // Predicated region
          $region93: #{double_conv_forward.4} parent=80 // pred_check
            _
          $region94: #{double_conv_forward.4} parent=80 // pred_check_branch
            %450 = sbr.rel (%p447) target = $region96
          $region95: #{double_conv_forward.4} parent=80 // pred_region
            %s451 = sand.u32 18, 7
            %s452 = ssub.s32 18, %s451
            %s453 = scalar_lea.vmem %s405, %s452
            %s454 = ssub.s32 18, %s451
            %s455 = scalar_lea.vmem %s407, %s454 [#allocation2]
            loop: start=0, step=1, limit=1
            $region97: #{double_conv_forward.4} parent=95 // loop_pre_header
              _
            $region98: #{double_conv_forward.4} parent=95 // loop_header
              %s457 = sphi 0, %s461
              %p458 = scmp.ge.s32.totalorder %s457, 1
              %s462 = sphi %s405, %s405
              %s463 = sphi %s407, %s407
            $region99: #{double_conv_forward.4} parent=95 // loop_header_branch
              %460 = sbr.rel (%p458) target = $region103
            $region100: #{double_conv_forward.4} parent=95 // loop_body
              %v464 = vld [vmem:[%s462] sm:$0xff]
              %465 = vst [vmem:[%s463] sm:$0xff] %v464
              %v466 = vld [vmem:[%s462 + $0x8] sm:$0xff]
              %467 = vst [vmem:[%s463 + $0x8] sm:$0xff] %v466
              %v468 = vld [vmem:[%s462 + $0x18] sm:$0xff]
              %469 = vst [vmem:[%s463 + $0x18] sm:$0xff] %v468
              %v470 = vld [vmem:[%s462 + $0x20] sm:$0xff]
              %471 = vst [vmem:[%s463 + $0x20] sm:$0xff] %v470
              %v472 = vld [vmem:[%s462 + $0x30] sm:$0xff]
              %473 = vst [vmem:[%s463 + $0x30] sm:$0xff] %v472
              %v474 = vld [vmem:[%s462 + $0x38] sm:$0xff]
              %475 = vst [vmem:[%s463 + $0x38] sm:$0xff] %v474
              %v476 = vld [vmem:[%s462 + $0x48] sm:$0xff]
              %477 = vst [vmem:[%s463 + $0x48] sm:$0xff] %v476
              %v478 = vld [vmem:[%s462 + $0x50] sm:$0xff]
              %479 = vst [vmem:[%s463 + $0x50] sm:$0xff] %v478
              %v480 = vld [vmem:[%s462 + $0x60] sm:$0xff]
              %481 = vst [vmem:[%s463 + $0x60] sm:$0xff] %v480
              %v482 = vld [vmem:[%s462 + $0x68] sm:$0xff]
              %483 = vst [vmem:[%s463 + $0x68] sm:$0xff] %v482
              %v484 = vld [vmem:[%s462 + $0x78] sm:$0xff]
              %485 = vst [vmem:[%s463 + $0x78] sm:$0xff] %v484
              %v486 = vld [vmem:[%s462 + $0x80] sm:$0xff]
              %487 = vst [vmem:[%s463 + $0x80] sm:$0xff] %v486
              %v488 = vld [vmem:[%s462 + $0x90] sm:$0xff]
              %489 = vst [vmem:[%s463 + $0x90] sm:$0xff] %v488
              %v490 = vld [vmem:[%s462 + $0x98] sm:$0xff]
              %491 = vst [vmem:[%s463 + $0x98] sm:$0xff] %v490
              %v492 = vld [vmem:[%s462 + $0xa8] sm:$0xff]
              %493 = vst [vmem:[%s463 + $0xa8] sm:$0xff] %v492
              %v494 = vld [vmem:[%s462 + $0xb0] sm:$0xff]
              %495 = vst [vmem:[%s463 + $0xb0] sm:$0xff] %v494
              %v496 = vld [vmem:[%s462 + $0xc0] sm:$0xff]
              %497 = vst [vmem:[%s463 + $0xc0] sm:$0xff] %v496
              %v498 = vld [vmem:[%s462 + $0xc8] sm:$0xff]
              %499 = vst [vmem:[%s463 + $0xc8] sm:$0xff] %v498
              %v500 = vld [vmem:[%s462 + $0xd8] sm:$0xff]
              %501 = vst [vmem:[%s463 + $0xd8] sm:$0xff] %v500
              %v502 = vld [vmem:[%s462 + $0xe0] sm:$0xff]
              %503 = vst [vmem:[%s463 + $0xe0] sm:$0xff] %v502
            $region101: #{double_conv_forward.4} parent=95 // loop_footer
              %s461 = sadd.s32 1, %s457
            $region102: #{double_conv_forward.4} parent=95 // loop_footer_branch
              %456 = sbr.rel target = $region98
            $region103: #{double_conv_forward.4} parent=95 // loop_exit
              _
            %s504 = sshllo.u32 0, %s451
            loop: start=0, step=1, limit=1
            $region104: #{double_conv_forward.4} parent=95 // loop_pre_header
              _
            $region105: #{double_conv_forward.4} parent=95 // loop_header
              %s506 = sphi 0, %s510
              %p507 = scmp.ge.s32.totalorder %s506, 1
              %s511 = sphi %s453, %s453
              %s512 = sphi %s455, %s455
            $region106: #{double_conv_forward.4} parent=95 // loop_header_branch
              %509 = sbr.rel (%p507) target = $region110
            $region107: #{double_conv_forward.4} parent=95 // loop_body
              %v513 = vld [vmem:[%s511] sm:%s504]
              %514 = vst [vmem:[%s512] sm:%s504] %v513
              %v515 = vld [vmem:[%s511 + $0x18] sm:%s504]
              %516 = vst [vmem:[%s512 + $0x18] sm:%s504] %v515
              %v517 = vld [vmem:[%s511 + $0x30] sm:%s504]
              %518 = vst [vmem:[%s512 + $0x30] sm:%s504] %v517
              %v519 = vld [vmem:[%s511 + $0x48] sm:%s504]
              %520 = vst [vmem:[%s512 + $0x48] sm:%s504] %v519
              %v521 = vld [vmem:[%s511 + $0x60] sm:%s504]
              %522 = vst [vmem:[%s512 + $0x60] sm:%s504] %v521
              %v523 = vld [vmem:[%s511 + $0x78] sm:%s504]
              %524 = vst [vmem:[%s512 + $0x78] sm:%s504] %v523
              %v525 = vld [vmem:[%s511 + $0x90] sm:%s504]
              %526 = vst [vmem:[%s512 + $0x90] sm:%s504] %v525
              %v527 = vld [vmem:[%s511 + $0xa8] sm:%s504]
              %528 = vst [vmem:[%s512 + $0xa8] sm:%s504] %v527
              %v529 = vld [vmem:[%s511 + $0xc0] sm:%s504]
              %530 = vst [vmem:[%s512 + $0xc0] sm:%s504] %v529
              %v531 = vld [vmem:[%s511 + $0xd8] sm:%s504]
              %532 = vst [vmem:[%s512 + $0xd8] sm:%s504] %v531
            $region108: #{double_conv_forward.4} parent=95 // loop_footer
              %s510 = sadd.s32 1, %s506
            $region109: #{double_conv_forward.4} parent=95 // loop_footer_branch
              %505 = sbr.rel target = $region105
            $region110: #{double_conv_forward.4} parent=95 // loop_exit
              _
          $region96: #{double_conv_forward.4} parent=80 // pred_fallthru
            _
        $region81: #{double_conv_forward.4} parent=76 // pred_fallthru
          _
        // Predicated region
        $region82: #{double_conv_forward.4} parent=76 // pred_check
          %p414 = pneg %p410
        $region83: #{double_conv_forward.4} parent=76 // pred_check_branch
          %416 = sbr.rel (%p414) target = $region85
        $region84: #{double_conv_forward.4} parent=76 // pred_region
          %s417 = sshllo.u32 0, 18
          loop: start=0, step=1, limit=1
          $region86: #{double_conv_forward.4} parent=84 // loop_pre_header
            _
          $region87: #{double_conv_forward.4} parent=84 // loop_header
            %s419 = sphi 0, %s423
            %p420 = scmp.ge.s32.totalorder %s419, 1
            %s424 = sphi %s405, %s405
            %s425 = sphi %s407, %s407
          $region88: #{double_conv_forward.4} parent=84 // loop_header_branch
            %422 = sbr.rel (%p420) target = $region92
          $region89: #{double_conv_forward.4} parent=84 // loop_body
            %v426 = vld [vmem:[%s424] sm:%s417]
            %427 = vst [vmem:[%s425] sm:%s417] %v426
            %v428 = vld [vmem:[%s424 + $0x18] sm:%s417]
            %429 = vst [vmem:[%s425 + $0x18] sm:%s417] %v428
            %v430 = vld [vmem:[%s424 + $0x30] sm:%s417]
            %431 = vst [vmem:[%s425 + $0x30] sm:%s417] %v430
            %v432 = vld [vmem:[%s424 + $0x48] sm:%s417]
            %433 = vst [vmem:[%s425 + $0x48] sm:%s417] %v432
            %v434 = vld [vmem:[%s424 + $0x60] sm:%s417]
            %435 = vst [vmem:[%s425 + $0x60] sm:%s417] %v434
            %v436 = vld [vmem:[%s424 + $0x78] sm:%s417]
            %437 = vst [vmem:[%s425 + $0x78] sm:%s417] %v436
            %v438 = vld [vmem:[%s424 + $0x90] sm:%s417]
            %439 = vst [vmem:[%s425 + $0x90] sm:%s417] %v438
            %v440 = vld [vmem:[%s424 + $0xa8] sm:%s417]
            %441 = vst [vmem:[%s425 + $0xa8] sm:%s417] %v440
            %v442 = vld [vmem:[%s424 + $0xc0] sm:%s417]
            %443 = vst [vmem:[%s425 + $0xc0] sm:%s417] %v442
            %v444 = vld [vmem:[%s424 + $0xd8] sm:%s417]
            %445 = vst [vmem:[%s425 + $0xd8] sm:%s417] %v444
          $region90: #{double_conv_forward.4} parent=84 // loop_footer
            %s423 = sadd.s32 1, %s419
          $region91: #{double_conv_forward.4} parent=84 // loop_footer_branch
            %418 = sbr.rel target = $region87
          $region92: #{double_conv_forward.4} parent=84 // loop_exit
            _
        $region85: #{double_conv_forward.4} parent=76 // pred_fallthru
          _
        // Predicated region
        $region111: #{double_conv_forward.4} parent=76 // pred_check
          _
        $region112: #{double_conv_forward.4} parent=76 // pred_check_branch
          %535 = sbr.rel (0) target = $region114
        $region113: #{double_conv_forward.4} parent=76 // pred_region
          %536 = vsyncadd %s408, 2880
        $region114: #{double_conv_forward.4} parent=76 // pred_fallthru
          _
      $region77: #{double_conv_forward.4} parent=31 // pred_fallthru
        _
      %v537 = vld [vmem:[%s389] sm:$0xff]
      %v538 = vld [vmem:[%s389 + $0x8] sm:$0xff]
      %v539 = vld [vmem:[%s389 + $0x10] sm:$0x3]
      %v540 = vld [vmem:[%s389 + $0x18] sm:$0xff]
      %v541 = vld [vmem:[%s389 + $0x20] sm:$0xff]
      %v542 = vld [vmem:[%s389 + $0x28] sm:$0x3]
      %v543 = vld [vmem:[%s389 + $0x30] sm:$0xff]
      %v544 = vld [vmem:[%s389 + $0x38] sm:$0xff]
      %v545 = vld [vmem:[%s389 + $0x40] sm:$0x3]
      %v546 = vld [vmem:[%s389 + $0x48] sm:$0xff]
      %v547 = vld [vmem:[%s389 + $0x50] sm:$0xff]
      %v548 = vld [vmem:[%s389 + $0x58] sm:$0x3]
      %v549 = vld [vmem:[%s389 + $0x60] sm:$0xff]
      %v550 = vld [vmem:[%s389 + $0x68] sm:$0xff]
      %v551 = vld [vmem:[%s389 + $0x70] sm:$0x3]
      %v552 = vld [vmem:[%s389 + $0x78] sm:$0xff]
      %v553 = vld [vmem:[%s389 + $0x80] sm:$0xff]
      %v554 = vld [vmem:[%s389 + $0x88] sm:$0x3]
      %v555 = vld [vmem:[%s389 + $0x90] sm:$0xff]
      %v556 = vld [vmem:[%s389 + $0x98] sm:$0xff]
      %v557 = vld [vmem:[%s389 + $0xa0] sm:$0x3]
      %v558 = vld [vmem:[%s389 + $0xa8] sm:$0xff]
      %v559 = vld [vmem:[%s389 + $0xb0] sm:$0xff]
      %v560 = vld [vmem:[%s389 + $0xb8] sm:$0x3]
      %v561 = vld [vmem:[%s389 + $0xc0] sm:$0xff]
      %v562 = vld [vmem:[%s389 + $0xc8] sm:$0xff]
      %v563 = vld [vmem:[%s389 + $0xd0] sm:$0x3]
      %v564 = vld [vmem:[%s389 + $0xd8] sm:$0xff]
      %v565 = vld [vmem:[%s389 + $0xe0] sm:$0xff]
      %v566 = vld [vmem:[%s389 + $0xe8] sm:$0x3]
      %v567 = vld [vmem:[%s2] sm:$0x1]
      %v569 = vlaneseq
      %v570 = vshrl.u32 %v569, 7
      %v571 = vsub.s32 0, %v570
      %v572 = vrot.slane %v567, %v571
      %v574 = vmul.f32 %v537, %v572
      %v575 = vmul.f32 %v538, %v572
      %v576 = vmul.f32 %v539, %v572
      %v577 = vmul.f32 %v540, %v572
      %v578 = vmul.f32 %v541, %v572
      %v579 = vmul.f32 %v542, %v572
      %v580 = vmul.f32 %v543, %v572
      %v581 = vmul.f32 %v544, %v572
      %v582 = vmul.f32 %v545, %v572
      %v583 = vmul.f32 %v546, %v572
      %v584 = vmul.f32 %v547, %v572
      %v585 = vmul.f32 %v548, %v572
      %v586 = vmul.f32 %v549, %v572
      %v587 = vmul.f32 %v550, %v572
      %v588 = vmul.f32 %v551, %v572
      %v589 = vmul.f32 %v552, %v572
      %v590 = vmul.f32 %v553, %v572
      %v591 = vmul.f32 %v554, %v572
      %v592 = vmul.f32 %v555, %v572
      %v593 = vmul.f32 %v556, %v572
      %v594 = vmul.f32 %v557, %v572
      %v595 = vmul.f32 %v558, %v572
      %v596 = vmul.f32 %v559, %v572
      %v597 = vmul.f32 %v560, %v572
      %v598 = vmul.f32 %v561, %v572
      %v599 = vmul.f32 %v562, %v572
      %v600 = vmul.f32 %v563, %v572
      %v601 = vmul.f32 %v564, %v572
      %v602 = vmul.f32 %v565, %v572
      %v603 = vmul.f32 %v566, %v572
      %v604 = vld [vmem:[%s3] sm:$0x1]
      %v606 = vlaneseq
      %v607 = vshrl.u32 %v606, 7
      %v608 = vsub.s32 0, %v607
      %v609 = vrot.slane %v604, %v608
      %v611 = vadd.f32 %v574, %v609
      %v612 = vadd.f32 %v575, %v609
      %v613 = vadd.f32 %v576, %v609
      %v614 = vadd.f32 %v577, %v609
      %v615 = vadd.f32 %v578, %v609
      %v616 = vadd.f32 %v579, %v609
      %v617 = vadd.f32 %v580, %v609
      %v618 = vadd.f32 %v581, %v609
      %v619 = vadd.f32 %v582, %v609
      %v620 = vadd.f32 %v583, %v609
      %v621 = vadd.f32 %v584, %v609
      %v622 = vadd.f32 %v585, %v609
      %v623 = vadd.f32 %v586, %v609
      %v624 = vadd.f32 %v587, %v609
      %v625 = vadd.f32 %v588, %v609
      %v626 = vadd.f32 %v589, %v609
      %v627 = vadd.f32 %v590, %v609
      %v628 = vadd.f32 %v591, %v609
      %v629 = vadd.f32 %v592, %v609
      %v630 = vadd.f32 %v593, %v609
      %v631 = vadd.f32 %v594, %v609
      %v632 = vadd.f32 %v595, %v609
      %v633 = vadd.f32 %v596, %v609
      %v634 = vadd.f32 %v597, %v609
      %v635 = vadd.f32 %v598, %v609
      %v636 = vadd.f32 %v599, %v609
      %v637 = vadd.f32 %v600, %v609
      %v638 = vadd.f32 %v601, %v609
      %v639 = vadd.f32 %v602, %v609
      %v640 = vadd.f32 %v603, %v609
      %s641 = smul.u32 %s23, 8
      %v642 = vstv %s641
      %v643 = vadd.s32 %v642, 1
      %v644 = vadd.s32 %v642, 2
      %v645 = vadd.s32 %v642, 3
      %v646 = vadd.s32 %v642, 4
      %v647 = vadd.s32 %v642, 5
      %v648 = vadd.s32 %v642, 6
      %v649 = vadd.s32 %v642, 7
      %v650 = vadd.s32 %v642, 8
      %v651 = vadd.s32 %v642, 9
      %v652 = vlaneseq
      %v653 = vshrl.u32 %v652, 7
      %v654 = vadd.s32 %v653, 8
      %v655 = vadd.s32 %v653, 16
      %vm656 = vcmp.ge.s32.totalorder %v642, 1
      %vm657 = vcmp.ge.s32.totalorder %v643, 1
      %vm658 = vcmp.ge.s32.totalorder %v644, 1
      %vm659 = vcmp.ge.s32.totalorder %v645, 1
      %vm660 = vcmp.ge.s32.totalorder %v646, 1
      %vm661 = vcmp.ge.s32.totalorder %v647, 1
      %vm662 = vcmp.ge.s32.totalorder %v648, 1
      %vm663 = vcmp.ge.s32.totalorder %v649, 1
      %vm664 = vcmp.ge.s32.totalorder %v650, 1
      %vm665 = vcmp.ge.s32.totalorder %v651, 1
      %vm666 = vcmp.le.s32.totalorder %v642, 16
      %vm667 = vcmp.le.s32.totalorder %v643, 16
      %vm668 = vcmp.le.s32.totalorder %v644, 16
      %vm669 = vcmp.le.s32.totalorder %v645, 16
      %vm670 = vcmp.le.s32.totalorder %v646, 16
      %vm671 = vcmp.le.s32.totalorder %v647, 16
      %vm672 = vcmp.le.s32.totalorder %v648, 16
      %vm673 = vcmp.le.s32.totalorder %v649, 16
      %vm674 = vcmp.le.s32.totalorder %v650, 16
      %vm675 = vcmp.le.s32.totalorder %v651, 16
      %vm676 = vmand %vm656, %vm666
      %vm677 = vmand %vm657, %vm667
      %vm678 = vmand %vm658, %vm668
      %vm679 = vmand %vm659, %vm669
      %vm680 = vmand %vm660, %vm670
      %vm681 = vmand %vm661, %vm671
      %vm682 = vmand %vm662, %vm672
      %vm683 = vmand %vm663, %vm673
      %vm684 = vmand %vm664, %vm674
      %vm685 = vmand %vm665, %vm675
      %vm686 = vcmp.ge.s32.totalorder %v653, 1
      %vm687 = vcmp.ge.s32.totalorder %v654, 1
      %vm688 = vcmp.ge.s32.totalorder %v655, 1
      %vm689 = vmand %vm676, %vm686
      %vm690 = vmand %vm676, %vm687
      %vm691 = vmand %vm676, %vm688
      %vm692 = vmand %vm677, %vm686
      %vm693 = vmand %vm677, %vm687
      %vm694 = vmand %vm677, %vm688
      %vm695 = vmand %vm678, %vm686
      %vm696 = vmand %vm678, %vm687
      %vm697 = vmand %vm678, %vm688
      %vm698 = vmand %vm679, %vm686
      %vm699 = vmand %vm679, %vm687
      %vm700 = vmand %vm679, %vm688
      %vm701 = vmand %vm680, %vm686
      %vm702 = vmand %vm680, %vm687
      %vm703 = vmand %vm680, %vm688
      %vm704 = vmand %vm681, %vm686
      %vm705 = vmand %vm681, %vm687
      %vm706 = vmand %vm681, %vm688
      %vm707 = vmand %vm682, %vm686
      %vm708 = vmand %vm682, %vm687
      %vm709 = vmand %vm682, %vm688
      %vm710 = vmand %vm683, %vm686
      %vm711 = vmand %vm683, %vm687
      %vm712 = vmand %vm683, %vm688
      %vm713 = vmand %vm684, %vm686
      %vm714 = vmand %vm684, %vm687
      %vm715 = vmand %vm684, %vm688
      %vm716 = vmand %vm685, %vm686
      %vm717 = vmand %vm685, %vm687
      %vm718 = vmand %vm685, %vm688
      %vm719 = vcmp.le.s32.totalorder %v653, 16
      %vm720 = vcmp.le.s32.totalorder %v654, 16
      %vm721 = vcmp.le.s32.totalorder %v655, 16
      %vm722 = vmand %vm689, %vm719
      %vm723 = vmand %vm690, %vm720
      %vm724 = vmand %vm691, %vm721
      %vm725 = vmand %vm692, %vm719
      %vm726 = vmand %vm693, %vm720
      %vm727 = vmand %vm694, %vm721
      %vm728 = vmand %vm695, %vm719
      %vm729 = vmand %vm696, %vm720
      %vm730 = vmand %vm697, %vm721
      %vm731 = vmand %vm698, %vm719
      %vm732 = vmand %vm699, %vm720
      %vm733 = vmand %vm700, %vm721
      %vm734 = vmand %vm701, %vm719
      %vm735 = vmand %vm702, %vm720
      %vm736 = vmand %vm703, %vm721
      %vm737 = vmand %vm704, %vm719
      %vm738 = vmand %vm705, %vm720
      %vm739 = vmand %vm706, %vm721
      %vm740 = vmand %vm707, %vm719
      %vm741 = vmand %vm708, %vm720
      %vm742 = vmand %vm709, %vm721
      %vm743 = vmand %vm710, %vm719
      %vm744 = vmand %vm711, %vm720
      %vm745 = vmand %vm712, %vm721
      %vm746 = vmand %vm713, %vm719
      %vm747 = vmand %vm714, %vm720
      %vm748 = vmand %vm715, %vm721
      %vm749 = vmand %vm716, %vm719
      %vm750 = vmand %vm717, %vm720
      %vm751 = vmand %vm718, %vm721
      %v752 = vmax.f32 %v611, 0.0
      %v753 = vmax.f32 %v612, 0.0
      %v754 = vmax.f32 %v613, 0.0
      %v755 = vmax.f32 %v614, 0.0
      %v756 = vmax.f32 %v615, 0.0
      %v757 = vmax.f32 %v616, 0.0
      %v758 = vmax.f32 %v617, 0.0
      %v759 = vmax.f32 %v618, 0.0
      %v760 = vmax.f32 %v619, 0.0
      %v761 = vmax.f32 %v620, 0.0
      %v762 = vmax.f32 %v621, 0.0
      %v763 = vmax.f32 %v622, 0.0
      %v764 = vmax.f32 %v623, 0.0
      %v765 = vmax.f32 %v624, 0.0
      %v766 = vmax.f32 %v625, 0.0
      %v767 = vmax.f32 %v626, 0.0
      %v768 = vmax.f32 %v627, 0.0
      %v769 = vmax.f32 %v628, 0.0
      %v770 = vmax.f32 %v629, 0.0
      %v771 = vmax.f32 %v630, 0.0
      %v772 = vmax.f32 %v631, 0.0
      %v773 = vmax.f32 %v632, 0.0
      %v774 = vmax.f32 %v633, 0.0
      %v775 = vmax.f32 %v634, 0.0
      %v776 = vmax.f32 %v635, 0.0
      %v777 = vmax.f32 %v636, 0.0
      %v778 = vmax.f32 %v637, 0.0
      %v779 = vmax.f32 %v638, 0.0
      %v780 = vmax.f32 %v639, 0.0
      %v781 = vmax.f32 %v640, 0.0
      %v782 = vsel %vm722, 1, 0
      %v783 = vsel %vm723, 1, 0
      %v784 = vsel %vm724, 1, 0
      %v785 = vsel %vm725, 1, 0
      %v786 = vsel %vm726, 1, 0
      %v787 = vsel %vm727, 1, 0
      %v788 = vsel %vm728, 1, 0
      %v789 = vsel %vm729, 1, 0
      %v790 = vsel %vm730, 1, 0
      %v791 = vsel %vm731, 1, 0
      %v792 = vsel %vm732, 1, 0
      %v793 = vsel %vm733, 1, 0
      %v794 = vsel %vm734, 1, 0
      %v795 = vsel %vm735, 1, 0
      %v796 = vsel %vm736, 1, 0
      %v797 = vsel %vm737, 1, 0
      %v798 = vsel %vm738, 1, 0
      %v799 = vsel %vm739, 1, 0
      %v800 = vsel %vm740, 1, 0
      %v801 = vsel %vm741, 1, 0
      %v802 = vsel %vm742, 1, 0
      %v803 = vsel %vm743, 1, 0
      %v804 = vsel %vm744, 1, 0
      %v805 = vsel %vm745, 1, 0
      %v806 = vsel %vm746, 1, 0
      %v807 = vsel %vm747, 1, 0
      %v808 = vsel %vm748, 1, 0
      %v809 = vsel %vm749, 1, 0
      %v810 = vsel %vm750, 1, 0
      %v811 = vsel %vm751, 1, 0
      %vm812 = vcmp.eq.s32.totalorder %v782, 1
      %vm813 = vcmp.eq.s32.totalorder %v783, 1
      %vm814 = vcmp.eq.s32.totalorder %v784, 1
      %vm815 = vcmp.eq.s32.totalorder %v785, 1
      %vm816 = vcmp.eq.s32.totalorder %v786, 1
      %vm817 = vcmp.eq.s32.totalorder %v787, 1
      %vm818 = vcmp.eq.s32.totalorder %v788, 1
      %vm819 = vcmp.eq.s32.totalorder %v789, 1
      %vm820 = vcmp.eq.s32.totalorder %v790, 1
      %vm821 = vcmp.eq.s32.totalorder %v791, 1
      %vm822 = vcmp.eq.s32.totalorder %v792, 1
      %vm823 = vcmp.eq.s32.totalorder %v793, 1
      %vm824 = vcmp.eq.s32.totalorder %v794, 1
      %vm825 = vcmp.eq.s32.totalorder %v795, 1
      %vm826 = vcmp.eq.s32.totalorder %v796, 1
      %vm827 = vcmp.eq.s32.totalorder %v797, 1
      %vm828 = vcmp.eq.s32.totalorder %v798, 1
      %vm829 = vcmp.eq.s32.totalorder %v799, 1
      %vm830 = vcmp.eq.s32.totalorder %v800, 1
      %vm831 = vcmp.eq.s32.totalorder %v801, 1
      %vm832 = vcmp.eq.s32.totalorder %v802, 1
      %vm833 = vcmp.eq.s32.totalorder %v803, 1
      %vm834 = vcmp.eq.s32.totalorder %v804, 1
      %vm835 = vcmp.eq.s32.totalorder %v805, 1
      %vm836 = vcmp.eq.s32.totalorder %v806, 1
      %vm837 = vcmp.eq.s32.totalorder %v807, 1
      %vm838 = vcmp.eq.s32.totalorder %v808, 1
      %vm839 = vcmp.eq.s32.totalorder %v809, 1
      %vm840 = vcmp.eq.s32.totalorder %v810, 1
      %vm841 = vcmp.eq.s32.totalorder %v811, 1
      %v842 = vsel %vm812, %v752, 0.0
      %v843 = vsel %vm813, %v753, 0.0
      %v844 = vsel %vm814, %v754, 0.0
      %v845 = vsel %vm815, %v755, 0.0
      %v846 = vsel %vm816, %v756, 0.0
      %v847 = vsel %vm817, %v757, 0.0
      %v848 = vsel %vm818, %v758, 0.0
      %v849 = vsel %vm819, %v759, 0.0
      %v850 = vsel %vm820, %v760, 0.0
      %v851 = vsel %vm821, %v761, 0.0
      %v852 = vsel %vm822, %v762, 0.0
      %v853 = vsel %vm823, %v763, 0.0
      %v854 = vsel %vm824, %v764, 0.0
      %v855 = vsel %vm825, %v765, 0.0
      %v856 = vsel %vm826, %v766, 0.0
      %v857 = vsel %vm827, %v767, 0.0
      %v858 = vsel %vm828, %v768, 0.0
      %v859 = vsel %vm829, %v769, 0.0
      %v860 = vsel %vm830, %v770, 0.0
      %v861 = vsel %vm831, %v771, 0.0
      %v862 = vsel %vm832, %v772, 0.0
      %v863 = vsel %vm833, %v773, 0.0
      %v864 = vsel %vm834, %v774, 0.0
      %v865 = vsel %vm835, %v775, 0.0
      %v866 = vsel %vm836, %v776, 0.0
      %v867 = vsel %vm837, %v777, 0.0
      %v868 = vsel %vm838, %v778, 0.0
      %v869 = vsel %vm839, %v779, 0.0
      %v870 = vsel %vm840, %v780, 0.0
      %v871 = vsel %vm841, %v781, 0.0
      %v872 = vld [vmem:[%s1] sm:$0xff]
      %v873 = vld [vmem:[%s1 + $0x8] sm:$0xff]
      %v874 = vld [vmem:[%s1 + $0x10] sm:$0xff]
      %v875 = vld [vmem:[%s1 + $0x18] sm:$0xff]
      %v876 = vld [vmem:[%s1 + $0x20] sm:$0xff]
      %v877 = vld [vmem:[%s1 + $0x28] sm:$0xff]
      %v878 = vld [vmem:[%s1 + $0x30] sm:$0xff]
      %v879 = vld [vmem:[%s1 + $0x38] sm:$0xff]
      %v880 = vld [vmem:[%s1 + $0x40] sm:$0xff]
      %v881 = vld [vmem:[%s1 + $0x48] sm:$0xff]
      %v882 = vld [vmem:[%s1 + $0x50] sm:$0xff]
      %v883 = vld [vmem:[%s1 + $0x58] sm:$0xff]
      %v884 = vld [vmem:[%s1 + $0x60] sm:$0xff]
      %v885 = vld [vmem:[%s1 + $0x68] sm:$0xff]
      %v886 = vld [vmem:[%s1 + $0x70] sm:$0xff]
      %v887 = vld [vmem:[%s1 + $0x78] sm:$0xff]
      %v888 = vld [vmem:[%s1 + $0x80] sm:$0xff]
      %v889 = vld [vmem:[%s1 + $0x88] sm:$0xff]
      %v890 = vld [vmem:[%s1 + $0x90] sm:$0xff]
      %v891 = vld [vmem:[%s1 + $0x98] sm:$0xff]
      %v892 = vld [vmem:[%s1 + $0xa0] sm:$0xff]
      %v893 = vld [vmem:[%s1 + $0xa8] sm:$0xff]
      %v894 = vld [vmem:[%s1 + $0xb0] sm:$0xff]
      %v895 = vld [vmem:[%s1 + $0xb8] sm:$0xff]
      %v896 = vld [vmem:[%s1 + $0xc0] sm:$0xff]
      %v897 = vld [vmem:[%s1 + $0xc8] sm:$0xff]
      %v898 = vld [vmem:[%s1 + $0xd0] sm:$0xff]
      %v899 = vld [vmem:[%s1 + $0xd8] sm:$0xff]
      %v900 = vld [vmem:[%s1 + $0xe0] sm:$0xff]
      %v901 = vld [vmem:[%s1 + $0xe8] sm:$0xff]
      %v902 = vld [vmem:[%s1 + $0xf0] sm:$0xff]
      %v903 = vld [vmem:[%s1 + $0xf8] sm:$0xff]
      %v904 = vld [vmem:[%s1 + $0x100] sm:$0xff]
      %v905 = vld [vmem:[%s1 + $0x108] sm:$0xff]
      %v906 = vld [vmem:[%s1 + $0x110] sm:$0xff]
      %v907 = vld [vmem:[%s1 + $0x118] sm:$0xff]
      %v908 = vld [vmem:[%s1 + $0x120] sm:$0xff]
      %v909 = vld [vmem:[%s1 + $0x128] sm:$0xff]
      %v910 = vld [vmem:[%s1 + $0x130] sm:$0xff]
      %v911 = vld [vmem:[%s1 + $0x138] sm:$0xff]
      %v912 = vld [vmem:[%s1 + $0x140] sm:$0xff]
      %v913 = vld [vmem:[%s1 + $0x148] sm:$0xff]
      %v914 = vld [vmem:[%s1 + $0x150] sm:$0xff]
      %v915 = vld [vmem:[%s1 + $0x158] sm:$0xff]
      %v916 = vld [vmem:[%s1 + $0x160] sm:$0xff]
      %v917 = vld [vmem:[%s1 + $0x168] sm:$0xff]
      %v918 = vld [vmem:[%s1 + $0x170] sm:$0xff]
      %v919 = vld [vmem:[%s1 + $0x178] sm:$0xff]
      %v920 = vld [vmem:[%s1 + $0x180] sm:$0xff]
      %v921 = vld [vmem:[%s1 + $0x188] sm:$0xff]
      %v922 = vld [vmem:[%s1 + $0x190] sm:$0xff]
      %v923 = vld [vmem:[%s1 + $0x198] sm:$0xff]
      %v924 = vld [vmem:[%s1 + $0x1a0] sm:$0xff]
      %v925 = vld [vmem:[%s1 + $0x1a8] sm:$0xff]
      %v926 = vld [vmem:[%s1 + $0x1b0] sm:$0xff]
      %v927 = vld [vmem:[%s1 + $0x1b8] sm:$0xff]
      %v928 = vld [vmem:[%s1 + $0x1c0] sm:$0xff]
      %v929 = vld [vmem:[%s1 + $0x1c8] sm:$0xff]
      %v930 = vld [vmem:[%s1 + $0x1d0] sm:$0xff]
      %v931 = vld [vmem:[%s1 + $0x1d8] sm:$0xff]
      %v932 = vld [vmem:[%s1 + $0x1e0] sm:$0xff]
      %v933 = vld [vmem:[%s1 + $0x1e8] sm:$0xff]
      %v934 = vld [vmem:[%s1 + $0x1f0] sm:$0xff]
      %v935 = vld [vmem:[%s1 + $0x1f8] sm:$0xff]
      %v936 = vld [vmem:[%s1 + $0x200] sm:$0xff]
      %v937 = vld [vmem:[%s1 + $0x208] sm:$0xff]
      %v938 = vld [vmem:[%s1 + $0x210] sm:$0xff]
      %v939 = vld [vmem:[%s1 + $0x218] sm:$0xff]
      %v940 = vld [vmem:[%s1 + $0x220] sm:$0xff]
      %v941 = vld [vmem:[%s1 + $0x228] sm:$0xff]
      %v942 = vld [vmem:[%s1 + $0x230] sm:$0xff]
      %v943 = vld [vmem:[%s1 + $0x238] sm:$0xff]
      %v944 = vld [vmem:[%s1 + $0x240] sm:$0xff]
      %v945 = vld [vmem:[%s1 + $0x248] sm:$0xff]
      %v946 = vld [vmem:[%s1 + $0x250] sm:$0xff]
      %v947 = vld [vmem:[%s1 + $0x258] sm:$0xff]
      %v948 = vld [vmem:[%s1 + $0x260] sm:$0xff]
      %v949 = vld [vmem:[%s1 + $0x268] sm:$0xff]
      %v950 = vld [vmem:[%s1 + $0x270] sm:$0xff]
      %v951 = vld [vmem:[%s1 + $0x278] sm:$0xff]
      %v952 = vld [vmem:[%s1 + $0x280] sm:$0xff]
      %v953 = vld [vmem:[%s1 + $0x288] sm:$0xff]
      %v954 = vld [vmem:[%s1 + $0x290] sm:$0xff]
      %v955 = vld [vmem:[%s1 + $0x298] sm:$0xff]
      %v956 = vld [vmem:[%s1 + $0x2a0] sm:$0xff]
      %v957 = vld [vmem:[%s1 + $0x2a8] sm:$0xff]
      %v958 = vld [vmem:[%s1 + $0x2b0] sm:$0xff]
      %v959 = vld [vmem:[%s1 + $0x2b8] sm:$0xff]
      %v960 = vld [vmem:[%s1 + $0x2c0] sm:$0xff]
      %v961 = vld [vmem:[%s1 + $0x2c8] sm:$0xff]
      %v962 = vld [vmem:[%s1 + $0x2d0] sm:$0xff]
      %v963 = vld [vmem:[%s1 + $0x2d8] sm:$0xff]
      %v964 = vld [vmem:[%s1 + $0x2e0] sm:$0xff]
      %v965 = vld [vmem:[%s1 + $0x2e8] sm:$0xff]
      %v966 = vld [vmem:[%s1 + $0x2f0] sm:$0xff]
      %v967 = vld [vmem:[%s1 + $0x2f8] sm:$0xff]
      %v968 = vld [vmem:[%s1 + $0x300] sm:$0xff]
      %v969 = vld [vmem:[%s1 + $0x308] sm:$0xff]
      %v970 = vld [vmem:[%s1 + $0x310] sm:$0xff]
      %v971 = vld [vmem:[%s1 + $0x318] sm:$0xff]
      %v972 = vld [vmem:[%s1 + $0x320] sm:$0xff]
      %v973 = vld [vmem:[%s1 + $0x328] sm:$0xff]
      %v974 = vld [vmem:[%s1 + $0x330] sm:$0xff]
      %v975 = vld [vmem:[%s1 + $0x338] sm:$0xff]
      %v976 = vld [vmem:[%s1 + $0x340] sm:$0xff]
      %v977 = vld [vmem:[%s1 + $0x348] sm:$0xff]
      %v978 = vld [vmem:[%s1 + $0x350] sm:$0xff]
      %v979 = vld [vmem:[%s1 + $0x358] sm:$0xff]
      %v980 = vld [vmem:[%s1 + $0x360] sm:$0xff]
      %v981 = vld [vmem:[%s1 + $0x368] sm:$0xff]
      %v982 = vld [vmem:[%s1 + $0x370] sm:$0xff]
      %v983 = vld [vmem:[%s1 + $0x378] sm:$0xff]
      %v984 = vld [vmem:[%s1 + $0x380] sm:$0xff]
      %v985 = vld [vmem:[%s1 + $0x388] sm:$0xff]
      %v986 = vld [vmem:[%s1 + $0x390] sm:$0xff]
      %v987 = vld [vmem:[%s1 + $0x398] sm:$0xff]
      %v988 = vld [vmem:[%s1 + $0x3a0] sm:$0xff]
      %v989 = vld [vmem:[%s1 + $0x3a8] sm:$0xff]
      %v990 = vld [vmem:[%s1 + $0x3b0] sm:$0xff]
      %v991 = vld [vmem:[%s1 + $0x3b8] sm:$0xff]
      %v992 = vld [vmem:[%s1 + $0x3c0] sm:$0xff]
      %v993 = vld [vmem:[%s1 + $0x3c8] sm:$0xff]
      %v994 = vld [vmem:[%s1 + $0x3d0] sm:$0xff]
      %v995 = vld [vmem:[%s1 + $0x3d8] sm:$0xff]
      %v996 = vld [vmem:[%s1 + $0x3e0] sm:$0xff]
      %v997 = vld [vmem:[%s1 + $0x3e8] sm:$0xff]
      %v998 = vld [vmem:[%s1 + $0x3f0] sm:$0xff]
      %v999 = vld [vmem:[%s1 + $0x3f8] sm:$0xff]
      %v1000 = vld [vmem:[%s1 + $0x400] sm:$0xff]
      %v1001 = vld [vmem:[%s1 + $0x408] sm:$0xff]
      %v1002 = vld [vmem:[%s1 + $0x410] sm:$0xff]
      %v1003 = vld [vmem:[%s1 + $0x418] sm:$0xff]
      %v1004 = vld [vmem:[%s1 + $0x420] sm:$0xff]
      %v1005 = vld [vmem:[%s1 + $0x428] sm:$0xff]
      %v1006 = vld [vmem:[%s1 + $0x430] sm:$0xff]
      %v1007 = vld [vmem:[%s1 + $0x438] sm:$0xff]
      %v1008 = vld [vmem:[%s1 + $0x440] sm:$0xff]
      %v1009 = vld [vmem:[%s1 + $0x448] sm:$0xff]
      %v1010 = vld [vmem:[%s1 + $0x450] sm:$0xff]
      %v1011 = vld [vmem:[%s1 + $0x458] sm:$0xff]
      %v1012 = vld [vmem:[%s1 + $0x460] sm:$0xff]
      %v1013 = vld [vmem:[%s1 + $0x468] sm:$0xff]
      %v1014 = vld [vmem:[%s1 + $0x470] sm:$0xff]
      %v1015 = vld [vmem:[%s1 + $0x478] sm:$0xff]
      %vm1040 = vcmask 1046528
      %v1041 = vrot.slane %v842, 1
      %v1042 = vrot.slane %v843, 1
      %v1043 = vsel %vm1040, %v1041, %v1042
      %v1044 = vrot.slane %v844, 1
      %v1045 = vsel %vm1040, %v1042, %v1044
      %v1046 = vrot.slane %v845, 1
      %v1047 = vrot.slane %v846, 1
      %v1048 = vsel %vm1040, %v1046, %v1047
      %v1049 = vrot.slane %v847, 1
      %v1050 = vsel %vm1040, %v1047, %v1049
      %v1051 = vrot.slane %v848, 1
      %v1052 = vrot.slane %v849, 1
      %v1053 = vsel %vm1040, %v1051, %v1052
      %v1054 = vrot.slane %v850, 1
      %v1055 = vsel %vm1040, %v1052, %v1054
      %v1056 = vrot.slane %v851, 1
      %v1057 = vrot.slane %v852, 1
      %v1058 = vsel %vm1040, %v1056, %v1057
      %v1059 = vrot.slane %v853, 1
      %v1060 = vsel %vm1040, %v1057, %v1059
      %v1061 = vrot.slane %v854, 1
      %v1062 = vrot.slane %v855, 1
      %v1063 = vsel %vm1040, %v1061, %v1062
      %v1064 = vrot.slane %v856, 1
      %v1065 = vsel %vm1040, %v1062, %v1064
      %v1066 = vrot.slane %v857, 1
      %v1067 = vrot.slane %v858, 1
      %v1068 = vsel %vm1040, %v1066, %v1067
      %v1069 = vrot.slane %v859, 1
      %v1070 = vsel %vm1040, %v1067, %v1069
      %v1071 = vrot.slane %v860, 1
      %v1072 = vrot.slane %v861, 1
      %v1073 = vsel %vm1040, %v1071, %v1072
      %v1074 = vrot.slane %v862, 1
      %v1075 = vsel %vm1040, %v1072, %v1074
      %v1076 = vrot.slane %v863, 1
      %v1077 = vrot.slane %v864, 1
      %v1078 = vsel %vm1040, %v1076, %v1077
      %v1079 = vrot.slane %v865, 1
      %v1080 = vsel %vm1040, %v1077, %v1079
      %1097 = vmatprep.subr.mxu0 0.0
      %1098 = vmatpush1.msra.mxu0 %v888
      %1099 = vmatprep.subr.mxu0 0.0
      %1100 = vmatpush1.msra.mxu0 %v889
      %1101 = vmatprep.subr.mxu0 0.0
      %1102 = vmatpush1.msra.mxu0 %v890
      %1103 = vmatprep.subr.mxu0 0.0
      %1104 = vmatpush1.msra.mxu0 %v891
      %1105 = vmatprep.subr.mxu0 0.0
      %1106 = vmatpush1.msra.mxu0 %v892
      %1107 = vmatprep.subr.mxu0 0.0
      %1108 = vmatpush1.msra.mxu0 %v893
      %1109 = vmatprep.subr.mxu0 0.0
      %1110 = vmatpush1.msra.mxu0 %v894
      %1111 = vmatprep.subr.mxu0 0.0
      %1112 = vmatpush1.msra.mxu0 %v895
      %1113 = vmatprep.subr.mxu0 0.0
      %1114 = vmatpush1.msra.mxu0 %v896
      %1115 = vmatprep.subr.mxu0 0.0
      %1116 = vmatpush1.msra.mxu0 %v897
      %1117 = vmatprep.subr.mxu0 0.0
      %1118 = vmatpush1.msra.mxu0 %v898
      %1119 = vmatprep.subr.mxu0 0.0
      %1120 = vmatpush1.msra.mxu0 %v899
      %1121 = vmatprep.subr.mxu0 0.0
      %1122 = vmatpush1.msra.mxu0 %v900
      %1123 = vmatprep.subr.mxu0 0.0
      %1124 = vmatpush1.msra.mxu0 %v901
      %1125 = vmatprep.subr.mxu0 0.0
      %1126 = vmatpush1.msra.mxu0 %v902
      %1127 = vmatprep.subr.mxu0 0.0
      %1128 = vmatpush1.msra.mxu0 %v903
      %1129 = vmatprep.subr.mxu0 0.0
      %1130 = vmatpush1.msra.mxu0 0.0
      %1131 = vmatprep.subr.mxu0 0.0
      %1132 = vmatpush1.msra.mxu0 0.0
      %1133 = vmatprep.subr.mxu0 0.0
      %1134 = vmatpush1.msra.mxu0 0.0
      %1135 = vmatprep.subr.mxu0 0.0
      %1136 = vmatpush1.msra.mxu0 0.0
      %1137 = vmatprep.subr.mxu0 0.0
      %1138 = vmatpush1.msra.mxu0 0.0
      %1139 = vmatprep.subr.mxu0 0.0
      %1140 = vmatpush1.msra.mxu0 0.0
      %1141 = vmatprep.subr.mxu0 0.0
      %1142 = vmatpush1.msra.mxu0 0.0
      %1143 = vmatprep.subr.mxu0 0.0
      %1144 = vmatpush1.msra.mxu0 0.0
      %1145 = vmatprep.subr.mxu0 0.0
      %1146 = vmatpush1.msra.mxu0 0.0
      %1147 = vmatprep.subr.mxu0 0.0
      %1148 = vmatpush1.msra.mxu0 0.0
      %1149 = vmatprep.subr.mxu0 0.0
      %1150 = vmatpush1.msra.mxu0 0.0
      %1151 = vmatprep.subr.mxu0 0.0
      %1152 = vmatpush1.msra.mxu0 0.0
      %1153 = vmatprep.subr.mxu0 0.0
      %1154 = vmatpush1.msra.mxu0 0.0
      %1155 = vmatprep.subr.mxu0 0.0
      %1156 = vmatpush1.msra.mxu0 0.0
      %1157 = vmatprep.subr.mxu0 0.0
      %1158 = vmatpush1.msra.mxu0 0.0
      %1159 = vmatprep.subr.mxu0 0.0
      %1160 = vmatpush1.msra.mxu0 0.0
      %1161 = vmatprep.mubr.f32.mxu0 0.0
      %1162 = vmatmul.mubr.f32.gmra.mrb[0].mxu0 %v1043
      %v1163 = vpop.f32.mrb[0].mxu0
      %v1164 = vadd.f32 0.0, %v1163
      %v1165 = vpop.f32.mrb[0].mxu0
      %1166 = vmatprep.mubr.f32.mxu0 0.0
      %1167 = vmatmul.mubr.f32.gmra.mrb[0].mxu0 %v1045
      %v1168 = vpop.f32.mrb[0].mxu0
      %v1169 = vadd.f32 0.0, %v1168
      %v1170 = vpop.f32.mrb[0].mxu0
      %1171 = vmatprep.mubr.f32.mxu0 0.0
      %1172 = vmatmul.mubr.f32.gmra.mrb[0].mxu0 %v1048
      %v1173 = vpop.f32.mrb[0].mxu0
      %v1174 = vadd.f32 0.0, %v1173
      %v1175 = vpop.f32.mrb[0].mxu0
      %1176 = vmatprep.mubr.f32.mxu0 0.0
      %1177 = vmatmul.mubr.f32.gmra.mrb[0].mxu0 %v1050
      %v1178 = vpop.f32.mrb[0].mxu0
      %v1179 = vadd.f32 0.0, %v1178
      %v1180 = vpop.f32.mrb[0].mxu0
      %1181 = vmatprep.mubr.f32.mxu0 0.0
      %1182 = vmatmul.mubr.f32.gmra.mrb[0].mxu0 %v1053
      %v1183 = vpop.f32.mrb[0].mxu0
      %v1184 = vadd.f32 0.0, %v1183
      %v1185 = vpop.f32.mrb[0].mxu0
      %1186 = vmatprep.mubr.f32.mxu0 0.0
      %1187 = vmatmul.mubr.f32.gmra.mrb[0].mxu0 %v1055
      %v1188 = vpop.f32.mrb[0].mxu0
      %v1189 = vadd.f32 0.0, %v1188
      %v1190 = vpop.f32.mrb[0].mxu0
      %1191 = vmatprep.mubr.f32.mxu0 0.0
      %1192 = vmatmul.mubr.f32.gmra.mrb[0].mxu0 %v1058
      %v1193 = vpop.f32.mrb[0].mxu0
      %v1194 = vadd.f32 0.0, %v1193
      %v1195 = vpop.f32.mrb[0].mxu0
      %1196 = vmatprep.mubr.f32.mxu0 0.0
      %1197 = vmatmul.mubr.f32.gmra.mrb[0].mxu0 %v1060
      %v1198 = vpop.f32.mrb[0].mxu0
      %v1199 = vadd.f32 0.0, %v1198
      %v1200 = vpop.f32.mrb[0].mxu0
      %1201 = vmatprep.mubr.f32.mxu0 0.0
      %1202 = vmatmul.mubr.f32.gmra.mrb[0].mxu0 %v1063
      %v1203 = vpop.f32.mrb[0].mxu0
      %v1204 = vadd.f32 0.0, %v1203
      %v1205 = vpop.f32.mrb[0].mxu0
      %1206 = vmatprep.mubr.f32.mxu0 0.0
      %1207 = vmatmul.mubr.f32.gmra.mrb[0].mxu0 %v1065
      %v1208 = vpop.f32.mrb[0].mxu0
      %v1209 = vadd.f32 0.0, %v1208
      %v1210 = vpop.f32.mrb[0].mxu0
      %1211 = vmatprep.mubr.f32.mxu0 0.0
      %1212 = vmatmul.mubr.f32.gmra.mrb[0].mxu0 %v1068
      %v1213 = vpop.f32.mrb[0].mxu0
      %v1214 = vadd.f32 0.0, %v1213
      %v1215 = vpop.f32.mrb[0].mxu0
      %1216 = vmatprep.mubr.f32.mxu0 0.0
      %1217 = vmatmul.mubr.f32.gmra.mrb[0].mxu0 %v1070
      %v1218 = vpop.f32.mrb[0].mxu0
      %v1219 = vadd.f32 0.0, %v1218
      %v1220 = vpop.f32.mrb[0].mxu0
      %1221 = vmatprep.mubr.f32.mxu0 0.0
      %1222 = vmatmul.mubr.f32.gmra.mrb[0].mxu0 %v1073
      %v1223 = vpop.f32.mrb[0].mxu0
      %v1224 = vadd.f32 0.0, %v1223
      %v1225 = vpop.f32.mrb[0].mxu0
      %1226 = vmatprep.mubr.f32.mxu0 0.0
      %1227 = vmatmul.mubr.f32.gmra.mrb[0].mxu0 %v1075
      %v1228 = vpop.f32.mrb[0].mxu0
      %v1229 = vadd.f32 0.0, %v1228
      %v1230 = vpop.f32.mrb[0].mxu0
      %1231 = vmatprep.mubr.f32.mxu0 0.0
      %1232 = vmatmul.mubr.f32.gmra.mrb[0].mxu0 %v1078
      %v1233 = vpop.f32.mrb[0].mxu0
      %v1234 = vadd.f32 0.0, %v1233
      %v1235 = vpop.f32.mrb[0].mxu0
      %1236 = vmatprep.mubr.f32.mxu0 0.0
      %1237 = vmatmul.mubr.f32.gmra.mrb[0].mxu0 %v1080
      %v1238 = vpop.f32.mrb[0].mxu0
      %v1239 = vadd.f32 0.0, %v1238
      %v1240 = vpop.f32.mrb[0].mxu0
      %1241 = vdwg.mxu0
      %1242 = vmatprep.subr.mxu0 0.0
      %1243 = vmatpush1.msra.mxu0 %v872
      %1244 = vmatprep.subr.mxu0 0.0
      %1245 = vmatpush1.msra.mxu0 %v873
      %1246 = vmatprep.subr.mxu0 0.0
      %1247 = vmatpush1.msra.mxu0 %v874
      %1248 = vmatprep.subr.mxu0 0.0
      %1249 = vmatpush1.msra.mxu0 %v875
      %1250 = vmatprep.subr.mxu0 0.0
      %1251 = vmatpush1.msra.mxu0 %v876
      %1252 = vmatprep.subr.mxu0 0.0
      %1253 = vmatpush1.msra.mxu0 %v877
      %1254 = vmatprep.subr.mxu0 0.0
      %1255 = vmatpush1.msra.mxu0 %v878
      %1256 = vmatprep.subr.mxu0 0.0
      %1257 = vmatpush1.msra.mxu0 %v879
      %1258 = vmatprep.subr.mxu0 0.0
      %1259 = vmatpush1.msra.mxu0 %v880
      %1260 = vmatprep.subr.mxu0 0.0
      %1261 = vmatpush1.msra.mxu0 %v881
      %1262 = vmatprep.subr.mxu0 0.0
      %1263 = vmatpush1.msra.mxu0 %v882
      %1264 = vmatprep.subr.mxu0 0.0
      %1265 = vmatpush1.msra.mxu0 %v883
      %1266 = vmatprep.subr.mxu0 0.0
      %1267 = vmatpush1.msra.mxu0 %v884
      %1268 = vmatprep.subr.mxu0 0.0
      %1269 = vmatpush1.msra.mxu0 %v885
      %1270 = vmatprep.subr.mxu0 0.0
      %1271 = vmatpush1.msra.mxu0 %v886
      %1272 = vmatprep.subr.mxu0 0.0
      %1273 = vmatpush1.msra.mxu0 %v887
      %1274 = vmatprep.subr.mxu0 0.0
      %1275 = vmatpush1.msra.mxu0 0.0
      %1276 = vmatprep.subr.mxu0 0.0
      %1277 = vmatpush1.msra.mxu0 0.0
      %1278 = vmatprep.subr.mxu0 0.0
      %1279 = vmatpush1.msra.mxu0 0.0
      %1280 = vmatprep.subr.mxu0 0.0
      %1281 = vmatpush1.msra.mxu0 0.0
      %1282 = vmatprep.subr.mxu0 0.0
      %1283 = vmatpush1.msra.mxu0 0.0
      %1284 = vmatprep.subr.mxu0 0.0
      %1285 = vmatpush1.msra.mxu0 0.0
      %1286 = vmatprep.subr.mxu0 0.0
      %1287 = vmatpush1.msra.mxu0 0.0
      %1288 = vmatprep.subr.mxu0 0.0
      %1289 = vmatpush1.msra.mxu0 0.0
      %1290 = vmatprep.subr.mxu0 0.0
      %1291 = vmatpush1.msra.mxu0 0.0
      %1292 = vmatprep.subr.mxu0 0.0
      %1293 = vmatpush1.msra.mxu0 0.0
      %1294 = vmatprep.subr.mxu0 0.0
      %1295 = vmatpush1.msra.mxu0 0.0
      %1296 = vmatprep.subr.mxu0 0.0
      %1297 = vmatpush1.msra.mxu0 0.0
      %1298 = vmatprep.subr.mxu0 0.0
      %1299 = vmatpush1.msra.mxu0 0.0
      %1300 = vmatprep.subr.mxu0 0.0
      %1301 = vmatpush1.msra.mxu0 0.0
      %1302 = vmatprep.subr.mxu0 0.0
      %1303 = vmatpush1.msra.mxu0 0.0
      %1304 = vmatprep.subr.mxu0 0.0
      %1305 = vmatpush1.msra.mxu0 0.0
      %1306 = vmatprep.mubr.f32.mxu0 0.0
      %1307 = vmatmul.mubr.f32.gmra.mrb[0].mxu0 %v842
      %v1308 = vpop.f32.mrb[0].mxu0
      %v1309 = vadd.f32 %v1164, %v1308
      %v1310 = vpop.f32.mrb[0].mxu0
      %1311 = vmatprep.mubr.f32.mxu0 0.0
      %1312 = vmatmul.mubr.f32.gmra.mrb[0].mxu0 %v843
      %v1313 = vpop.f32.mrb[0].mxu0
      %v1314 = vadd.f32 %v1169, %v1313
      %v1315 = vpop.f32.mrb[0].mxu0
      %1316 = vmatprep.mubr.f32.mxu0 0.0
      %1317 = vmatmul.mubr.f32.gmra.mrb[0].mxu0 %v845
      %v1318 = vpop.f32.mrb[0].mxu0
      %v1319 = vadd.f32 %v1174, %v1318
      %v1320 = vpop.f32.mrb[0].mxu0
      %1321 = vmatprep.mubr.f32.mxu0 0.0
      %1322 = vmatmul.mubr.f32.gmra.mrb[0].mxu0 %v846
      %v1323 = vpop.f32.mrb[0].mxu0
      %v1324 = vadd.f32 %v1179, %v1323
      %v1325 = vpop.f32.mrb[0].mxu0
      %1326 = vmatprep.mubr.f32.mxu0 0.0
      %1327 = vmatmul.mubr.f32.gmra.mrb[0].mxu0 %v848
      %v1328 = vpop.f32.mrb[0].mxu0
      %v1329 = vadd.f32 %v1184, %v1328
      %v1330 = vpop.f32.mrb[0].mxu0
      %1331 = vmatprep.mubr.f32.mxu0 0.0
      %1332 = vmatmul.mubr.f32.gmra.mrb[0].mxu0 %v849
      %v1333 = vpop.f32.mrb[0].mxu0
      %v1334 = vadd.f32 %v1189, %v1333
      %v1335 = vpop.f32.mrb[0].mxu0
      %1336 = vmatprep.mubr.f32.mxu0 0.0
      %1337 = vmatmul.mubr.f32.gmra.mrb[0].mxu0 %v851
      %v1338 = vpop.f32.mrb[0].mxu0
      %v1339 = vadd.f32 %v1194, %v1338
      %v1340 = vpop.f32.mrb[0].mxu0
      %1341 = vmatprep.mubr.f32.mxu0 0.0
      %1342 = vmatmul.mubr.f32.gmra.mrb[0].mxu0 %v852
      %v1343 = vpop.f32.mrb[0].mxu0
      %v1344 = vadd.f32 %v1199, %v1343
      %v1345 = vpop.f32.mrb[0].mxu0
      %1346 = vmatprep.mubr.f32.mxu0 0.0
      %1347 = vmatmul.mubr.f32.gmra.mrb[0].mxu0 %v854
      %v1348 = vpop.f32.mrb[0].mxu0
      %v1349 = vadd.f32 %v1204, %v1348
      %v1350 = vpop.f32.mrb[0].mxu0
      %1351 = vmatprep.mubr.f32.mxu0 0.0
      %1352 = vmatmul.mubr.f32.gmra.mrb[0].mxu0 %v855
      %v1353 = vpop.f32.mrb[0].mxu0
      %v1354 = vadd.f32 %v1209, %v1353
      %v1355 = vpop.f32.mrb[0].mxu0
      %1356 = vmatprep.mubr.f32.mxu0 0.0
      %1357 = vmatmul.mubr.f32.gmra.mrb[0].mxu0 %v857
      %v1358 = vpop.f32.mrb[0].mxu0
      %v1359 = vadd.f32 %v1214, %v1358
      %v1360 = vpop.f32.mrb[0].mxu0
      %1361 = vmatprep.mubr.f32.mxu0 0.0
      %1362 = vmatmul.mubr.f32.gmra.mrb[0].mxu0 %v858
      %v1363 = vpop.f32.mrb[0].mxu0
      %v1364 = vadd.f32 %v1219, %v1363
      %v1365 = vpop.f32.mrb[0].mxu0
      %1366 = vmatprep.mubr.f32.mxu0 0.0
      %1367 = vmatmul.mubr.f32.gmra.mrb[0].mxu0 %v860
      %v1368 = vpop.f32.mrb[0].mxu0
      %v1369 = vadd.f32 %v1224, %v1368
      %v1370 = vpop.f32.mrb[0].mxu0
      %1371 = vmatprep.mubr.f32.mxu0 0.0
      %1372 = vmatmul.mubr.f32.gmra.mrb[0].mxu0 %v861
      %v1373 = vpop.f32.mrb[0].mxu0
      %v1374 = vadd.f32 %v1229, %v1373
      %v1375 = vpop.f32.mrb[0].mxu0
      %1376 = vmatprep.mubr.f32.mxu0 0.0
      %1377 = vmatmul.mubr.f32.gmra.mrb[0].mxu0 %v863
      %v1378 = vpop.f32.mrb[0].mxu0
      %v1379 = vadd.f32 %v1234, %v1378
      %v1380 = vpop.f32.mrb[0].mxu0
      %1381 = vmatprep.mubr.f32.mxu0 0.0
      %1382 = vmatmul.mubr.f32.gmra.mrb[0].mxu0 %v864
      %v1383 = vpop.f32.mrb[0].mxu0
      %v1384 = vadd.f32 %v1239, %v1383
      %v1385 = vpop.f32.mrb[0].mxu0
      %1386 = vdwg.mxu0
      %vm1387 = vcmask 1045504
      %v1388 = vrot.slane %v842, 2
      %v1389 = vrot.slane %v843, 2
      %v1390 = vsel %vm1387, %v1388, %v1389
      %v1391 = vrot.slane %v844, 2
      %v1392 = vsel %vm1387, %v1389, %v1391
      %v1393 = vrot.slane %v845, 2
      %v1394 = vrot.slane %v846, 2
      %v1395 = vsel %vm1387, %v1393, %v1394
      %v1396 = vrot.slane %v847, 2
      %v1397 = vsel %vm1387, %v1394, %v1396
      %v1398 = vrot.slane %v848, 2
      %v1399 = vrot.slane %v849, 2
      %v1400 = vsel %vm1387, %v1398, %v1399
      %v1401 = vrot.slane %v850, 2
      %v1402 = vsel %vm1387, %v1399, %v1401
      %v1403 = vrot.slane %v851, 2
      %v1404 = vrot.slane %v852, 2
      %v1405 = vsel %vm1387, %v1403, %v1404
      %v1406 = vrot.slane %v853, 2
      %v1407 = vsel %vm1387, %v1404, %v1406
      %v1408 = vrot.slane %v854, 2
      %v1409 = vrot.slane %v855, 2
      %v1410 = vsel %vm1387, %v1408, %v1409
      %v1411 = vrot.slane %v856, 2
      %v1412 = vsel %vm1387, %v1409, %v1411
      %v1413 = vrot.slane %v857, 2
      %v1414 = vrot.slane %v858, 2
      %v1415 = vsel %vm1387, %v1413, %v1414
      %v1416 = vrot.slane %v859, 2
      %v1417 = vsel %vm1387, %v1414, %v1416
      %v1418 = vrot.slane %v860, 2
      %v1419 = vrot.slane %v861, 2
      %v1420 = vsel %vm1387, %v1418, %v1419
      %v1421 = vrot.slane %v862, 2
      %v1422 = vsel %vm1387, %v1419, %v1421
      %v1423 = vrot.slane %v863, 2
      %v1424 = vrot.slane %v864, 2
      %v1425 = vsel %vm1387, %v1423, %v1424
      %v1426 = vrot.slane %v865, 2
      %v1427 = vsel %vm1387, %v1424, %v1426
      %1444 = vmatprep.subr.mxu0 0.0
      %1445 = vmatpush1.msra.mxu0 %v904
      %1446 = vmatprep.subr.mxu0 0.0
      %1447 = vmatpush1.msra.mxu0 %v905
      %1448 = vmatprep.subr.mxu0 0.0
      %1449 = vmatpush1.msra.mxu0 %v906
      %1450 = vmatprep.subr.mxu0 0.0
      %1451 = vmatpush1.msra.mxu0 %v907
      %1452 = vmatprep.subr.mxu0 0.0
      %1453 = vmatpush1.msra.mxu0 %v908
      %1454 = vmatprep.subr.mxu0 0.0
      %1455 = vmatpush1.msra.mxu0 %v909
      %1456 = vmatprep.subr.mxu0 0.0
      %1457 = vmatpush1.msra.mxu0 %v910
      %1458 = vmatprep.subr.mxu0 0.0
      %1459 = vmatpush1.msra.mxu0 %v911
      %1460 = vmatprep.subr.mxu0 0.0
      %1461 = vmatpush1.msra.mxu0 %v912
      %1462 = vmatprep.subr.mxu0 0.0
      %1463 = vmatpush1.msra.mxu0 %v913
      %1464 = vmatprep.subr.mxu0 0.0
      %1465 = vmatpush1.msra.mxu0 %v914
      %1466 = vmatprep.subr.mxu0 0.0
      %1467 = vmatpush1.msra.mxu0 %v915
      %1468 = vmatprep.subr.mxu0 0.0
      %1469 = vmatpush1.msra.mxu0 %v916
      %1470 = vmatprep.subr.mxu0 0.0
      %1471 = vmatpush1.msra.mxu0 %v917
      %1472 = vmatprep.subr.mxu0 0.0
      %1473 = vmatpush1.msra.mxu0 %v918
      %1474 = vmatprep.subr.mxu0 0.0
      %1475 = vmatpush1.msra.mxu0 %v919
      %1476 = vmatprep.subr.mxu0 0.0
      %1477 = vmatpush1.msra.mxu0 0.0
      %1478 = vmatprep.subr.mxu0 0.0
      %1479 = vmatpush1.msra.mxu0 0.0
      %1480 = vmatprep.subr.mxu0 0.0
      %1481 = vmatpush1.msra.mxu0 0.0
      %1482 = vmatprep.subr.mxu0 0.0
      %1483 = vmatpush1.msra.mxu0 0.0
      %1484 = vmatprep.subr.mxu0 0.0
      %1485 = vmatpush1.msra.mxu0 0.0
      %1486 = vmatprep.subr.mxu0 0.0
      %1487 = vmatpush1.msra.mxu0 0.0
      %1488 = vmatprep.subr.mxu0 0.0
      %1489 = vmatpush1.msra.mxu0 0.0
      %1490 = vmatprep.subr.mxu0 0.0
      %1491 = vmatpush1.msra.mxu0 0.0
      %1492 = vmatprep.subr.mxu0 0.0
      %1493 = vmatpush1.msra.mxu0 0.0
      %1494 = vmatprep.subr.mxu0 0.0
      %1495 = vmatpush1.msra.mxu0 0.0
      %1496 = vmatprep.subr.mxu0 0.0
      %1497 = vmatpush1.msra.mxu0 0.0
      %1498 = vmatprep.subr.mxu0 0.0
      %1499 = vmatpush1.msra.mxu0 0.0
      %1500 = vmatprep.subr.mxu0 0.0
      %1501 = vmatpush1.msra.mxu0 0.0
      %1502 = vmatprep.subr.mxu0 0.0
      %1503 = vmatpush1.msra.mxu0 0.0
      %1504 = vmatprep.subr.mxu0 0.0
      %1505 = vmatpush1.msra.mxu0 0.0
      %1506 = vmatprep.subr.mxu0 0.0
      %1507 = vmatpush1.msra.mxu0 0.0
      %1508 = vmatprep.mubr.f32.mxu0 0.0
      %1509 = vmatmul.mubr.f32.gmra.mrb[0].mxu0 %v1390
      %v1510 = vpop.f32.mrb[0].mxu0
      %v1511 = vadd.f32 0.0, %v1510
      %v1512 = vpop.f32.mrb[0].mxu0
      %1513 = vmatprep.mubr.f32.mxu0 0.0
      %1514 = vmatmul.mubr.f32.gmra.mrb[0].mxu0 %v1392
      %v1515 = vpop.f32.mrb[0].mxu0
      %v1516 = vadd.f32 0.0, %v1515
      %v1517 = vpop.f32.mrb[0].mxu0
      %1518 = vmatprep.mubr.f32.mxu0 0.0
      %1519 = vmatmul.mubr.f32.gmra.mrb[0].mxu0 %v1395
      %v1520 = vpop.f32.mrb[0].mxu0
      %v1521 = vadd.f32 0.0, %v1520
      %v1522 = vpop.f32.mrb[0].mxu0
      %1523 = vmatprep.mubr.f32.mxu0 0.0
      %1524 = vmatmul.mubr.f32.gmra.mrb[0].mxu0 %v1397
      %v1525 = vpop.f32.mrb[0].mxu0
      %v1526 = vadd.f32 0.0, %v1525
      %v1527 = vpop.f32.mrb[0].mxu0
      %1528 = vmatprep.mubr.f32.mxu0 0.0
      %1529 = vmatmul.mubr.f32.gmra.mrb[0].mxu0 %v1400
      %v1530 = vpop.f32.mrb[0].mxu0
      %v1531 = vadd.f32 0.0, %v1530
      %v1532 = vpop.f32.mrb[0].mxu0
      %1533 = vmatprep.mubr.f32.mxu0 0.0
      %1534 = vmatmul.mubr.f32.gmra.mrb[0].mxu0 %v1402
      %v1535 = vpop.f32.mrb[0].mxu0
      %v1536 = vadd.f32 0.0, %v1535
      %v1537 = vpop.f32.mrb[0].mxu0
      %1538 = vmatprep.mubr.f32.mxu0 0.0
      %1539 = vmatmul.mubr.f32.gmra.mrb[0].mxu0 %v1405
      %v1540 = vpop.f32.mrb[0].mxu0
      %v1541 = vadd.f32 0.0, %v1540
      %v1542 = vpop.f32.mrb[0].mxu0
      %1543 = vmatprep.mubr.f32.mxu0 0.0
      %1544 = vmatmul.mubr.f32.gmra.mrb[0].mxu0 %v1407
      %v1545 = vpop.f32.mrb[0].mxu0
      %v1546 = vadd.f32 0.0, %v1545
      %v1547 = vpop.f32.mrb[0].mxu0
      %1548 = vmatprep.mubr.f32.mxu0 0.0
      %1549 = vmatmul.mubr.f32.gmra.mrb[0].mxu0 %v1410
      %v1550 = vpop.f32.mrb[0].mxu0
      %v1551 = vadd.f32 0.0, %v1550
      %v1552 = vpop.f32.mrb[0].mxu0
      %1553 = vmatprep.mubr.f32.mxu0 0.0
      %1554 = vmatmul.mubr.f32.gmra.mrb[0].mxu0 %v1412
      %v1555 = vpop.f32.mrb[0].mxu0
      %v1556 = vadd.f32 0.0, %v1555
      %v1557 = vpop.f32.mrb[0].mxu0
      %1558 = vmatprep.mubr.f32.mxu0 0.0
      %1559 = vmatmul.mubr.f32.gmra.mrb[0].mxu0 %v1415
      %v1560 = vpop.f32.mrb[0].mxu0
      %v1561 = vadd.f32 0.0, %v1560
      %v1562 = vpop.f32.mrb[0].mxu0
      %1563 = vmatprep.mubr.f32.mxu0 0.0
      %1564 = vmatmul.mubr.f32.gmra.mrb[0].mxu0 %v1417
      %v1565 = vpop.f32.mrb[0].mxu0
      %v1566 = vadd.f32 0.0, %v1565
      %v1567 = vpop.f32.mrb[0].mxu0
      %1568 = vmatprep.mubr.f32.mxu0 0.0
      %1569 = vmatmul.mubr.f32.gmra.mrb[0].mxu0 %v1420
      %v1570 = vpop.f32.mrb[0].mxu0
      %v1571 = vadd.f32 0.0, %v1570
      %v1572 = vpop.f32.mrb[0].mxu0
      %1573 = vmatprep.mubr.f32.mxu0 0.0
      %1574 = vmatmul.mubr.f32.gmra.mrb[0].mxu0 %v1422
      %v1575 = vpop.f32.mrb[0].mxu0
      %v1576 = vadd.f32 0.0, %v1575
      %v1577 = vpop.f32.mrb[0].mxu0
      %1578 = vmatprep.mubr.f32.mxu0 0.0
      %1579 = vmatmul.mubr.f32.gmra.mrb[0].mxu0 %v1425
      %v1580 = vpop.f32.mrb[0].mxu0
      %v1581 = vadd.f32 0.0, %v1580
      %v1582 = vpop.f32.mrb[0].mxu0
      %1583 = vmatprep.mubr.f32.mxu0 0.0
      %1584 = vmatmul.mubr.f32.gmra.mrb[0].mxu0 %v1427
      %v1585 = vpop.f32.mrb[0].mxu0
      %v1586 = vadd.f32 0.0, %v1585
      %v1587 = vpop.f32.mrb[0].mxu0
      %1588 = vdwg.mxu0
      %v1589 = vadd.f32 %v1309, %v1511
      %v1590 = vadd.f32 %v1314, %v1516
      %v1591 = vadd.f32 %v1319, %v1521
      %v1592 = vadd.f32 %v1324, %v1526
      %v1593 = vadd.f32 %v1329, %v1531
      %v1594 = vadd.f32 %v1334, %v1536
      %v1595 = vadd.f32 %v1339, %v1541
      %v1596 = vadd.f32 %v1344, %v1546
      %v1597 = vadd.f32 %v1349, %v1551
      %v1598 = vadd.f32 %v1354, %v1556
      %v1599 = vadd.f32 %v1359, %v1561
      %v1600 = vadd.f32 %v1364, %v1566
      %v1601 = vadd.f32 %v1369, %v1571
      %v1602 = vadd.f32 %v1374, %v1576
      %v1603 = vadd.f32 %v1379, %v1581
      %v1604 = vadd.f32 %v1384, %v1586
      %1605 = vmatprep.subr.mxu0 0.0
      %1606 = vmatpush1.msra.mxu0 %v920
      %1607 = vmatprep.subr.mxu0 0.0
      %1608 = vmatpush1.msra.mxu0 %v921
      %1609 = vmatprep.subr.mxu0 0.0
      %1610 = vmatpush1.msra.mxu0 %v922
      %1611 = vmatprep.subr.mxu0 0.0
      %1612 = vmatpush1.msra.mxu0 %v923
      %1613 = vmatprep.subr.mxu0 0.0
      %1614 = vmatpush1.msra.mxu0 %v924
      %1615 = vmatprep.subr.mxu0 0.0
      %1616 = vmatpush1.msra.mxu0 %v925
      %1617 = vmatprep.subr.mxu0 0.0
      %1618 = vmatpush1.msra.mxu0 %v926
      %1619 = vmatprep.subr.mxu0 0.0
      %1620 = vmatpush1.msra.mxu0 %v927
      %1621 = vmatprep.subr.mxu0 0.0
      %1622 = vmatpush1.msra.mxu0 %v928
      %1623 = vmatprep.subr.mxu0 0.0
      %1624 = vmatpush1.msra.mxu0 %v929
      %1625 = vmatprep.subr.mxu0 0.0
      %1626 = vmatpush1.msra.mxu0 %v930
      %1627 = vmatprep.subr.mxu0 0.0
      %1628 = vmatpush1.msra.mxu0 %v931
      %1629 = vmatprep.subr.mxu0 0.0
      %1630 = vmatpush1.msra.mxu0 %v932
      %1631 = vmatprep.subr.mxu0 0.0
      %1632 = vmatpush1.msra.mxu0 %v933
      %1633 = vmatprep.subr.mxu0 0.0
      %1634 = vmatpush1.msra.mxu0 %v934
      %1635 = vmatprep.subr.mxu0 0.0
      %1636 = vmatpush1.msra.mxu0 %v935
      %1637 = vmatprep.subr.mxu0 0.0
      %1638 = vmatpush1.msra.mxu0 0.0
      %1639 = vmatprep.subr.mxu0 0.0
      %1640 = vmatpush1.msra.mxu0 0.0
      %1641 = vmatprep.subr.mxu0 0.0
      %1642 = vmatpush1.msra.mxu0 0.0
      %1643 = vmatprep.subr.mxu0 0.0
      %1644 = vmatpush1.msra.mxu0 0.0
      %1645 = vmatprep.subr.mxu0 0.0
      %1646 = vmatpush1.msra.mxu0 0.0
      %1647 = vmatprep.subr.mxu0 0.0
      %1648 = vmatpush1.msra.mxu0 0.0
      %1649 = vmatprep.subr.mxu0 0.0
      %1650 = vmatpush1.msra.mxu0 0.0
      %1651 = vmatprep.subr.mxu0 0.0
      %1652 = vmatpush1.msra.mxu0 0.0
      %1653 = vmatprep.subr.mxu0 0.0
      %1654 = vmatpush1.msra.mxu0 0.0
      %1655 = vmatprep.subr.mxu0 0.0
      %1656 = vmatpush1.msra.mxu0 0.0
      %1657 = vmatprep.subr.mxu0 0.0
      %1658 = vmatpush1.msra.mxu0 0.0
      %1659 = vmatprep.subr.mxu0 0.0
      %1660 = vmatpush1.msra.mxu0 0.0
      %1661 = vmatprep.subr.mxu0 0.0
      %1662 = vmatpush1.msra.mxu0 0.0
      %1663 = vmatprep.subr.mxu0 0.0
      %1664 = vmatpush1.msra.mxu0 0.0
      %1665 = vmatprep.subr.mxu0 0.0
      %1666 = vmatpush1.msra.mxu0 0.0
      %1667 = vmatprep.subr.mxu0 0.0
      %1668 = vmatpush1.msra.mxu0 0.0
      %1669 = vmatprep.mubr.f32.mxu0 0.0
      %1670 = vmatmul.mubr.f32.gmra.mrb[0].mxu0 %v845
      %v1671 = vpop.f32.mrb[0].mxu0
      %v1672 = vadd.f32 0.0, %v1671
      %v1673 = vpop.f32.mrb[0].mxu0
      %1674 = vmatprep.mubr.f32.mxu0 0.0
      %1675 = vmatmul.mubr.f32.gmra.mrb[0].mxu0 %v846
      %v1676 = vpop.f32.mrb[0].mxu0
      %v1677 = vadd.f32 0.0, %v1676
      %v1678 = vpop.f32.mrb[0].mxu0
      %1679 = vmatprep.mubr.f32.mxu0 0.0
      %1680 = vmatmul.mubr.f32.gmra.mrb[0].mxu0 %v848
      %v1681 = vpop.f32.mrb[0].mxu0
      %v1682 = vadd.f32 0.0, %v1681
      %v1683 = vpop.f32.mrb[0].mxu0
      %1684 = vmatprep.mubr.f32.mxu0 0.0
      %1685 = vmatmul.mubr.f32.gmra.mrb[0].mxu0 %v849
      %v1686 = vpop.f32.mrb[0].mxu0
      %v1687 = vadd.f32 0.0, %v1686
      %v1688 = vpop.f32.mrb[0].mxu0
      %1689 = vmatprep.mubr.f32.mxu0 0.0
      %1690 = vmatmul.mubr.f32.gmra.mrb[0].mxu0 %v851
      %v1691 = vpop.f32.mrb[0].mxu0
      %v1692 = vadd.f32 0.0, %v1691
      %v1693 = vpop.f32.mrb[0].mxu0
      %1694 = vmatprep.mubr.f32.mxu0 0.0
      %1695 = vmatmul.mubr.f32.gmra.mrb[0].mxu0 %v852
      %v1696 = vpop.f32.mrb[0].mxu0
      %v1697 = vadd.f32 0.0, %v1696
      %v1698 = vpop.f32.mrb[0].mxu0
      %1699 = vmatprep.mubr.f32.mxu0 0.0
      %1700 = vmatmul.mubr.f32.gmra.mrb[0].mxu0 %v854
      %v1701 = vpop.f32.mrb[0].mxu0
      %v1702 = vadd.f32 0.0, %v1701
      %v1703 = vpop.f32.mrb[0].mxu0
      %1704 = vmatprep.mubr.f32.mxu0 0.0
      %1705 = vmatmul.mubr.f32.gmra.mrb[0].mxu0 %v855
      %v1706 = vpop.f32.mrb[0].mxu0
      %v1707 = vadd.f32 0.0, %v1706
      %v1708 = vpop.f32.mrb[0].mxu0
      %1709 = vmatprep.mubr.f32.mxu0 0.0
      %1710 = vmatmul.mubr.f32.gmra.mrb[0].mxu0 %v857
      %v1711 = vpop.f32.mrb[0].mxu0
      %v1712 = vadd.f32 0.0, %v1711
      %v1713 = vpop.f32.mrb[0].mxu0
      %1714 = vmatprep.mubr.f32.mxu0 0.0
      %1715 = vmatmul.mubr.f32.gmra.mrb[0].mxu0 %v858
      %v1716 = vpop.f32.mrb[0].mxu0
      %v1717 = vadd.f32 0.0, %v1716
      %v1718 = vpop.f32.mrb[0].mxu0
      %1719 = vmatprep.mubr.f32.mxu0 0.0
      %1720 = vmatmul.mubr.f32.gmra.mrb[0].mxu0 %v860
      %v1721 = vpop.f32.mrb[0].mxu0
      %v1722 = vadd.f32 0.0, %v1721
      %v1723 = vpop.f32.mrb[0].mxu0
      %1724 = vmatprep.mubr.f32.mxu0 0.0
      %1725 = vmatmul.mubr.f32.gmra.mrb[0].mxu0 %v861
      %v1726 = vpop.f32.mrb[0].mxu0
      %v1727 = vadd.f32 0.0, %v1726
      %v1728 = vpop.f32.mrb[0].mxu0
      %1729 = vmatprep.mubr.f32.mxu0 0.0
      %1730 = vmatmul.mubr.f32.gmra.mrb[0].mxu0 %v863
      %v1731 = vpop.f32.mrb[0].mxu0
      %v1732 = vadd.f32 0.0, %v1731
      %v1733 = vpop.f32.mrb[0].mxu0
      %1734 = vmatprep.mubr.f32.mxu0 0.0
      %1735 = vmatmul.mubr.f32.gmra.mrb[0].mxu0 %v864
      %v1736 = vpop.f32.mrb[0].mxu0
      %v1737 = vadd.f32 0.0, %v1736
      %v1738 = vpop.f32.mrb[0].mxu0
      %1739 = vmatprep.mubr.f32.mxu0 0.0
      %1740 = vmatmul.mubr.f32.gmra.mrb[0].mxu0 %v866
      %v1741 = vpop.f32.mrb[0].mxu0
      %v1742 = vadd.f32 0.0, %v1741
      %v1743 = vpop.f32.mrb[0].mxu0
      %1744 = vmatprep.mubr.f32.mxu0 0.0
      %1745 = vmatmul.mubr.f32.gmra.mrb[0].mxu0 %v867
      %v1746 = vpop.f32.mrb[0].mxu0
      %v1747 = vadd.f32 0.0, %v1746
      %v1748 = vpop.f32.mrb[0].mxu0
      %1749 = vdwg.mxu0
      %v1750 = vadd.f32 %v1589, %v1672
      %v1751 = vadd.f32 %v1590, %v1677
      %v1752 = vadd.f32 %v1591, %v1682
      %v1753 = vadd.f32 %v1592, %v1687
      %v1754 = vadd.f32 %v1593, %v1692
      %v1755 = vadd.f32 %v1594, %v1697
      %v1756 = vadd.f32 %v1595, %v1702
      %v1757 = vadd.f32 %v1596, %v1707
      %v1758 = vadd.f32 %v1597, %v1712
      %v1759 = vadd.f32 %v1598, %v1717
      %v1760 = vadd.f32 %v1599, %v1722
      %v1761 = vadd.f32 %v1600, %v1727
      %v1762 = vadd.f32 %v1601, %v1732
      %v1763 = vadd.f32 %v1602, %v1737
      %v1764 = vadd.f32 %v1603, %v1742
      %v1765 = vadd.f32 %v1604, %v1747
      %v1769 = vrot.slane %v866, 1
      %v1770 = vrot.slane %v867, 1
      %v1771 = vsel %vm1040, %v1769, %v1770
      %v1772 = vrot.slane %v868, 1
      %v1773 = vsel %vm1040, %v1770, %v1772
      %1776 = vmatprep.subr.mxu0 0.0
      %1777 = vmatpush1.msra.mxu0 %v936
      %1778 = vmatprep.subr.mxu0 0.0
      %1779 = vmatpush1.msra.mxu0 %v937
      %1780 = vmatprep.subr.mxu0 0.0
      %1781 = vmatpush1.msra.mxu0 %v938
      %1782 = vmatprep.subr.mxu0 0.0
      %1783 = vmatpush1.msra.mxu0 %v939
      %1784 = vmatprep.subr.mxu0 0.0
      %1785 = vmatpush1.msra.mxu0 %v940
      %1786 = vmatprep.subr.mxu0 0.0
      %1787 = vmatpush1.msra.mxu0 %v941
      %1788 = vmatprep.subr.mxu0 0.0
      %1789 = vmatpush1.msra.mxu0 %v942
      %1790 = vmatprep.subr.mxu0 0.0
      %1791 = vmatpush1.msra.mxu0 %v943
      %1792 = vmatprep.subr.mxu0 0.0
      %1793 = vmatpush1.msra.mxu0 %v944
      %1794 = vmatprep.subr.mxu0 0.0
      %1795 = vmatpush1.msra.mxu0 %v945
      %1796 = vmatprep.subr.mxu0 0.0
      %1797 = vmatpush1.msra.mxu0 %v946
      %1798 = vmatprep.subr.mxu0 0.0
      %1799 = vmatpush1.msra.mxu0 %v947
      %1800 = vmatprep.subr.mxu0 0.0
      %1801 = vmatpush1.msra.mxu0 %v948
      %1802 = vmatprep.subr.mxu0 0.0
      %1803 = vmatpush1.msra.mxu0 %v949
      %1804 = vmatprep.subr.mxu0 0.0
      %1805 = vmatpush1.msra.mxu0 %v950
      %1806 = vmatprep.subr.mxu0 0.0
      %1807 = vmatpush1.msra.mxu0 %v951
      %1808 = vmatprep.subr.mxu0 0.0
      %1809 = vmatpush1.msra.mxu0 0.0
      %1810 = vmatprep.subr.mxu0 0.0
      %1811 = vmatpush1.msra.mxu0 0.0
      %1812 = vmatprep.subr.mxu0 0.0
      %1813 = vmatpush1.msra.mxu0 0.0
      %1814 = vmatprep.subr.mxu0 0.0
      %1815 = vmatpush1.msra.mxu0 0.0
      %1816 = vmatprep.subr.mxu0 0.0
      %1817 = vmatpush1.msra.mxu0 0.0
      %1818 = vmatprep.subr.mxu0 0.0
      %1819 = vmatpush1.msra.mxu0 0.0
      %1820 = vmatprep.subr.mxu0 0.0
      %1821 = vmatpush1.msra.mxu0 0.0
      %1822 = vmatprep.subr.mxu0 0.0
      %1823 = vmatpush1.msra.mxu0 0.0
      %1824 = vmatprep.subr.mxu0 0.0
      %1825 = vmatpush1.msra.mxu0 0.0
      %1826 = vmatprep.subr.mxu0 0.0
      %1827 = vmatpush1.msra.mxu0 0.0
      %1828 = vmatprep.subr.mxu0 0.0
      %1829 = vmatpush1.msra.mxu0 0.0
      %1830 = vmatprep.subr.mxu0 0.0
      %1831 = vmatpush1.msra.mxu0 0.0
      %1832 = vmatprep.subr.mxu0 0.0
      %1833 = vmatpush1.msra.mxu0 0.0
      %1834 = vmatprep.subr.mxu0 0.0
      %1835 = vmatpush1.msra.mxu0 0.0
      %1836 = vmatprep.subr.mxu0 0.0
      %1837 = vmatpush1.msra.mxu0 0.0
      %1838 = vmatprep.subr.mxu0 0.0
      %1839 = vmatpush1.msra.mxu0 0.0
      %1840 = vmatprep.mubr.f32.mxu0 0.0
      %1841 = vmatmul.mubr.f32.gmra.mrb[0].mxu0 %v1048
      %v1842 = vpop.f32.mrb[0].mxu0
      %v1843 = vadd.f32 0.0, %v1842
      %v1844 = vpop.f32.mrb[0].mxu0
      %1845 = vmatprep.mubr.f32.mxu0 0.0
      %1846 = vmatmul.mubr.f32.gmra.mrb[0].mxu0 %v1050
      %v1847 = vpop.f32.mrb[0].mxu0
      %v1848 = vadd.f32 0.0, %v1847
      %v1849 = vpop.f32.mrb[0].mxu0
      %1850 = vmatprep.mubr.f32.mxu0 0.0
      %1851 = vmatmul.mubr.f32.gmra.mrb[0].mxu0 %v1053
      %v1852 = vpop.f32.mrb[0].mxu0
      %v1853 = vadd.f32 0.0, %v1852
      %v1854 = vpop.f32.mrb[0].mxu0
      %1855 = vmatprep.mubr.f32.mxu0 0.0
      %1856 = vmatmul.mubr.f32.gmra.mrb[0].mxu0 %v1055
      %v1857 = vpop.f32.mrb[0].mxu0
      %v1858 = vadd.f32 0.0, %v1857
      %v1859 = vpop.f32.mrb[0].mxu0
      %1860 = vmatprep.mubr.f32.mxu0 0.0
      %1861 = vmatmul.mubr.f32.gmra.mrb[0].mxu0 %v1058
      %v1862 = vpop.f32.mrb[0].mxu0
      %v1863 = vadd.f32 0.0, %v1862
      %v1864 = vpop.f32.mrb[0].mxu0
      %1865 = vmatprep.mubr.f32.mxu0 0.0
      %1866 = vmatmul.mubr.f32.gmra.mrb[0].mxu0 %v1060
      %v1867 = vpop.f32.mrb[0].mxu0
      %v1868 = vadd.f32 0.0, %v1867
      %v1869 = vpop.f32.mrb[0].mxu0
      %1870 = vmatprep.mubr.f32.mxu0 0.0
      %1871 = vmatmul.mubr.f32.gmra.mrb[0].mxu0 %v1063
      %v1872 = vpop.f32.mrb[0].mxu0
      %v1873 = vadd.f32 0.0, %v1872
      %v1874 = vpop.f32.mrb[0].mxu0
      %1875 = vmatprep.mubr.f32.mxu0 0.0
      %1876 = vmatmul.mubr.f32.gmra.mrb[0].mxu0 %v1065
      %v1877 = vpop.f32.mrb[0].mxu0
      %v1878 = vadd.f32 0.0, %v1877
      %v1879 = vpop.f32.mrb[0].mxu0
      %1880 = vmatprep.mubr.f32.mxu0 0.0
      %1881 = vmatmul.mubr.f32.gmra.mrb[0].mxu0 %v1068
      %v1882 = vpop.f32.mrb[0].mxu0
      %v1883 = vadd.f32 0.0, %v1882
      %v1884 = vpop.f32.mrb[0].mxu0
      %1885 = vmatprep.mubr.f32.mxu0 0.0
      %1886 = vmatmul.mubr.f32.gmra.mrb[0].mxu0 %v1070
      %v1887 = vpop.f32.mrb[0].mxu0
      %v1888 = vadd.f32 0.0, %v1887
      %v1889 = vpop.f32.mrb[0].mxu0
      %1890 = vmatprep.mubr.f32.mxu0 0.0
      %1891 = vmatmul.mubr.f32.gmra.mrb[0].mxu0 %v1073
      %v1892 = vpop.f32.mrb[0].mxu0
      %v1893 = vadd.f32 0.0, %v1892
      %v1894 = vpop.f32.mrb[0].mxu0
      %1895 = vmatprep.mubr.f32.mxu0 0.0
      %1896 = vmatmul.mubr.f32.gmra.mrb[0].mxu0 %v1075
      %v1897 = vpop.f32.mrb[0].mxu0
      %v1898 = vadd.f32 0.0, %v1897
      %v1899 = vpop.f32.mrb[0].mxu0
      %1900 = vmatprep.mubr.f32.mxu0 0.0
      %1901 = vmatmul.mubr.f32.gmra.mrb[0].mxu0 %v1078
      %v1902 = vpop.f32.mrb[0].mxu0
      %v1903 = vadd.f32 0.0, %v1902
      %v1904 = vpop.f32.mrb[0].mxu0
      %1905 = vmatprep.mubr.f32.mxu0 0.0
      %1906 = vmatmul.mubr.f32.gmra.mrb[0].mxu0 %v1080
      %v1907 = vpop.f32.mrb[0].mxu0
      %v1908 = vadd.f32 0.0, %v1907
      %v1909 = vpop.f32.mrb[0].mxu0
      %1910 = vmatprep.mubr.f32.mxu0 0.0
      %1911 = vmatmul.mubr.f32.gmra.mrb[0].mxu0 %v1771
      %v1912 = vpop.f32.mrb[0].mxu0
      %v1913 = vadd.f32 0.0, %v1912
      %v1914 = vpop.f32.mrb[0].mxu0
      %1915 = vmatprep.mubr.f32.mxu0 0.0
      %1916 = vmatmul.mubr.f32.gmra.mrb[0].mxu0 %v1773
      %v1917 = vpop.f32.mrb[0].mxu0
      %v1918 = vadd.f32 0.0, %v1917
      %v1919 = vpop.f32.mrb[0].mxu0
      %1920 = vdwg.mxu0
      %v1921 = vadd.f32 %v1750, %v1843
      %v1922 = vadd.f32 %v1751, %v1848
      %v1923 = vadd.f32 %v1752, %v1853
      %v1924 = vadd.f32 %v1753, %v1858
      %v1925 = vadd.f32 %v1754, %v1863
      %v1926 = vadd.f32 %v1755, %v1868
      %v1927 = vadd.f32 %v1756, %v1873
      %v1928 = vadd.f32 %v1757, %v1878
      %v1929 = vadd.f32 %v1758, %v1883
      %v1930 = vadd.f32 %v1759, %v1888
      %v1931 = vadd.f32 %v1760, %v1893
      %v1932 = vadd.f32 %v1761, %v1898
      %v1933 = vadd.f32 %v1762, %v1903
      %v1934 = vadd.f32 %v1763, %v1908
      %v1935 = vadd.f32 %v1764, %v1913
      %v1936 = vadd.f32 %v1765, %v1918
      %v1937 = vrot.slane %v866, 2
      %v1938 = vrot.slane %v867, 2
      %v1939 = vsel %vm1387, %v1937, %v1938
      %v1940 = vrot.slane %v868, 2
      %v1941 = vsel %vm1387, %v1938, %v1940
      %1944 = vmatprep.subr.mxu0 0.0
      %1945 = vmatpush1.msra.mxu0 %v952
      %1946 = vmatprep.subr.mxu0 0.0
      %1947 = vmatpush1.msra.mxu0 %v953
      %1948 = vmatprep.subr.mxu0 0.0
      %1949 = vmatpush1.msra.mxu0 %v954
      %1950 = vmatprep.subr.mxu0 0.0
      %1951 = vmatpush1.msra.mxu0 %v955
      %1952 = vmatprep.subr.mxu0 0.0
      %1953 = vmatpush1.msra.mxu0 %v956
      %1954 = vmatprep.subr.mxu0 0.0
      %1955 = vmatpush1.msra.mxu0 %v957
      %1956 = vmatprep.subr.mxu0 0.0
      %1957 = vmatpush1.msra.mxu0 %v958
      %1958 = vmatprep.subr.mxu0 0.0
      %1959 = vmatpush1.msra.mxu0 %v959
      %1960 = vmatprep.subr.mxu0 0.0
      %1961 = vmatpush1.msra.mxu0 %v960
      %1962 = vmatprep.subr.mxu0 0.0
      %1963 = vmatpush1.msra.mxu0 %v961
      %1964 = vmatprep.subr.mxu0 0.0
      %1965 = vmatpush1.msra.mxu0 %v962
      %1966 = vmatprep.subr.mxu0 0.0
      %1967 = vmatpush1.msra.mxu0 %v963
      %1968 = vmatprep.subr.mxu0 0.0
      %1969 = vmatpush1.msra.mxu0 %v964
      %1970 = vmatprep.subr.mxu0 0.0
      %1971 = vmatpush1.msra.mxu0 %v965
      %1972 = vmatprep.subr.mxu0 0.0
      %1973 = vmatpush1.msra.mxu0 %v966
      %1974 = vmatprep.subr.mxu0 0.0
      %1975 = vmatpush1.msra.mxu0 %v967
      %1976 = vmatprep.subr.mxu0 0.0
      %1977 = vmatpush1.msra.mxu0 0.0
      %1978 = vmatprep.subr.mxu0 0.0
      %1979 = vmatpush1.msra.mxu0 0.0
      %1980 = vmatprep.subr.mxu0 0.0
      %1981 = vmatpush1.msra.mxu0 0.0
      %1982 = vmatprep.subr.mxu0 0.0
      %1983 = vmatpush1.msra.mxu0 0.0
      %1984 = vmatprep.subr.mxu0 0.0
      %1985 = vmatpush1.msra.mxu0 0.0
      %1986 = vmatprep.subr.mxu0 0.0
      %1987 = vmatpush1.msra.mxu0 0.0
      %1988 = vmatprep.subr.mxu0 0.0
      %1989 = vmatpush1.msra.mxu0 0.0
      %1990 = vmatprep.subr.mxu0 0.0
      %1991 = vmatpush1.msra.mxu0 0.0
      %1992 = vmatprep.subr.mxu0 0.0
      %1993 = vmatpush1.msra.mxu0 0.0
      %1994 = vmatprep.subr.mxu0 0.0
      %1995 = vmatpush1.msra.mxu0 0.0
      %1996 = vmatprep.subr.mxu0 0.0
      %1997 = vmatpush1.msra.mxu0 0.0
      %1998 = vmatprep.subr.mxu0 0.0
      %1999 = vmatpush1.msra.mxu0 0.0
      %2000 = vmatprep.subr.mxu0 0.0
      %2001 = vmatpush1.msra.mxu0 0.0
      %2002 = vmatprep.subr.mxu0 0.0
      %2003 = vmatpush1.msra.mxu0 0.0
      %2004 = vmatprep.subr.mxu0 0.0
      %2005 = vmatpush1.msra.mxu0 0.0
      %2006 = vmatprep.subr.mxu0 0.0
      %2007 = vmatpush1.msra.mxu0 0.0
      %2008 = vmatprep.mubr.f32.mxu0 0.0
      %2009 = vmatmul.mubr.f32.gmra.mrb[0].mxu0 %v1395
      %v2010 = vpop.f32.mrb[0].mxu0
      %v2011 = vadd.f32 0.0, %v2010
      %v2012 = vpop.f32.mrb[0].mxu0
      %2013 = vmatprep.mubr.f32.mxu0 0.0
      %2014 = vmatmul.mubr.f32.gmra.mrb[0].mxu0 %v1397
      %v2015 = vpop.f32.mrb[0].mxu0
      %v2016 = vadd.f32 0.0, %v2015
      %v2017 = vpop.f32.mrb[0].mxu0
      %2018 = vmatprep.mubr.f32.mxu0 0.0
      %2019 = vmatmul.mubr.f32.gmra.mrb[0].mxu0 %v1400
      %v2020 = vpop.f32.mrb[0].mxu0
      %v2021 = vadd.f32 0.0, %v2020
      %v2022 = vpop.f32.mrb[0].mxu0
      %2023 = vmatprep.mubr.f32.mxu0 0.0
      %2024 = vmatmul.mubr.f32.gmra.mrb[0].mxu0 %v1402
      %v2025 = vpop.f32.mrb[0].mxu0
      %v2026 = vadd.f32 0.0, %v2025
      %v2027 = vpop.f32.mrb[0].mxu0
      %2028 = vmatprep.mubr.f32.mxu0 0.0
      %2029 = vmatmul.mubr.f32.gmra.mrb[0].mxu0 %v1405
      %v2030 = vpop.f32.mrb[0].mxu0
      %v2031 = vadd.f32 0.0, %v2030
      %v2032 = vpop.f32.mrb[0].mxu0
      %2033 = vmatprep.mubr.f32.mxu0 0.0
      %2034 = vmatmul.mubr.f32.gmra.mrb[0].mxu0 %v1407
      %v2035 = vpop.f32.mrb[0].mxu0
      %v2036 = vadd.f32 0.0, %v2035
      %v2037 = vpop.f32.mrb[0].mxu0
      %2038 = vmatprep.mubr.f32.mxu0 0.0
      %2039 = vmatmul.mubr.f32.gmra.mrb[0].mxu0 %v1410
      %v2040 = vpop.f32.mrb[0].mxu0
      %v2041 = vadd.f32 0.0, %v2040
      %v2042 = vpop.f32.mrb[0].mxu0
      %2043 = vmatprep.mubr.f32.mxu0 0.0
      %2044 = vmatmul.mubr.f32.gmra.mrb[0].mxu0 %v1412
      %v2045 = vpop.f32.mrb[0].mxu0
      %v2046 = vadd.f32 0.0, %v2045
      %v2047 = vpop.f32.mrb[0].mxu0
      %2048 = vmatprep.mubr.f32.mxu0 0.0
      %2049 = vmatmul.mubr.f32.gmra.mrb[0].mxu0 %v1415
      %v2050 = vpop.f32.mrb[0].mxu0
      %v2051 = vadd.f32 0.0, %v2050
      %v2052 = vpop.f32.mrb[0].mxu0
      %2053 = vmatprep.mubr.f32.mxu0 0.0
      %2054 = vmatmul.mubr.f32.gmra.mrb[0].mxu0 %v1417
      %v2055 = vpop.f32.mrb[0].mxu0
      %v2056 = vadd.f32 0.0, %v2055
      %v2057 = vpop.f32.mrb[0].mxu0
      %2058 = vmatprep.mubr.f32.mxu0 0.0
      %2059 = vmatmul.mubr.f32.gmra.mrb[0].mxu0 %v1420
      %v2060 = vpop.f32.mrb[0].mxu0
      %v2061 = vadd.f32 0.0, %v2060
      %v2062 = vpop.f32.mrb[0].mxu0
      %2063 = vmatprep.mubr.f32.mxu0 0.0
      %2064 = vmatmul.mubr.f32.gmra.mrb[0].mxu0 %v1422
      %v2065 = vpop.f32.mrb[0].mxu0
      %v2066 = vadd.f32 0.0, %v2065
      %v2067 = vpop.f32.mrb[0].mxu0
      %2068 = vmatprep.mubr.f32.mxu0 0.0
      %2069 = vmatmul.mubr.f32.gmra.mrb[0].mxu0 %v1425
      %v2070 = vpop.f32.mrb[0].mxu0
      %v2071 = vadd.f32 0.0, %v2070
      %v2072 = vpop.f32.mrb[0].mxu0
      %2073 = vmatprep.mubr.f32.mxu0 0.0
      %2074 = vmatmul.mubr.f32.gmra.mrb[0].mxu0 %v1427
      %v2075 = vpop.f32.mrb[0].mxu0
      %v2076 = vadd.f32 0.0, %v2075
      %v2077 = vpop.f32.mrb[0].mxu0
      %2078 = vmatprep.mubr.f32.mxu0 0.0
      %2079 = vmatmul.mubr.f32.gmra.mrb[0].mxu0 %v1939
      %v2080 = vpop.f32.mrb[0].mxu0
      %v2081 = vadd.f32 0.0, %v2080
      %v2082 = vpop.f32.mrb[0].mxu0
      %2083 = vmatprep.mubr.f32.mxu0 0.0
      %2084 = vmatmul.mubr.f32.gmra.mrb[0].mxu0 %v1941
      %v2085 = vpop.f32.mrb[0].mxu0
      %v2086 = vadd.f32 0.0, %v2085
      %v2087 = vpop.f32.mrb[0].mxu0
      %2088 = vdwg.mxu0
      %v2089 = vadd.f32 %v1921, %v2011
      %v2090 = vadd.f32 %v1922, %v2016
      %v2091 = vadd.f32 %v1923, %v2021
      %v2092 = vadd.f32 %v1924, %v2026
      %v2093 = vadd.f32 %v1925, %v2031
      %v2094 = vadd.f32 %v1926, %v2036
      %v2095 = vadd.f32 %v1927, %v2041
      %v2096 = vadd.f32 %v1928, %v2046
      %v2097 = vadd.f32 %v1929, %v2051
      %v2098 = vadd.f32 %v1930, %v2056
      %v2099 = vadd.f32 %v1931, %v2061
      %v2100 = vadd.f32 %v1932, %v2066
      %v2101 = vadd.f32 %v1933, %v2071
      %v2102 = vadd.f32 %v1934, %v2076
      %v2103 = vadd.f32 %v1935, %v2081
      %v2104 = vadd.f32 %v1936, %v2086
      %2105 = vmatprep.subr.mxu0 0.0
      %2106 = vmatpush1.msra.mxu0 %v968
      %2107 = vmatprep.subr.mxu0 0.0
      %2108 = vmatpush1.msra.mxu0 %v969
      %2109 = vmatprep.subr.mxu0 0.0
      %2110 = vmatpush1.msra.mxu0 %v970
      %2111 = vmatprep.subr.mxu0 0.0
      %2112 = vmatpush1.msra.mxu0 %v971
      %2113 = vmatprep.subr.mxu0 0.0
      %2114 = vmatpush1.msra.mxu0 %v972
      %2115 = vmatprep.subr.mxu0 0.0
      %2116 = vmatpush1.msra.mxu0 %v973
      %2117 = vmatprep.subr.mxu0 0.0
      %2118 = vmatpush1.msra.mxu0 %v974
      %2119 = vmatprep.subr.mxu0 0.0
      %2120 = vmatpush1.msra.mxu0 %v975
      %2121 = vmatprep.subr.mxu0 0.0
      %2122 = vmatpush1.msra.mxu0 %v976
      %2123 = vmatprep.subr.mxu0 0.0
      %2124 = vmatpush1.msra.mxu0 %v977
      %2125 = vmatprep.subr.mxu0 0.0
      %2126 = vmatpush1.msra.mxu0 %v978
      %2127 = vmatprep.subr.mxu0 0.0
      %2128 = vmatpush1.msra.mxu0 %v979
      %2129 = vmatprep.subr.mxu0 0.0
      %2130 = vmatpush1.msra.mxu0 %v980
      %2131 = vmatprep.subr.mxu0 0.0
      %2132 = vmatpush1.msra.mxu0 %v981
      %2133 = vmatprep.subr.mxu0 0.0
      %2134 = vmatpush1.msra.mxu0 %v982
      %2135 = vmatprep.subr.mxu0 0.0
      %2136 = vmatpush1.msra.mxu0 %v983
      %2137 = vmatprep.subr.mxu0 0.0
      %2138 = vmatpush1.msra.mxu0 0.0
      %2139 = vmatprep.subr.mxu0 0.0
      %2140 = vmatpush1.msra.mxu0 0.0
      %2141 = vmatprep.subr.mxu0 0.0
      %2142 = vmatpush1.msra.mxu0 0.0
      %2143 = vmatprep.subr.mxu0 0.0
      %2144 = vmatpush1.msra.mxu0 0.0
      %2145 = vmatprep.subr.mxu0 0.0
      %2146 = vmatpush1.msra.mxu0 0.0
      %2147 = vmatprep.subr.mxu0 0.0
      %2148 = vmatpush1.msra.mxu0 0.0
      %2149 = vmatprep.subr.mxu0 0.0
      %2150 = vmatpush1.msra.mxu0 0.0
      %2151 = vmatprep.subr.mxu0 0.0
      %2152 = vmatpush1.msra.mxu0 0.0
      %2153 = vmatprep.subr.mxu0 0.0
      %2154 = vmatpush1.msra.mxu0 0.0
      %2155 = vmatprep.subr.mxu0 0.0
      %2156 = vmatpush1.msra.mxu0 0.0
      %2157 = vmatprep.subr.mxu0 0.0
      %2158 = vmatpush1.msra.mxu0 0.0
      %2159 = vmatprep.subr.mxu0 0.0
      %2160 = vmatpush1.msra.mxu0 0.0
      %2161 = vmatprep.subr.mxu0 0.0
      %2162 = vmatpush1.msra.mxu0 0.0
      %2163 = vmatprep.subr.mxu0 0.0
      %2164 = vmatpush1.msra.mxu0 0.0
      %2165 = vmatprep.subr.mxu0 0.0
      %2166 = vmatpush1.msra.mxu0 0.0
      %2167 = vmatprep.subr.mxu0 0.0
      %2168 = vmatpush1.msra.mxu0 0.0
      %2169 = vmatprep.mubr.f32.mxu0 0.0
      %2170 = vmatmul.mubr.f32.gmra.mrb[0].mxu0 %v848
      %v2171 = vpop.f32.mrb[0].mxu0
      %v2172 = vadd.f32 0.0, %v2171
      %v2173 = vpop.f32.mrb[0].mxu0
      %2174 = vmatprep.mubr.f32.mxu0 0.0
      %2175 = vmatmul.mubr.f32.gmra.mrb[0].mxu0 %v849
      %v2176 = vpop.f32.mrb[0].mxu0
      %v2177 = vadd.f32 0.0, %v2176
      %v2178 = vpop.f32.mrb[0].mxu0
      %2179 = vmatprep.mubr.f32.mxu0 0.0
      %2180 = vmatmul.mubr.f32.gmra.mrb[0].mxu0 %v851
      %v2181 = vpop.f32.mrb[0].mxu0
      %v2182 = vadd.f32 0.0, %v2181
      %v2183 = vpop.f32.mrb[0].mxu0
      %2184 = vmatprep.mubr.f32.mxu0 0.0
      %2185 = vmatmul.mubr.f32.gmra.mrb[0].mxu0 %v852
      %v2186 = vpop.f32.mrb[0].mxu0
      %v2187 = vadd.f32 0.0, %v2186
      %v2188 = vpop.f32.mrb[0].mxu0
      %2189 = vmatprep.mubr.f32.mxu0 0.0
      %2190 = vmatmul.mubr.f32.gmra.mrb[0].mxu0 %v854
      %v2191 = vpop.f32.mrb[0].mxu0
      %v2192 = vadd.f32 0.0, %v2191
      %v2193 = vpop.f32.mrb[0].mxu0
      %2194 = vmatprep.mubr.f32.mxu0 0.0
      %2195 = vmatmul.mubr.f32.gmra.mrb[0].mxu0 %v855
      %v2196 = vpop.f32.mrb[0].mxu0
      %v2197 = vadd.f32 0.0, %v2196
      %v2198 = vpop.f32.mrb[0].mxu0
      %2199 = vmatprep.mubr.f32.mxu0 0.0
      %2200 = vmatmul.mubr.f32.gmra.mrb[0].mxu0 %v857
      %v2201 = vpop.f32.mrb[0].mxu0
      %v2202 = vadd.f32 0.0, %v2201
      %v2203 = vpop.f32.mrb[0].mxu0
      %2204 = vmatprep.mubr.f32.mxu0 0.0
      %2205 = vmatmul.mubr.f32.gmra.mrb[0].mxu0 %v858
      %v2206 = vpop.f32.mrb[0].mxu0
      %v2207 = vadd.f32 0.0, %v2206
      %v2208 = vpop.f32.mrb[0].mxu0
      %2209 = vmatprep.mubr.f32.mxu0 0.0
      %2210 = vmatmul.mubr.f32.gmra.mrb[0].mxu0 %v860
      %v2211 = vpop.f32.mrb[0].mxu0
      %v2212 = vadd.f32 0.0, %v2211
      %v2213 = vpop.f32.mrb[0].mxu0
      %2214 = vmatprep.mubr.f32.mxu0 0.0
      %2215 = vmatmul.mubr.f32.gmra.mrb[0].mxu0 %v861
      %v2216 = vpop.f32.mrb[0].mxu0
      %v2217 = vadd.f32 0.0, %v2216
      %v2218 = vpop.f32.mrb[0].mxu0
      %2219 = vmatprep.mubr.f32.mxu0 0.0
      %2220 = vmatmul.mubr.f32.gmra.mrb[0].mxu0 %v863
      %v2221 = vpop.f32.mrb[0].mxu0
      %v2222 = vadd.f32 0.0, %v2221
      %v2223 = vpop.f32.mrb[0].mxu0
      %2224 = vmatprep.mubr.f32.mxu0 0.0
      %2225 = vmatmul.mubr.f32.gmra.mrb[0].mxu0 %v864
      %v2226 = vpop.f32.mrb[0].mxu0
      %v2227 = vadd.f32 0.0, %v2226
      %v2228 = vpop.f32.mrb[0].mxu0
      %2229 = vmatprep.mubr.f32.mxu0 0.0
      %2230 = vmatmul.mubr.f32.gmra.mrb[0].mxu0 %v866
      %v2231 = vpop.f32.mrb[0].mxu0
      %v2232 = vadd.f32 0.0, %v2231
      %v2233 = vpop.f32.mrb[0].mxu0
      %2234 = vmatprep.mubr.f32.mxu0 0.0
      %2235 = vmatmul.mubr.f32.gmra.mrb[0].mxu0 %v867
      %v2236 = vpop.f32.mrb[0].mxu0
      %v2237 = vadd.f32 0.0, %v2236
      %v2238 = vpop.f32.mrb[0].mxu0
      %2239 = vmatprep.mubr.f32.mxu0 0.0
      %2240 = vmatmul.mubr.f32.gmra.mrb[0].mxu0 %v869
      %v2241 = vpop.f32.mrb[0].mxu0
      %v2242 = vadd.f32 0.0, %v2241
      %v2243 = vpop.f32.mrb[0].mxu0
      %2244 = vmatprep.mubr.f32.mxu0 0.0
      %2245 = vmatmul.mubr.f32.gmra.mrb[0].mxu0 %v870
      %v2246 = vpop.f32.mrb[0].mxu0
      %v2247 = vadd.f32 0.0, %v2246
      %v2248 = vpop.f32.mrb[0].mxu0
      %2249 = vdwg.mxu0
      %v2250 = vadd.f32 %v2089, %v2172
      %v2251 = vadd.f32 %v2090, %v2177
      %v2252 = vadd.f32 %v2091, %v2182
      %v2253 = vadd.f32 %v2092, %v2187
      %v2254 = vadd.f32 %v2093, %v2192
      %v2255 = vadd.f32 %v2094, %v2197
      %v2256 = vadd.f32 %v2095, %v2202
      %v2257 = vadd.f32 %v2096, %v2207
      %v2258 = vadd.f32 %v2097, %v2212
      %v2259 = vadd.f32 %v2098, %v2217
      %v2260 = vadd.f32 %v2099, %v2222
      %v2261 = vadd.f32 %v2100, %v2227
      %v2262 = vadd.f32 %v2101, %v2232
      %v2263 = vadd.f32 %v2102, %v2237
      %v2264 = vadd.f32 %v2103, %v2242
      %v2265 = vadd.f32 %v2104, %v2247
      %v2269 = vrot.slane %v869, 1
      %v2270 = vrot.slane %v870, 1
      %v2271 = vsel %vm1040, %v2269, %v2270
      %v2272 = vrot.slane %v871, 1
      %v2273 = vsel %vm1040, %v2270, %v2272
      %2276 = vmatprep.subr.mxu0 0.0
      %2277 = vmatpush1.msra.mxu0 %v984
      %2278 = vmatprep.subr.mxu0 0.0
      %2279 = vmatpush1.msra.mxu0 %v985
      %2280 = vmatprep.subr.mxu0 0.0
      %2281 = vmatpush1.msra.mxu0 %v986
      %2282 = vmatprep.subr.mxu0 0.0
      %2283 = vmatpush1.msra.mxu0 %v987
      %2284 = vmatprep.subr.mxu0 0.0
      %2285 = vmatpush1.msra.mxu0 %v988
      %2286 = vmatprep.subr.mxu0 0.0
      %2287 = vmatpush1.msra.mxu0 %v989
      %2288 = vmatprep.subr.mxu0 0.0
      %2289 = vmatpush1.msra.mxu0 %v990
      %2290 = vmatprep.subr.mxu0 0.0
      %2291 = vmatpush1.msra.mxu0 %v991
      %2292 = vmatprep.subr.mxu0 0.0
      %2293 = vmatpush1.msra.mxu0 %v992
      %2294 = vmatprep.subr.mxu0 0.0
      %2295 = vmatpush1.msra.mxu0 %v993
      %2296 = vmatprep.subr.mxu0 0.0
      %2297 = vmatpush1.msra.mxu0 %v994
      %2298 = vmatprep.subr.mxu0 0.0
      %2299 = vmatpush1.msra.mxu0 %v995
      %2300 = vmatprep.subr.mxu0 0.0
      %2301 = vmatpush1.msra.mxu0 %v996
      %2302 = vmatprep.subr.mxu0 0.0
      %2303 = vmatpush1.msra.mxu0 %v997
      %2304 = vmatprep.subr.mxu0 0.0
      %2305 = vmatpush1.msra.mxu0 %v998
      %2306 = vmatprep.subr.mxu0 0.0
      %2307 = vmatpush1.msra.mxu0 %v999
      %2308 = vmatprep.subr.mxu0 0.0
      %2309 = vmatpush1.msra.mxu0 0.0
      %2310 = vmatprep.subr.mxu0 0.0
      %2311 = vmatpush1.msra.mxu0 0.0
      %2312 = vmatprep.subr.mxu0 0.0
      %2313 = vmatpush1.msra.mxu0 0.0
      %2314 = vmatprep.subr.mxu0 0.0
      %2315 = vmatpush1.msra.mxu0 0.0
      %2316 = vmatprep.subr.mxu0 0.0
      %2317 = vmatpush1.msra.mxu0 0.0
      %2318 = vmatprep.subr.mxu0 0.0
      %2319 = vmatpush1.msra.mxu0 0.0
      %2320 = vmatprep.subr.mxu0 0.0
      %2321 = vmatpush1.msra.mxu0 0.0
      %2322 = vmatprep.subr.mxu0 0.0
      %2323 = vmatpush1.msra.mxu0 0.0
      %2324 = vmatprep.subr.mxu0 0.0
      %2325 = vmatpush1.msra.mxu0 0.0
      %2326 = vmatprep.subr.mxu0 0.0
      %2327 = vmatpush1.msra.mxu0 0.0
      %2328 = vmatprep.subr.mxu0 0.0
      %2329 = vmatpush1.msra.mxu0 0.0
      %2330 = vmatprep.subr.mxu0 0.0
      %2331 = vmatpush1.msra.mxu0 0.0
      %2332 = vmatprep.subr.mxu0 0.0
      %2333 = vmatpush1.msra.mxu0 0.0
      %2334 = vmatprep.subr.mxu0 0.0
      %2335 = vmatpush1.msra.mxu0 0.0
      %2336 = vmatprep.subr.mxu0 0.0
      %2337 = vmatpush1.msra.mxu0 0.0
      %2338 = vmatprep.subr.mxu0 0.0
      %2339 = vmatpush1.msra.mxu0 0.0
      %2340 = vmatprep.mubr.f32.mxu0 0.0
      %2341 = vmatmul.mubr.f32.gmra.mrb[0].mxu0 %v1053
      %v2342 = vpop.f32.mrb[0].mxu0
      %v2343 = vadd.f32 0.0, %v2342
      %v2344 = vpop.f32.mrb[0].mxu0
      %2345 = vmatprep.mubr.f32.mxu0 0.0
      %2346 = vmatmul.mubr.f32.gmra.mrb[0].mxu0 %v1055
      %v2347 = vpop.f32.mrb[0].mxu0
      %v2348 = vadd.f32 0.0, %v2347
      %v2349 = vpop.f32.mrb[0].mxu0
      %2350 = vmatprep.mubr.f32.mxu0 0.0
      %2351 = vmatmul.mubr.f32.gmra.mrb[0].mxu0 %v1058
      %v2352 = vpop.f32.mrb[0].mxu0
      %v2353 = vadd.f32 0.0, %v2352
      %v2354 = vpop.f32.mrb[0].mxu0
      %2355 = vmatprep.mubr.f32.mxu0 0.0
      %2356 = vmatmul.mubr.f32.gmra.mrb[0].mxu0 %v1060
      %v2357 = vpop.f32.mrb[0].mxu0
      %v2358 = vadd.f32 0.0, %v2357
      %v2359 = vpop.f32.mrb[0].mxu0
      %2360 = vmatprep.mubr.f32.mxu0 0.0
      %2361 = vmatmul.mubr.f32.gmra.mrb[0].mxu0 %v1063
      %v2362 = vpop.f32.mrb[0].mxu0
      %v2363 = vadd.f32 0.0, %v2362
      %v2364 = vpop.f32.mrb[0].mxu0
      %2365 = vmatprep.mubr.f32.mxu0 0.0
      %2366 = vmatmul.mubr.f32.gmra.mrb[0].mxu0 %v1065
      %v2367 = vpop.f32.mrb[0].mxu0
      %v2368 = vadd.f32 0.0, %v2367
      %v2369 = vpop.f32.mrb[0].mxu0
      %2370 = vmatprep.mubr.f32.mxu0 0.0
      %2371 = vmatmul.mubr.f32.gmra.mrb[0].mxu0 %v1068
      %v2372 = vpop.f32.mrb[0].mxu0
      %v2373 = vadd.f32 0.0, %v2372
      %v2374 = vpop.f32.mrb[0].mxu0
      %2375 = vmatprep.mubr.f32.mxu0 0.0
      %2376 = vmatmul.mubr.f32.gmra.mrb[0].mxu0 %v1070
      %v2377 = vpop.f32.mrb[0].mxu0
      %v2378 = vadd.f32 0.0, %v2377
      %v2379 = vpop.f32.mrb[0].mxu0
      %2380 = vmatprep.mubr.f32.mxu0 0.0
      %2381 = vmatmul.mubr.f32.gmra.mrb[0].mxu0 %v1073
      %v2382 = vpop.f32.mrb[0].mxu0
      %v2383 = vadd.f32 0.0, %v2382
      %v2384 = vpop.f32.mrb[0].mxu0
      %2385 = vmatprep.mubr.f32.mxu0 0.0
      %2386 = vmatmul.mubr.f32.gmra.mrb[0].mxu0 %v1075
      %v2387 = vpop.f32.mrb[0].mxu0
      %v2388 = vadd.f32 0.0, %v2387
      %v2389 = vpop.f32.mrb[0].mxu0
      %2390 = vmatprep.mubr.f32.mxu0 0.0
      %2391 = vmatmul.mubr.f32.gmra.mrb[0].mxu0 %v1078
      %v2392 = vpop.f32.mrb[0].mxu0
      %v2393 = vadd.f32 0.0, %v2392
      %v2394 = vpop.f32.mrb[0].mxu0
      %2395 = vmatprep.mubr.f32.mxu0 0.0
      %2396 = vmatmul.mubr.f32.gmra.mrb[0].mxu0 %v1080
      %v2397 = vpop.f32.mrb[0].mxu0
      %v2398 = vadd.f32 0.0, %v2397
      %v2399 = vpop.f32.mrb[0].mxu0
      %2400 = vmatprep.mubr.f32.mxu0 0.0
      %2401 = vmatmul.mubr.f32.gmra.mrb[0].mxu0 %v1771
      %v2402 = vpop.f32.mrb[0].mxu0
      %v2403 = vadd.f32 0.0, %v2402
      %v2404 = vpop.f32.mrb[0].mxu0
      %2405 = vmatprep.mubr.f32.mxu0 0.0
      %2406 = vmatmul.mubr.f32.gmra.mrb[0].mxu0 %v1773
      %v2407 = vpop.f32.mrb[0].mxu0
      %v2408 = vadd.f32 0.0, %v2407
      %v2409 = vpop.f32.mrb[0].mxu0
      %2410 = vmatprep.mubr.f32.mxu0 0.0
      %2411 = vmatmul.mubr.f32.gmra.mrb[0].mxu0 %v2271
      %v2412 = vpop.f32.mrb[0].mxu0
      %v2413 = vadd.f32 0.0, %v2412
      %v2414 = vpop.f32.mrb[0].mxu0
      %2415 = vmatprep.mubr.f32.mxu0 0.0
      %2416 = vmatmul.mubr.f32.gmra.mrb[0].mxu0 %v2273
      %v2417 = vpop.f32.mrb[0].mxu0
      %v2418 = vadd.f32 0.0, %v2417
      %v2419 = vpop.f32.mrb[0].mxu0
      %2420 = vdwg.mxu0
      %v2421 = vadd.f32 %v2250, %v2343
      %v2422 = vadd.f32 %v2251, %v2348
      %v2423 = vadd.f32 %v2252, %v2353
      %v2424 = vadd.f32 %v2253, %v2358
      %v2425 = vadd.f32 %v2254, %v2363
      %v2426 = vadd.f32 %v2255, %v2368
      %v2427 = vadd.f32 %v2256, %v2373
      %v2428 = vadd.f32 %v2257, %v2378
      %v2429 = vadd.f32 %v2258, %v2383
      %v2430 = vadd.f32 %v2259, %v2388
      %v2431 = vadd.f32 %v2260, %v2393
      %v2432 = vadd.f32 %v2261, %v2398
      %v2433 = vadd.f32 %v2262, %v2403
      %v2434 = vadd.f32 %v2263, %v2408
      %v2435 = vadd.f32 %v2264, %v2413
      %v2436 = vadd.f32 %v2265, %v2418
      %v2437 = vrot.slane %v869, 2
      %v2438 = vrot.slane %v870, 2
      %v2439 = vsel %vm1387, %v2437, %v2438
      %v2440 = vrot.slane %v871, 2
      %v2441 = vsel %vm1387, %v2438, %v2440
      %2444 = vmatprep.subr.mxu0 0.0
      %2445 = vmatpush1.msra.mxu0 %v1000
      %2446 = vmatprep.subr.mxu0 0.0
      %2447 = vmatpush1.msra.mxu0 %v1001
      %2448 = vmatprep.subr.mxu0 0.0
      %2449 = vmatpush1.msra.mxu0 %v1002
      %2450 = vmatprep.subr.mxu0 0.0
      %2451 = vmatpush1.msra.mxu0 %v1003
      %2452 = vmatprep.subr.mxu0 0.0
      %2453 = vmatpush1.msra.mxu0 %v1004
      %2454 = vmatprep.subr.mxu0 0.0
      %2455 = vmatpush1.msra.mxu0 %v1005
      %2456 = vmatprep.subr.mxu0 0.0
      %2457 = vmatpush1.msra.mxu0 %v1006
      %2458 = vmatprep.subr.mxu0 0.0
      %2459 = vmatpush1.msra.mxu0 %v1007
      %2460 = vmatprep.subr.mxu0 0.0
      %2461 = vmatpush1.msra.mxu0 %v1008
      %2462 = vmatprep.subr.mxu0 0.0
      %2463 = vmatpush1.msra.mxu0 %v1009
      %2464 = vmatprep.subr.mxu0 0.0
      %2465 = vmatpush1.msra.mxu0 %v1010
      %2466 = vmatprep.subr.mxu0 0.0
      %2467 = vmatpush1.msra.mxu0 %v1011
      %2468 = vmatprep.subr.mxu0 0.0
      %2469 = vmatpush1.msra.mxu0 %v1012
      %2470 = vmatprep.subr.mxu0 0.0
      %2471 = vmatpush1.msra.mxu0 %v1013
      %2472 = vmatprep.subr.mxu0 0.0
      %2473 = vmatpush1.msra.mxu0 %v1014
      %2474 = vmatprep.subr.mxu0 0.0
      %2475 = vmatpush1.msra.mxu0 %v1015
      %2476 = vmatprep.subr.mxu0 0.0
      %2477 = vmatpush1.msra.mxu0 0.0
      %2478 = vmatprep.subr.mxu0 0.0
      %2479 = vmatpush1.msra.mxu0 0.0
      %2480 = vmatprep.subr.mxu0 0.0
      %2481 = vmatpush1.msra.mxu0 0.0
      %2482 = vmatprep.subr.mxu0 0.0
      %2483 = vmatpush1.msra.mxu0 0.0
      %2484 = vmatprep.subr.mxu0 0.0
      %2485 = vmatpush1.msra.mxu0 0.0
      %2486 = vmatprep.subr.mxu0 0.0
      %2487 = vmatpush1.msra.mxu0 0.0
      %2488 = vmatprep.subr.mxu0 0.0
      %2489 = vmatpush1.msra.mxu0 0.0
      %2490 = vmatprep.subr.mxu0 0.0
      %2491 = vmatpush1.msra.mxu0 0.0
      %2492 = vmatprep.subr.mxu0 0.0
      %2493 = vmatpush1.msra.mxu0 0.0
      %2494 = vmatprep.subr.mxu0 0.0
      %2495 = vmatpush1.msra.mxu0 0.0
      %2496 = vmatprep.subr.mxu0 0.0
      %2497 = vmatpush1.msra.mxu0 0.0
      %2498 = vmatprep.subr.mxu0 0.0
      %2499 = vmatpush1.msra.mxu0 0.0
      %2500 = vmatprep.subr.mxu0 0.0
      %2501 = vmatpush1.msra.mxu0 0.0
      %2502 = vmatprep.subr.mxu0 0.0
      %2503 = vmatpush1.msra.mxu0 0.0
      %2504 = vmatprep.subr.mxu0 0.0
      %2505 = vmatpush1.msra.mxu0 0.0
      %2506 = vmatprep.subr.mxu0 0.0
      %2507 = vmatpush1.msra.mxu0 0.0
      %2508 = vmatprep.mubr.f32.mxu0 0.0
      %2509 = vmatmul.mubr.f32.gmra.mrb[0].mxu0 %v1400
      %v2510 = vpop.f32.mrb[0].mxu0
      %v2511 = vadd.f32 0.0, %v2510
      %v2512 = vpop.f32.mrb[0].mxu0
      %2513 = vmatprep.mubr.f32.mxu0 0.0
      %2514 = vmatmul.mubr.f32.gmra.mrb[0].mxu0 %v1402
      %v2515 = vpop.f32.mrb[0].mxu0
      %v2516 = vadd.f32 0.0, %v2515
      %v2517 = vpop.f32.mrb[0].mxu0
      %2518 = vmatprep.mubr.f32.mxu0 0.0
      %2519 = vmatmul.mubr.f32.gmra.mrb[0].mxu0 %v1405
      %v2520 = vpop.f32.mrb[0].mxu0
      %v2521 = vadd.f32 0.0, %v2520
      %v2522 = vpop.f32.mrb[0].mxu0
      %2523 = vmatprep.mubr.f32.mxu0 0.0
      %2524 = vmatmul.mubr.f32.gmra.mrb[0].mxu0 %v1407
      %v2525 = vpop.f32.mrb[0].mxu0
      %v2526 = vadd.f32 0.0, %v2525
      %v2527 = vpop.f32.mrb[0].mxu0
      %2528 = vmatprep.mubr.f32.mxu0 0.0
      %2529 = vmatmul.mubr.f32.gmra.mrb[0].mxu0 %v1410
      %v2530 = vpop.f32.mrb[0].mxu0
      %v2531 = vadd.f32 0.0, %v2530
      %v2532 = vpop.f32.mrb[0].mxu0
      %2533 = vmatprep.mubr.f32.mxu0 0.0
      %2534 = vmatmul.mubr.f32.gmra.mrb[0].mxu0 %v1412
      %v2535 = vpop.f32.mrb[0].mxu0
      %v2536 = vadd.f32 0.0, %v2535
      %v2537 = vpop.f32.mrb[0].mxu0
      %2538 = vmatprep.mubr.f32.mxu0 0.0
      %2539 = vmatmul.mubr.f32.gmra.mrb[0].mxu0 %v1415
      %v2540 = vpop.f32.mrb[0].mxu0
      %v2541 = vadd.f32 0.0, %v2540
      %v2542 = vpop.f32.mrb[0].mxu0
      %2543 = vmatprep.mubr.f32.mxu0 0.0
      %2544 = vmatmul.mubr.f32.gmra.mrb[0].mxu0 %v1417
      %v2545 = vpop.f32.mrb[0].mxu0
      %v2546 = vadd.f32 0.0, %v2545
      %v2547 = vpop.f32.mrb[0].mxu0
      %2548 = vmatprep.mubr.f32.mxu0 0.0
      %2549 = vmatmul.mubr.f32.gmra.mrb[0].mxu0 %v1420
      %v2550 = vpop.f32.mrb[0].mxu0
      %v2551 = vadd.f32 0.0, %v2550
      %v2552 = vpop.f32.mrb[0].mxu0
      %2553 = vmatprep.mubr.f32.mxu0 0.0
      %2554 = vmatmul.mubr.f32.gmra.mrb[0].mxu0 %v1422
      %v2555 = vpop.f32.mrb[0].mxu0
      %v2556 = vadd.f32 0.0, %v2555
      %v2557 = vpop.f32.mrb[0].mxu0
      %2558 = vmatprep.mubr.f32.mxu0 0.0
      %2559 = vmatmul.mubr.f32.gmra.mrb[0].mxu0 %v1425
      %v2560 = vpop.f32.mrb[0].mxu0
      %v2561 = vadd.f32 0.0, %v2560
      %v2562 = vpop.f32.mrb[0].mxu0
      %2563 = vmatprep.mubr.f32.mxu0 0.0
      %2564 = vmatmul.mubr.f32.gmra.mrb[0].mxu0 %v1427
      %v2565 = vpop.f32.mrb[0].mxu0
      %v2566 = vadd.f32 0.0, %v2565
      %v2567 = vpop.f32.mrb[0].mxu0
      %2568 = vmatprep.mubr.f32.mxu0 0.0
      %2569 = vmatmul.mubr.f32.gmra.mrb[0].mxu0 %v1939
      %v2570 = vpop.f32.mrb[0].mxu0
      %v2571 = vadd.f32 0.0, %v2570
      %v2572 = vpop.f32.mrb[0].mxu0
      %2573 = vmatprep.mubr.f32.mxu0 0.0
      %2574 = vmatmul.mubr.f32.gmra.mrb[0].mxu0 %v1941
      %v2575 = vpop.f32.mrb[0].mxu0
      %v2576 = vadd.f32 0.0, %v2575
      %v2577 = vpop.f32.mrb[0].mxu0
      %2578 = vmatprep.mubr.f32.mxu0 0.0
      %2579 = vmatmul.mubr.f32.gmra.mrb[0].mxu0 %v2439
      %v2580 = vpop.f32.mrb[0].mxu0
      %v2581 = vadd.f32 0.0, %v2580
      %v2582 = vpop.f32.mrb[0].mxu0
      %2583 = vmatprep.mubr.f32.mxu0 0.0
      %2584 = vmatmul.mubr.f32.gmra.mrb[0].mxu0 %v2441
      %v2585 = vpop.f32.mrb[0].mxu0
      %v2586 = vadd.f32 0.0, %v2585
      %v2587 = vpop.f32.mrb[0].mxu0
      %2588 = vdwg.mxu0
      %v2589 = vadd.f32 %v2421, %v2511
      %v2590 = vadd.f32 %v2422, %v2516
      %v2591 = vadd.f32 %v2423, %v2521
      %v2592 = vadd.f32 %v2424, %v2526
      %v2593 = vadd.f32 %v2425, %v2531
      %v2594 = vadd.f32 %v2426, %v2536
      %v2595 = vadd.f32 %v2427, %v2541
      %v2596 = vadd.f32 %v2428, %v2546
      %v2597 = vadd.f32 %v2429, %v2551
      %v2598 = vadd.f32 %v2430, %v2556
      %v2599 = vadd.f32 %v2431, %v2561
      %v2600 = vadd.f32 %v2432, %v2566
      %v2601 = vadd.f32 %v2433, %v2571
      %v2602 = vadd.f32 %v2434, %v2576
      %v2603 = vadd.f32 %v2435, %v2581
      %v2604 = vadd.f32 %v2436, %v2586
      // Predicated region
      $region115: #{double_conv_forward.4} parent=31 // pred_check
        %p2605 = pneg %p254
      $region116: #{double_conv_forward.4} parent=31 // pred_check_branch
        %2607 = sbr.rel (%p2605) target = $region118
      $region117: #{double_conv_forward.4} parent=31 // pred_region
        %2608 = vst [vmem:[%s244] sm:$0x1] 0.0
        %2609 = vst [vmem:[%s247] sm:$0x1] 0.0
      $region118: #{double_conv_forward.4} parent=31 // pred_fallthru
        _
      %v2610 = vld [vmem:[%s244] sm:$0x1]
      %v2611 = vadd.f32 %v2589, %v2590
      %v2612 = vadd.f32 %v2611, %v2591
      %v2613 = vadd.f32 %v2612, %v2592
      %v2614 = vadd.f32 %v2613, %v2593
      %v2615 = vadd.f32 %v2614, %v2594
      %v2616 = vadd.f32 %v2615, %v2595
      %v2617 = vadd.f32 %v2616, %v2596
      %v2618 = vadd.f32 %v2617, %v2597
      %v2619 = vadd.f32 %v2618, %v2598
      %v2620 = vadd.f32 %v2619, %v2599
      %v2621 = vadd.f32 %v2620, %v2600
      %v2622 = vadd.f32 %v2621, %v2601
      %v2623 = vadd.f32 %v2622, %v2602
      %v2624 = vadd.f32 %v2623, %v2603
      %v2625 = vadd.f32 %v2624, %v2604
      %v2626 = vrot.slane %v2625, 4
      %v2627 = vadd.f32 %v2625, %v2626
      %v2628 = vrot.slane %v2627, 2
      %v2629 = vadd.f32 %v2627, %v2628
      %v2630 = vrot.slane %v2629, 1
      %v2631 = vadd.f32 %v2629, %v2630
      %v2632 = vadd.f32 %v2610, %v2631
      %2633 = vst [vmem:[%s244] sm:$0x1] %v2632
      %v2634 = vld [vmem:[%s247] sm:$0x1]
      %v2635 = vmul.f32 %v2589, %v2589
      %v2636 = vmul.f32 %v2590, %v2590
      %v2637 = vmul.f32 %v2591, %v2591
      %v2638 = vmul.f32 %v2592, %v2592
      %v2639 = vmul.f32 %v2593, %v2593
      %v2640 = vmul.f32 %v2594, %v2594
      %v2641 = vmul.f32 %v2595, %v2595
      %v2642 = vmul.f32 %v2596, %v2596
      %v2643 = vmul.f32 %v2597, %v2597
      %v2644 = vmul.f32 %v2598, %v2598
      %v2645 = vmul.f32 %v2599, %v2599
      %v2646 = vmul.f32 %v2600, %v2600
      %v2647 = vmul.f32 %v2601, %v2601
      %v2648 = vmul.f32 %v2602, %v2602
      %v2649 = vmul.f32 %v2603, %v2603
      %v2650 = vmul.f32 %v2604, %v2604
      %v2651 = vadd.f32 %v2635, %v2636
      %v2652 = vadd.f32 %v2651, %v2637
      %v2653 = vadd.f32 %v2652, %v2638
      %v2654 = vadd.f32 %v2653, %v2639
      %v2655 = vadd.f32 %v2654, %v2640
      %v2656 = vadd.f32 %v2655, %v2641
      %v2657 = vadd.f32 %v2656, %v2642
      %v2658 = vadd.f32 %v2657, %v2643
      %v2659 = vadd.f32 %v2658, %v2644
      %v2660 = vadd.f32 %v2659, %v2645
      %v2661 = vadd.f32 %v2660, %v2646
      %v2662 = vadd.f32 %v2661, %v2647
      %v2663 = vadd.f32 %v2662, %v2648
      %v2664 = vadd.f32 %v2663, %v2649
      %v2665 = vadd.f32 %v2664, %v2650
      %v2666 = vrot.slane %v2665, 4
      %v2667 = vadd.f32 %v2665, %v2666
      %v2668 = vrot.slane %v2667, 2
      %v2669 = vadd.f32 %v2667, %v2668
      %v2670 = vrot.slane %v2669, 1
      %v2671 = vadd.f32 %v2669, %v2670
      %v2672 = vadd.f32 %v2634, %v2671
      %2673 = vst [vmem:[%s247] sm:$0x1] %v2672
      %2674 = vst [vmem:[%s240] sm:$0xff] %v2589
      %2675 = vst [vmem:[%s240 + $0x8] sm:$0xff] %v2590
      %2676 = vst [vmem:[%s240 + $0x10] sm:$0xff] %v2591
      %2677 = vst [vmem:[%s240 + $0x18] sm:$0xff] %v2592
      %2678 = vst [vmem:[%s240 + $0x20] sm:$0xff] %v2593
      %2679 = vst [vmem:[%s240 + $0x28] sm:$0xff] %v2594
      %2680 = vst [vmem:[%s240 + $0x30] sm:$0xff] %v2595
      %2681 = vst [vmem:[%s240 + $0x38] sm:$0xff] %v2596
      %2682 = vst [vmem:[%s240 + $0x40] sm:$0xff] %v2597
      %2683 = vst [vmem:[%s240 + $0x48] sm:$0xff] %v2598
      %2684 = vst [vmem:[%s240 + $0x50] sm:$0xff] %v2599
      %2685 = vst [vmem:[%s240 + $0x58] sm:$0xff] %v2600
      %2686 = vst [vmem:[%s240 + $0x60] sm:$0xff] %v2601
      %2687 = vst [vmem:[%s240 + $0x68] sm:$0xff] %v2602
      %2688 = vst [vmem:[%s240 + $0x70] sm:$0xff] %v2603
      %2689 = vst [vmem:[%s240 + $0x78] sm:$0xff] %v2604
      %s2690 = smul.u32 8, %s23
      %p2691 = scmp.lt.s32.totalorder %s22, 1
      %s2692 = scalar_select %p2691, %s22, 1
      %p2693 = scmp.lt.s32.totalorder %s2690, 15
      %s2694 = scalar_select %p2693, %s2690, 15
      %s2695 = smul.addr %s2694, 2
      %s2696 = smul.addr %s2692, 32
      %s2697 = sadd.s32 %s2695, %s2696
      %s2698 = smul.addr %s2697, 8
      %s2699 = scalar_lea.vmem %s4, %s2698
      %p2700 = scmp.lt.s32.totalorder %s22, 1
      %s2701 = scalar_select %p2700, %s22, 1
      %s2702 = scalar_lea.vmem %s5, %s2701
      %p2703 = scmp.lt.s32.totalorder %s22, 1
      %s2704 = scalar_select %p2703, %s22, 1
      %s2705 = scalar_lea.vmem %s6, %s2704
      // Predicated region
      $region119: #{double_conv_forward.4} parent=31 // pred_check
        %p2706 = pneg %p113
      $region120: #{double_conv_forward.4} parent=31 // pred_check_branch
        %2708 = sbr.rel (%p2706) target = $region122
      $region121: #{double_conv_forward.4} parent=31 // pred_region
        %s2709 = smul.u32 8, %s23
      $region122: #{double_conv_forward.4} parent=31 // pred_fallthru
        _
      // Predicated region
      $region123: #{double_conv_forward.4} parent=31 // pred_check
        %p2710 = pneg %p139
      $region124: #{double_conv_forward.4} parent=31 // pred_check_branch
        %2712 = sbr.rel (%p2710) target = $region126
      $region125: #{double_conv_forward.4} parent=31 // pred_region
        _
      $region126: #{double_conv_forward.4} parent=31 // pred_fallthru
        _
      // Predicated region
      $region127: #{double_conv_forward.4} parent=31 // pred_check
        %p2713 = pneg %p165
      $region128: #{double_conv_forward.4} parent=31 // pred_check_branch
        %2715 = sbr.rel (%p2713) target = $region130
      $region129: #{double_conv_forward.4} parent=31 // pred_region
        _
      $region130: #{double_conv_forward.4} parent=31 // pred_fallthru
        _
    $region32: #{double_conv_forward.4} parent=5 // pred_fallthru
      _
    %p2716 = scmp.le.s32.totalorder 2, %s13
    // Predicated region
    $region131: #{double_conv_forward.4} parent=5 // pred_check
      %p2717 = pneg %p2716
    $region132: #{double_conv_forward.4} parent=5 // pred_check_branch
      %2719 = sbr.rel (%p2717) target = $region134
    $region133: #{double_conv_forward.4} parent=5 // pred_region
      %s2720 = ssub.s32 %s13, 2
      // Predicated region
      $region135: #{double_conv_forward.4} parent=133 // pred_check
        %p2721 = pneg %p119
      $region136: #{double_conv_forward.4} parent=133 // pred_check_branch
        %2723 = sbr.rel (%p2721) target = $region138
      $region137: #{double_conv_forward.4} parent=133 // pred_region
        %s2724 = smul.u32 8, %s25
        %p2725 = scmp.lt.s32.totalorder %s24, 1
        %s2726 = scalar_select %p2725, %s24, 1
        %p2727 = scmp.lt.s32.totalorder %s2724, 15
        %s2728 = scalar_select %p2727, %s2724, 15
        %s2729 = smul.addr %s2728, 2
        %s2730 = smul.addr %s2726, 32
        %s2731 = sadd.s32 %s2729, %s2730
        %s2732 = smul.addr %s2731, 8
        %s2733 = scalar_lea.vmem %s4, %s2732
      $region138: #{double_conv_forward.4} parent=133 // pred_fallthru
        _
      // Predicated region
      $region139: #{double_conv_forward.4} parent=133 // pred_check
        %p2734 = pneg %p145
      $region140: #{double_conv_forward.4} parent=133 // pred_check_branch
        %2736 = sbr.rel (%p2734) target = $region142
      $region141: #{double_conv_forward.4} parent=133 // pred_region
        %p2737 = scmp.lt.s32.totalorder %s24, 1
        %s2738 = scalar_select %p2737, %s24, 1
        %s2739 = scalar_lea.vmem %s5, %s2738
      $region142: #{double_conv_forward.4} parent=133 // pred_fallthru
        _
      // Predicated region
      $region143: #{double_conv_forward.4} parent=133 // pred_check
        %p2740 = pneg %p171
      $region144: #{double_conv_forward.4} parent=133 // pred_check_branch
        %2742 = sbr.rel (%p2740) target = $region146
      $region145: #{double_conv_forward.4} parent=133 // pred_region
        %p2743 = scmp.lt.s32.totalorder %s24, 1
        %s2744 = scalar_select %p2743, %s24, 1
        %s2745 = scalar_lea.vmem %s6, %s2744
      $region146: #{double_conv_forward.4} parent=133 // pred_fallthru
        _
    $region134: #{double_conv_forward.4} parent=5 // pred_fallthru
      _
  $region6: #{double_conv_forward.4} parent=0 // loop_footer
    %s17 = sadd.s32 1, %s13
  $region7: #{double_conv_forward.4} parent=0 // loop_footer_branch
    %12 = sbr.rel target = $region3
  $region8: #{double_conv_forward.4} parent=0 // loop_exit
    _
  %2746 = vsyncmov [#allocation3]
  %s2747 = vpop.sfrf %2746
  %p2748 = scmp.eq.s32.totalorder %s2747, 0
  %p2749 = pneg %p2748
  %2751 = shalt.err (%p2749)
  %s2752 = scalar_lea.sflag [#allocation3], 1
  %2753 = vsyncmov %s2752
  %s2754 = vpop.sfrf %2753
  %p2755 = scmp.eq.s32.totalorder %s2754, 0
  %p2756 = pneg %p2755
  %2758 = shalt.err (%p2756)

</llo_original>
